<compile_context>
chip_gen: v7x
topology: tpu7x:2x2x1
jax: 0.10.0
libtpu: 0.0.40
codegen_flags: <defaults>
</compile_context>

<pallas_src>
import jax
import jax.numpy as jnp
from jax import lax
from jax.experimental import pallas as pl
from jax.experimental.pallas import tpu as pltpu

EPS = 1e-5                      # PyTorch BatchNorm2d default
LANE = 128                      # pad channel dims to lane width for dense stores
MATMUL_DTYPE = jnp.bfloat16     # MXU input dtype (accumulation stays float32)
_VMEM_LIMIT = 48 * 1024 * 1024


def _round_up(x, m):
    return ((x + m - 1) // m) * m


# ---------------- in-kernel helpers ----------------

def _conv3x3_accumulate(xp, w_ref, H, W, col0):
    """3x3 conv (padding=1) as 9 shifted MXU matmuls.

    xp:    (H+2, >=col0+W+2, C) zero-padded activation value (MATMUL_DTYPE).
    w_ref: (9, C, Cop) weight ref (slot k = kh*3 + kw).
    Returns (H*W, Cop) float32 accumulator.
    """
    C = xp.shape[-1]
    Cop = w_ref.shape[-1]
    acc = jnp.zeros((H * W, Cop), jnp.float32)
    for k in range(9):
        dh, dw = k // 3, k % 3
        win = xp[dh:dh + H, col0 + dw:col0 + dw + W, :].reshape(H * W, C)
        acc = acc + jnp.dot(win, w_ref[k], preferred_element_type=jnp.float32)
    return acc


# ---------------- Pallas kernels ----------------

def _conv1_kernel(x_ref, w_ref, raw_ref, sum_ref, sq_ref, xpad_ref):
    # x_ref:    (1, H, W, Cin)       input block (one sample)
    # w_ref:    (9, Cin, C1p)        resident conv1 weights (bf16)
    # raw_ref:  (1, H, W, C1p)       raw conv1 output (pre-BN, f32)
    # sum_ref / sq_ref: (1, 1, C1p)  per-block BN partial statistics
    # xpad_ref: VMEM scratch (H+2, W+9, Cin) bf16 — zero-padded halo built in VMEM;
    #           left pad of 8 keeps the interior store sublane-aligned, conv
    #           windows read columns [7, 7+W+2).
    _, H, W, _ = x_ref.shape
    C1p = w_ref.shape[-1]
    xpad_ref[...] = jnp.zeros_like(xpad_ref)
    xpad_ref[1:H + 1, 8:8 + W, :] = x_ref[0].astype(MATMUL_DTYPE)
    acc = _conv3x3_accumulate(xpad_ref[...], w_ref, H, W, 7)
    raw_ref[0] = acc.reshape(H, W, C1p)
    sum_ref[0] = jnp.sum(acc, axis=0, keepdims=True)
    sq_ref[0] = jnp.sum(acc * acc, axis=0, keepdims=True)


def _bn_relu_conv2_kernel(raw1_ref, s1_ref, t1_ref, w2_ref,
                          raw2_ref, sum_ref, sq_ref, hpad_ref):
    # raw1_ref: (1, H, W, C1p)  raw conv1 output
    # s1/t1:    (1, C1p)        folded BN1 scale / shift (global stats)
    # w2_ref:   (9, C1p, C1p)   resident conv2 weights (bf16)
    # raw2_ref: (1, H, W, C1p)  raw conv2 output; sum/sq: (1, 1, C1p) BN2 partials
    # hpad_ref: VMEM scratch (H+2, W+9, C1p) bf16 (same halo layout as conv1).
    _, H, W, C1p = raw1_ref.shape
    h = jnp.maximum(raw1_ref[0] * s1_ref[...] + t1_ref[...], 0.0)   # BN1 + ReLU (f32)
    hpad_ref[...] = jnp.zeros_like(hpad_ref)
    hpad_ref[1:H + 1, 8:8 + W, :] = h.astype(MATMUL_DTYPE)
    acc = _conv3x3_accumulate(hpad_ref[...], w2_ref, H, W, 7)
    raw2_ref[0] = acc.reshape(H, W, C1p)
    sum_ref[0] = jnp.sum(acc, axis=0, keepdims=True)
    sq_ref[0] = jnp.sum(acc * acc, axis=0, keepdims=True)


def _bn_add_proj_relu_kernel(raw2_ref, s2_ref, t2_ref, x_ref, wr_ref, o_ref):
    # BN2 + residual 1x1-conv + ReLU  (in_channels != out_channels path)
    _, H, W, C1p = raw2_ref.shape
    Cin = x_ref.shape[-1]
    y = raw2_ref[0] * s2_ref[...] + t2_ref[...]
    xr = x_ref[0].astype(MATMUL_DTYPE).reshape(H * W, Cin)
    res = jnp.dot(xr, wr_ref[...], preferred_element_type=jnp.float32)
    o_ref[0] = jnp.maximum(y + res.reshape(H, W, C1p), 0.0)


def _bn_add_relu_kernel(raw2_ref, s2_ref, t2_ref, xpad_ref, o_ref):
    # BN2 + identity residual + ReLU (in_channels == out_channels path, no matmul)
    y = raw2_ref[0] * s2_ref[...] + t2_ref[...]
    o_ref[0] = jnp.maximum(y + xpad_ref[0], 0.0)


# ---------------- pallas_call wrappers ----------------

def _compiler_params():
    return pltpu.CompilerParams(
        dimension_semantics=("parallel",),       # batch axis -> megacore sharding
        vmem_limit_bytes=_VMEM_LIMIT)


def _conv1_stage(x_nhwc, w1, C1p):
    N, H, W, Cin = x_nhwc.shape
    return pl.pallas_call(
        _conv1_kernel,
        out_shape=(jax.ShapeDtypeStruct((N, H, W, C1p), jnp.float32),
                   jax.ShapeDtypeStruct((N, 1, C1p), jnp.float32),
                   jax.ShapeDtypeStruct((N, 1, C1p), jnp.float32)),
        grid_spec=pltpu.PrefetchScalarGridSpec(
            num_scalar_prefetch=0,
            grid=(N,),
            in_specs=[pl.BlockSpec((1, H, W, Cin), lambda n: (n, 0, 0, 0)),
                      pl.BlockSpec((9, Cin, C1p), lambda n: (0, 0, 0))],
            out_specs=[pl.BlockSpec((1, H, W, C1p), lambda n: (n, 0, 0, 0)),
                       pl.BlockSpec((1, 1, C1p), lambda n: (n, 0, 0)),
                       pl.BlockSpec((1, 1, C1p), lambda n: (n, 0, 0))],
            scratch_shapes=[pltpu.VMEM((H + 2, W + 9, Cin), MATMUL_DTYPE)]),
        compiler_params=_compiler_params(),
    )(x_nhwc, w1)


def _conv2_stage(raw1, s1, t1, w2):
    N, H, W, C1p = raw1.shape
    return pl.pallas_call(
        _bn_relu_conv2_kernel,
        out_shape=(jax.ShapeDtypeStruct((N, H, W, C1p), jnp.float32),
                   jax.ShapeDtypeStruct((N, 1, C1p), jnp.float32),
                   jax.ShapeDtypeStruct((N, 1, C1p), jnp.float32)),
        grid_spec=pltpu.PrefetchScalarGridSpec(
            num_scalar_prefetch=0,
            grid=(N,),
            in_specs=[pl.BlockSpec((1, H, W, C1p), lambda n: (n, 0, 0, 0)),
                      pl.BlockSpec((1, C1p), lambda n: (0, 0)),
                      pl.BlockSpec((1, C1p), lambda n: (0, 0)),
                      pl.BlockSpec((9, C1p, C1p), lambda n: (0, 0, 0))],
            out_specs=[pl.BlockSpec((1, H, W, C1p), lambda n: (n, 0, 0, 0)),
                       pl.BlockSpec((1, 1, C1p), lambda n: (n, 0, 0)),
                       pl.BlockSpec((1, 1, C1p), lambda n: (n, 0, 0))],
            scratch_shapes=[pltpu.VMEM((H + 2, W + 9, C1p), MATMUL_DTYPE)]),
        compiler_params=_compiler_params(),
    )(raw1, s1, t1, w2)


def _finalize_proj(raw2, s2, t2, x_nhwc, wr):
    N, H, W, C1p = raw2.shape
    Cin = x_nhwc.shape[-1]
    return pl.pallas_call(
        _bn_add_proj_relu_kernel,
        out_shape=jax.ShapeDtypeStruct((N, H, W, C1p), jnp.float32),
        grid_spec=pltpu.PrefetchScalarGridSpec(
            num_scalar_prefetch=0,
            grid=(N,),
            in_specs=[pl.BlockSpec((1, H, W, C1p), lambda n: (n, 0, 0, 0)),
                      pl.BlockSpec((1, C1p), lambda n: (0, 0)),
                      pl.BlockSpec((1, C1p), lambda n: (0, 0)),
                      pl.BlockSpec((1, H, W, Cin), lambda n: (n, 0, 0, 0)),
                      pl.BlockSpec((Cin, C1p), lambda n: (0, 0))],
            out_specs=pl.BlockSpec((1, H, W, C1p), lambda n: (n, 0, 0, 0))),
        compiler_params=_compiler_params(),
    )(raw2, s2, t2, x_nhwc, wr)


def _finalize_identity(raw2, s2, t2, x_chan_padded):
    N, H, W, C1p = raw2.shape
    return pl.pallas_call(
        _bn_add_relu_kernel,
        out_shape=jax.ShapeDtypeStruct((N, H, W, C1p), jnp.float32),
        grid_spec=pltpu.PrefetchScalarGridSpec(
            num_scalar_prefetch=0,
            grid=(N,),
            in_specs=[pl.BlockSpec((1, H, W, C1p), lambda n: (n, 0, 0, 0)),
                      pl.BlockSpec((1, C1p), lambda n: (0, 0)),
                      pl.BlockSpec((1, C1p), lambda n: (0, 0)),
                      pl.BlockSpec((1, H, W, C1p), lambda n: (n, 0, 0, 0))],
            out_specs=pl.BlockSpec((1, H, W, C1p), lambda n: (n, 0, 0, 0))),
        compiler_params=_compiler_params(),
    )(raw2, s2, t2, x_chan_padded)


# ---------------- JAX glue (tiny, channel-sized work only) ----------------

def _fold_bn(sums, sqs, gamma_p, beta_p, count):
    """Reduce per-block partials to global batch stats and fold gamma/beta."""
    total = jnp.sum(sums, axis=(0, 1))
    total_sq = jnp.sum(sqs, axis=(0, 1))
    mean = total / count
    var = jnp.maximum(total_sq / count - mean * mean, 0.0)
    scale = gamma_p * lax.rsqrt(var + EPS)
    shift = beta_p - mean * scale
    return scale.reshape(1, -1), shift.reshape(1, -1)


def _prep_conv3x3_weight(w, cin_pad, cout_pad):
    # PyTorch (Cout, Cin, 3, 3) -> (9, cin_pad, cout_pad) bf16; slot k = kh*3+kw.
    Cout, Cin = w.shape[0], w.shape[1]
    wm = jnp.transpose(w, (2, 3, 1, 0)).reshape(9, Cin, Cout)
    wm = jnp.pad(wm, ((0, 0), (0, cin_pad - Cin), (0, cout_pad - Cout)))
    return wm.astype(MATMUL_DTYPE)


def _pad_vec(v, n, fill):
    return jnp.pad(v.astype(jnp.float32), (0, n - v.shape[0]), constant_values=fill)


def _forward(x_nchw, params):
    N, Cin, H, W = x_nchw.shape
    Cout = params["w1"].shape[0]
    C1p = _round_up(Cout, LANE)                                   # lane-dense channels

    x = jnp.transpose(x_nchw, (0, 2, 3, 1)).astype(jnp.float32)   # NHWC

    w1 = _prep_conv3x3_weight(params["w1"], Cin, C1p)             # (9, Cin, C1p)
    w2 = _prep_conv3x3_weight(params["w2"], C1p, C1p)             # (9, C1p, C1p)
    g1 = _pad_vec(params["g1"], C1p, 1.0)
    b1 = _pad_vec(params["b1"], C1p, 0.0)
    g2 = _pad_vec(params["g2"], C1p, 1.0)
    b2 = _pad_vec(params["b2"], C1p, 0.0)

    count = N * H * W

    raw1, sum1, sq1 = _conv1_stage(x, w1, C1p)
    s1, t1 = _fold_bn(sum1, sq1, g1, b1, count)

    raw2, sum2, sq2 = _conv2_stage(raw1, s1, t1, w2)
    s2, t2 = _fold_bn(sum2, sq2, g2, b2, count)

    if params["wr"] is not None:
        wr = jnp.transpose(params["wr"][:, :, 0, 0], (1, 0))      # (Cin, Cout)
        wr = jnp.pad(wr, ((0, 0), (0, C1p - Cout))).astype(MATMUL_DTYPE)
        out = _finalize_proj(raw2, s2, t2, x, wr)
    else:
        # Channel pad is a no-op (elided) whenever Cout is already a lane multiple.
        x_cp = jnp.pad(x, ((0, 0), (0, 0), (0, 0), (0, C1p - Cin)))
        out = _finalize_identity(raw2, s2, t2, x_cp)

    out = out[..., :Cout]
    return jnp.transpose(out, (0, 3, 1, 2))                       # back to NCHW


residual_attention_block = jax.jit(_forward)


# ---------------- parameters & pure-JAX reference ----------------

def init_params(key, in_channels, out_channels):
    k1, k2, k3 = jax.random.split(key, 3)
    params = {
        "w1": 0.1 * jax.random.normal(k1, (out_channels, in_channels, 3, 3), jnp.float32),
        "w2": 0.1 * jax.random.normal(k2, (out_channels, out_channels, 3, 3), jnp.float32),
        "g1": jnp.ones((out_channels,), jnp.float32),
        "b1": jnp.zeros((out_channels,), jnp.float32),
        "g2": jnp.ones((out_channels,), jnp.float32),
        "b2": jnp.zeros((out_channels,), jnp.float32),
    }
    if in_channels != out_channels:
        params["wr"] = 0.1 * jax.random.normal(
            k3, (out_channels, in_channels, 1, 1), jnp.float32)
    else:
        params["wr"] = None
    return params


def _ref_forward(x_nchw, params, matmul_dtype=jnp.float32):
    """Pure-JAX reference (train-mode BatchNorm), precision-matched via matmul_dtype."""
    dn = ("NCHW", "OIHW", "NCHW")

    def conv(x, w, pad):
        return lax.conv_general_dilated(
            x.astype(matmul_dtype), w.astype(matmul_dtype),
            window_strides=(1, 1), padding=((pad, pad), (pad, pad)),
            dimension_numbers=dn, preferred_element_type=jnp.float32)

    def bn(x, g, b):
        mean = jnp.mean(x, axis=(0, 2, 3), keepdims=True)
        var = jnp.mean((x - mean) ** 2, axis=(0, 2, 3), keepdims=True)
        return ((x - mean) * lax.rsqrt(var + EPS) * g.reshape(1, -1, 1, 1)
                + b.reshape(1, -1, 1, 1))

    residual = x_nchw
    if params["wr"] is not None:
        residual = conv(x_nchw, params["wr"], 0)
    h = jax.nn.relu(bn(conv(x_nchw, params["w1"], 1), params["g1"], params["b1"]))
    y = bn(conv(h, params["w2"], 1), params["g2"], params["b2"]) + residual
    return jax.nn.relu(y)


if __name__ == "__main__":
    key = jax.random.PRNGKey(0)
    kx1, kx2, kp1, kp2 = jax.random.split(key, 4)

    N, Cin, Cout, H, W = 2, 4, 8, 16, 16

    # Case 1: in_channels != out_channels -> 1x1-conv residual path.
    x1 = jax.random.normal(kx1, (N, Cin, H, W), jnp.float32)
    params1 = init_params(kp1, Cin, Cout)
    out1 = jax.block_until_ready(residual_attention_block(x1, params1))
    assert out1.shape == (N, Cout, H, W)
    ref1 = _ref_forward(x1, params1, matmul_dtype=MATMUL_DTYPE)
    err1 = float(jnp.max(jnp.abs(out1 - ref1)))
    assert err1 < 2e-2, f"case1 mismatch vs reference: {err1}"

    # Case 2: in_channels == out_channels -> identity residual path (no matmul).
    x2 = jax.random.normal(kx2, (N, Cout, H, W), jnp.float32)
    params2 = init_params(kp2, Cout, Cout)
    out2 = jax.block_until_ready(residual_attention_block(x2, params2))
    assert out2.shape == (N, Cout, H, W)
    ref2 = _ref_forward(x2, params2, matmul_dtype=MATMUL_DTYPE)
    err2 = float(jnp.max(jnp.abs(out2 - ref2)))
    assert err2 < 2e-2, f"case2 mismatch vs reference: {err2}"

    print("KERNEL_OK")
</pallas_src>

<mosaic_0001>
module attributes {stable_mosaic.version = 11 : i64} {
  func.func @_conv1_kernel(%arg0: i32, %arg1: memref<1x16x16x4xf32, #tpu.memory_space<vmem>>, %arg2: memref<9x4x128xbf16, #tpu.memory_space<vmem>>, %arg3: memref<1x16x16x128xf32, #tpu.memory_space<vmem>>, %arg4: memref<1x1x128xf32, #tpu.memory_space<vmem>>, %arg5: memref<1x1x128xf32, #tpu.memory_space<vmem>>, %arg6: memref<18x25x4xbf16, #tpu.memory_space<vmem>>) attributes {dimension_semantics = [#tpu.dimension_semantics<parallel>], iteration_bounds = array<i64: 2>, scalar_prefetch = 0 : i64, scratch_operands = 1 : i64, tpu.core_type = #tpu.core_type<tc>, window_params = [{transform_indices = @transform_0, window_bounds = array<i64: 1, 16, 16, 4>}, {pipeline_mode = #tpu.pipeline_mode<synchronous>, transform_indices = @transform_1, window_bounds = array<i64: 9, 4, 128>}, {transform_indices = @transform_2, window_bounds = array<i64: 1, 16, 16, 128>}, {transform_indices = @transform_3, window_bounds = array<i64: 1, 1, 128>}, {transform_indices = @transform_4, window_bounds = array<i64: 1, 1, 128>}]} {
    %cst = arith.constant 0.000000e+00 : bf16
    %0 = vector.broadcast %cst : bf16 to vector<18x25x4xbf16>
    %c0 = arith.constant 0 : index
    %c0_0 = arith.constant 0 : index
    %c0_1 = arith.constant 0 : index
    %1 = vector.load %arg6[%c0, %c0_0, %c0_1] : memref<18x25x4xbf16, #tpu.memory_space<vmem>>, vector<18x25x4xbf16>
    tpu.vector_store %arg6[%c0, %c0_0, %c0_1], %0 {strides = array<i32>} : memref<18x25x4xbf16, #tpu.memory_space<vmem>>, vector<18x25x4xbf16>,
    %c0_2 = arith.constant 0 : index
    %c0_3 = arith.constant 0 : index
    %c0_4 = arith.constant 0 : index
    %c0_5 = arith.constant 0 : index
    %2 = vector.load %arg1[%c0_2, %c0_3, %c0_4, %c0_5] : memref<1x16x16x4xf32, #tpu.memory_space<vmem>>, vector<1x16x16x4xf32>
    %3 = vector.shape_cast %2 : vector<1x16x16x4xf32> to vector<16x16x4xf32>
    %4 = arith.truncf %3 : vector<16x16x4xf32> to vector<16x16x4xbf16>
    %c1 = arith.constant 1 : index
    %c8 = arith.constant 8 : index
    %c0_6 = arith.constant 0 : index
    %5 = vector.load %arg6[%c1, %c8, %c0_6] : memref<18x25x4xbf16, #tpu.memory_space<vmem>>, vector<16x16x4xbf16>
    tpu.vector_store %arg6[%c1, %c8, %c0_6], %4 {strides = array<i32>} : memref<18x25x4xbf16, #tpu.memory_space<vmem>>, vector<16x16x4xbf16>,
    %c0_7 = arith.constant 0 : index
    %c0_8 = arith.constant 0 : index
    %c0_9 = arith.constant 0 : index
    %6 = vector.load %arg6[%c0_7, %c0_8, %c0_9] : memref<18x25x4xbf16, #tpu.memory_space<vmem>>, vector<18x25x4xbf16>
    %cst_10 = arith.constant 0.000000e+00 : f32
    %7 = vector.broadcast %cst_10 : f32 to vector<256x128xf32>
    %8 = vector.extract_strided_slice %6 {offsets = [0, 7, 0], sizes = [16, 16, 4], strides = [1, 1, 1]} : vector<18x25x4xbf16> to vector<16x16x4xbf16>
    %9 = vector.shape_cast %8 : vector<16x16x4xbf16> to vector<256x4xbf16>
    %c0_11 = arith.constant 0 : index
    %c0_12 = arith.constant 0 : index
    %c0_13 = arith.constant 0 : index
    %10 = vector.load %arg2[%c0_11, %c0_12, %c0_13] : memref<9x4x128xbf16, #tpu.memory_space<vmem>>, vector<1x4x128xbf16>
    %11 = vector.shape_cast %10 : vector<1x4x128xbf16> to vector<4x128xbf16>
    %cst_14 = arith.constant dense<0.000000e+00> : vector<256x128xf32>
    %12 = tpu.matmul %9, %11, %cst_14 {dimension_numbers = #tpu.dot_dimension_numbers<[1], [0], [0], [1], [0, 0, 1, 1], [], []>} : vector<256x4xbf16>, vector<4x128xbf16>, vector<256x128xf32> -> vector<256x128xf32>
    %13 = arith.addf %7, %12 : vector<256x128xf32>
    %14 = vector.extract_strided_slice %6 {offsets = [0, 8, 0], sizes = [16, 16, 4], strides = [1, 1, 1]} : vector<18x25x4xbf16> to vector<16x16x4xbf16>
    %15 = vector.shape_cast %14 : vector<16x16x4xbf16> to vector<256x4xbf16>
    %c1_15 = arith.constant 1 : index
    %c0_16 = arith.constant 0 : index
    %c0_17 = arith.constant 0 : index
    %16 = vector.load %arg2[%c1_15, %c0_16, %c0_17] : memref<9x4x128xbf16, #tpu.memory_space<vmem>>, vector<1x4x128xbf16>
    %17 = vector.shape_cast %16 : vector<1x4x128xbf16> to vector<4x128xbf16>
    %cst_18 = arith.constant dense<0.000000e+00> : vector<256x128xf32>
    %18 = tpu.matmul %15, %17, %cst_18 {dimension_numbers = #tpu.dot_dimension_numbers<[1], [0], [0], [1], [0, 0, 1, 1], [], []>} : vector<256x4xbf16>, vector<4x128xbf16>, vector<256x128xf32> -> vector<256x128xf32>
    %19 = arith.addf %13, %18 : vector<256x128xf32>
    %20 = vector.extract_strided_slice %6 {offsets = [0, 9, 0], sizes = [16, 16, 4], strides = [1, 1, 1]} : vector<18x25x4xbf16> to vector<16x16x4xbf16>
    %21 = vector.shape_cast %20 : vector<16x16x4xbf16> to vector<256x4xbf16>
    %c2 = arith.constant 2 : index
    %c0_19 = arith.constant 0 : index
    %c0_20 = arith.constant 0 : index
    %22 = vector.load %arg2[%c2, %c0_19, %c0_20] : memref<9x4x128xbf16, #tpu.memory_space<vmem>>, vector<1x4x128xbf16>
    %23 = vector.shape_cast %22 : vector<1x4x128xbf16> to vector<4x128xbf16>
    %cst_21 = arith.constant dense<0.000000e+00> : vector<256x128xf32>
    %24 = tpu.matmul %21, %23, %cst_21 {dimension_numbers = #tpu.dot_dimension_numbers<[1], [0], [0], [1], [0, 0, 1, 1], [], []>} : vector<256x4xbf16>, vector<4x128xbf16>, vector<256x128xf32> -> vector<256x128xf32>
    %25 = arith.addf %19, %24 : vector<256x128xf32>
    %26 = vector.extract_strided_slice %6 {offsets = [1, 7, 0], sizes = [16, 16, 4], strides = [1, 1, 1]} : vector<18x25x4xbf16> to vector<16x16x4xbf16>
    %27 = vector.shape_cast %26 : vector<16x16x4xbf16> to vector<256x4xbf16>
    %c3 = arith.constant 3 : index
    %c0_22 = arith.constant 0 : index
    %c0_23 = arith.constant 0 : index
    %28 = vector.load %arg2[%c3, %c0_22, %c0_23] : memref<9x4x128xbf16, #tpu.memory_space<vmem>>, vector<1x4x128xbf16>
    %29 = vector.shape_cast %28 : vector<1x4x128xbf16> to vector<4x128xbf16>
    %cst_24 = arith.constant dense<0.000000e+00> : vector<256x128xf32>
    %30 = tpu.matmul %27, %29, %cst_24 {dimension_numbers = #tpu.dot_dimension_numbers<[1], [0], [0], [1], [0, 0, 1, 1], [], []>} : vector<256x4xbf16>, vector<4x128xbf16>, vector<256x128xf32> -> vector<256x128xf32>
    %31 = arith.addf %25, %30 : vector<256x128xf32>
    %32 = vector.extract_strided_slice %6 {offsets = [1, 8, 0], sizes = [16, 16, 4], strides = [1, 1, 1]} : vector<18x25x4xbf16> to vector<16x16x4xbf16>
    %33 = vector.shape_cast %32 : vector<16x16x4xbf16> to vector<256x4xbf16>
    %c4 = arith.constant 4 : index
    %c0_25 = arith.constant 0 : index
    %c0_26 = arith.constant 0 : index
    %34 = vector.load %arg2[%c4, %c0_25, %c0_26] : memref<9x4x128xbf16, #tpu.memory_space<vmem>>, vector<1x4x128xbf16>
    %35 = vector.shape_cast %34 : vector<1x4x128xbf16> to vector<4x128xbf16>
    %cst_27 = arith.constant dense<0.000000e+00> : vector<256x128xf32>
    %36 = tpu.matmul %33, %35, %cst_27 {dimension_numbers = #tpu.dot_dimension_numbers<[1], [0], [0], [1], [0, 0, 1, 1], [], []>} : vector<256x4xbf16>, vector<4x128xbf16>, vector<256x128xf32> -> vector<256x128xf32>
    %37 = arith.addf %31, %36 : vector<256x128xf32>
    %38 = vector.extract_strided_slice %6 {offsets = [1, 9, 0], sizes = [16, 16, 4], strides = [1, 1, 1]} : vector<18x25x4xbf16> to vector<16x16x4xbf16>
    %39 = vector.shape_cast %38 : vector<16x16x4xbf16> to vector<256x4xbf16>
    %c5 = arith.constant 5 : index
    %c0_28 = arith.constant 0 : index
    %c0_29 = arith.constant 0 : index
    %40 = vector.load %arg2[%c5, %c0_28, %c0_29] : memref<9x4x128xbf16, #tpu.memory_space<vmem>>, vector<1x4x128xbf16>
    %41 = vector.shape_cast %40 : vector<1x4x128xbf16> to vector<4x128xbf16>
    %cst_30 = arith.constant dense<0.000000e+00> : vector<256x128xf32>
    %42 = tpu.matmul %39, %41, %cst_30 {dimension_numbers = #tpu.dot_dimension_numbers<[1], [0], [0], [1], [0, 0, 1, 1], [], []>} : vector<256x4xbf16>, vector<4x128xbf16>, vector<256x128xf32> -> vector<256x128xf32>
    %43 = arith.addf %37, %42 : vector<256x128xf32>
    %44 = vector.extract_strided_slice %6 {offsets = [2, 7, 0], sizes = [16, 16, 4], strides = [1, 1, 1]} : vector<18x25x4xbf16> to vector<16x16x4xbf16>
    %45 = vector.shape_cast %44 : vector<16x16x4xbf16> to vector<256x4xbf16>
    %c6 = arith.constant 6 : index
    %c0_31 = arith.constant 0 : index
    %c0_32 = arith.constant 0 : index
    %46 = vector.load %arg2[%c6, %c0_31, %c0_32] : memref<9x4x128xbf16, #tpu.memory_space<vmem>>, vector<1x4x128xbf16>
    %47 = vector.shape_cast %46 : vector<1x4x128xbf16> to vector<4x128xbf16>
    %cst_33 = arith.constant dense<0.000000e+00> : vector<256x128xf32>
    %48 = tpu.matmul %45, %47, %cst_33 {dimension_numbers = #tpu.dot_dimension_numbers<[1], [0], [0], [1], [0, 0, 1, 1], [], []>} : vector<256x4xbf16>, vector<4x128xbf16>, vector<256x128xf32> -> vector<256x128xf32>
    %49 = arith.addf %43, %48 : vector<256x128xf32>
    %50 = vector.extract_strided_slice %6 {offsets = [2, 8, 0], sizes = [16, 16, 4], strides = [1, 1, 1]} : vector<18x25x4xbf16> to vector<16x16x4xbf16>
    %51 = vector.shape_cast %50 : vector<16x16x4xbf16> to vector<256x4xbf16>
    %c7 = arith.constant 7 : index
    %c0_34 = arith.constant 0 : index
    %c0_35 = arith.constant 0 : index
    %52 = vector.load %arg2[%c7, %c0_34, %c0_35] : memref<9x4x128xbf16, #tpu.memory_space<vmem>>, vector<1x4x128xbf16>
    %53 = vector.shape_cast %52 : vector<1x4x128xbf16> to vector<4x128xbf16>
    %cst_36 = arith.constant dense<0.000000e+00> : vector<256x128xf32>
    %54 = tpu.matmul %51, %53, %cst_36 {dimension_numbers = #tpu.dot_dimension_numbers<[1], [0], [0], [1], [0, 0, 1, 1], [], []>} : vector<256x4xbf16>, vector<4x128xbf16>, vector<256x128xf32> -> vector<256x128xf32>
    %55 = arith.addf %49, %54 : vector<256x128xf32>
    %56 = vector.extract_strided_slice %6 {offsets = [2, 9, 0], sizes = [16, 16, 4], strides = [1, 1, 1]} : vector<18x25x4xbf16> to vector<16x16x4xbf16>
    %57 = vector.shape_cast %56 : vector<16x16x4xbf16> to vector<256x4xbf16>
    %c8_37 = arith.constant 8 : index
    %c0_38 = arith.constant 0 : index
    %c0_39 = arith.constant 0 : index
    %58 = vector.load %arg2[%c8_37, %c0_38, %c0_39] : memref<9x4x128xbf16, #tpu.memory_space<vmem>>, vector<1x4x128xbf16>
    %59 = vector.shape_cast %58 : vector<1x4x128xbf16> to vector<4x128xbf16>
    %cst_40 = arith.constant dense<0.000000e+00> : vector<256x128xf32>
    %60 = tpu.matmul %57, %59, %cst_40 {dimension_numbers = #tpu.dot_dimension_numbers<[1], [0], [0], [1], [0, 0, 1, 1], [], []>} : vector<256x4xbf16>, vector<4x128xbf16>, vector<256x128xf32> -> vector<256x128xf32>
    %61 = arith.addf %55, %60 : vector<256x128xf32>
    %62 = vector.shape_cast %61 : vector<256x128xf32> to vector<16x16x128xf32>
    %c0_41 = arith.constant 0 : index
    %c0_42 = arith.constant 0 : index
    %c0_43 = arith.constant 0 : index
    %c0_44 = arith.constant 0 : index
    %63 = vector.load %arg3[%c0_41, %c0_42, %c0_43, %c0_44] : memref<1x16x16x128xf32, #tpu.memory_space<vmem>>, vector<1x16x16x128xf32>
    %64 = vector.shape_cast %63 : vector<1x16x16x128xf32> to vector<16x16x128xf32>
    %65 = vector.shape_cast %62 : vector<16x16x128xf32> to vector<1x16x16x128xf32>
    tpu.vector_store %arg3[%c0_41, %c0_42, %c0_43, %c0_44], %65 {strides = array<i32>} : memref<1x16x16x128xf32, #tpu.memory_space<vmem>>, vector<1x16x16x128xf32>,
    %cst_45 = arith.constant dense<0.000000e+00> : vector<128xf32>
    %66 = vector.multi_reduction <add>, %61, %cst_45 [0] : vector<256x128xf32> to vector<128xf32>
    %67 = vector.shape_cast %66 : vector<128xf32> to vector<1x128xf32>
    %c0_46 = arith.constant 0 : index
    %c0_47 = arith.constant 0 : index
    %c0_48 = arith.constant 0 : index
    %68 = vector.load %arg4[%c0_46, %c0_47, %c0_48] : memref<1x1x128xf32, #tpu.memory_space<vmem>>, vector<1x1x128xf32>
    %69 = vector.shape_cast %68 : vector<1x1x128xf32> to vector<1x128xf32>
    %70 = vector.shape_cast %67 : vector<1x128xf32> to vector<1x1x128xf32>
    tpu.vector_store %arg4[%c0_46, %c0_47, %c0_48], %70 {strides = array<i32>} : memref<1x1x128xf32, #tpu.memory_space<vmem>>, vector<1x1x128xf32>,
    %71 = arith.mulf %61, %61 : vector<256x128xf32>
    %cst_49 = arith.constant dense<0.000000e+00> : vector<128xf32>
    %72 = vector.multi_reduction <add>, %71, %cst_49 [0] : vector<256x128xf32> to vector<128xf32>
    %73 = vector.shape_cast %72 : vector<128xf32> to vector<1x128xf32>
    %c0_50 = arith.constant 0 : index
    %c0_51 = arith.constant 0 : index
    %c0_52 = arith.constant 0 : index
    %74 = vector.load %arg5[%c0_50, %c0_51, %c0_52] : memref<1x1x128xf32, #tpu.memory_space<vmem>>, vector<1x1x128xf32>
    %75 = vector.shape_cast %74 : vector<1x1x128xf32> to vector<1x128xf32>
    %76 = vector.shape_cast %73 : vector<1x128xf32> to vector<1x1x128xf32>
    tpu.vector_store %arg5[%c0_50, %c0_51, %c0_52], %76 {strides = array<i32>} : memref<1x1x128xf32, #tpu.memory_space<vmem>>, vector<1x1x128xf32>,
    return
  }
  func.func @transform_0(%arg0: i32) -> (i32, i32, i32, i32) {
    %c0_i32 = arith.constant 0 : i32
    %c0_i32_0 = arith.constant 0 : i32
    %c0_i32_1 = arith.constant 0 : i32
    %c0_i32_2 = arith.constant 0 : i32
    return %arg0, %c0_i32, %c0_i32_0, %c0_i32_1 : i32, i32, i32, i32
  }
  func.func @transform_1(%arg0: i32) -> (i32, i32, i32) {
    %c0_i32 = arith.constant 0 : i32
    %c0_i32_0 = arith.constant 0 : i32
    %c0_i32_1 = arith.constant 0 : i32
    %c0_i32_2 = arith.constant 0 : i32
    return %c0_i32, %c0_i32_0, %c0_i32_1 : i32, i32, i32
  }
  func.func @transform_2(%arg0: i32) -> (i32, i32, i32, i32) {
    %c0_i32 = arith.constant 0 : i32
    %c0_i32_0 = arith.constant 0 : i32
    %c0_i32_1 = arith.constant 0 : i32
    %c0_i32_2 = arith.constant 0 : i32
    return %arg0, %c0_i32, %c0_i32_0, %c0_i32_1 : i32, i32, i32, i32
  }
  func.func @transform_3(%arg0: i32) -> (i32, i32, i32) {
    %c0_i32 = arith.constant 0 : i32
    %c0_i32_0 = arith.constant 0 : i32
    %c0_i32_1 = arith.constant 0 : i32
    return %arg0, %c0_i32, %c0_i32_0 : i32, i32, i32
  }
  func.func @transform_4(%arg0: i32) -> (i32, i32, i32) {
    %c0_i32 = arith.constant 0 : i32
    %c0_i32_0 = arith.constant 0 : i32
    %c0_i32_1 = arith.constant 0 : i32
    return %arg0, %c0_i32, %c0_i32_0 : i32, i32, i32
  }
}

module attributes {stable_mosaic.version = 11 : i64} {
  func.func @_bn_relu_conv2_kernel(%arg0: i32, %arg1: memref<1x16x16x128xf32, #tpu.memory_space<vmem>>, %arg2: memref<1x128xf32, #tpu.memory_space<vmem>>, %arg3: memref<1x128xf32, #tpu.memory_space<vmem>>, %arg4: memref<9x128x128xbf16, #tpu.memory_space<vmem>>, %arg5: memref<1x16x16x128xf32, #tpu.memory_space<vmem>>, %arg6: memref<1x1x128xf32, #tpu.memory_space<vmem>>, %arg7: memref<1x1x128xf32, #tpu.memory_space<vmem>>, %arg8: memref<18x25x128xbf16, #tpu.memory_space<vmem>>) attributes {dimension_semantics = [#tpu.dimension_semantics<parallel>], iteration_bounds = array<i64: 2>, scalar_prefetch = 0 : i64, scratch_operands = 1 : i64, tpu.core_type = #tpu.core_type<tc>, window_params = [{transform_indices = @transform_0, window_bounds = array<i64: 1, 16, 16, 128>}, {pipeline_mode = #tpu.pipeline_mode<synchronous>, transform_indices = @transform_1, window_bounds = array<i64: 1, 128>}, {pipeline_mode = #tpu.pipeline_mode<synchronous>, transform_indices = @transform_2, window_bounds = array<i64: 1, 128>}, {pipeline_mode = #tpu.pipeline_mode<synchronous>, transform_indices = @transform_3, window_bounds = array<i64: 9, 128, 128>}, {transform_indices = @transform_4, window_bounds = array<i64: 1, 16, 16, 128>}, {transform_indices = @transform_5, window_bounds = array<i64: 1, 1, 128>}, {transform_indices = @transform_6, window_bounds = array<i64: 1, 1, 128>}]} {
    %c0 = arith.constant 0 : index
    %c0_0 = arith.constant 0 : index
    %c0_1 = arith.constant 0 : index
    %c0_2 = arith.constant 0 : index
    %0 = vector.load %arg1[%c0, %c0_0, %c0_1, %c0_2] : memref<1x16x16x128xf32, #tpu.memory_space<vmem>>, vector<1x16x16x128xf32>
    %1 = vector.shape_cast %0 : vector<1x16x16x128xf32> to vector<16x16x128xf32>
    %c0_3 = arith.constant 0 : index
    %c0_4 = arith.constant 0 : index
    %2 = vector.load %arg2[%c0_3, %c0_4] : memref<1x128xf32, #tpu.memory_space<vmem>>, vector<1x128xf32>
    %3 = vector.shape_cast %2 : vector<1x128xf32> to vector<1x1x128xf32>
    %4 = vector.broadcast %3 : vector<1x1x128xf32> to vector<16x16x128xf32>
    %5 = arith.mulf %1, %4 : vector<16x16x128xf32>
    %c0_5 = arith.constant 0 : index
    %c0_6 = arith.constant 0 : index
    %6 = vector.load %arg3[%c0_5, %c0_6] : memref<1x128xf32, #tpu.memory_space<vmem>>, vector<1x128xf32>
    %7 = vector.shape_cast %6 : vector<1x128xf32> to vector<1x1x128xf32>
    %8 = vector.broadcast %7 : vector<1x1x128xf32> to vector<16x16x128xf32>
    %9 = arith.addf %5, %8 : vector<16x16x128xf32>
    %cst = arith.constant 0.000000e+00 : f32
    %10 = vector.broadcast %cst : f32 to vector<16x16x128xf32>
    %11 = arith.maximumf %9, %10 : vector<16x16x128xf32>
    %cst_7 = arith.constant 0.000000e+00 : bf16
    %12 = vector.broadcast %cst_7 : bf16 to vector<18x25x128xbf16>
    %c0_8 = arith.constant 0 : index
    %c0_9 = arith.constant 0 : index
    %c0_10 = arith.constant 0 : index
    %13 = vector.load %arg8[%c0_8, %c0_9, %c0_10] : memref<18x25x128xbf16, #tpu.memory_space<vmem>>, vector<18x25x128xbf16>
    tpu.vector_store %arg8[%c0_8, %c0_9, %c0_10], %12 {strides = array<i32>} : memref<18x25x128xbf16, #tpu.memory_space<vmem>>, vector<18x25x128xbf16>,
    %14 = arith.truncf %11 : vector<16x16x128xf32> to vector<16x16x128xbf16>
    %c1 = arith.constant 1 : index
    %c8 = arith.constant 8 : index
    %c0_11 = arith.constant 0 : index
    %15 = vector.load %arg8[%c1, %c8, %c0_11] : memref<18x25x128xbf16, #tpu.memory_space<vmem>>, vector<16x16x128xbf16>
    tpu.vector_store %arg8[%c1, %c8, %c0_11], %14 {strides = array<i32>} : memref<18x25x128xbf16, #tpu.memory_space<vmem>>, vector<16x16x128xbf16>,
    %c0_12 = arith.constant 0 : index
    %c0_13 = arith.constant 0 : index
    %c0_14 = arith.constant 0 : index
    %16 = vector.load %arg8[%c0_12, %c0_13, %c0_14] : memref<18x25x128xbf16, #tpu.memory_space<vmem>>, vector<18x25x128xbf16>
    %cst_15 = arith.constant 0.000000e+00 : f32
    %17 = vector.broadcast %cst_15 : f32 to vector<256x128xf32>
    %18 = vector.extract_strided_slice %16 {offsets = [0, 7, 0], sizes = [16, 16, 128], strides = [1, 1, 1]} : vector<18x25x128xbf16> to vector<16x16x128xbf16>
    %19 = vector.shape_cast %18 : vector<16x16x128xbf16> to vector<256x128xbf16>
    %c0_16 = arith.constant 0 : index
    %c0_17 = arith.constant 0 : index
    %c0_18 = arith.constant 0 : index
    %20 = vector.load %arg4[%c0_16, %c0_17, %c0_18] : memref<9x128x128xbf16, #tpu.memory_space<vmem>>, vector<1x128x128xbf16>
    %21 = vector.shape_cast %20 : vector<1x128x128xbf16> to vector<128x128xbf16>
    %cst_19 = arith.constant dense<0.000000e+00> : vector<256x128xf32>
    %22 = tpu.matmul %19, %21, %cst_19 {dimension_numbers = #tpu.dot_dimension_numbers<[1], [0], [0], [1], [0, 0, 1, 1], [], []>} : vector<256x128xbf16>, vector<128x128xbf16>, vector<256x128xf32> -> vector<256x128xf32>
    %23 = arith.addf %17, %22 : vector<256x128xf32>
    %24 = vector.extract_strided_slice %16 {offsets = [0, 8, 0], sizes = [16, 16, 128], strides = [1, 1, 1]} : vector<18x25x128xbf16> to vector<16x16x128xbf16>
    %25 = vector.shape_cast %24 : vector<16x16x128xbf16> to vector<256x128xbf16>
    %c1_20 = arith.constant 1 : index
    %c0_21 = arith.constant 0 : index
    %c0_22 = arith.constant 0 : index
    %26 = vector.load %arg4[%c1_20, %c0_21, %c0_22] : memref<9x128x128xbf16, #tpu.memory_space<vmem>>, vector<1x128x128xbf16>
    %27 = vector.shape_cast %26 : vector<1x128x128xbf16> to vector<128x128xbf16>
    %cst_23 = arith.constant dense<0.000000e+00> : vector<256x128xf32>
    %28 = tpu.matmul %25, %27, %cst_23 {dimension_numbers = #tpu.dot_dimension_numbers<[1], [0], [0], [1], [0, 0, 1, 1], [], []>} : vector<256x128xbf16>, vector<128x128xbf16>, vector<256x128xf32> -> vector<256x128xf32>
    %29 = arith.addf %23, %28 : vector<256x128xf32>
    %30 = vector.extract_strided_slice %16 {offsets = [0, 9, 0], sizes = [16, 16, 128], strides = [1, 1, 1]} : vector<18x25x128xbf16> to vector<16x16x128xbf16>
    %31 = vector.shape_cast %30 : vector<16x16x128xbf16> to vector<256x128xbf16>
    %c2 = arith.constant 2 : index
    %c0_24 = arith.constant 0 : index
    %c0_25 = arith.constant 0 : index
    %32 = vector.load %arg4[%c2, %c0_24, %c0_25] : memref<9x128x128xbf16, #tpu.memory_space<vmem>>, vector<1x128x128xbf16>
    %33 = vector.shape_cast %32 : vector<1x128x128xbf16> to vector<128x128xbf16>
    %cst_26 = arith.constant dense<0.000000e+00> : vector<256x128xf32>
    %34 = tpu.matmul %31, %33, %cst_26 {dimension_numbers = #tpu.dot_dimension_numbers<[1], [0], [0], [1], [0, 0, 1, 1], [], []>} : vector<256x128xbf16>, vector<128x128xbf16>, vector<256x128xf32> -> vector<256x128xf32>
    %35 = arith.addf %29, %34 : vector<256x128xf32>
    %36 = vector.extract_strided_slice %16 {offsets = [1, 7, 0], sizes = [16, 16, 128], strides = [1, 1, 1]} : vector<18x25x128xbf16> to vector<16x16x128xbf16>
    %37 = vector.shape_cast %36 : vector<16x16x128xbf16> to vector<256x128xbf16>
    %c3 = arith.constant 3 : index
    %c0_27 = arith.constant 0 : index
    %c0_28 = arith.constant 0 : index
    %38 = vector.load %arg4[%c3, %c0_27, %c0_28] : memref<9x128x128xbf16, #tpu.memory_space<vmem>>, vector<1x128x128xbf16>
    %39 = vector.shape_cast %38 : vector<1x128x128xbf16> to vector<128x128xbf16>
    %cst_29 = arith.constant dense<0.000000e+00> : vector<256x128xf32>
    %40 = tpu.matmul %37, %39, %cst_29 {dimension_numbers = #tpu.dot_dimension_numbers<[1], [0], [0], [1], [0, 0, 1, 1], [], []>} : vector<256x128xbf16>, vector<128x128xbf16>, vector<256x128xf32> -> vector<256x128xf32>
    %41 = arith.addf %35, %40 : vector<256x128xf32>
    %42 = vector.extract_strided_slice %16 {offsets = [1, 8, 0], sizes = [16, 16, 128], strides = [1, 1, 1]} : vector<18x25x128xbf16> to vector<16x16x128xbf16>
    %43 = vector.shape_cast %42 : vector<16x16x128xbf16> to vector<256x128xbf16>
    %c4 = arith.constant 4 : index
    %c0_30 = arith.constant 0 : index
    %c0_31 = arith.constant 0 : index
    %44 = vector.load %arg4[%c4, %c0_30, %c0_31] : memref<9x128x128xbf16, #tpu.memory_space<vmem>>, vector<1x128x128xbf16>
    %45 = vector.shape_cast %44 : vector<1x128x128xbf16> to vector<128x128xbf16>
    %cst_32 = arith.constant dense<0.000000e+00> : vector<256x128xf32>
    %46 = tpu.matmul %43, %45, %cst_32 {dimension_numbers = #tpu.dot_dimension_numbers<[1], [0], [0], [1], [0, 0, 1, 1], [], []>} : vector<256x128xbf16>, vector<128x128xbf16>, vector<256x128xf32> -> vector<256x128xf32>
    %47 = arith.addf %41, %46 : vector<256x128xf32>
    %48 = vector.extract_strided_slice %16 {offsets = [1, 9, 0], sizes = [16, 16, 128], strides = [1, 1, 1]} : vector<18x25x128xbf16> to vector<16x16x128xbf16>
    %49 = vector.shape_cast %48 : vector<16x16x128xbf16> to vector<256x128xbf16>
    %c5 = arith.constant 5 : index
    %c0_33 = arith.constant 0 : index
    %c0_34 = arith.constant 0 : index
    %50 = vector.load %arg4[%c5, %c0_33, %c0_34] : memref<9x128x128xbf16, #tpu.memory_space<vmem>>, vector<1x128x128xbf16>
    %51 = vector.shape_cast %50 : vector<1x128x128xbf16> to vector<128x128xbf16>
    %cst_35 = arith.constant dense<0.000000e+00> : vector<256x128xf32>
    %52 = tpu.matmul %49, %51, %cst_35 {dimension_numbers = #tpu.dot_dimension_numbers<[1], [0], [0], [1], [0, 0, 1, 1], [], []>} : vector<256x128xbf16>, vector<128x128xbf16>, vector<256x128xf32> -> vector<256x128xf32>
    %53 = arith.addf %47, %52 : vector<256x128xf32>
    %54 = vector.extract_strided_slice %16 {offsets = [2, 7, 0], sizes = [16, 16, 128], strides = [1, 1, 1]} : vector<18x25x128xbf16> to vector<16x16x128xbf16>
    %55 = vector.shape_cast %54 : vector<16x16x128xbf16> to vector<256x128xbf16>
    %c6 = arith.constant 6 : index
    %c0_36 = arith.constant 0 : index
    %c0_37 = arith.constant 0 : index
    %56 = vector.load %arg4[%c6, %c0_36, %c0_37] : memref<9x128x128xbf16, #tpu.memory_space<vmem>>, vector<1x128x128xbf16>
    %57 = vector.shape_cast %56 : vector<1x128x128xbf16> to vector<128x128xbf16>
    %cst_38 = arith.constant dense<0.000000e+00> : vector<256x128xf32>
    %58 = tpu.matmul %55, %57, %cst_38 {dimension_numbers = #tpu.dot_dimension_numbers<[1], [0], [0], [1], [0, 0, 1, 1], [], []>} : vector<256x128xbf16>, vector<128x128xbf16>, vector<256x128xf32> -> vector<256x128xf32>
    %59 = arith.addf %53, %58 : vector<256x128xf32>
    %60 = vector.extract_strided_slice %16 {offsets = [2, 8, 0], sizes = [16, 16, 128], strides = [1, 1, 1]} : vector<18x25x128xbf16> to vector<16x16x128xbf16>
    %61 = vector.shape_cast %60 : vector<16x16x128xbf16> to vector<256x128xbf16>
    %c7 = arith.constant 7 : index
    %c0_39 = arith.constant 0 : index
    %c0_40 = arith.constant 0 : index
    %62 = vector.load %arg4[%c7, %c0_39, %c0_40] : memref<9x128x128xbf16, #tpu.memory_space<vmem>>, vector<1x128x128xbf16>
    %63 = vector.shape_cast %62 : vector<1x128x128xbf16> to vector<128x128xbf16>
    %cst_41 = arith.constant dense<0.000000e+00> : vector<256x128xf32>
    %64 = tpu.matmul %61, %63, %cst_41 {dimension_numbers = #tpu.dot_dimension_numbers<[1], [0], [0], [1], [0, 0, 1, 1], [], []>} : vector<256x128xbf16>, vector<128x128xbf16>, vector<256x128xf32> -> vector<256x128xf32>
    %65 = arith.addf %59, %64 : vector<256x128xf32>
    %66 = vector.extract_strided_slice %16 {offsets = [2, 9, 0], sizes = [16, 16, 128], strides = [1, 1, 1]} : vector<18x25x128xbf16> to vector<16x16x128xbf16>
    %67 = vector.shape_cast %66 : vector<16x16x128xbf16> to vector<256x128xbf16>
    %c8_42 = arith.constant 8 : index
    %c0_43 = arith.constant 0 : index
    %c0_44 = arith.constant 0 : index
    %68 = vector.load %arg4[%c8_42, %c0_43, %c0_44] : memref<9x128x128xbf16, #tpu.memory_space<vmem>>, vector<1x128x128xbf16>
    %69 = vector.shape_cast %68 : vector<1x128x128xbf16> to vector<128x128xbf16>
    %cst_45 = arith.constant dense<0.000000e+00> : vector<256x128xf32>
    %70 = tpu.matmul %67, %69, %cst_45 {dimension_numbers = #tpu.dot_dimension_numbers<[1], [0], [0], [1], [0, 0, 1, 1], [], []>} : vector<256x128xbf16>, vector<128x128xbf16>, vector<256x128xf32> -> vector<256x128xf32>
    %71 = arith.addf %65, %70 : vector<256x128xf32>
    %72 = vector.shape_cast %71 : vector<256x128xf32> to vector<16x16x128xf32>
    %c0_46 = arith.constant 0 : index
    %c0_47 = arith.constant 0 : index
    %c0_48 = arith.constant 0 : index
    %c0_49 = arith.constant 0 : index
    %73 = vector.load %arg5[%c0_46, %c0_47, %c0_48, %c0_49] : memref<1x16x16x128xf32, #tpu.memory_space<vmem>>, vector<1x16x16x128xf32>
    %74 = vector.shape_cast %73 : vector<1x16x16x128xf32> to vector<16x16x128xf32>
    %75 = vector.shape_cast %72 : vector<16x16x128xf32> to vector<1x16x16x128xf32>
    tpu.vector_store %arg5[%c0_46, %c0_47, %c0_48, %c0_49], %75 {strides = array<i32>} : memref<1x16x16x128xf32, #tpu.memory_space<vmem>>, vector<1x16x16x128xf32>,
    %cst_50 = arith.constant dense<0.000000e+00> : vector<128xf32>
    %76 = vector.multi_reduction <add>, %71, %cst_50 [0] : vector<256x128xf32> to vector<128xf32>
    %77 = vector.shape_cast %76 : vector<128xf32> to vector<1x128xf32>
    %c0_51 = arith.constant 0 : index
    %c0_52 = arith.constant 0 : index
    %c0_53 = arith.constant 0 : index
    %78 = vector.load %arg6[%c0_51, %c0_52, %c0_53] : memref<1x1x128xf32, #tpu.memory_space<vmem>>, vector<1x1x128xf32>
    %79 = vector.shape_cast %78 : vector<1x1x128xf32> to vector<1x128xf32>
    %80 = vector.shape_cast %77 : vector<1x128xf32> to vector<1x1x128xf32>
    tpu.vector_store %arg6[%c0_51, %c0_52, %c0_53], %80 {strides = array<i32>} : memref<1x1x128xf32, #tpu.memory_space<vmem>>, vector<1x1x128xf32>,
    %81 = arith.mulf %71, %71 : vector<256x128xf32>
    %cst_54 = arith.constant dense<0.000000e+00> : vector<128xf32>
    %82 = vector.multi_reduction <add>, %81, %cst_54 [0] : vector<256x128xf32> to vector<128xf32>
    %83 = vector.shape_cast %82 : vector<128xf32> to vector<1x128xf32>
    %c0_55 = arith.constant 0 : index
    %c0_56 = arith.constant 0 : index
    %c0_57 = arith.constant 0 : index
    %84 = vector.load %arg7[%c0_55, %c0_56, %c0_57] : memref<1x1x128xf32, #tpu.memory_space<vmem>>, vector<1x1x128xf32>
    %85 = vector.shape_cast %84 : vector<1x1x128xf32> to vector<1x128xf32>
    %86 = vector.shape_cast %83 : vector<1x128xf32> to vector<1x1x128xf32>
    tpu.vector_store %arg7[%c0_55, %c0_56, %c0_57], %86 {strides = array<i32>} : memref<1x1x128xf32, #tpu.memory_space<vmem>>, vector<1x1x128xf32>,
    return
  }
  func.func @transform_0(%arg0: i32) -> (i32, i32, i32, i32) {
    %c0_i32 = arith.constant 0 : i32
    %c0_i32_0 = arith.constant 0 : i32
    %c0_i32_1 = arith.constant 0 : i32
    %c0_i32_2 = arith.constant 0 : i32
    return %arg0, %c0_i32, %c0_i32_0, %c0_i32_1 : i32, i32, i32, i32
  }
  func.func @transform_1(%arg0: i32) -> (i32, i32) {
    %c0_i32 = arith.constant 0 : i32
    %c0_i32_0 = arith.constant 0 : i32
    %c0_i32_1 = arith.constant 0 : i32
    return %c0_i32, %c0_i32_0 : i32, i32
  }
  func.func @transform_2(%arg0: i32) -> (i32, i32) {
    %c0_i32 = arith.constant 0 : i32
    %c0_i32_0 = arith.constant 0 : i32
    %c0_i32_1 = arith.constant 0 : i32
    return %c0_i32, %c0_i32_0 : i32, i32
  }
  func.func @transform_3(%arg0: i32) -> (i32, i32, i32) {
    %c0_i32 = arith.constant 0 : i32
    %c0_i32_0 = arith.constant 0 : i32
    %c0_i32_1 = arith.constant 0 : i32
    %c0_i32_2 = arith.constant 0 : i32
    return %c0_i32, %c0_i32_0, %c0_i32_1 : i32, i32, i32
  }
  func.func @transform_4(%arg0: i32) -> (i32, i32, i32, i32) {
    %c0_i32 = arith.constant 0 : i32
    %c0_i32_0 = arith.constant 0 : i32
    %c0_i32_1 = arith.constant 0 : i32
    %c0_i32_2 = arith.constant 0 : i32
    return %arg0, %c0_i32, %c0_i32_0, %c0_i32_1 : i32, i32, i32, i32
  }
  func.func @transform_5(%arg0: i32) -> (i32, i32, i32) {
    %c0_i32 = arith.constant 0 : i32
    %c0_i32_0 = arith.constant 0 : i32
    %c0_i32_1 = arith.constant 0 : i32
    return %arg0, %c0_i32, %c0_i32_0 : i32, i32, i32
  }
  func.func @transform_6(%arg0: i32) -> (i32, i32, i32) {
    %c0_i32 = arith.constant 0 : i32
    %c0_i32_0 = arith.constant 0 : i32
    %c0_i32_1 = arith.constant 0 : i32
    return %arg0, %c0_i32, %c0_i32_0 : i32, i32, i32
  }
}

module attributes {stable_mosaic.version = 11 : i64} {
  func.func @_bn_add_proj_relu_kernel(%arg0: i32, %arg1: memref<1x16x16x128xf32, #tpu.memory_space<vmem>>, %arg2: memref<1x128xf32, #tpu.memory_space<vmem>>, %arg3: memref<1x128xf32, #tpu.memory_space<vmem>>, %arg4: memref<1x16x16x4xf32, #tpu.memory_space<vmem>>, %arg5: memref<4x128xbf16, #tpu.memory_space<vmem>>, %arg6: memref<1x16x16x128xf32, #tpu.memory_space<vmem>>) attributes {dimension_semantics = [#tpu.dimension_semantics<parallel>], iteration_bounds = array<i64: 2>, scalar_prefetch = 0 : i64, scratch_operands = 0 : i64, tpu.core_type = #tpu.core_type<tc>, window_params = [{transform_indices = @transform_0, window_bounds = array<i64: 1, 16, 16, 128>}, {pipeline_mode = #tpu.pipeline_mode<synchronous>, transform_indices = @transform_1, window_bounds = array<i64: 1, 128>}, {pipeline_mode = #tpu.pipeline_mode<synchronous>, transform_indices = @transform_2, window_bounds = array<i64: 1, 128>}, {transform_indices = @transform_3, window_bounds = array<i64: 1, 16, 16, 4>}, {pipeline_mode = #tpu.pipeline_mode<synchronous>, transform_indices = @transform_4, window_bounds = array<i64: 4, 128>}, {transform_indices = @transform_5, window_bounds = array<i64: 1, 16, 16, 128>}]} {
    %c0 = arith.constant 0 : index
    %c0_0 = arith.constant 0 : index
    %c0_1 = arith.constant 0 : index
    %c0_2 = arith.constant 0 : index
    %0 = vector.load %arg1[%c0, %c0_0, %c0_1, %c0_2] : memref<1x16x16x128xf32, #tpu.memory_space<vmem>>, vector<1x16x16x128xf32>
    %1 = vector.shape_cast %0 : vector<1x16x16x128xf32> to vector<16x16x128xf32>
    %c0_3 = arith.constant 0 : index
    %c0_4 = arith.constant 0 : index
    %2 = vector.load %arg2[%c0_3, %c0_4] : memref<1x128xf32, #tpu.memory_space<vmem>>, vector<1x128xf32>
    %3 = vector.shape_cast %2 : vector<1x128xf32> to vector<1x1x128xf32>
    %4 = vector.broadcast %3 : vector<1x1x128xf32> to vector<16x16x128xf32>
    %5 = arith.mulf %1, %4 : vector<16x16x128xf32>
    %c0_5 = arith.constant 0 : index
    %c0_6 = arith.constant 0 : index
    %6 = vector.load %arg3[%c0_5, %c0_6] : memref<1x128xf32, #tpu.memory_space<vmem>>, vector<1x128xf32>
    %7 = vector.shape_cast %6 : vector<1x128xf32> to vector<1x1x128xf32>
    %8 = vector.broadcast %7 : vector<1x1x128xf32> to vector<16x16x128xf32>
    %9 = arith.addf %5, %8 : vector<16x16x128xf32>
    %c0_7 = arith.constant 0 : index
    %c0_8 = arith.constant 0 : index
    %c0_9 = arith.constant 0 : index
    %c0_10 = arith.constant 0 : index
    %10 = vector.load %arg4[%c0_7, %c0_8, %c0_9, %c0_10] : memref<1x16x16x4xf32, #tpu.memory_space<vmem>>, vector<1x16x16x4xf32>
    %11 = vector.shape_cast %10 : vector<1x16x16x4xf32> to vector<16x16x4xf32>
    %12 = arith.truncf %11 : vector<16x16x4xf32> to vector<16x16x4xbf16>
    %13 = vector.shape_cast %12 : vector<16x16x4xbf16> to vector<256x4xbf16>
    %c0_11 = arith.constant 0 : index
    %c0_12 = arith.constant 0 : index
    %14 = vector.load %arg5[%c0_11, %c0_12] : memref<4x128xbf16, #tpu.memory_space<vmem>>, vector<4x128xbf16>
    %cst = arith.constant dense<0.000000e+00> : vector<256x128xf32>
    %15 = tpu.matmul %13, %14, %cst {dimension_numbers = #tpu.dot_dimension_numbers<[1], [0], [0], [1], [0, 0, 1, 1], [], []>} : vector<256x4xbf16>, vector<4x128xbf16>, vector<256x128xf32> -> vector<256x128xf32>
    %16 = vector.shape_cast %15 : vector<256x128xf32> to vector<16x16x128xf32>
    %17 = arith.addf %9, %16 : vector<16x16x128xf32>
    %cst_13 = arith.constant 0.000000e+00 : f32
    %18 = vector.broadcast %cst_13 : f32 to vector<16x16x128xf32>
    %19 = arith.maximumf %17, %18 : vector<16x16x128xf32>
    %c0_14 = arith.constant 0 : index
    %c0_15 = arith.constant 0 : index
    %c0_16 = arith.constant 0 : index
    %c0_17 = arith.constant 0 : index
    %20 = vector.load %arg6[%c0_14, %c0_15, %c0_16, %c0_17] : memref<1x16x16x128xf32, #tpu.memory_space<vmem>>, vector<1x16x16x128xf32>
    %21 = vector.shape_cast %20 : vector<1x16x16x128xf32> to vector<16x16x128xf32>
    %22 = vector.shape_cast %19 : vector<16x16x128xf32> to vector<1x16x16x128xf32>
    tpu.vector_store %arg6[%c0_14, %c0_15, %c0_16, %c0_17], %22 {strides = array<i32>} : memref<1x16x16x128xf32, #tpu.memory_space<vmem>>, vector<1x16x16x128xf32>,
    return
  }
  func.func @transform_0(%arg0: i32) -> (i32, i32, i32, i32) {
    %c0_i32 = arith.constant 0 : i32
    %c0_i32_0 = arith.constant 0 : i32
    %c0_i32_1 = arith.constant 0 : i32
    %c0_i32_2 = arith.constant 0 : i32
    return %arg0, %c0_i32, %c0_i32_0, %c0_i32_1 : i32, i32, i32, i32
  }
  func.func @transform_1(%arg0: i32) -> (i32, i32) {
    %c0_i32 = arith.constant 0 : i32
    %c0_i32_0 = arith.constant 0 : i32
    %c0_i32_1 = arith.constant 0 : i32
    return %c0_i32, %c0_i32_0 : i32, i32
  }
  func.func @transform_2(%arg0: i32) -> (i32, i32) {
    %c0_i32 = arith.constant 0 : i32
    %c0_i32_0 = arith.constant 0 : i32
    %c0_i32_1 = arith.constant 0 : i32
    return %c0_i32, %c0_i32_0 : i32, i32
  }
  func.func @transform_3(%arg0: i32) -> (i32, i32, i32, i32) {
    %c0_i32 = arith.constant 0 : i32
    %c0_i32_0 = arith.constant 0 : i32
    %c0_i32_1 = arith.constant 0 : i32
    %c0_i32_2 = arith.constant 0 : i32
    return %arg0, %c0_i32, %c0_i32_0, %c0_i32_1 : i32, i32, i32, i32
  }
  func.func @transform_4(%arg0: i32) -> (i32, i32) {
    %c0_i32 = arith.constant 0 : i32
    %c0_i32_0 = arith.constant 0 : i32
    %c0_i32_1 = arith.constant 0 : i32
    return %c0_i32, %c0_i32_0 : i32, i32
  }
  func.func @transform_5(%arg0: i32) -> (i32, i32, i32, i32) {
    %c0_i32 = arith.constant 0 : i32
    %c0_i32_0 = arith.constant 0 : i32
    %c0_i32_1 = arith.constant 0 : i32
    %c0_i32_2 = arith.constant 0 : i32
    return %arg0, %c0_i32, %c0_i32_0, %c0_i32_1 : i32, i32, i32, i32
  }
}

</mosaic_0001>

<llo_original>
// kernel: _forward.5
$region0: #{_forward.5}
  #allocation0 [shape = 'u32[]', space=smem, size = 0x4, offset = 0x4, fixed_abs, tag = 'smem constant byte address 0x4 - core index']
  #allocation1 [shape = 'u32[144,128]{1,0:T(1,128)}', space=vmem, size = 0x12000, scoped, tag = 'internal scratch']
  %s0 = inlined_call_operand.vmem [shape: f32[2,16,16,128], index: 0, kind: input, shape index: {}]
  %s1 = inlined_call_operand.vmem [shape: f32[1,128], index: 1, kind: input, shape index: {}]
  %s2 = inlined_call_operand.vmem [shape: f32[1,128], index: 2, kind: input, shape index: {}]
  %s3 = inlined_call_operand.vmem [shape: f32[2,16,16,4], index: 3, kind: input, shape index: {}]
  %s4 = inlined_call_operand.vmem [shape: bf16[4,128], index: 4, kind: input, shape index: {}]
  %s5 = inlined_call_operand.vmem [shape: f32[2,16,16,128], index: 5, kind: output, shape index: {}]
  %s6 = sld [smem:[#allocation0]]
  $region53: #{_forward.5} parent=0
    _
  %s8 = ssub.s32 1, %s6
  %s9 = scalar_select 0, %s8, %s6
  loop: start=0, step=1, limit=4
  $region2: #{_forward.5} parent=0 // loop_pre_header
    _
  $region3: #{_forward.5} parent=0 // loop_header
    %s11 = sphi 0, %s15
    %p12 = scmp.ge.s32.totalorder %s11, 4
    %s21 = sphi 0, %s23
    %s24 = sphi 0, %s21
    %s25 = sphi 0, %s24
    %s41 = sphi 0, %s25
    %s45 = sphi 0, %s45
    %s47 = sphi 0, %s45
    %s48 = sphi 0, %s47
    %s62 = sphi 0, %s48
    %s66 = sphi 0, %s66
    %s68 = sphi 0, %s66
    %s69 = sphi 0, %s68
    %s83 = sphi 0, %s69
    %s89 = sphi 0, %s91
    %s92 = sphi 0, %s89
    %s93 = sphi 0, %s92
    %s109 = sphi 0, %s93
    %s113 = sphi 0, %s113
    %s115 = sphi 0, %s113
    %s116 = sphi 0, %s115
    %s130 = sphi 0, %s116
    %s136 = sphi 0, %s138
    %s139 = sphi 0, %s136
    %s140 = sphi 0, %s139
    %s156 = sphi 0, %s140
  $region4: #{_forward.5} parent=0 // loop_header_branch
    %14 = sbr.rel (%p12) target = $region8
  $region5: #{_forward.5} parent=0 // loop_body
    %s16 = ssub.s32 %s11, 1
    %s17 = ssub.s32 %s11, 2
    %s18 = sadd.s32 %s11, 1
    %s19 = ssub.s32 %s11, %s18
    %p20 = scmp.eq.s32.totalorder %s19, 0
    %s22 = sadd.s32 %s21, 1
    %s23 = scalar_select %p20, %s21, %s22
    %p26 = pneg %p20
    %p27 = scmp.eq.s32.totalorder %s11, 1
    %p28 = por %p26, %p27
    %p29 = scmp.ne.s32.totalorder %s21, %s24
    %p30 = scmp.eq.s32.totalorder %s11, 0
    %p31 = por %p29, %p30
    %p32 = scmp.ne.s32.totalorder %s21, %s24
    %p33 = scmp.eq.s32.totalorder %s16, 1
    %p34 = por %p32, %p33
    %p35 = scmp.ne.s32.totalorder %s24, %s25
    %p36 = scmp.eq.s32.totalorder %s16, 0
    %p37 = por %p35, %p36
    %p38 = scmp.ne.s32.totalorder %s24, %s25
    %p39 = scmp.eq.s32.totalorder %s17, 1
    %p40 = por %p38, %p39
    %p42 = scmp.ne.s32.totalorder %s25, %s41
    %p43 = scmp.eq.s32.totalorder %s17, 0
    %p44 = por %p42, %p43
    %s46 = sadd.s32 %s45, 1
    %p49 = scmp.eq.s32.totalorder %s11, 1
    %p50 = scmp.ne.s32.totalorder %s45, %s47
    %p51 = scmp.eq.s32.totalorder %s11, 0
    %p52 = por %p50, %p51
    %p53 = scmp.ne.s32.totalorder %s45, %s47
    %p54 = scmp.eq.s32.totalorder %s16, 1
    %p55 = por %p53, %p54
    %p56 = scmp.ne.s32.totalorder %s47, %s48
    %p57 = scmp.eq.s32.totalorder %s16, 0
    %p58 = por %p56, %p57
    %p59 = scmp.ne.s32.totalorder %s47, %s48
    %p60 = scmp.eq.s32.totalorder %s17, 1
    %p61 = por %p59, %p60
    %p63 = scmp.ne.s32.totalorder %s48, %s62
    %p64 = scmp.eq.s32.totalorder %s17, 0
    %p65 = por %p63, %p64
    %s67 = sadd.s32 %s66, 1
    %p70 = scmp.eq.s32.totalorder %s11, 1
    %p71 = scmp.ne.s32.totalorder %s66, %s68
    %p72 = scmp.eq.s32.totalorder %s11, 0
    %p73 = por %p71, %p72
    %p74 = scmp.ne.s32.totalorder %s66, %s68
    %p75 = scmp.eq.s32.totalorder %s16, 1
    %p76 = por %p74, %p75
    %p77 = scmp.ne.s32.totalorder %s68, %s69
    %p78 = scmp.eq.s32.totalorder %s16, 0
    %p79 = por %p77, %p78
    %p80 = scmp.ne.s32.totalorder %s68, %s69
    %p81 = scmp.eq.s32.totalorder %s17, 1
    %p82 = por %p80, %p81
    %p84 = scmp.ne.s32.totalorder %s69, %s83
    %p85 = scmp.eq.s32.totalorder %s17, 0
    %p86 = por %p84, %p85
    %s87 = ssub.s32 %s11, %s18
    %p88 = scmp.eq.s32.totalorder %s87, 0
    %s90 = sadd.s32 %s89, 1
    %s91 = scalar_select %p88, %s89, %s90
    %p94 = pneg %p88
    %p95 = scmp.eq.s32.totalorder %s11, 1
    %p96 = por %p94, %p95
    %p97 = scmp.ne.s32.totalorder %s89, %s92
    %p98 = scmp.eq.s32.totalorder %s11, 0
    %p99 = por %p97, %p98
    %p100 = scmp.ne.s32.totalorder %s89, %s92
    %p101 = scmp.eq.s32.totalorder %s16, 1
    %p102 = por %p100, %p101
    %p103 = scmp.ne.s32.totalorder %s92, %s93
    %p104 = scmp.eq.s32.totalorder %s16, 0
    %p105 = por %p103, %p104
    %p106 = scmp.ne.s32.totalorder %s92, %s93
    %p107 = scmp.eq.s32.totalorder %s17, 1
    %p108 = por %p106, %p107
    %p110 = scmp.ne.s32.totalorder %s93, %s109
    %p111 = scmp.eq.s32.totalorder %s17, 0
    %p112 = por %p110, %p111
    %s114 = sadd.s32 %s113, 1
    %p117 = scmp.eq.s32.totalorder %s11, 1
    %p118 = scmp.ne.s32.totalorder %s113, %s115
    %p119 = scmp.eq.s32.totalorder %s11, 0
    %p120 = por %p118, %p119
    %p121 = scmp.ne.s32.totalorder %s113, %s115
    %p122 = scmp.eq.s32.totalorder %s16, 1
    %p123 = por %p121, %p122
    %p124 = scmp.ne.s32.totalorder %s115, %s116
    %p125 = scmp.eq.s32.totalorder %s16, 0
    %p126 = por %p124, %p125
    %p127 = scmp.ne.s32.totalorder %s115, %s116
    %p128 = scmp.eq.s32.totalorder %s17, 1
    %p129 = por %p127, %p128
    %p131 = scmp.ne.s32.totalorder %s116, %s130
    %p132 = scmp.eq.s32.totalorder %s17, 0
    %p133 = por %p131, %p132
    %s134 = ssub.s32 %s11, %s18
    %p135 = scmp.eq.s32.totalorder %s134, 0
    %s137 = sadd.s32 %s136, 1
    %s138 = scalar_select %p135, %s136, %s137
    %p141 = pneg %p135
    %p142 = scmp.eq.s32.totalorder %s11, 1
    %p143 = por %p141, %p142
    %p144 = scmp.ne.s32.totalorder %s136, %s139
    %p145 = scmp.eq.s32.totalorder %s11, 0
    %p146 = por %p144, %p145
    %p147 = scmp.ne.s32.totalorder %s136, %s139
    %p148 = scmp.eq.s32.totalorder %s16, 1
    %p149 = por %p147, %p148
    %p150 = scmp.ne.s32.totalorder %s139, %s140
    %p151 = scmp.eq.s32.totalorder %s16, 0
    %p152 = por %p150, %p151
    %p153 = scmp.ne.s32.totalorder %s139, %s140
    %p154 = scmp.eq.s32.totalorder %s17, 1
    %p155 = por %p153, %p154
    %p157 = scmp.ne.s32.totalorder %s140, %s156
    %p158 = scmp.eq.s32.totalorder %s17, 0
    %p159 = por %p157, %p158
    %p160 = scmp.le.s32.totalorder 1, %s11
    %p161 = scmp.lt.s32.totalorder %s11, 3
    %p162 = pnand %p160, %p161
    %p163 = pneg %p162
    // Predicated region
    $region9: #{_forward.5} parent=5 // pred_check
      _
    $region10: #{_forward.5} parent=5 // pred_check_branch
      %165 = sbr.rel (%p162) target = $region12
    $region11: #{_forward.5} parent=5 // pred_region
      %s166 = ssub.s32 %s11, 1
      // Predicated region
      $region13: #{_forward.5} parent=11 // pred_check
        %p167 = pneg %p58
      $region14: #{_forward.5} parent=11 // pred_check_branch
        %169 = sbr.rel (%p167) target = $region16
      $region15: #{_forward.5} parent=11 // pred_region
        _
      $region16: #{_forward.5} parent=11 // pred_fallthru
        _
      // Predicated region
      $region17: #{_forward.5} parent=11 // pred_check
        %p170 = pneg %p79
      $region18: #{_forward.5} parent=11 // pred_check_branch
        %172 = sbr.rel (%p170) target = $region20
      $region19: #{_forward.5} parent=11 // pred_region
        _
      $region20: #{_forward.5} parent=11 // pred_fallthru
        _
      // Predicated region
      $region21: #{_forward.5} parent=11 // pred_check
        %p173 = pneg %p126
      $region22: #{_forward.5} parent=11 // pred_check_branch
        %175 = sbr.rel (%p173) target = $region24
      $region23: #{_forward.5} parent=11 // pred_region
        _
      $region24: #{_forward.5} parent=11 // pred_fallthru
        _
    $region12: #{_forward.5} parent=5 // pred_fallthru
      _
    %p176 = scmp.lt.s32.totalorder %s11, 2
    // Predicated region
    $region25: #{_forward.5} parent=5 // pred_check
      %p177 = pneg %p176
    $region26: #{_forward.5} parent=5 // pred_check_branch
      %179 = sbr.rel (%p177) target = $region28
    $region27: #{_forward.5} parent=5 // pred_region
      // Predicated region
      $region29: #{_forward.5} parent=27 // pred_check
        %p180 = pneg %p31
      $region30: #{_forward.5} parent=27 // pred_check_branch
        %182 = sbr.rel (%p180) target = $region32
      $region31: #{_forward.5} parent=27 // pred_region
        %p183 = scmp.lt.s32.totalorder %s11, 1
        %s184 = scalar_select %p183, %s11, 1
        %s185 = smul.addr %s184, 32
        %s186 = smul.addr %s185, 8
        %s187 = scalar_lea.vmem %s0, %s186
      $region32: #{_forward.5} parent=27 // pred_fallthru
        _
      // Predicated region
      $region33: #{_forward.5} parent=27 // pred_check
        %p188 = pneg %p99
      $region34: #{_forward.5} parent=27 // pred_check_branch
        %190 = sbr.rel (%p188) target = $region36
      $region35: #{_forward.5} parent=27 // pred_region
        %p191 = scmp.lt.s32.totalorder %s11, 1
        %s192 = scalar_select %p191, %s11, 1
        %s193 = smul.addr %s192, 32
        %s194 = smul.addr %s193, 8
        %s195 = scalar_lea.vmem %s3, %s194
      $region36: #{_forward.5} parent=27 // pred_fallthru
        _
    $region28: #{_forward.5} parent=5 // pred_fallthru
      _
    %p196 = scmp.le.s32.totalorder 1, %s11
    %p197 = scmp.lt.s32.totalorder %s11, 3
    %p198 = pnand %p196, %p197
    %p199 = pneg %p198
    // Predicated region
    $region37: #{_forward.5} parent=5 // pred_check
      _
    $region38: #{_forward.5} parent=5 // pred_check_branch
      %201 = sbr.rel (%p198) target = $region40
    $region39: #{_forward.5} parent=5 // pred_region
      %s202 = ssub.s32 %s11, 1
      %p203 = scmp.lt.s32.totalorder %s16, 1
      %s204 = scalar_select %p203, %s16, 1
      %s205 = smul.addr %s204, 32
      %s206 = smul.addr %s205, 8
      %s207 = scalar_lea.vmem %s0, %s206
      %p208 = pneg %p37
      %p209 = pneg %p34
      %p210 = pneg %p58
      %p211 = pneg %p55
      %p212 = pneg %p79
      %p213 = pneg %p76
      %p214 = scmp.lt.s32.totalorder %s16, 1
      %s215 = scalar_select %p214, %s16, 1
      %s216 = smul.addr %s215, 32
      %s217 = smul.addr %s216, 8
      %s218 = scalar_lea.vmem %s3, %s217
      %p219 = pneg %p105
      %p220 = pneg %p102
      %p221 = pneg %p126
      %p222 = pneg %p123
      %p223 = pneg %p152
      %p224 = pneg %p149
      %p225 = scmp.lt.s32.totalorder %s16, 1
      %s226 = scalar_select %p225, %s16, 1
      %s227 = smul.addr %s226, 32
      %s228 = smul.addr %s227, 8
      %s229 = scalar_lea.vmem %s5, %s228
      %p230 = scmp.lt.s32.totalorder %s16, 1
      %s231 = scalar_select %p230, %s16, 1
      %s232 = smul.addr %s231, 32
      %s233 = smul.addr %s232, 8
      %s234 = scalar_lea.vmem %s0, %s233
      %p235 = scmp.lt.s32.totalorder %s16, 1
      %s236 = scalar_select %p235, %s16, 1
      %s237 = smul.addr %s236, 32
      %s238 = smul.addr %s237, 8
      %s239 = scalar_lea.vmem %s3, %s238
      %p240 = scmp.lt.s32.totalorder %s16, 1
      %s241 = scalar_select %p240, %s16, 1
      %s242 = smul.addr %s241, 32
      %s243 = smul.addr %s242, 8
      %s244 = scalar_lea.vmem %s5, %s243
      %v246 = vld [vmem:[%s234] sm:$0xff]
      %v247 = vld [vmem:[%s234 + $0x8] sm:$0xff]
      %v248 = vld [vmem:[%s234 + $0x10] sm:$0xff]
      %v249 = vld [vmem:[%s234 + $0x18] sm:$0xff]
      %v250 = vld [vmem:[%s234 + $0x20] sm:$0xff]
      %v251 = vld [vmem:[%s234 + $0x28] sm:$0xff]
      %v252 = vld [vmem:[%s234 + $0x30] sm:$0xff]
      %v253 = vld [vmem:[%s234 + $0x38] sm:$0xff]
      %v254 = vld [vmem:[%s234 + $0x40] sm:$0xff]
      %v255 = vld [vmem:[%s234 + $0x48] sm:$0xff]
      %v256 = vld [vmem:[%s234 + $0x50] sm:$0xff]
      %v257 = vld [vmem:[%s234 + $0x58] sm:$0xff]
      %v258 = vld [vmem:[%s234 + $0x60] sm:$0xff]
      %v259 = vld [vmem:[%s234 + $0x68] sm:$0xff]
      %v260 = vld [vmem:[%s234 + $0x70] sm:$0xff]
      %v261 = vld [vmem:[%s234 + $0x78] sm:$0xff]
      %v262 = vld [vmem:[%s234 + $0x80] sm:$0xff]
      %v263 = vld [vmem:[%s234 + $0x88] sm:$0xff]
      %v264 = vld [vmem:[%s234 + $0x90] sm:$0xff]
      %v265 = vld [vmem:[%s234 + $0x98] sm:$0xff]
      %v266 = vld [vmem:[%s234 + $0xa0] sm:$0xff]
      %v267 = vld [vmem:[%s234 + $0xa8] sm:$0xff]
      %v268 = vld [vmem:[%s234 + $0xb0] sm:$0xff]
      %v269 = vld [vmem:[%s234 + $0xb8] sm:$0xff]
      %v270 = vld [vmem:[%s234 + $0xc0] sm:$0xff]
      %v271 = vld [vmem:[%s234 + $0xc8] sm:$0xff]
      %v272 = vld [vmem:[%s234 + $0xd0] sm:$0xff]
      %v273 = vld [vmem:[%s234 + $0xd8] sm:$0xff]
      %v274 = vld [vmem:[%s234 + $0xe0] sm:$0xff]
      %v275 = vld [vmem:[%s234 + $0xe8] sm:$0xff]
      %v276 = vld [vmem:[%s234 + $0xf0] sm:$0xff]
      %v277 = vld [vmem:[%s234 + $0xf8] sm:$0xff]
      %v278 = vld [vmem:[%s1] sm:$0x1]
      %v280 = vlaneseq
      %v281 = vshrl.u32 %v280, 7
      %v282 = vsub.s32 0, %v281
      %v283 = vrot.slane %v278, %v282
      %v285 = vmul.f32 %v246, %v283
      %v286 = vmul.f32 %v247, %v283
      %v287 = vmul.f32 %v248, %v283
      %v288 = vmul.f32 %v249, %v283
      %v289 = vmul.f32 %v250, %v283
      %v290 = vmul.f32 %v251, %v283
      %v291 = vmul.f32 %v252, %v283
      %v292 = vmul.f32 %v253, %v283
      %v293 = vmul.f32 %v254, %v283
      %v294 = vmul.f32 %v255, %v283
      %v295 = vmul.f32 %v256, %v283
      %v296 = vmul.f32 %v257, %v283
      %v297 = vmul.f32 %v258, %v283
      %v298 = vmul.f32 %v259, %v283
      %v299 = vmul.f32 %v260, %v283
      %v300 = vmul.f32 %v261, %v283
      %v301 = vmul.f32 %v262, %v283
      %v302 = vmul.f32 %v263, %v283
      %v303 = vmul.f32 %v264, %v283
      %v304 = vmul.f32 %v265, %v283
      %v305 = vmul.f32 %v266, %v283
      %v306 = vmul.f32 %v267, %v283
      %v307 = vmul.f32 %v268, %v283
      %v308 = vmul.f32 %v269, %v283
      %v309 = vmul.f32 %v270, %v283
      %v310 = vmul.f32 %v271, %v283
      %v311 = vmul.f32 %v272, %v283
      %v312 = vmul.f32 %v273, %v283
      %v313 = vmul.f32 %v274, %v283
      %v314 = vmul.f32 %v275, %v283
      %v315 = vmul.f32 %v276, %v283
      %v316 = vmul.f32 %v277, %v283
      %v317 = vld [vmem:[%s2] sm:$0x1]
      %v319 = vlaneseq
      %v320 = vshrl.u32 %v319, 7
      %v321 = vsub.s32 0, %v320
      %v322 = vrot.slane %v317, %v321
      %v324 = vadd.f32 %v285, %v322
      %v325 = vadd.f32 %v286, %v322
      %v326 = vadd.f32 %v287, %v322
      %v327 = vadd.f32 %v288, %v322
      %v328 = vadd.f32 %v289, %v322
      %v329 = vadd.f32 %v290, %v322
      %v330 = vadd.f32 %v291, %v322
      %v331 = vadd.f32 %v292, %v322
      %v332 = vadd.f32 %v293, %v322
      %v333 = vadd.f32 %v294, %v322
      %v334 = vadd.f32 %v295, %v322
      %v335 = vadd.f32 %v296, %v322
      %v336 = vadd.f32 %v297, %v322
      %v337 = vadd.f32 %v298, %v322
      %v338 = vadd.f32 %v299, %v322
      %v339 = vadd.f32 %v300, %v322
      %v340 = vadd.f32 %v301, %v322
      %v341 = vadd.f32 %v302, %v322
      %v342 = vadd.f32 %v303, %v322
      %v343 = vadd.f32 %v304, %v322
      %v344 = vadd.f32 %v305, %v322
      %v345 = vadd.f32 %v306, %v322
      %v346 = vadd.f32 %v307, %v322
      %v347 = vadd.f32 %v308, %v322
      %v348 = vadd.f32 %v309, %v322
      %v349 = vadd.f32 %v310, %v322
      %v350 = vadd.f32 %v311, %v322
      %v351 = vadd.f32 %v312, %v322
      %v352 = vadd.f32 %v313, %v322
      %v353 = vadd.f32 %v314, %v322
      %v354 = vadd.f32 %v315, %v322
      %v355 = vadd.f32 %v316, %v322
      %v356 = vld [vmem:[%s239] sm:$0xff]
      %v357 = vld [vmem:[%s239 + $0x8] sm:$0xff]
      %v358 = vld [vmem:[%s239 + $0x10] sm:$0xff]
      %v359 = vld [vmem:[%s239 + $0x18] sm:$0xff]
      %v360 = vld [vmem:[%s239 + $0x20] sm:$0xff]
      %v361 = vld [vmem:[%s239 + $0x28] sm:$0xff]
      %v362 = vld [vmem:[%s239 + $0x30] sm:$0xff]
      %v363 = vld [vmem:[%s239 + $0x38] sm:$0xff]
      %v364 = vld [vmem:[%s239 + $0x40] sm:$0xff]
      %v365 = vld [vmem:[%s239 + $0x48] sm:$0xff]
      %v366 = vld [vmem:[%s239 + $0x50] sm:$0xff]
      %v367 = vld [vmem:[%s239 + $0x58] sm:$0xff]
      %v368 = vld [vmem:[%s239 + $0x60] sm:$0xff]
      %v369 = vld [vmem:[%s239 + $0x68] sm:$0xff]
      %v370 = vld [vmem:[%s239 + $0x70] sm:$0xff]
      %v371 = vld [vmem:[%s239 + $0x78] sm:$0xff]
      %v372 = vld [vmem:[%s239 + $0x80] sm:$0xff]
      %v373 = vld [vmem:[%s239 + $0x88] sm:$0xff]
      %v374 = vld [vmem:[%s239 + $0x90] sm:$0xff]
      %v375 = vld [vmem:[%s239 + $0x98] sm:$0xff]
      %v376 = vld [vmem:[%s239 + $0xa0] sm:$0xff]
      %v377 = vld [vmem:[%s239 + $0xa8] sm:$0xff]
      %v378 = vld [vmem:[%s239 + $0xb0] sm:$0xff]
      %v379 = vld [vmem:[%s239 + $0xb8] sm:$0xff]
      %v380 = vld [vmem:[%s239 + $0xc0] sm:$0xff]
      %v381 = vld [vmem:[%s239 + $0xc8] sm:$0xff]
      %v382 = vld [vmem:[%s239 + $0xd0] sm:$0xff]
      %v383 = vld [vmem:[%s239 + $0xd8] sm:$0xff]
      %v384 = vld [vmem:[%s239 + $0xe0] sm:$0xff]
      %v385 = vld [vmem:[%s239 + $0xe8] sm:$0xff]
      %v386 = vld [vmem:[%s239 + $0xf0] sm:$0xff]
      %v387 = vld [vmem:[%s239 + $0xf8] sm:$0xff]
      %v388 = vpack.c.bf16 %v357, %v356
      %v389 = vpack.c.bf16 %v359, %v358
      %v390 = vpack.c.bf16 %v361, %v360
      %v391 = vpack.c.bf16 %v363, %v362
      %v392 = vpack.c.bf16 %v365, %v364
      %v393 = vpack.c.bf16 %v367, %v366
      %v394 = vpack.c.bf16 %v369, %v368
      %v395 = vpack.c.bf16 %v371, %v370
      %v396 = vpack.c.bf16 %v373, %v372
      %v397 = vpack.c.bf16 %v375, %v374
      %v398 = vpack.c.bf16 %v377, %v376
      %v399 = vpack.c.bf16 %v379, %v378
      %v400 = vpack.c.bf16 %v381, %v380
      %v401 = vpack.c.bf16 %v383, %v382
      %v402 = vpack.c.bf16 %v385, %v384
      %v403 = vpack.c.bf16 %v387, %v386
      %v404 = vld [vmem:[%s4] sm:$0x3]
      %vm405 = vcmask 31744
      %v407 = vsel %vm405, %v388, 0
      %v410 = vsel %vm405, %v389, 0
      %v413 = vsel %vm405, %v390, 0
      %v416 = vsel %vm405, %v391, 0
      %v419 = vsel %vm405, %v392, 0
      %v422 = vsel %vm405, %v393, 0
      %v425 = vsel %vm405, %v394, 0
      %v428 = vsel %vm405, %v395, 0
      %v431 = vsel %vm405, %v396, 0
      %v434 = vsel %vm405, %v397, 0
      %v437 = vsel %vm405, %v398, 0
      %v440 = vsel %vm405, %v399, 0
      %v443 = vsel %vm405, %v400, 0
      %v446 = vsel %vm405, %v401, 0
      %v449 = vsel %vm405, %v402, 0
      %v452 = vsel %vm405, %v403, 0
      %vm454 = vcmask 1041408
      %v456 = vsel %vm454, %v404, 0
      %458 = vmatprep.subr.bf16.mxu0 0
      %459 = vmatpush1.bf16.msra.mxu0 %v456
      %460 = vmatprep.subr.bf16.mxu0 0
      %461 = vmatpush1.bf16.msra.mxu0 0
      %462 = vmatprep.subr.bf16.mxu0 0
      %463 = vmatpush1.bf16.msra.mxu0 0
      %464 = vmatprep.subr.bf16.mxu0 0
      %465 = vmatpush1.bf16.msra.mxu0 0
      %466 = vmatprep.subr.bf16.mxu0 0
      %467 = vmatpush1.bf16.msra.mxu0 0
      %468 = vmatprep.subr.bf16.mxu0 0
      %469 = vmatpush1.bf16.msra.mxu0 0
      %470 = vmatprep.subr.bf16.mxu0 0
      %471 = vmatpush1.bf16.msra.mxu0 0
      %472 = vmatprep.subr.bf16.mxu0 0
      %473 = vmatpush1.bf16.msra.mxu0 0
      %474 = vmatprep.subr.bf16.mxu0 0
      %475 = vmatpush1.bf16.msra.mxu0 0
      %476 = vmatprep.subr.bf16.mxu0 0
      %477 = vmatpush1.bf16.msra.mxu0 0
      %478 = vmatprep.subr.bf16.mxu0 0
      %479 = vmatpush1.bf16.msra.mxu0 0
      %480 = vmatprep.subr.bf16.mxu0 0
      %481 = vmatpush1.bf16.msra.mxu0 0
      %482 = vmatprep.subr.bf16.mxu0 0
      %483 = vmatpush1.bf16.msra.mxu0 0
      %484 = vmatprep.subr.bf16.mxu0 0
      %485 = vmatpush1.bf16.msra.mxu0 0
      %486 = vmatprep.subr.bf16.mxu0 0
      %487 = vmatpush1.bf16.msra.mxu0 0
      %488 = vmatprep.subr.bf16.mxu0 0
      %489 = vmatpush1.bf16.msra.mxu0 0
      %490 = vmatprep.mubr.bf16.mxu0 0
      %491 = vmatmul.mubr.bf16.gmra.mrb[0].mxu0 %v407
      %v492 = vpop.f32.mrb[0].mxu0
      %v493 = vadd.f32 0.0, %v492
      %v494 = vpop.f32.mrb[0].mxu0
      %v495 = vpop.f32.mrb[0].mxu0
      %v496 = vadd.f32 0.0, %v495
      %v497 = vpop.f32.mrb[0].mxu0
      %498 = vmatprep.mubr.bf16.mxu0 0
      %499 = vmatmul.mubr.bf16.gmra.mrb[0].mxu0 %v410
      %v500 = vpop.f32.mrb[0].mxu0
      %v501 = vadd.f32 0.0, %v500
      %v502 = vpop.f32.mrb[0].mxu0
      %v503 = vpop.f32.mrb[0].mxu0
      %v504 = vadd.f32 0.0, %v503
      %v505 = vpop.f32.mrb[0].mxu0
      %506 = vmatprep.mubr.bf16.mxu0 0
      %507 = vmatmul.mubr.bf16.gmra.mrb[0].mxu0 %v413
      %v508 = vpop.f32.mrb[0].mxu0
      %v509 = vadd.f32 0.0, %v508
      %v510 = vpop.f32.mrb[0].mxu0
      %v511 = vpop.f32.mrb[0].mxu0
      %v512 = vadd.f32 0.0, %v511
      %v513 = vpop.f32.mrb[0].mxu0
      %514 = vmatprep.mubr.bf16.mxu0 0
      %515 = vmatmul.mubr.bf16.gmra.mrb[0].mxu0 %v416
      %v516 = vpop.f32.mrb[0].mxu0
      %v517 = vadd.f32 0.0, %v516
      %v518 = vpop.f32.mrb[0].mxu0
      %v519 = vpop.f32.mrb[0].mxu0
      %v520 = vadd.f32 0.0, %v519
      %v521 = vpop.f32.mrb[0].mxu0
      %522 = vmatprep.mubr.bf16.mxu0 0
      %523 = vmatmul.mubr.bf16.gmra.mrb[0].mxu0 %v419
      %v524 = vpop.f32.mrb[0].mxu0
      %v525 = vadd.f32 0.0, %v524
      %v526 = vpop.f32.mrb[0].mxu0
      %v527 = vpop.f32.mrb[0].mxu0
      %v528 = vadd.f32 0.0, %v527
      %v529 = vpop.f32.mrb[0].mxu0
      %530 = vmatprep.mubr.bf16.mxu0 0
      %531 = vmatmul.mubr.bf16.gmra.mrb[0].mxu0 %v422
      %v532 = vpop.f32.mrb[0].mxu0
      %v533 = vadd.f32 0.0, %v532
      %v534 = vpop.f32.mrb[0].mxu0
      %v535 = vpop.f32.mrb[0].mxu0
      %v536 = vadd.f32 0.0, %v535
      %v537 = vpop.f32.mrb[0].mxu0
      %538 = vmatprep.mubr.bf16.mxu0 0
      %539 = vmatmul.mubr.bf16.gmra.mrb[0].mxu0 %v425
      %v540 = vpop.f32.mrb[0].mxu0
      %v541 = vadd.f32 0.0, %v540
      %v542 = vpop.f32.mrb[0].mxu0
      %v543 = vpop.f32.mrb[0].mxu0
      %v544 = vadd.f32 0.0, %v543
      %v545 = vpop.f32.mrb[0].mxu0
      %546 = vmatprep.mubr.bf16.mxu0 0
      %547 = vmatmul.mubr.bf16.gmra.mrb[0].mxu0 %v428
      %v548 = vpop.f32.mrb[0].mxu0
      %v549 = vadd.f32 0.0, %v548
      %v550 = vpop.f32.mrb[0].mxu0
      %v551 = vpop.f32.mrb[0].mxu0
      %v552 = vadd.f32 0.0, %v551
      %v553 = vpop.f32.mrb[0].mxu0
      %554 = vmatprep.mubr.bf16.mxu0 0
      %555 = vmatmul.mubr.bf16.gmra.mrb[0].mxu0 %v431
      %v556 = vpop.f32.mrb[0].mxu0
      %v557 = vadd.f32 0.0, %v556
      %v558 = vpop.f32.mrb[0].mxu0
      %v559 = vpop.f32.mrb[0].mxu0
      %v560 = vadd.f32 0.0, %v559
      %v561 = vpop.f32.mrb[0].mxu0
      %562 = vmatprep.mubr.bf16.mxu0 0
      %563 = vmatmul.mubr.bf16.gmra.mrb[0].mxu0 %v434
      %v564 = vpop.f32.mrb[0].mxu0
      %v565 = vadd.f32 0.0, %v564
      %v566 = vpop.f32.mrb[0].mxu0
      %v567 = vpop.f32.mrb[0].mxu0
      %v568 = vadd.f32 0.0, %v567
      %v569 = vpop.f32.mrb[0].mxu0
      %570 = vmatprep.mubr.bf16.mxu0 0
      %571 = vmatmul.mubr.bf16.gmra.mrb[0].mxu0 %v437
      %v572 = vpop.f32.mrb[0].mxu0
      %v573 = vadd.f32 0.0, %v572
      %v574 = vpop.f32.mrb[0].mxu0
      %v575 = vpop.f32.mrb[0].mxu0
      %v576 = vadd.f32 0.0, %v575
      %v577 = vpop.f32.mrb[0].mxu0
      %578 = vmatprep.mubr.bf16.mxu0 0
      %579 = vmatmul.mubr.bf16.gmra.mrb[0].mxu0 %v440
      %v580 = vpop.f32.mrb[0].mxu0
      %v581 = vadd.f32 0.0, %v580
      %v582 = vpop.f32.mrb[0].mxu0
      %v583 = vpop.f32.mrb[0].mxu0
      %v584 = vadd.f32 0.0, %v583
      %v585 = vpop.f32.mrb[0].mxu0
      %586 = vmatprep.mubr.bf16.mxu0 0
      %587 = vmatmul.mubr.bf16.gmra.mrb[0].mxu0 %v443
      %v588 = vpop.f32.mrb[0].mxu0
      %v589 = vadd.f32 0.0, %v588
      %v590 = vpop.f32.mrb[0].mxu0
      %v591 = vpop.f32.mrb[0].mxu0
      %v592 = vadd.f32 0.0, %v591
      %v593 = vpop.f32.mrb[0].mxu0
      %594 = vmatprep.mubr.bf16.mxu0 0
      %595 = vmatmul.mubr.bf16.gmra.mrb[0].mxu0 %v446
      %v596 = vpop.f32.mrb[0].mxu0
      %v597 = vadd.f32 0.0, %v596
      %v598 = vpop.f32.mrb[0].mxu0
      %v599 = vpop.f32.mrb[0].mxu0
      %v600 = vadd.f32 0.0, %v599
      %v601 = vpop.f32.mrb[0].mxu0
      %602 = vmatprep.mubr.bf16.mxu0 0
      %603 = vmatmul.mubr.bf16.gmra.mrb[0].mxu0 %v449
      %v604 = vpop.f32.mrb[0].mxu0
      %v605 = vadd.f32 0.0, %v604
      %v606 = vpop.f32.mrb[0].mxu0
      %v607 = vpop.f32.mrb[0].mxu0
      %v608 = vadd.f32 0.0, %v607
      %v609 = vpop.f32.mrb[0].mxu0
      %610 = vmatprep.mubr.bf16.mxu0 0
      %611 = vmatmul.mubr.bf16.gmra.mrb[0].mxu0 %v452
      %v612 = vpop.f32.mrb[0].mxu0
      %v613 = vadd.f32 0.0, %v612
      %v614 = vpop.f32.mrb[0].mxu0
      %v615 = vpop.f32.mrb[0].mxu0
      %v616 = vadd.f32 0.0, %v615
      %v617 = vpop.f32.mrb[0].mxu0
      %618 = vdwg.mxu0
      %v619 = vadd.f32 %v324, %v493
      %v620 = vadd.f32 %v325, %v496
      %v621 = vadd.f32 %v326, %v501
      %v622 = vadd.f32 %v327, %v504
      %v623 = vadd.f32 %v328, %v509
      %v624 = vadd.f32 %v329, %v512
      %v625 = vadd.f32 %v330, %v517
      %v626 = vadd.f32 %v331, %v520
      %v627 = vadd.f32 %v332, %v525
      %v628 = vadd.f32 %v333, %v528
      %v629 = vadd.f32 %v334, %v533
      %v630 = vadd.f32 %v335, %v536
      %v631 = vadd.f32 %v336, %v541
      %v632 = vadd.f32 %v337, %v544
      %v633 = vadd.f32 %v338, %v549
      %v634 = vadd.f32 %v339, %v552
      %v635 = vadd.f32 %v340, %v557
      %v636 = vadd.f32 %v341, %v560
      %v637 = vadd.f32 %v342, %v565
      %v638 = vadd.f32 %v343, %v568
      %v639 = vadd.f32 %v344, %v573
      %v640 = vadd.f32 %v345, %v576
      %v641 = vadd.f32 %v346, %v581
      %v642 = vadd.f32 %v347, %v584
      %v643 = vadd.f32 %v348, %v589
      %v644 = vadd.f32 %v349, %v592
      %v645 = vadd.f32 %v350, %v597
      %v646 = vadd.f32 %v351, %v600
      %v647 = vadd.f32 %v352, %v605
      %v648 = vadd.f32 %v353, %v608
      %v649 = vadd.f32 %v354, %v613
      %v650 = vadd.f32 %v355, %v616
      %v651 = vmax.f32 %v619, 0.0
      %v652 = vmax.f32 %v620, 0.0
      %v653 = vmax.f32 %v621, 0.0
      %v654 = vmax.f32 %v622, 0.0
      %v655 = vmax.f32 %v623, 0.0
      %v656 = vmax.f32 %v624, 0.0
      %v657 = vmax.f32 %v625, 0.0
      %v658 = vmax.f32 %v626, 0.0
      %v659 = vmax.f32 %v627, 0.0
      %v660 = vmax.f32 %v628, 0.0
      %v661 = vmax.f32 %v629, 0.0
      %v662 = vmax.f32 %v630, 0.0
      %v663 = vmax.f32 %v631, 0.0
      %v664 = vmax.f32 %v632, 0.0
      %v665 = vmax.f32 %v633, 0.0
      %v666 = vmax.f32 %v634, 0.0
      %v667 = vmax.f32 %v635, 0.0
      %v668 = vmax.f32 %v636, 0.0
      %v669 = vmax.f32 %v637, 0.0
      %v670 = vmax.f32 %v638, 0.0
      %v671 = vmax.f32 %v639, 0.0
      %v672 = vmax.f32 %v640, 0.0
      %v673 = vmax.f32 %v641, 0.0
      %v674 = vmax.f32 %v642, 0.0
      %v675 = vmax.f32 %v643, 0.0
      %v676 = vmax.f32 %v644, 0.0
      %v677 = vmax.f32 %v645, 0.0
      %v678 = vmax.f32 %v646, 0.0
      %v679 = vmax.f32 %v647, 0.0
      %v680 = vmax.f32 %v648, 0.0
      %v681 = vmax.f32 %v649, 0.0
      %v682 = vmax.f32 %v650, 0.0
      %683 = vst [vmem:[%s244] sm:$0xff] %v651
      %684 = vst [vmem:[%s244 + $0x8] sm:$0xff] %v652
      %685 = vst [vmem:[%s244 + $0x10] sm:$0xff] %v653
      %686 = vst [vmem:[%s244 + $0x18] sm:$0xff] %v654
      %687 = vst [vmem:[%s244 + $0x20] sm:$0xff] %v655
      %688 = vst [vmem:[%s244 + $0x28] sm:$0xff] %v656
      %689 = vst [vmem:[%s244 + $0x30] sm:$0xff] %v657
      %690 = vst [vmem:[%s244 + $0x38] sm:$0xff] %v658
      %691 = vst [vmem:[%s244 + $0x40] sm:$0xff] %v659
      %692 = vst [vmem:[%s244 + $0x48] sm:$0xff] %v660
      %693 = vst [vmem:[%s244 + $0x50] sm:$0xff] %v661
      %694 = vst [vmem:[%s244 + $0x58] sm:$0xff] %v662
      %695 = vst [vmem:[%s244 + $0x60] sm:$0xff] %v663
      %696 = vst [vmem:[%s244 + $0x68] sm:$0xff] %v664
      %697 = vst [vmem:[%s244 + $0x70] sm:$0xff] %v665
      %698 = vst [vmem:[%s244 + $0x78] sm:$0xff] %v666
      %699 = vst [vmem:[%s244 + $0x80] sm:$0xff] %v667
      %700 = vst [vmem:[%s244 + $0x88] sm:$0xff] %v668
      %701 = vst [vmem:[%s244 + $0x90] sm:$0xff] %v669
      %702 = vst [vmem:[%s244 + $0x98] sm:$0xff] %v670
      %703 = vst [vmem:[%s244 + $0xa0] sm:$0xff] %v671
      %704 = vst [vmem:[%s244 + $0xa8] sm:$0xff] %v672
      %705 = vst [vmem:[%s244 + $0xb0] sm:$0xff] %v673
      %706 = vst [vmem:[%s244 + $0xb8] sm:$0xff] %v674
      %707 = vst [vmem:[%s244 + $0xc0] sm:$0xff] %v675
      %708 = vst [vmem:[%s244 + $0xc8] sm:$0xff] %v676
      %709 = vst [vmem:[%s244 + $0xd0] sm:$0xff] %v677
      %710 = vst [vmem:[%s244 + $0xd8] sm:$0xff] %v678
      %711 = vst [vmem:[%s244 + $0xe0] sm:$0xff] %v679
      %712 = vst [vmem:[%s244 + $0xe8] sm:$0xff] %v680
      %713 = vst [vmem:[%s244 + $0xf0] sm:$0xff] %v681
      %714 = vst [vmem:[%s244 + $0xf8] sm:$0xff] %v682
      %p715 = scmp.lt.s32.totalorder %s16, 1
      %s716 = scalar_select %p715, %s16, 1
      %s717 = smul.addr %s716, 32
      %s718 = smul.addr %s717, 8
      %s719 = scalar_lea.vmem %s5, %s718
      // Predicated region
      $region41: #{_forward.5} parent=39 // pred_check
        %p720 = pneg %p149
      $region42: #{_forward.5} parent=39 // pred_check_branch
        %722 = sbr.rel (%p720) target = $region44
      $region43: #{_forward.5} parent=39 // pred_region
        _
      $region44: #{_forward.5} parent=39 // pred_fallthru
        _
    $region40: #{_forward.5} parent=5 // pred_fallthru
      _
    %p723 = scmp.le.s32.totalorder 2, %s11
    // Predicated region
    $region45: #{_forward.5} parent=5 // pred_check
      %p724 = pneg %p723
    $region46: #{_forward.5} parent=5 // pred_check_branch
      %726 = sbr.rel (%p724) target = $region48
    $region47: #{_forward.5} parent=5 // pred_region
      %s727 = ssub.s32 %s11, 2
      // Predicated region
      $region49: #{_forward.5} parent=47 // pred_check
        %p728 = pneg %p155
      $region50: #{_forward.5} parent=47 // pred_check_branch
        %730 = sbr.rel (%p728) target = $region52
      $region51: #{_forward.5} parent=47 // pred_region
        %p731 = scmp.lt.s32.totalorder %s17, 1
        %s732 = scalar_select %p731, %s17, 1
        %s733 = smul.addr %s732, 32
        %s734 = smul.addr %s733, 8
        %s735 = scalar_lea.vmem %s5, %s734
      $region52: #{_forward.5} parent=47 // pred_fallthru
        _
    $region48: #{_forward.5} parent=5 // pred_fallthru
      _
  $region6: #{_forward.5} parent=0 // loop_footer
    %s15 = sadd.s32 1, %s11
  $region7: #{_forward.5} parent=0 // loop_footer_branch
    %10 = sbr.rel target = $region3
  $region8: #{_forward.5} parent=0 // loop_exit
    _

// kernel: _forward.3
$region0: #{_forward.3}
  #allocation0 [shape = 'u32[]', space=smem, size = 0x4, offset = 0x4, fixed_abs, tag = 'smem constant byte address 0x4 - core index']
  #allocation1 [shape = 'u32[144,128]{1,0:T(1,128)}', space=vmem, size = 0x12000, scoped, tag = 'internal scratch']
  #allocation2 [shape = 'bf16[18,25,4]{2,1,0:T(8,128)(2,1)}', space=vmem, size = 0x24000, scoped, tag = 'scratch operand']
  %s0 = inlined_call_operand.vmem [shape: f32[2,16,16,4], index: 0, kind: input, shape index: {}]
  %s1 = inlined_call_operand.vmem [shape: bf16[9,4,128], index: 1, kind: input, shape index: {}]
  %s2 = inlined_call_operand.vmem [shape: f32[2,16,16,128], index: 2, kind: output, shape index: {0}]
  %s3 = inlined_call_operand.vmem [shape: f32[2,1,128], index: 3, kind: output, shape index: {1}]
  %s4 = inlined_call_operand.vmem [shape: f32[2,1,128], index: 4, kind: output, shape index: {2}]
  %5 = xla_tuple %s2, %s3, %s4
  %s6 = sld [smem:[#allocation0]]
  $region57: #{_forward.3} parent=0
    _
  %s8 = ssub.s32 1, %s6
  %s9 = scalar_select 0, %s8, %s6
  loop: start=0, step=1, limit=4
  $region2: #{_forward.3} parent=0 // loop_pre_header
    _
  $region3: #{_forward.3} parent=0 // loop_header
    %s11 = sphi 0, %s15
    %p12 = scmp.ge.s32.totalorder %s11, 4
    %s21 = sphi 0, %s23
    %s24 = sphi 0, %s21
    %s25 = sphi 0, %s24
    %s41 = sphi 0, %s25
    %s45 = sphi 0, %s45
    %s47 = sphi 0, %s45
    %s48 = sphi 0, %s47
    %s62 = sphi 0, %s48
    %s68 = sphi 0, %s70
    %s71 = sphi 0, %s68
    %s72 = sphi 0, %s71
    %s88 = sphi 0, %s72
    %s94 = sphi 0, %s96
    %s97 = sphi 0, %s94
    %s98 = sphi 0, %s97
    %s114 = sphi 0, %s98
    %s120 = sphi 0, %s122
    %s123 = sphi 0, %s120
    %s124 = sphi 0, %s123
    %s140 = sphi 0, %s124
  $region4: #{_forward.3} parent=0 // loop_header_branch
    %14 = sbr.rel (%p12) target = $region8
  $region5: #{_forward.3} parent=0 // loop_body
    %s16 = ssub.s32 %s11, 1
    %s17 = ssub.s32 %s11, 2
    %s18 = sadd.s32 %s11, 1
    %s19 = ssub.s32 %s11, %s18
    %p20 = scmp.eq.s32.totalorder %s19, 0
    %s22 = sadd.s32 %s21, 1
    %s23 = scalar_select %p20, %s21, %s22
    %p26 = pneg %p20
    %p27 = scmp.eq.s32.totalorder %s11, 1
    %p28 = por %p26, %p27
    %p29 = scmp.ne.s32.totalorder %s21, %s24
    %p30 = scmp.eq.s32.totalorder %s11, 0
    %p31 = por %p29, %p30
    %p32 = scmp.ne.s32.totalorder %s21, %s24
    %p33 = scmp.eq.s32.totalorder %s16, 1
    %p34 = por %p32, %p33
    %p35 = scmp.ne.s32.totalorder %s24, %s25
    %p36 = scmp.eq.s32.totalorder %s16, 0
    %p37 = por %p35, %p36
    %p38 = scmp.ne.s32.totalorder %s24, %s25
    %p39 = scmp.eq.s32.totalorder %s17, 1
    %p40 = por %p38, %p39
    %p42 = scmp.ne.s32.totalorder %s25, %s41
    %p43 = scmp.eq.s32.totalorder %s17, 0
    %p44 = por %p42, %p43
    %s46 = sadd.s32 %s45, 1
    %p49 = scmp.eq.s32.totalorder %s11, 1
    %p50 = scmp.ne.s32.totalorder %s45, %s47
    %p51 = scmp.eq.s32.totalorder %s11, 0
    %p52 = por %p50, %p51
    %p53 = scmp.ne.s32.totalorder %s45, %s47
    %p54 = scmp.eq.s32.totalorder %s16, 1
    %p55 = por %p53, %p54
    %p56 = scmp.ne.s32.totalorder %s47, %s48
    %p57 = scmp.eq.s32.totalorder %s16, 0
    %p58 = por %p56, %p57
    %p59 = scmp.ne.s32.totalorder %s47, %s48
    %p60 = scmp.eq.s32.totalorder %s17, 1
    %p61 = por %p59, %p60
    %p63 = scmp.ne.s32.totalorder %s48, %s62
    %p64 = scmp.eq.s32.totalorder %s17, 0
    %p65 = por %p63, %p64
    %s66 = ssub.s32 %s11, %s18
    %p67 = scmp.eq.s32.totalorder %s66, 0
    %s69 = sadd.s32 %s68, 1
    %s70 = scalar_select %p67, %s68, %s69
    %p73 = pneg %p67
    %p74 = scmp.eq.s32.totalorder %s11, 1
    %p75 = por %p73, %p74
    %p76 = scmp.ne.s32.totalorder %s68, %s71
    %p77 = scmp.eq.s32.totalorder %s11, 0
    %p78 = por %p76, %p77
    %p79 = scmp.ne.s32.totalorder %s68, %s71
    %p80 = scmp.eq.s32.totalorder %s16, 1
    %p81 = por %p79, %p80
    %p82 = scmp.ne.s32.totalorder %s71, %s72
    %p83 = scmp.eq.s32.totalorder %s16, 0
    %p84 = por %p82, %p83
    %p85 = scmp.ne.s32.totalorder %s71, %s72
    %p86 = scmp.eq.s32.totalorder %s17, 1
    %p87 = por %p85, %p86
    %p89 = scmp.ne.s32.totalorder %s72, %s88
    %p90 = scmp.eq.s32.totalorder %s17, 0
    %p91 = por %p89, %p90
    %s92 = ssub.s32 %s11, %s18
    %p93 = scmp.eq.s32.totalorder %s92, 0
    %s95 = sadd.s32 %s94, 1
    %s96 = scalar_select %p93, %s94, %s95
    %p99 = pneg %p93
    %p100 = scmp.eq.s32.totalorder %s11, 1
    %p101 = por %p99, %p100
    %p102 = scmp.ne.s32.totalorder %s94, %s97
    %p103 = scmp.eq.s32.totalorder %s11, 0
    %p104 = por %p102, %p103
    %p105 = scmp.ne.s32.totalorder %s94, %s97
    %p106 = scmp.eq.s32.totalorder %s16, 1
    %p107 = por %p105, %p106
    %p108 = scmp.ne.s32.totalorder %s97, %s98
    %p109 = scmp.eq.s32.totalorder %s16, 0
    %p110 = por %p108, %p109
    %p111 = scmp.ne.s32.totalorder %s97, %s98
    %p112 = scmp.eq.s32.totalorder %s17, 1
    %p113 = por %p111, %p112
    %p115 = scmp.ne.s32.totalorder %s98, %s114
    %p116 = scmp.eq.s32.totalorder %s17, 0
    %p117 = por %p115, %p116
    %s118 = ssub.s32 %s11, %s18
    %p119 = scmp.eq.s32.totalorder %s118, 0
    %s121 = sadd.s32 %s120, 1
    %s122 = scalar_select %p119, %s120, %s121
    %p125 = pneg %p119
    %p126 = scmp.eq.s32.totalorder %s11, 1
    %p127 = por %p125, %p126
    %p128 = scmp.ne.s32.totalorder %s120, %s123
    %p129 = scmp.eq.s32.totalorder %s11, 0
    %p130 = por %p128, %p129
    %p131 = scmp.ne.s32.totalorder %s120, %s123
    %p132 = scmp.eq.s32.totalorder %s16, 1
    %p133 = por %p131, %p132
    %p134 = scmp.ne.s32.totalorder %s123, %s124
    %p135 = scmp.eq.s32.totalorder %s16, 0
    %p136 = por %p134, %p135
    %p137 = scmp.ne.s32.totalorder %s123, %s124
    %p138 = scmp.eq.s32.totalorder %s17, 1
    %p139 = por %p137, %p138
    %p141 = scmp.ne.s32.totalorder %s124, %s140
    %p142 = scmp.eq.s32.totalorder %s17, 0
    %p143 = por %p141, %p142
    %p144 = scmp.le.s32.totalorder 1, %s11
    %p145 = scmp.lt.s32.totalorder %s11, 3
    %p146 = pnand %p144, %p145
    %p147 = pneg %p146
    // Predicated region
    $region9: #{_forward.3} parent=5 // pred_check
      _
    $region10: #{_forward.3} parent=5 // pred_check_branch
      %149 = sbr.rel (%p146) target = $region12
    $region11: #{_forward.3} parent=5 // pred_region
      %s150 = ssub.s32 %s11, 1
      // Predicated region
      $region13: #{_forward.3} parent=11 // pred_check
        %p151 = pneg %p58
      $region14: #{_forward.3} parent=11 // pred_check_branch
        %153 = sbr.rel (%p151) target = $region16
      $region15: #{_forward.3} parent=11 // pred_region
        _
      $region16: #{_forward.3} parent=11 // pred_fallthru
        _
    $region12: #{_forward.3} parent=5 // pred_fallthru
      _
    %p154 = scmp.lt.s32.totalorder %s11, 2
    // Predicated region
    $region17: #{_forward.3} parent=5 // pred_check
      %p155 = pneg %p154
    $region18: #{_forward.3} parent=5 // pred_check_branch
      %157 = sbr.rel (%p155) target = $region20
    $region19: #{_forward.3} parent=5 // pred_region
      // Predicated region
      $region21: #{_forward.3} parent=19 // pred_check
        %p158 = pneg %p31
      $region22: #{_forward.3} parent=19 // pred_check_branch
        %160 = sbr.rel (%p158) target = $region24
      $region23: #{_forward.3} parent=19 // pred_region
        %p161 = scmp.lt.s32.totalorder %s11, 1
        %s162 = scalar_select %p161, %s11, 1
        %s163 = smul.addr %s162, 32
        %s164 = smul.addr %s163, 8
        %s165 = scalar_lea.vmem %s0, %s164
      $region24: #{_forward.3} parent=19 // pred_fallthru
        _
    $region20: #{_forward.3} parent=5 // pred_fallthru
      _
    %p166 = scmp.le.s32.totalorder 1, %s11
    %p167 = scmp.lt.s32.totalorder %s11, 3
    %p168 = pnand %p166, %p167
    %p169 = pneg %p168
    // Predicated region
    $region25: #{_forward.3} parent=5 // pred_check
      _
    $region26: #{_forward.3} parent=5 // pred_check_branch
      %171 = sbr.rel (%p168) target = $region28
    $region27: #{_forward.3} parent=5 // pred_region
      %s172 = ssub.s32 %s11, 1
      %p173 = scmp.lt.s32.totalorder %s16, 1
      %s174 = scalar_select %p173, %s16, 1
      %s175 = smul.addr %s174, 32
      %s176 = smul.addr %s175, 8
      %s177 = scalar_lea.vmem %s0, %s176
      %p178 = pneg %p37
      %p179 = pneg %p34
      %p180 = pneg %p58
      %p181 = pneg %p55
      %p182 = pneg %p84
      %p183 = pneg %p81
      %p184 = scmp.lt.s32.totalorder %s16, 1
      %s185 = scalar_select %p184, %s16, 1
      %s186 = smul.addr %s185, 32
      %s187 = smul.addr %s186, 8
      %s188 = scalar_lea.vmem %s2, %s187
      %p189 = pneg %p110
      %p190 = pneg %p107
      %p191 = scmp.lt.s32.totalorder %s16, 1
      %s192 = scalar_select %p191, %s16, 1
      %s193 = scalar_lea.vmem %s3, %s192
      %p194 = pneg %p136
      %p195 = pneg %p133
      %p196 = scmp.lt.s32.totalorder %s16, 1
      %s197 = scalar_select %p196, %s16, 1
      %s198 = scalar_lea.vmem %s4, %s197
      %p199 = scmp.lt.s32.totalorder %s16, 1
      %s200 = scalar_select %p199, %s16, 1
      %s201 = smul.addr %s200, 32
      %s202 = smul.addr %s201, 8
      %s203 = scalar_lea.vmem %s0, %s202
      %p204 = scmp.lt.s32.totalorder %s16, 1
      %s205 = scalar_select %p204, %s16, 1
      %s206 = smul.addr %s205, 32
      %s207 = smul.addr %s206, 8
      %s208 = scalar_lea.vmem %s2, %s207
      %p209 = scmp.lt.s32.totalorder %s16, 1
      %s210 = scalar_select %p209, %s16, 1
      %s211 = scalar_lea.vmem %s3, %s210
      %p212 = scmp.lt.s32.totalorder %s16, 1
      %s213 = scalar_select %p212, %s16, 1
      %s214 = scalar_lea.vmem %s4, %s213
      %vm216 = vcmask 27648
      %217 = vst.msk [vmem:[#allocation2] sm:$0xf] %vm216, 0
      %218 = vst.msk [vmem:[#allocation2 + $0x4] sm:$0xf] %vm216, 0
      %219 = vst.msk [vmem:[#allocation2 + $0x8] sm:$0xf] %vm216, 0
      %vm220 = vcmask 24576
      %vm221 = vsmask.f32 256
      %vm222 = vmand %vm220, %vm221
      %v223 = vld [vmem:[#allocation2 + $0xc] sm:$0x1]
      %v224 = vsel %vm222, 0, %v223
      %225 = vst [vmem:[#allocation2 + $0xc] sm:$0x1] %v224
      %226 = vst.msk [vmem:[#allocation2 + $0x10] sm:$0xf] %vm216, 0
      %227 = vst.msk [vmem:[#allocation2 + $0x14] sm:$0xf] %vm216, 0
      %228 = vst.msk [vmem:[#allocation2 + $0x18] sm:$0xf] %vm216, 0
      %v229 = vld [vmem:[#allocation2 + $0x1c] sm:$0x1]
      %v230 = vsel %vm222, 0, %v229
      %231 = vst [vmem:[#allocation2 + $0x1c] sm:$0x1] %v230
      %232 = vst.msk [vmem:[#allocation2 + $0x20] sm:$0xf] %vm216, 0
      %233 = vst.msk [vmem:[#allocation2 + $0x24] sm:$0xf] %vm216, 0
      %234 = vst.msk [vmem:[#allocation2 + $0x28] sm:$0xf] %vm216, 0
      %v235 = vld [vmem:[#allocation2 + $0x2c] sm:$0x1]
      %v236 = vsel %vm222, 0, %v235
      %237 = vst [vmem:[#allocation2 + $0x2c] sm:$0x1] %v236
      %238 = vst.msk [vmem:[#allocation2 + $0x30] sm:$0xf] %vm216, 0
      %239 = vst.msk [vmem:[#allocation2 + $0x34] sm:$0xf] %vm216, 0
      %240 = vst.msk [vmem:[#allocation2 + $0x38] sm:$0xf] %vm216, 0
      %v241 = vld [vmem:[#allocation2 + $0x3c] sm:$0x1]
      %v242 = vsel %vm222, 0, %v241
      %243 = vst [vmem:[#allocation2 + $0x3c] sm:$0x1] %v242
      %244 = vst.msk [vmem:[#allocation2 + $0x40] sm:$0xf] %vm216, 0
      %245 = vst.msk [vmem:[#allocation2 + $0x44] sm:$0xf] %vm216, 0
      %246 = vst.msk [vmem:[#allocation2 + $0x48] sm:$0xf] %vm216, 0
      %v247 = vld [vmem:[#allocation2 + $0x4c] sm:$0x1]
      %v248 = vsel %vm222, 0, %v247
      %249 = vst [vmem:[#allocation2 + $0x4c] sm:$0x1] %v248
      %250 = vst.msk [vmem:[#allocation2 + $0x50] sm:$0xf] %vm216, 0
      %251 = vst.msk [vmem:[#allocation2 + $0x54] sm:$0xf] %vm216, 0
      %252 = vst.msk [vmem:[#allocation2 + $0x58] sm:$0xf] %vm216, 0
      %v253 = vld [vmem:[#allocation2 + $0x5c] sm:$0x1]
      %v254 = vsel %vm222, 0, %v253
      %255 = vst [vmem:[#allocation2 + $0x5c] sm:$0x1] %v254
      %256 = vst.msk [vmem:[#allocation2 + $0x60] sm:$0xf] %vm216, 0
      %257 = vst.msk [vmem:[#allocation2 + $0x64] sm:$0xf] %vm216, 0
      %258 = vst.msk [vmem:[#allocation2 + $0x68] sm:$0xf] %vm216, 0
      %v259 = vld [vmem:[#allocation2 + $0x6c] sm:$0x1]
      %v260 = vsel %vm222, 0, %v259
      %261 = vst [vmem:[#allocation2 + $0x6c] sm:$0x1] %v260
      %262 = vst.msk [vmem:[#allocation2 + $0x70] sm:$0xf] %vm216, 0
      %263 = vst.msk [vmem:[#allocation2 + $0x74] sm:$0xf] %vm216, 0
      %264 = vst.msk [vmem:[#allocation2 + $0x78] sm:$0xf] %vm216, 0
      %v265 = vld [vmem:[#allocation2 + $0x7c] sm:$0x1]
      %v266 = vsel %vm222, 0, %v265
      %267 = vst [vmem:[#allocation2 + $0x7c] sm:$0x1] %v266
      %268 = vst.msk [vmem:[#allocation2 + $0x80] sm:$0xf] %vm216, 0
      %269 = vst.msk [vmem:[#allocation2 + $0x84] sm:$0xf] %vm216, 0
      %270 = vst.msk [vmem:[#allocation2 + $0x88] sm:$0xf] %vm216, 0
      %v271 = vld [vmem:[#allocation2 + $0x8c] sm:$0x1]
      %v272 = vsel %vm222, 0, %v271
      %273 = vst [vmem:[#allocation2 + $0x8c] sm:$0x1] %v272
      %274 = vst.msk [vmem:[#allocation2 + $0x90] sm:$0xf] %vm216, 0
      %275 = vst.msk [vmem:[#allocation2 + $0x94] sm:$0xf] %vm216, 0
      %276 = vst.msk [vmem:[#allocation2 + $0x98] sm:$0xf] %vm216, 0
      %v277 = vld [vmem:[#allocation2 + $0x9c] sm:$0x1]
      %v278 = vsel %vm222, 0, %v277
      %279 = vst [vmem:[#allocation2 + $0x9c] sm:$0x1] %v278
      %280 = vst.msk [vmem:[#allocation2 + $0xa0] sm:$0xf] %vm216, 0
      %281 = vst.msk [vmem:[#allocation2 + $0xa4] sm:$0xf] %vm216, 0
      %282 = vst.msk [vmem:[#allocation2 + $0xa8] sm:$0xf] %vm216, 0
      %v283 = vld [vmem:[#allocation2 + $0xac] sm:$0x1]
      %v284 = vsel %vm222, 0, %v283
      %285 = vst [vmem:[#allocation2 + $0xac] sm:$0x1] %v284
      %286 = vst.msk [vmem:[#allocation2 + $0xb0] sm:$0xf] %vm216, 0
      %287 = vst.msk [vmem:[#allocation2 + $0xb4] sm:$0xf] %vm216, 0
      %288 = vst.msk [vmem:[#allocation2 + $0xb8] sm:$0xf] %vm216, 0
      %v289 = vld [vmem:[#allocation2 + $0xbc] sm:$0x1]
      %v290 = vsel %vm222, 0, %v289
      %291 = vst [vmem:[#allocation2 + $0xbc] sm:$0x1] %v290
      %292 = vst.msk [vmem:[#allocation2 + $0xc0] sm:$0xf] %vm216, 0
      %293 = vst.msk [vmem:[#allocation2 + $0xc4] sm:$0xf] %vm216, 0
      %294 = vst.msk [vmem:[#allocation2 + $0xc8] sm:$0xf] %vm216, 0
      %v295 = vld [vmem:[#allocation2 + $0xcc] sm:$0x1]
      %v296 = vsel %vm222, 0, %v295
      %297 = vst [vmem:[#allocation2 + $0xcc] sm:$0x1] %v296
      %298 = vst.msk [vmem:[#allocation2 + $0xd0] sm:$0xf] %vm216, 0
      %299 = vst.msk [vmem:[#allocation2 + $0xd4] sm:$0xf] %vm216, 0
      %300 = vst.msk [vmem:[#allocation2 + $0xd8] sm:$0xf] %vm216, 0
      %v301 = vld [vmem:[#allocation2 + $0xdc] sm:$0x1]
      %v302 = vsel %vm222, 0, %v301
      %303 = vst [vmem:[#allocation2 + $0xdc] sm:$0x1] %v302
      %304 = vst.msk [vmem:[#allocation2 + $0xe0] sm:$0xf] %vm216, 0
      %305 = vst.msk [vmem:[#allocation2 + $0xe4] sm:$0xf] %vm216, 0
      %306 = vst.msk [vmem:[#allocation2 + $0xe8] sm:$0xf] %vm216, 0
      %v307 = vld [vmem:[#allocation2 + $0xec] sm:$0x1]
      %v308 = vsel %vm222, 0, %v307
      %309 = vst [vmem:[#allocation2 + $0xec] sm:$0x1] %v308
      %310 = vst.msk [vmem:[#allocation2 + $0xf0] sm:$0xf] %vm216, 0
      %311 = vst.msk [vmem:[#allocation2 + $0xf4] sm:$0xf] %vm216, 0
      %312 = vst.msk [vmem:[#allocation2 + $0xf8] sm:$0xf] %vm216, 0
      %v313 = vld [vmem:[#allocation2 + $0xfc] sm:$0x1]
      %v314 = vsel %vm222, 0, %v313
      %315 = vst [vmem:[#allocation2 + $0xfc] sm:$0x1] %v314
      %316 = vst.msk [vmem:[#allocation2 + $0x100] sm:$0xf] %vm216, 0
      %317 = vst.msk [vmem:[#allocation2 + $0x104] sm:$0xf] %vm216, 0
      %318 = vst.msk [vmem:[#allocation2 + $0x108] sm:$0xf] %vm216, 0
      %v319 = vld [vmem:[#allocation2 + $0x10c] sm:$0x1]
      %v320 = vsel %vm222, 0, %v319
      %321 = vst [vmem:[#allocation2 + $0x10c] sm:$0x1] %v320
      %322 = vst.msk [vmem:[#allocation2 + $0x110] sm:$0xf] %vm216, 0
      %323 = vst.msk [vmem:[#allocation2 + $0x114] sm:$0xf] %vm216, 0
      %324 = vst.msk [vmem:[#allocation2 + $0x118] sm:$0xf] %vm216, 0
      %v325 = vld [vmem:[#allocation2 + $0x11c] sm:$0x1]
      %v326 = vsel %vm222, 0, %v325
      %327 = vst [vmem:[#allocation2 + $0x11c] sm:$0x1] %v326
      %v328 = vld [vmem:[%s203] sm:$0xff]
      %v329 = vld [vmem:[%s203 + $0x8] sm:$0xff]
      %v330 = vld [vmem:[%s203 + $0x10] sm:$0xff]
      %v331 = vld [vmem:[%s203 + $0x18] sm:$0xff]
      %v332 = vld [vmem:[%s203 + $0x20] sm:$0xff]
      %v333 = vld [vmem:[%s203 + $0x28] sm:$0xff]
      %v334 = vld [vmem:[%s203 + $0x30] sm:$0xff]
      %v335 = vld [vmem:[%s203 + $0x38] sm:$0xff]
      %v336 = vld [vmem:[%s203 + $0x40] sm:$0xff]
      %v337 = vld [vmem:[%s203 + $0x48] sm:$0xff]
      %v338 = vld [vmem:[%s203 + $0x50] sm:$0xff]
      %v339 = vld [vmem:[%s203 + $0x58] sm:$0xff]
      %v340 = vld [vmem:[%s203 + $0x60] sm:$0xff]
      %v341 = vld [vmem:[%s203 + $0x68] sm:$0xff]
      %v342 = vld [vmem:[%s203 + $0x70] sm:$0xff]
      %v343 = vld [vmem:[%s203 + $0x78] sm:$0xff]
      %v344 = vld [vmem:[%s203 + $0x80] sm:$0xff]
      %v345 = vld [vmem:[%s203 + $0x88] sm:$0xff]
      %v346 = vld [vmem:[%s203 + $0x90] sm:$0xff]
      %v347 = vld [vmem:[%s203 + $0x98] sm:$0xff]
      %v348 = vld [vmem:[%s203 + $0xa0] sm:$0xff]
      %v349 = vld [vmem:[%s203 + $0xa8] sm:$0xff]
      %v350 = vld [vmem:[%s203 + $0xb0] sm:$0xff]
      %v351 = vld [vmem:[%s203 + $0xb8] sm:$0xff]
      %v352 = vld [vmem:[%s203 + $0xc0] sm:$0xff]
      %v353 = vld [vmem:[%s203 + $0xc8] sm:$0xff]
      %v354 = vld [vmem:[%s203 + $0xd0] sm:$0xff]
      %v355 = vld [vmem:[%s203 + $0xd8] sm:$0xff]
      %v356 = vld [vmem:[%s203 + $0xe0] sm:$0xff]
      %v357 = vld [vmem:[%s203 + $0xe8] sm:$0xff]
      %v358 = vld [vmem:[%s203 + $0xf0] sm:$0xff]
      %v359 = vld [vmem:[%s203 + $0xf8] sm:$0xff]
      %v360 = vpack.c.bf16 %v329, %v328
      %v361 = vpack.c.bf16 %v331, %v330
      %v362 = vpack.c.bf16 %v333, %v332
      %v363 = vpack.c.bf16 %v335, %v334
      %v364 = vpack.c.bf16 %v337, %v336
      %v365 = vpack.c.bf16 %v339, %v338
      %v366 = vpack.c.bf16 %v341, %v340
      %v367 = vpack.c.bf16 %v343, %v342
      %v368 = vpack.c.bf16 %v345, %v344
      %v369 = vpack.c.bf16 %v347, %v346
      %v370 = vpack.c.bf16 %v349, %v348
      %v371 = vpack.c.bf16 %v351, %v350
      %v372 = vpack.c.bf16 %v353, %v352
      %v373 = vpack.c.bf16 %v355, %v354
      %v374 = vpack.c.bf16 %v357, %v356
      %v375 = vpack.c.bf16 %v359, %v358
      %v392 = vunpack.c.l.b16 %v360
      %v393 = vunpack.c.h.b16 %v360
      %v394 = vunpack.c.l.b16 %v361
      %v395 = vunpack.c.h.b16 %v361
      %v396 = vunpack.c.l.b16 %v362
      %v397 = vunpack.c.h.b16 %v362
      %v398 = vunpack.c.l.b16 %v363
      %v399 = vunpack.c.h.b16 %v363
      %v400 = vunpack.c.l.b16 %v364
      %v401 = vunpack.c.h.b16 %v364
      %v402 = vunpack.c.l.b16 %v365
      %v403 = vunpack.c.h.b16 %v365
      %v404 = vunpack.c.l.b16 %v366
      %v405 = vunpack.c.h.b16 %v366
      %v406 = vunpack.c.l.b16 %v367
      %v407 = vunpack.c.h.b16 %v367
      %v408 = vunpack.c.l.b16 %v368
      %v409 = vunpack.c.h.b16 %v368
      %v410 = vunpack.c.l.b16 %v369
      %v411 = vunpack.c.h.b16 %v369
      %v412 = vunpack.c.l.b16 %v370
      %v413 = vunpack.c.h.b16 %v370
      %v414 = vunpack.c.l.b16 %v371
      %v415 = vunpack.c.h.b16 %v371
      %v416 = vunpack.c.l.b16 %v372
      %v417 = vunpack.c.h.b16 %v372
      %v418 = vunpack.c.l.b16 %v373
      %v419 = vunpack.c.h.b16 %v373
      %v420 = vunpack.c.l.b16 %v374
      %v421 = vunpack.c.h.b16 %v374
      %v422 = vunpack.c.l.b16 %v375
      %v423 = vunpack.c.h.b16 %v375
      %v424 = vpack.c.b16 %v392, %v392
      %v425 = vpack.c.b16 %v393, %v393
      %v426 = vpack.c.b16 %v394, %v394
      %v427 = vpack.c.b16 %v395, %v395
      %v428 = vpack.c.b16 %v396, %v396
      %v429 = vpack.c.b16 %v397, %v397
      %v430 = vpack.c.b16 %v398, %v398
      %v431 = vpack.c.b16 %v399, %v399
      %v432 = vpack.c.b16 %v400, %v400
      %v433 = vpack.c.b16 %v401, %v401
      %v434 = vpack.c.b16 %v402, %v402
      %v435 = vpack.c.b16 %v403, %v403
      %v436 = vpack.c.b16 %v404, %v404
      %v437 = vpack.c.b16 %v405, %v405
      %v438 = vpack.c.b16 %v406, %v406
      %v439 = vpack.c.b16 %v407, %v407
      %v440 = vpack.c.b16 %v408, %v408
      %v441 = vpack.c.b16 %v409, %v409
      %v442 = vpack.c.b16 %v410, %v410
      %v443 = vpack.c.b16 %v411, %v411
      %v444 = vpack.c.b16 %v412, %v412
      %v445 = vpack.c.b16 %v413, %v413
      %v446 = vpack.c.b16 %v414, %v414
      %v447 = vpack.c.b16 %v415, %v415
      %v448 = vpack.c.b16 %v416, %v416
      %v449 = vpack.c.b16 %v417, %v417
      %v450 = vpack.c.b16 %v418, %v418
      %v451 = vpack.c.b16 %v419, %v419
      %v452 = vpack.c.b16 %v420, %v420
      %v453 = vpack.c.b16 %v421, %v421
      %v454 = vpack.c.b16 %v422, %v422
      %v455 = vpack.c.b16 %v423, %v423
      %s488 = scalar_lea.vmem [#allocation2], 16
      %489 = vst.msk [vmem:[%s488 + $0x4] sm:$0xf] %vm216, %v424
      %490 = vst.msk [vmem:[%s488 + $0x8] sm:$0xf] %vm216, %v425
      %491 = vst.msk [vmem:[%s488 + $0x14] sm:$0xf] %vm216, %v426
      %492 = vst.msk [vmem:[%s488 + $0x18] sm:$0xf] %vm216, %v427
      %493 = vst.msk [vmem:[%s488 + $0x24] sm:$0xf] %vm216, %v428
      %494 = vst.msk [vmem:[%s488 + $0x28] sm:$0xf] %vm216, %v429
      %495 = vst.msk [vmem:[%s488 + $0x34] sm:$0xf] %vm216, %v430
      %496 = vst.msk [vmem:[%s488 + $0x38] sm:$0xf] %vm216, %v431
      %497 = vst.msk [vmem:[%s488 + $0x44] sm:$0xf] %vm216, %v432
      %498 = vst.msk [vmem:[%s488 + $0x48] sm:$0xf] %vm216, %v433
      %499 = vst.msk [vmem:[%s488 + $0x54] sm:$0xf] %vm216, %v434
      %500 = vst.msk [vmem:[%s488 + $0x58] sm:$0xf] %vm216, %v435
      %501 = vst.msk [vmem:[%s488 + $0x64] sm:$0xf] %vm216, %v436
      %502 = vst.msk [vmem:[%s488 + $0x68] sm:$0xf] %vm216, %v437
      %503 = vst.msk [vmem:[%s488 + $0x74] sm:$0xf] %vm216, %v438
      %504 = vst.msk [vmem:[%s488 + $0x78] sm:$0xf] %vm216, %v439
      %505 = vst.msk [vmem:[%s488 + $0x84] sm:$0xf] %vm216, %v440
      %506 = vst.msk [vmem:[%s488 + $0x88] sm:$0xf] %vm216, %v441
      %507 = vst.msk [vmem:[%s488 + $0x94] sm:$0xf] %vm216, %v442
      %508 = vst.msk [vmem:[%s488 + $0x98] sm:$0xf] %vm216, %v443
      %509 = vst.msk [vmem:[%s488 + $0xa4] sm:$0xf] %vm216, %v444
      %510 = vst.msk [vmem:[%s488 + $0xa8] sm:$0xf] %vm216, %v445
      %511 = vst.msk [vmem:[%s488 + $0xb4] sm:$0xf] %vm216, %v446
      %512 = vst.msk [vmem:[%s488 + $0xb8] sm:$0xf] %vm216, %v447
      %513 = vst.msk [vmem:[%s488 + $0xc4] sm:$0xf] %vm216, %v448
      %514 = vst.msk [vmem:[%s488 + $0xc8] sm:$0xf] %vm216, %v449
      %515 = vst.msk [vmem:[%s488 + $0xd4] sm:$0xf] %vm216, %v450
      %516 = vst.msk [vmem:[%s488 + $0xd8] sm:$0xf] %vm216, %v451
      %517 = vst.msk [vmem:[%s488 + $0xe4] sm:$0xf] %vm216, %v452
      %518 = vst.msk [vmem:[%s488 + $0xe8] sm:$0xf] %vm216, %v453
      %519 = vst.msk [vmem:[%s488 + $0xf4] sm:$0xf] %vm216, %v454
      %520 = vst.msk [vmem:[%s488 + $0xf8] sm:$0xf] %vm216, %v455
      %v521 = vld [vmem:[#allocation2] sm:$0xf]
      %v522 = vld [vmem:[#allocation2 + $0x4] sm:$0xf]
      %v523 = vld [vmem:[#allocation2 + $0x8] sm:$0xf]
      %v524 = vld [vmem:[#allocation2 + $0xc] sm:$0x1]
      %v525 = vld [vmem:[#allocation2 + $0x10] sm:$0xf]
      %v526 = vld [vmem:[#allocation2 + $0x14] sm:$0xf]
      %v527 = vld [vmem:[#allocation2 + $0x18] sm:$0xf]
      %v528 = vld [vmem:[#allocation2 + $0x1c] sm:$0x1]
      %v529 = vld [vmem:[#allocation2 + $0x20] sm:$0xf]
      %v530 = vld [vmem:[#allocation2 + $0x24] sm:$0xf]
      %v531 = vld [vmem:[#allocation2 + $0x28] sm:$0xf]
      %v532 = vld [vmem:[#allocation2 + $0x2c] sm:$0x1]
      %v533 = vld [vmem:[#allocation2 + $0x30] sm:$0xf]
      %v534 = vld [vmem:[#allocation2 + $0x34] sm:$0xf]
      %v535 = vld [vmem:[#allocation2 + $0x38] sm:$0xf]
      %v536 = vld [vmem:[#allocation2 + $0x3c] sm:$0x1]
      %v537 = vld [vmem:[#allocation2 + $0x40] sm:$0xf]
      %v538 = vld [vmem:[#allocation2 + $0x44] sm:$0xf]
      %v539 = vld [vmem:[#allocation2 + $0x48] sm:$0xf]
      %v540 = vld [vmem:[#allocation2 + $0x4c] sm:$0x1]
      %v541 = vld [vmem:[#allocation2 + $0x50] sm:$0xf]
      %v542 = vld [vmem:[#allocation2 + $0x54] sm:$0xf]
      %v543 = vld [vmem:[#allocation2 + $0x58] sm:$0xf]
      %v544 = vld [vmem:[#allocation2 + $0x5c] sm:$0x1]
      %v545 = vld [vmem:[#allocation2 + $0x60] sm:$0xf]
      %v546 = vld [vmem:[#allocation2 + $0x64] sm:$0xf]
      %v547 = vld [vmem:[#allocation2 + $0x68] sm:$0xf]
      %v548 = vld [vmem:[#allocation2 + $0x6c] sm:$0x1]
      %v549 = vld [vmem:[#allocation2 + $0x70] sm:$0xf]
      %v550 = vld [vmem:[#allocation2 + $0x74] sm:$0xf]
      %v551 = vld [vmem:[#allocation2 + $0x78] sm:$0xf]
      %v552 = vld [vmem:[#allocation2 + $0x7c] sm:$0x1]
      %v553 = vld [vmem:[#allocation2 + $0x80] sm:$0xf]
      %v554 = vld [vmem:[#allocation2 + $0x84] sm:$0xf]
      %v555 = vld [vmem:[#allocation2 + $0x88] sm:$0xf]
      %v556 = vld [vmem:[#allocation2 + $0x8c] sm:$0x1]
      %v557 = vld [vmem:[#allocation2 + $0x90] sm:$0xf]
      %v558 = vld [vmem:[#allocation2 + $0x94] sm:$0xf]
      %v559 = vld [vmem:[#allocation2 + $0x98] sm:$0xf]
      %v560 = vld [vmem:[#allocation2 + $0x9c] sm:$0x1]
      %v561 = vld [vmem:[#allocation2 + $0xa0] sm:$0xf]
      %v562 = vld [vmem:[#allocation2 + $0xa4] sm:$0xf]
      %v563 = vld [vmem:[#allocation2 + $0xa8] sm:$0xf]
      %v564 = vld [vmem:[#allocation2 + $0xac] sm:$0x1]
      %v565 = vld [vmem:[#allocation2 + $0xb0] sm:$0xf]
      %v566 = vld [vmem:[#allocation2 + $0xb4] sm:$0xf]
      %v567 = vld [vmem:[#allocation2 + $0xb8] sm:$0xf]
      %v568 = vld [vmem:[#allocation2 + $0xbc] sm:$0x1]
      %v569 = vld [vmem:[#allocation2 + $0xc0] sm:$0xf]
      %v570 = vld [vmem:[#allocation2 + $0xc4] sm:$0xf]
      %v571 = vld [vmem:[#allocation2 + $0xc8] sm:$0xf]
      %v572 = vld [vmem:[#allocation2 + $0xcc] sm:$0x1]
      %v573 = vld [vmem:[#allocation2 + $0xd0] sm:$0xf]
      %v574 = vld [vmem:[#allocation2 + $0xd4] sm:$0xf]
      %v575 = vld [vmem:[#allocation2 + $0xd8] sm:$0xf]
      %v576 = vld [vmem:[#allocation2 + $0xdc] sm:$0x1]
      %v577 = vld [vmem:[#allocation2 + $0xe0] sm:$0xf]
      %v578 = vld [vmem:[#allocation2 + $0xe4] sm:$0xf]
      %v579 = vld [vmem:[#allocation2 + $0xe8] sm:$0xf]
      %v580 = vld [vmem:[#allocation2 + $0xec] sm:$0x1]
      %v581 = vld [vmem:[#allocation2 + $0xf0] sm:$0xf]
      %v582 = vld [vmem:[#allocation2 + $0xf4] sm:$0xf]
      %v583 = vld [vmem:[#allocation2 + $0xf8] sm:$0xf]
      %v584 = vld [vmem:[#allocation2 + $0xfc] sm:$0x1]
      %v585 = vld [vmem:[#allocation2 + $0x100] sm:$0xf]
      %v586 = vld [vmem:[#allocation2 + $0x104] sm:$0xf]
      %v587 = vld [vmem:[#allocation2 + $0x108] sm:$0xf]
      %v588 = vld [vmem:[#allocation2 + $0x10c] sm:$0x1]
      %v589 = vld [vmem:[#allocation2 + $0x110] sm:$0xf]
      %v590 = vld [vmem:[#allocation2 + $0x114] sm:$0xf]
      %v591 = vld [vmem:[#allocation2 + $0x118] sm:$0xf]
      %v592 = vld [vmem:[#allocation2 + $0x11c] sm:$0x1]
      %vm593 = vsmask.f32 4368
      %vm594 = vmor %vm221, %vm593
      %v596 = vshrl.u32 %v521, 16
      %v598 = vrot.slane %v596, 7
      %v599 = vrot.slane %v598, 4
      %v601 = vshrl.u32 %v522, 16
      %v603 = vrot.slane %v601, 7
      %v604 = vshll.u32 %v522, 16
      %v606 = vor.u32 %v603, %v604
      %v607 = vsel %vm594, %v599, %v606
      %v608 = vrot.slane %v603, 4
      %v610 = vshrl.u32 %v523, 16
      %v612 = vrot.slane %v610, 7
      %v613 = vshll.u32 %v523, 16
      %v615 = vor.u32 %v612, %v613
      %v616 = vsel %vm594, %v608, %v615
      %v618 = vshrl.u32 %v525, 16
      %v620 = vrot.slane %v618, 7
      %v621 = vrot.slane %v620, 4
      %v623 = vshrl.u32 %v526, 16
      %v625 = vrot.slane %v623, 7
      %v626 = vshll.u32 %v526, 16
      %v628 = vor.u32 %v625, %v626
      %v629 = vsel %vm594, %v621, %v628
      %v630 = vrot.slane %v625, 4
      %v632 = vshrl.u32 %v527, 16
      %v634 = vrot.slane %v632, 7
      %v635 = vshll.u32 %v527, 16
      %v637 = vor.u32 %v634, %v635
      %v638 = vsel %vm594, %v630, %v637
      %v640 = vshrl.u32 %v529, 16
      %v642 = vrot.slane %v640, 7
      %v643 = vrot.slane %v642, 4
      %v645 = vshrl.u32 %v530, 16
      %v647 = vrot.slane %v645, 7
      %v648 = vshll.u32 %v530, 16
      %v650 = vor.u32 %v647, %v648
      %v651 = vsel %vm594, %v643, %v650
      %v652 = vrot.slane %v647, 4
      %v654 = vshrl.u32 %v531, 16
      %v656 = vrot.slane %v654, 7
      %v657 = vshll.u32 %v531, 16
      %v659 = vor.u32 %v656, %v657
      %v660 = vsel %vm594, %v652, %v659
      %v662 = vshrl.u32 %v533, 16
      %v664 = vrot.slane %v662, 7
      %v665 = vrot.slane %v664, 4
      %v667 = vshrl.u32 %v534, 16
      %v669 = vrot.slane %v667, 7
      %v670 = vshll.u32 %v534, 16
      %v672 = vor.u32 %v669, %v670
      %v673 = vsel %vm594, %v665, %v672
      %v674 = vrot.slane %v669, 4
      %v676 = vshrl.u32 %v535, 16
      %v678 = vrot.slane %v676, 7
      %v679 = vshll.u32 %v535, 16
      %v681 = vor.u32 %v678, %v679
      %v682 = vsel %vm594, %v674, %v681
      %v684 = vshrl.u32 %v537, 16
      %v686 = vrot.slane %v684, 7
      %v687 = vrot.slane %v686, 4
      %v689 = vshrl.u32 %v538, 16
      %v691 = vrot.slane %v689, 7
      %v692 = vshll.u32 %v538, 16
      %v694 = vor.u32 %v691, %v692
      %v695 = vsel %vm594, %v687, %v694
      %v696 = vrot.slane %v691, 4
      %v698 = vshrl.u32 %v539, 16
      %v700 = vrot.slane %v698, 7
      %v701 = vshll.u32 %v539, 16
      %v703 = vor.u32 %v700, %v701
      %v704 = vsel %vm594, %v696, %v703
      %v706 = vshrl.u32 %v541, 16
      %v708 = vrot.slane %v706, 7
      %v709 = vrot.slane %v708, 4
      %v711 = vshrl.u32 %v542, 16
      %v713 = vrot.slane %v711, 7
      %v714 = vshll.u32 %v542, 16
      %v716 = vor.u32 %v713, %v714
      %v717 = vsel %vm594, %v709, %v716
      %v718 = vrot.slane %v713, 4
      %v720 = vshrl.u32 %v543, 16
      %v722 = vrot.slane %v720, 7
      %v723 = vshll.u32 %v543, 16
      %v725 = vor.u32 %v722, %v723
      %v726 = vsel %vm594, %v718, %v725
      %v728 = vshrl.u32 %v545, 16
      %v730 = vrot.slane %v728, 7
      %v731 = vrot.slane %v730, 4
      %v733 = vshrl.u32 %v546, 16
      %v735 = vrot.slane %v733, 7
      %v736 = vshll.u32 %v546, 16
      %v738 = vor.u32 %v735, %v736
      %v739 = vsel %vm594, %v731, %v738
      %v740 = vrot.slane %v735, 4
      %v742 = vshrl.u32 %v547, 16
      %v744 = vrot.slane %v742, 7
      %v745 = vshll.u32 %v547, 16
      %v747 = vor.u32 %v744, %v745
      %v748 = vsel %vm594, %v740, %v747
      %v750 = vshrl.u32 %v549, 16
      %v752 = vrot.slane %v750, 7
      %v753 = vrot.slane %v752, 4
      %v755 = vshrl.u32 %v550, 16
      %v757 = vrot.slane %v755, 7
      %v758 = vshll.u32 %v550, 16
      %v760 = vor.u32 %v757, %v758
      %v761 = vsel %vm594, %v753, %v760
      %v762 = vrot.slane %v757, 4
      %v764 = vshrl.u32 %v551, 16
      %v766 = vrot.slane %v764, 7
      %v767 = vshll.u32 %v551, 16
      %v769 = vor.u32 %v766, %v767
      %v770 = vsel %vm594, %v762, %v769
      %v772 = vshrl.u32 %v553, 16
      %v774 = vrot.slane %v772, 7
      %v775 = vrot.slane %v774, 4
      %v777 = vshrl.u32 %v554, 16
      %v779 = vrot.slane %v777, 7
      %v780 = vshll.u32 %v554, 16
      %v782 = vor.u32 %v779, %v780
      %v783 = vsel %vm594, %v775, %v782
      %v784 = vrot.slane %v779, 4
      %v786 = vshrl.u32 %v555, 16
      %v788 = vrot.slane %v786, 7
      %v789 = vshll.u32 %v555, 16
      %v791 = vor.u32 %v788, %v789
      %v792 = vsel %vm594, %v784, %v791
      %v794 = vshrl.u32 %v557, 16
      %v796 = vrot.slane %v794, 7
      %v797 = vrot.slane %v796, 4
      %v799 = vshrl.u32 %v558, 16
      %v801 = vrot.slane %v799, 7
      %v802 = vshll.u32 %v558, 16
      %v804 = vor.u32 %v801, %v802
      %v805 = vsel %vm594, %v797, %v804
      %v806 = vrot.slane %v801, 4
      %v808 = vshrl.u32 %v559, 16
      %v810 = vrot.slane %v808, 7
      %v811 = vshll.u32 %v559, 16
      %v813 = vor.u32 %v810, %v811
      %v814 = vsel %vm594, %v806, %v813
      %v816 = vshrl.u32 %v561, 16
      %v818 = vrot.slane %v816, 7
      %v819 = vrot.slane %v818, 4
      %v821 = vshrl.u32 %v562, 16
      %v823 = vrot.slane %v821, 7
      %v824 = vshll.u32 %v562, 16
      %v826 = vor.u32 %v823, %v824
      %v827 = vsel %vm594, %v819, %v826
      %v828 = vrot.slane %v823, 4
      %v830 = vshrl.u32 %v563, 16
      %v832 = vrot.slane %v830, 7
      %v833 = vshll.u32 %v563, 16
      %v835 = vor.u32 %v832, %v833
      %v836 = vsel %vm594, %v828, %v835
      %v838 = vshrl.u32 %v565, 16
      %v840 = vrot.slane %v838, 7
      %v841 = vrot.slane %v840, 4
      %v843 = vshrl.u32 %v566, 16
      %v845 = vrot.slane %v843, 7
      %v846 = vshll.u32 %v566, 16
      %v848 = vor.u32 %v845, %v846
      %v849 = vsel %vm594, %v841, %v848
      %v850 = vrot.slane %v845, 4
      %v852 = vshrl.u32 %v567, 16
      %v854 = vrot.slane %v852, 7
      %v855 = vshll.u32 %v567, 16
      %v857 = vor.u32 %v854, %v855
      %v858 = vsel %vm594, %v850, %v857
      %v860 = vshrl.u32 %v569, 16
      %v862 = vrot.slane %v860, 7
      %v863 = vrot.slane %v862, 4
      %v865 = vshrl.u32 %v570, 16
      %v867 = vrot.slane %v865, 7
      %v868 = vshll.u32 %v570, 16
      %v870 = vor.u32 %v867, %v868
      %v871 = vsel %vm594, %v863, %v870
      %v872 = vrot.slane %v867, 4
      %v874 = vshrl.u32 %v571, 16
      %v876 = vrot.slane %v874, 7
      %v877 = vshll.u32 %v571, 16
      %v879 = vor.u32 %v876, %v877
      %v880 = vsel %vm594, %v872, %v879
      %v882 = vshrl.u32 %v573, 16
      %v884 = vrot.slane %v882, 7
      %v885 = vrot.slane %v884, 4
      %v887 = vshrl.u32 %v574, 16
      %v889 = vrot.slane %v887, 7
      %v890 = vshll.u32 %v574, 16
      %v892 = vor.u32 %v889, %v890
      %v893 = vsel %vm594, %v885, %v892
      %v894 = vrot.slane %v889, 4
      %v896 = vshrl.u32 %v575, 16
      %v898 = vrot.slane %v896, 7
      %v899 = vshll.u32 %v575, 16
      %v901 = vor.u32 %v898, %v899
      %v902 = vsel %vm594, %v894, %v901
      %v904 = vshrl.u32 %v577, 16
      %v906 = vrot.slane %v904, 7
      %v907 = vrot.slane %v906, 4
      %v909 = vshrl.u32 %v578, 16
      %v911 = vrot.slane %v909, 7
      %v912 = vshll.u32 %v578, 16
      %v914 = vor.u32 %v911, %v912
      %v915 = vsel %vm594, %v907, %v914
      %v916 = vrot.slane %v911, 4
      %v918 = vshrl.u32 %v579, 16
      %v920 = vrot.slane %v918, 7
      %v921 = vshll.u32 %v579, 16
      %v923 = vor.u32 %v920, %v921
      %v924 = vsel %vm594, %v916, %v923
      %v926 = vshrl.u32 %v581, 16
      %v928 = vrot.slane %v926, 7
      %v929 = vrot.slane %v928, 4
      %v931 = vshrl.u32 %v582, 16
      %v933 = vrot.slane %v931, 7
      %v934 = vshll.u32 %v582, 16
      %v936 = vor.u32 %v933, %v934
      %v937 = vsel %vm594, %v929, %v936
      %v938 = vrot.slane %v933, 4
      %v940 = vshrl.u32 %v583, 16
      %v942 = vrot.slane %v940, 7
      %v943 = vshll.u32 %v583, 16
      %v945 = vor.u32 %v942, %v943
      %v946 = vsel %vm594, %v938, %v945
      %v947 = vld [vmem:[%s1] sm:$0x3]
      %s948 = scalar_lea.vmem %s1, 2
      %v949 = vld [vmem:[%s948] sm:$0x3]
      %v982 = vunpack.c.l.b16 %v522
      %v983 = vunpack.c.l.b16 %v523
      %v984 = vunpack.c.l.b16 %v526
      %v985 = vunpack.c.l.b16 %v527
      %v986 = vunpack.c.l.b16 %v530
      %v987 = vunpack.c.l.b16 %v531
      %v988 = vunpack.c.l.b16 %v534
      %v989 = vunpack.c.l.b16 %v535
      %v990 = vunpack.c.l.b16 %v538
      %v991 = vunpack.c.l.b16 %v539
      %v992 = vunpack.c.l.b16 %v542
      %v993 = vunpack.c.l.b16 %v543
      %v994 = vunpack.c.l.b16 %v546
      %v995 = vunpack.c.l.b16 %v547
      %v996 = vunpack.c.l.b16 %v550
      %v997 = vunpack.c.l.b16 %v551
      %v998 = vunpack.c.l.b16 %v554
      %v999 = vunpack.c.l.b16 %v555
      %v1000 = vunpack.c.l.b16 %v558
      %v1001 = vunpack.c.l.b16 %v559
      %v1002 = vunpack.c.l.b16 %v562
      %v1003 = vunpack.c.l.b16 %v563
      %v1004 = vunpack.c.l.b16 %v566
      %v1005 = vunpack.c.l.b16 %v567
      %v1006 = vunpack.c.l.b16 %v570
      %v1007 = vunpack.c.l.b16 %v571
      %v1008 = vunpack.c.l.b16 %v574
      %v1009 = vunpack.c.l.b16 %v575
      %v1010 = vunpack.c.l.b16 %v578
      %v1011 = vunpack.c.l.b16 %v579
      %v1012 = vunpack.c.l.b16 %v582
      %v1013 = vunpack.c.l.b16 %v583
      %v1014 = vpack.c.b16 %v983, %v982
      %v1015 = vpack.c.b16 %v985, %v984
      %v1016 = vpack.c.b16 %v987, %v986
      %v1017 = vpack.c.b16 %v989, %v988
      %v1018 = vpack.c.b16 %v991, %v990
      %v1019 = vpack.c.b16 %v993, %v992
      %v1020 = vpack.c.b16 %v995, %v994
      %v1021 = vpack.c.b16 %v997, %v996
      %v1022 = vpack.c.b16 %v999, %v998
      %v1023 = vpack.c.b16 %v1001, %v1000
      %v1024 = vpack.c.b16 %v1003, %v1002
      %v1025 = vpack.c.b16 %v1005, %v1004
      %v1026 = vpack.c.b16 %v1007, %v1006
      %v1027 = vpack.c.b16 %v1009, %v1008
      %v1028 = vpack.c.b16 %v1011, %v1010
      %v1029 = vpack.c.b16 %v1013, %v1012
      %vm1030 = vcmask 31744
      %v1032 = vsel %vm1030, %v1014, 0
      %v1035 = vsel %vm1030, %v1015, 0
      %v1038 = vsel %vm1030, %v1016, 0
      %v1041 = vsel %vm1030, %v1017, 0
      %v1044 = vsel %vm1030, %v1018, 0
      %v1047 = vsel %vm1030, %v1019, 0
      %v1050 = vsel %vm1030, %v1020, 0
      %v1053 = vsel %vm1030, %v1021, 0
      %v1056 = vsel %vm1030, %v1022, 0
      %v1059 = vsel %vm1030, %v1023, 0
      %v1062 = vsel %vm1030, %v1024, 0
      %v1065 = vsel %vm1030, %v1025, 0
      %v1068 = vsel %vm1030, %v1026, 0
      %v1071 = vsel %vm1030, %v1027, 0
      %v1074 = vsel %vm1030, %v1028, 0
      %v1077 = vsel %vm1030, %v1029, 0
      %vm1079 = vcmask 1041408
      %v1081 = vsel %vm1079, %v949, 0
      %1083 = vmatprep.subr.bf16.mxu0 0
      %1084 = vmatpush1.bf16.msra.mxu0 %v1081
      %1085 = vmatprep.subr.bf16.mxu0 0
      %1086 = vmatpush1.bf16.msra.mxu0 0
      %1087 = vmatprep.subr.bf16.mxu0 0
      %1088 = vmatpush1.bf16.msra.mxu0 0
      %1089 = vmatprep.subr.bf16.mxu0 0
      %1090 = vmatpush1.bf16.msra.mxu0 0
      %1091 = vmatprep.subr.bf16.mxu0 0
      %1092 = vmatpush1.bf16.msra.mxu0 0
      %1093 = vmatprep.subr.bf16.mxu0 0
      %1094 = vmatpush1.bf16.msra.mxu0 0
      %1095 = vmatprep.subr.bf16.mxu0 0
      %1096 = vmatpush1.bf16.msra.mxu0 0
      %1097 = vmatprep.subr.bf16.mxu0 0
      %1098 = vmatpush1.bf16.msra.mxu0 0
      %1099 = vmatprep.subr.bf16.mxu0 0
      %1100 = vmatpush1.bf16.msra.mxu0 0
      %1101 = vmatprep.subr.bf16.mxu0 0
      %1102 = vmatpush1.bf16.msra.mxu0 0
      %1103 = vmatprep.subr.bf16.mxu0 0
      %1104 = vmatpush1.bf16.msra.mxu0 0
      %1105 = vmatprep.subr.bf16.mxu0 0
      %1106 = vmatpush1.bf16.msra.mxu0 0
      %1107 = vmatprep.subr.bf16.mxu0 0
      %1108 = vmatpush1.bf16.msra.mxu0 0
      %1109 = vmatprep.subr.bf16.mxu0 0
      %1110 = vmatpush1.bf16.msra.mxu0 0
      %1111 = vmatprep.subr.bf16.mxu0 0
      %1112 = vmatpush1.bf16.msra.mxu0 0
      %1113 = vmatprep.subr.bf16.mxu0 0
      %1114 = vmatpush1.bf16.msra.mxu0 0
      %1115 = vmatprep.mubr.bf16.mxu0 0
      %1116 = vmatmul.mubr.bf16.gmra.mrb[0].mxu0 %v1032
      %v1117 = vpop.f32.mrb[0].mxu0
      %v1118 = vadd.f32 0.0, %v1117
      %v1119 = vpop.f32.mrb[0].mxu0
      %v1120 = vpop.f32.mrb[0].mxu0
      %v1121 = vadd.f32 0.0, %v1120
      %v1122 = vpop.f32.mrb[0].mxu0
      %1123 = vmatprep.mubr.bf16.mxu0 0
      %1124 = vmatmul.mubr.bf16.gmra.mrb[0].mxu0 %v1035
      %v1125 = vpop.f32.mrb[0].mxu0
      %v1126 = vadd.f32 0.0, %v1125
      %v1127 = vpop.f32.mrb[0].mxu0
      %v1128 = vpop.f32.mrb[0].mxu0
      %v1129 = vadd.f32 0.0, %v1128
      %v1130 = vpop.f32.mrb[0].mxu0
      %1131 = vmatprep.mubr.bf16.mxu0 0
      %1132 = vmatmul.mubr.bf16.gmra.mrb[0].mxu0 %v1038
      %v1133 = vpop.f32.mrb[0].mxu0
      %v1134 = vadd.f32 0.0, %v1133
      %v1135 = vpop.f32.mrb[0].mxu0
      %v1136 = vpop.f32.mrb[0].mxu0
      %v1137 = vadd.f32 0.0, %v1136
      %v1138 = vpop.f32.mrb[0].mxu0
      %1139 = vmatprep.mubr.bf16.mxu0 0
      %1140 = vmatmul.mubr.bf16.gmra.mrb[0].mxu0 %v1041
      %v1141 = vpop.f32.mrb[0].mxu0
      %v1142 = vadd.f32 0.0, %v1141
      %v1143 = vpop.f32.mrb[0].mxu0
      %v1144 = vpop.f32.mrb[0].mxu0
      %v1145 = vadd.f32 0.0, %v1144
      %v1146 = vpop.f32.mrb[0].mxu0
      %1147 = vmatprep.mubr.bf16.mxu0 0
      %1148 = vmatmul.mubr.bf16.gmra.mrb[0].mxu0 %v1044
      %v1149 = vpop.f32.mrb[0].mxu0
      %v1150 = vadd.f32 0.0, %v1149
      %v1151 = vpop.f32.mrb[0].mxu0
      %v1152 = vpop.f32.mrb[0].mxu0
      %v1153 = vadd.f32 0.0, %v1152
      %v1154 = vpop.f32.mrb[0].mxu0
      %1155 = vmatprep.mubr.bf16.mxu0 0
      %1156 = vmatmul.mubr.bf16.gmra.mrb[0].mxu0 %v1047
      %v1157 = vpop.f32.mrb[0].mxu0
      %v1158 = vadd.f32 0.0, %v1157
      %v1159 = vpop.f32.mrb[0].mxu0
      %v1160 = vpop.f32.mrb[0].mxu0
      %v1161 = vadd.f32 0.0, %v1160
      %v1162 = vpop.f32.mrb[0].mxu0
      %1163 = vmatprep.mubr.bf16.mxu0 0
      %1164 = vmatmul.mubr.bf16.gmra.mrb[0].mxu0 %v1050
      %v1165 = vpop.f32.mrb[0].mxu0
      %v1166 = vadd.f32 0.0, %v1165
      %v1167 = vpop.f32.mrb[0].mxu0
      %v1168 = vpop.f32.mrb[0].mxu0
      %v1169 = vadd.f32 0.0, %v1168
      %v1170 = vpop.f32.mrb[0].mxu0
      %1171 = vmatprep.mubr.bf16.mxu0 0
      %1172 = vmatmul.mubr.bf16.gmra.mrb[0].mxu0 %v1053
      %v1173 = vpop.f32.mrb[0].mxu0
      %v1174 = vadd.f32 0.0, %v1173
      %v1175 = vpop.f32.mrb[0].mxu0
      %v1176 = vpop.f32.mrb[0].mxu0
      %v1177 = vadd.f32 0.0, %v1176
      %v1178 = vpop.f32.mrb[0].mxu0
      %1179 = vmatprep.mubr.bf16.mxu0 0
      %1180 = vmatmul.mubr.bf16.gmra.mrb[0].mxu0 %v1056
      %v1181 = vpop.f32.mrb[0].mxu0
      %v1182 = vadd.f32 0.0, %v1181
      %v1183 = vpop.f32.mrb[0].mxu0
      %v1184 = vpop.f32.mrb[0].mxu0
      %v1185 = vadd.f32 0.0, %v1184
      %v1186 = vpop.f32.mrb[0].mxu0
      %1187 = vmatprep.mubr.bf16.mxu0 0
      %1188 = vmatmul.mubr.bf16.gmra.mrb[0].mxu0 %v1059
      %v1189 = vpop.f32.mrb[0].mxu0
      %v1190 = vadd.f32 0.0, %v1189
      %v1191 = vpop.f32.mrb[0].mxu0
      %v1192 = vpop.f32.mrb[0].mxu0
      %v1193 = vadd.f32 0.0, %v1192
      %v1194 = vpop.f32.mrb[0].mxu0
      %1195 = vmatprep.mubr.bf16.mxu0 0
      %1196 = vmatmul.mubr.bf16.gmra.mrb[0].mxu0 %v1062
      %v1197 = vpop.f32.mrb[0].mxu0
      %v1198 = vadd.f32 0.0, %v1197
      %v1199 = vpop.f32.mrb[0].mxu0
      %v1200 = vpop.f32.mrb[0].mxu0
      %v1201 = vadd.f32 0.0, %v1200
      %v1202 = vpop.f32.mrb[0].mxu0
      %1203 = vmatprep.mubr.bf16.mxu0 0
      %1204 = vmatmul.mubr.bf16.gmra.mrb[0].mxu0 %v1065
      %v1205 = vpop.f32.mrb[0].mxu0
      %v1206 = vadd.f32 0.0, %v1205
      %v1207 = vpop.f32.mrb[0].mxu0
      %v1208 = vpop.f32.mrb[0].mxu0
      %v1209 = vadd.f32 0.0, %v1208
      %v1210 = vpop.f32.mrb[0].mxu0
      %1211 = vmatprep.mubr.bf16.mxu0 0
      %1212 = vmatmul.mubr.bf16.gmra.mrb[0].mxu0 %v1068
      %v1213 = vpop.f32.mrb[0].mxu0
      %v1214 = vadd.f32 0.0, %v1213
      %v1215 = vpop.f32.mrb[0].mxu0
      %v1216 = vpop.f32.mrb[0].mxu0
      %v1217 = vadd.f32 0.0, %v1216
      %v1218 = vpop.f32.mrb[0].mxu0
      %1219 = vmatprep.mubr.bf16.mxu0 0
      %1220 = vmatmul.mubr.bf16.gmra.mrb[0].mxu0 %v1071
      %v1221 = vpop.f32.mrb[0].mxu0
      %v1222 = vadd.f32 0.0, %v1221
      %v1223 = vpop.f32.mrb[0].mxu0
      %v1224 = vpop.f32.mrb[0].mxu0
      %v1225 = vadd.f32 0.0, %v1224
      %v1226 = vpop.f32.mrb[0].mxu0
      %1227 = vmatprep.mubr.bf16.mxu0 0
      %1228 = vmatmul.mubr.bf16.gmra.mrb[0].mxu0 %v1074
      %v1229 = vpop.f32.mrb[0].mxu0
      %v1230 = vadd.f32 0.0, %v1229
      %v1231 = vpop.f32.mrb[0].mxu0
      %v1232 = vpop.f32.mrb[0].mxu0
      %v1233 = vadd.f32 0.0, %v1232
      %v1234 = vpop.f32.mrb[0].mxu0
      %1235 = vmatprep.mubr.bf16.mxu0 0
      %1236 = vmatmul.mubr.bf16.gmra.mrb[0].mxu0 %v1077
      %v1237 = vpop.f32.mrb[0].mxu0
      %v1238 = vadd.f32 0.0, %v1237
      %v1239 = vpop.f32.mrb[0].mxu0
      %v1240 = vpop.f32.mrb[0].mxu0
      %v1241 = vadd.f32 0.0, %v1240
      %v1242 = vpop.f32.mrb[0].mxu0
      %1243 = vdwg.mxu0
      %v1244 = vunpack.c.l.b16 %v607
      %v1245 = vunpack.c.l.b16 %v616
      %v1246 = vunpack.c.l.b16 %v629
      %v1247 = vunpack.c.l.b16 %v638
      %v1248 = vunpack.c.l.b16 %v651
      %v1249 = vunpack.c.l.b16 %v660
      %v1250 = vunpack.c.l.b16 %v673
      %v1251 = vunpack.c.l.b16 %v682
      %v1252 = vunpack.c.l.b16 %v695
      %v1253 = vunpack.c.l.b16 %v704
      %v1254 = vunpack.c.l.b16 %v717
      %v1255 = vunpack.c.l.b16 %v726
      %v1256 = vunpack.c.l.b16 %v739
      %v1257 = vunpack.c.l.b16 %v748
      %v1258 = vunpack.c.l.b16 %v761
      %v1259 = vunpack.c.l.b16 %v770
      %v1260 = vunpack.c.l.b16 %v783
      %v1261 = vunpack.c.l.b16 %v792
      %v1262 = vunpack.c.l.b16 %v805
      %v1263 = vunpack.c.l.b16 %v814
      %v1264 = vunpack.c.l.b16 %v827
      %v1265 = vunpack.c.l.b16 %v836
      %v1266 = vunpack.c.l.b16 %v849
      %v1267 = vunpack.c.l.b16 %v858
      %v1268 = vunpack.c.l.b16 %v871
      %v1269 = vunpack.c.l.b16 %v880
      %v1270 = vunpack.c.l.b16 %v893
      %v1271 = vunpack.c.l.b16 %v902
      %v1272 = vunpack.c.l.b16 %v915
      %v1273 = vunpack.c.l.b16 %v924
      %v1274 = vunpack.c.l.b16 %v937
      %v1275 = vunpack.c.l.b16 %v946
      %v1276 = vpack.c.b16 %v1245, %v1244
      %v1277 = vpack.c.b16 %v1247, %v1246
      %v1278 = vpack.c.b16 %v1249, %v1248
      %v1279 = vpack.c.b16 %v1251, %v1250
      %v1280 = vpack.c.b16 %v1253, %v1252
      %v1281 = vpack.c.b16 %v1255, %v1254
      %v1282 = vpack.c.b16 %v1257, %v1256
      %v1283 = vpack.c.b16 %v1259, %v1258
      %v1284 = vpack.c.b16 %v1261, %v1260
      %v1285 = vpack.c.b16 %v1263, %v1262
      %v1286 = vpack.c.b16 %v1265, %v1264
      %v1287 = vpack.c.b16 %v1267, %v1266
      %v1288 = vpack.c.b16 %v1269, %v1268
      %v1289 = vpack.c.b16 %v1271, %v1270
      %v1290 = vpack.c.b16 %v1273, %v1272
      %v1291 = vpack.c.b16 %v1275, %v1274
      %v1293 = vsel %vm1030, %v1276, 0
      %v1296 = vsel %vm1030, %v1277, 0
      %v1299 = vsel %vm1030, %v1278, 0
      %v1302 = vsel %vm1030, %v1279, 0
      %v1305 = vsel %vm1030, %v1280, 0
      %v1308 = vsel %vm1030, %v1281, 0
      %v1311 = vsel %vm1030, %v1282, 0
      %v1314 = vsel %vm1030, %v1283, 0
      %v1317 = vsel %vm1030, %v1284, 0
      %v1320 = vsel %vm1030, %v1285, 0
      %v1323 = vsel %vm1030, %v1286, 0
      %v1326 = vsel %vm1030, %v1287, 0
      %v1329 = vsel %vm1030, %v1288, 0
      %v1332 = vsel %vm1030, %v1289, 0
      %v1335 = vsel %vm1030, %v1290, 0
      %v1338 = vsel %vm1030, %v1291, 0
      %v1341 = vsel %vm1079, %v947, 0
      %1343 = vmatprep.subr.bf16.mxu0 0
      %1344 = vmatpush1.bf16.msra.mxu0 %v1341
      %1345 = vmatprep.subr.bf16.mxu0 0
      %1346 = vmatpush1.bf16.msra.mxu0 0
      %1347 = vmatprep.subr.bf16.mxu0 0
      %1348 = vmatpush1.bf16.msra.mxu0 0
      %1349 = vmatprep.subr.bf16.mxu0 0
      %1350 = vmatpush1.bf16.msra.mxu0 0
      %1351 = vmatprep.subr.bf16.mxu0 0
      %1352 = vmatpush1.bf16.msra.mxu0 0
      %1353 = vmatprep.subr.bf16.mxu0 0
      %1354 = vmatpush1.bf16.msra.mxu0 0
      %1355 = vmatprep.subr.bf16.mxu0 0
      %1356 = vmatpush1.bf16.msra.mxu0 0
      %1357 = vmatprep.subr.bf16.mxu0 0
      %1358 = vmatpush1.bf16.msra.mxu0 0
      %1359 = vmatprep.subr.bf16.mxu0 0
      %1360 = vmatpush1.bf16.msra.mxu0 0
      %1361 = vmatprep.subr.bf16.mxu0 0
      %1362 = vmatpush1.bf16.msra.mxu0 0
      %1363 = vmatprep.subr.bf16.mxu0 0
      %1364 = vmatpush1.bf16.msra.mxu0 0
      %1365 = vmatprep.subr.bf16.mxu0 0
      %1366 = vmatpush1.bf16.msra.mxu0 0
      %1367 = vmatprep.subr.bf16.mxu0 0
      %1368 = vmatpush1.bf16.msra.mxu0 0
      %1369 = vmatprep.subr.bf16.mxu0 0
      %1370 = vmatpush1.bf16.msra.mxu0 0
      %1371 = vmatprep.subr.bf16.mxu0 0
      %1372 = vmatpush1.bf16.msra.mxu0 0
      %1373 = vmatprep.subr.bf16.mxu0 0
      %1374 = vmatpush1.bf16.msra.mxu0 0
      %1375 = vmatprep.mubr.bf16.mxu0 0
      %1376 = vmatmul.mubr.bf16.gmra.mrb[0].mxu0 %v1293
      %v1377 = vpop.f32.mrb[0].mxu0
      %v1378 = vadd.f32 %v1118, %v1377
      %v1379 = vpop.f32.mrb[0].mxu0
      %v1380 = vpop.f32.mrb[0].mxu0
      %v1381 = vadd.f32 %v1121, %v1380
      %v1382 = vpop.f32.mrb[0].mxu0
      %1383 = vmatprep.mubr.bf16.mxu0 0
      %1384 = vmatmul.mubr.bf16.gmra.mrb[0].mxu0 %v1296
      %v1385 = vpop.f32.mrb[0].mxu0
      %v1386 = vadd.f32 %v1126, %v1385
      %v1387 = vpop.f32.mrb[0].mxu0
      %v1388 = vpop.f32.mrb[0].mxu0
      %v1389 = vadd.f32 %v1129, %v1388
      %v1390 = vpop.f32.mrb[0].mxu0
      %1391 = vmatprep.mubr.bf16.mxu0 0
      %1392 = vmatmul.mubr.bf16.gmra.mrb[0].mxu0 %v1299
      %v1393 = vpop.f32.mrb[0].mxu0
      %v1394 = vadd.f32 %v1134, %v1393
      %v1395 = vpop.f32.mrb[0].mxu0
      %v1396 = vpop.f32.mrb[0].mxu0
      %v1397 = vadd.f32 %v1137, %v1396
      %v1398 = vpop.f32.mrb[0].mxu0
      %1399 = vmatprep.mubr.bf16.mxu0 0
      %1400 = vmatmul.mubr.bf16.gmra.mrb[0].mxu0 %v1302
      %v1401 = vpop.f32.mrb[0].mxu0
      %v1402 = vadd.f32 %v1142, %v1401
      %v1403 = vpop.f32.mrb[0].mxu0
      %v1404 = vpop.f32.mrb[0].mxu0
      %v1405 = vadd.f32 %v1145, %v1404
      %v1406 = vpop.f32.mrb[0].mxu0
      %1407 = vmatprep.mubr.bf16.mxu0 0
      %1408 = vmatmul.mubr.bf16.gmra.mrb[0].mxu0 %v1305
      %v1409 = vpop.f32.mrb[0].mxu0
      %v1410 = vadd.f32 %v1150, %v1409
      %v1411 = vpop.f32.mrb[0].mxu0
      %v1412 = vpop.f32.mrb[0].mxu0
      %v1413 = vadd.f32 %v1153, %v1412
      %v1414 = vpop.f32.mrb[0].mxu0
      %1415 = vmatprep.mubr.bf16.mxu0 0
      %1416 = vmatmul.mubr.bf16.gmra.mrb[0].mxu0 %v1308
      %v1417 = vpop.f32.mrb[0].mxu0
      %v1418 = vadd.f32 %v1158, %v1417
      %v1419 = vpop.f32.mrb[0].mxu0
      %v1420 = vpop.f32.mrb[0].mxu0
      %v1421 = vadd.f32 %v1161, %v1420
      %v1422 = vpop.f32.mrb[0].mxu0
      %1423 = vmatprep.mubr.bf16.mxu0 0
      %1424 = vmatmul.mubr.bf16.gmra.mrb[0].mxu0 %v1311
      %v1425 = vpop.f32.mrb[0].mxu0
      %v1426 = vadd.f32 %v1166, %v1425
      %v1427 = vpop.f32.mrb[0].mxu0
      %v1428 = vpop.f32.mrb[0].mxu0
      %v1429 = vadd.f32 %v1169, %v1428
      %v1430 = vpop.f32.mrb[0].mxu0
      %1431 = vmatprep.mubr.bf16.mxu0 0
      %1432 = vmatmul.mubr.bf16.gmra.mrb[0].mxu0 %v1314
      %v1433 = vpop.f32.mrb[0].mxu0
      %v1434 = vadd.f32 %v1174, %v1433
      %v1435 = vpop.f32.mrb[0].mxu0
      %v1436 = vpop.f32.mrb[0].mxu0
      %v1437 = vadd.f32 %v1177, %v1436
      %v1438 = vpop.f32.mrb[0].mxu0
      %1439 = vmatprep.mubr.bf16.mxu0 0
      %1440 = vmatmul.mubr.bf16.gmra.mrb[0].mxu0 %v1317
      %v1441 = vpop.f32.mrb[0].mxu0
      %v1442 = vadd.f32 %v1182, %v1441
      %v1443 = vpop.f32.mrb[0].mxu0
      %v1444 = vpop.f32.mrb[0].mxu0
      %v1445 = vadd.f32 %v1185, %v1444
      %v1446 = vpop.f32.mrb[0].mxu0
      %1447 = vmatprep.mubr.bf16.mxu0 0
      %1448 = vmatmul.mubr.bf16.gmra.mrb[0].mxu0 %v1320
      %v1449 = vpop.f32.mrb[0].mxu0
      %v1450 = vadd.f32 %v1190, %v1449
      %v1451 = vpop.f32.mrb[0].mxu0
      %v1452 = vpop.f32.mrb[0].mxu0
      %v1453 = vadd.f32 %v1193, %v1452
      %v1454 = vpop.f32.mrb[0].mxu0
      %1455 = vmatprep.mubr.bf16.mxu0 0
      %1456 = vmatmul.mubr.bf16.gmra.mrb[0].mxu0 %v1323
      %v1457 = vpop.f32.mrb[0].mxu0
      %v1458 = vadd.f32 %v1198, %v1457
      %v1459 = vpop.f32.mrb[0].mxu0
      %v1460 = vpop.f32.mrb[0].mxu0
      %v1461 = vadd.f32 %v1201, %v1460
      %v1462 = vpop.f32.mrb[0].mxu0
      %1463 = vmatprep.mubr.bf16.mxu0 0
      %1464 = vmatmul.mubr.bf16.gmra.mrb[0].mxu0 %v1326
      %v1465 = vpop.f32.mrb[0].mxu0
      %v1466 = vadd.f32 %v1206, %v1465
      %v1467 = vpop.f32.mrb[0].mxu0
      %v1468 = vpop.f32.mrb[0].mxu0
      %v1469 = vadd.f32 %v1209, %v1468
      %v1470 = vpop.f32.mrb[0].mxu0
      %1471 = vmatprep.mubr.bf16.mxu0 0
      %1472 = vmatmul.mubr.bf16.gmra.mrb[0].mxu0 %v1329
      %v1473 = vpop.f32.mrb[0].mxu0
      %v1474 = vadd.f32 %v1214, %v1473
      %v1475 = vpop.f32.mrb[0].mxu0
      %v1476 = vpop.f32.mrb[0].mxu0
      %v1477 = vadd.f32 %v1217, %v1476
      %v1478 = vpop.f32.mrb[0].mxu0
      %1479 = vmatprep.mubr.bf16.mxu0 0
      %1480 = vmatmul.mubr.bf16.gmra.mrb[0].mxu0 %v1332
      %v1481 = vpop.f32.mrb[0].mxu0
      %v1482 = vadd.f32 %v1222, %v1481
      %v1483 = vpop.f32.mrb[0].mxu0
      %v1484 = vpop.f32.mrb[0].mxu0
      %v1485 = vadd.f32 %v1225, %v1484
      %v1486 = vpop.f32.mrb[0].mxu0
      %1487 = vmatprep.mubr.bf16.mxu0 0
      %1488 = vmatmul.mubr.bf16.gmra.mrb[0].mxu0 %v1335
      %v1489 = vpop.f32.mrb[0].mxu0
      %v1490 = vadd.f32 %v1230, %v1489
      %v1491 = vpop.f32.mrb[0].mxu0
      %v1492 = vpop.f32.mrb[0].mxu0
      %v1493 = vadd.f32 %v1233, %v1492
      %v1494 = vpop.f32.mrb[0].mxu0
      %1495 = vmatprep.mubr.bf16.mxu0 0
      %1496 = vmatmul.mubr.bf16.gmra.mrb[0].mxu0 %v1338
      %v1497 = vpop.f32.mrb[0].mxu0
      %v1498 = vadd.f32 %v1238, %v1497
      %v1499 = vpop.f32.mrb[0].mxu0
      %v1500 = vpop.f32.mrb[0].mxu0
      %v1501 = vadd.f32 %v1241, %v1500
      %v1502 = vpop.f32.mrb[0].mxu0
      %1503 = vdwg.mxu0
      %vm1504 = vsmask.f32 3328
      %vm1505 = vsmask.f32 7440
      %vm1506 = vmor %vm1504, %vm1505
      %v1507 = vrot.slane %v601, 4
      %v1508 = vrot.slane %v604, 5
      %v1509 = vor.u32 %v1507, %v1508
      %v1510 = vrot.slane %v1509, 4
      %v1511 = vrot.slane %v613, 5
      %v1512 = vsel %vm1506, %v1510, %v1511
      %v1513 = vrot.slane %v610, 4
      %v1514 = vor.u32 %v1513, %v1511
      %v1515 = vrot.slane %v1514, 4
      %v1517 = vshll.u32 %v524, 16
      %v1519 = vrot.slane %v1517, 5
      %v1520 = vsel %vm1506, %v1515, %v1519
      %v1521 = vrot.slane %v623, 4
      %v1522 = vrot.slane %v626, 5
      %v1523 = vor.u32 %v1521, %v1522
      %v1524 = vrot.slane %v1523, 4
      %v1525 = vrot.slane %v635, 5
      %v1526 = vsel %vm1506, %v1524, %v1525
      %v1527 = vrot.slane %v632, 4
      %v1528 = vor.u32 %v1527, %v1525
      %v1529 = vrot.slane %v1528, 4
      %v1531 = vshll.u32 %v528, 16
      %v1533 = vrot.slane %v1531, 5
      %v1534 = vsel %vm1506, %v1529, %v1533
      %v1535 = vrot.slane %v645, 4
      %v1536 = vrot.slane %v648, 5
      %v1537 = vor.u32 %v1535, %v1536
      %v1538 = vrot.slane %v1537, 4
      %v1539 = vrot.slane %v657, 5
      %v1540 = vsel %vm1506, %v1538, %v1539
      %v1541 = vrot.slane %v654, 4
      %v1542 = vor.u32 %v1541, %v1539
      %v1543 = vrot.slane %v1542, 4
      %v1545 = vshll.u32 %v532, 16
      %v1547 = vrot.slane %v1545, 5
      %v1548 = vsel %vm1506, %v1543, %v1547
      %v1549 = vrot.slane %v667, 4
      %v1550 = vrot.slane %v670, 5
      %v1551 = vor.u32 %v1549, %v1550
      %v1552 = vrot.slane %v1551, 4
      %v1553 = vrot.slane %v679, 5
      %v1554 = vsel %vm1506, %v1552, %v1553
      %v1555 = vrot.slane %v676, 4
      %v1556 = vor.u32 %v1555, %v1553
      %v1557 = vrot.slane %v1556, 4
      %v1559 = vshll.u32 %v536, 16
      %v1561 = vrot.slane %v1559, 5
      %v1562 = vsel %vm1506, %v1557, %v1561
      %v1563 = vrot.slane %v689, 4
      %v1564 = vrot.slane %v692, 5
      %v1565 = vor.u32 %v1563, %v1564
      %v1566 = vrot.slane %v1565, 4
      %v1567 = vrot.slane %v701, 5
      %v1568 = vsel %vm1506, %v1566, %v1567
      %v1569 = vrot.slane %v698, 4
      %v1570 = vor.u32 %v1569, %v1567
      %v1571 = vrot.slane %v1570, 4
      %v1573 = vshll.u32 %v540, 16
      %v1575 = vrot.slane %v1573, 5
      %v1576 = vsel %vm1506, %v1571, %v1575
      %v1577 = vrot.slane %v711, 4
      %v1578 = vrot.slane %v714, 5
      %v1579 = vor.u32 %v1577, %v1578
      %v1580 = vrot.slane %v1579, 4
      %v1581 = vrot.slane %v723, 5
      %v1582 = vsel %vm1506, %v1580, %v1581
      %v1583 = vrot.slane %v720, 4
      %v1584 = vor.u32 %v1583, %v1581
      %v1585 = vrot.slane %v1584, 4
      %v1587 = vshll.u32 %v544, 16
      %v1589 = vrot.slane %v1587, 5
      %v1590 = vsel %vm1506, %v1585, %v1589
      %v1591 = vrot.slane %v733, 4
      %v1592 = vrot.slane %v736, 5
      %v1593 = vor.u32 %v1591, %v1592
      %v1594 = vrot.slane %v1593, 4
      %v1595 = vrot.slane %v745, 5
      %v1596 = vsel %vm1506, %v1594, %v1595
      %v1597 = vrot.slane %v742, 4
      %v1598 = vor.u32 %v1597, %v1595
      %v1599 = vrot.slane %v1598, 4
      %v1601 = vshll.u32 %v548, 16
      %v1603 = vrot.slane %v1601, 5
      %v1604 = vsel %vm1506, %v1599, %v1603
      %v1605 = vrot.slane %v755, 4
      %v1606 = vrot.slane %v758, 5
      %v1607 = vor.u32 %v1605, %v1606
      %v1608 = vrot.slane %v1607, 4
      %v1609 = vrot.slane %v767, 5
      %v1610 = vsel %vm1506, %v1608, %v1609
      %v1611 = vrot.slane %v764, 4
      %v1612 = vor.u32 %v1611, %v1609
      %v1613 = vrot.slane %v1612, 4
      %v1615 = vshll.u32 %v552, 16
      %v1617 = vrot.slane %v1615, 5
      %v1618 = vsel %vm1506, %v1613, %v1617
      %v1619 = vrot.slane %v777, 4
      %v1620 = vrot.slane %v780, 5
      %v1621 = vor.u32 %v1619, %v1620
      %v1622 = vrot.slane %v1621, 4
      %v1623 = vrot.slane %v789, 5
      %v1624 = vsel %vm1506, %v1622, %v1623
      %v1625 = vrot.slane %v786, 4
      %v1626 = vor.u32 %v1625, %v1623
      %v1627 = vrot.slane %v1626, 4
      %v1629 = vshll.u32 %v556, 16
      %v1631 = vrot.slane %v1629, 5
      %v1632 = vsel %vm1506, %v1627, %v1631
      %v1633 = vrot.slane %v799, 4
      %v1634 = vrot.slane %v802, 5
      %v1635 = vor.u32 %v1633, %v1634
      %v1636 = vrot.slane %v1635, 4
      %v1637 = vrot.slane %v811, 5
      %v1638 = vsel %vm1506, %v1636, %v1637
      %v1639 = vrot.slane %v808, 4
      %v1640 = vor.u32 %v1639, %v1637
      %v1641 = vrot.slane %v1640, 4
      %v1643 = vshll.u32 %v560, 16
      %v1645 = vrot.slane %v1643, 5
      %v1646 = vsel %vm1506, %v1641, %v1645
      %v1647 = vrot.slane %v821, 4
      %v1648 = vrot.slane %v824, 5
      %v1649 = vor.u32 %v1647, %v1648
      %v1650 = vrot.slane %v1649, 4
      %v1651 = vrot.slane %v833, 5
      %v1652 = vsel %vm1506, %v1650, %v1651
      %v1653 = vrot.slane %v830, 4
      %v1654 = vor.u32 %v1653, %v1651
      %v1655 = vrot.slane %v1654, 4
      %v1657 = vshll.u32 %v564, 16
      %v1659 = vrot.slane %v1657, 5
      %v1660 = vsel %vm1506, %v1655, %v1659
      %v1661 = vrot.slane %v843, 4
      %v1662 = vrot.slane %v846, 5
      %v1663 = vor.u32 %v1661, %v1662
      %v1664 = vrot.slane %v1663, 4
      %v1665 = vrot.slane %v855, 5
      %v1666 = vsel %vm1506, %v1664, %v1665
      %v1667 = vrot.slane %v852, 4
      %v1668 = vor.u32 %v1667, %v1665
      %v1669 = vrot.slane %v1668, 4
      %v1671 = vshll.u32 %v568, 16
      %v1673 = vrot.slane %v1671, 5
      %v1674 = vsel %vm1506, %v1669, %v1673
      %v1675 = vrot.slane %v865, 4
      %v1676 = vrot.slane %v868, 5
      %v1677 = vor.u32 %v1675, %v1676
      %v1678 = vrot.slane %v1677, 4
      %v1679 = vrot.slane %v877, 5
      %v1680 = vsel %vm1506, %v1678, %v1679
      %v1681 = vrot.slane %v874, 4
      %v1682 = vor.u32 %v1681, %v1679
      %v1683 = vrot.slane %v1682, 4
      %v1685 = vshll.u32 %v572, 16
      %v1687 = vrot.slane %v1685, 5
      %v1688 = vsel %vm1506, %v1683, %v1687
      %v1689 = vrot.slane %v887, 4
      %v1690 = vrot.slane %v890, 5
      %v1691 = vor.u32 %v1689, %v1690
      %v1692 = vrot.slane %v1691, 4
      %v1693 = vrot.slane %v899, 5
      %v1694 = vsel %vm1506, %v1692, %v1693
      %v1695 = vrot.slane %v896, 4
      %v1696 = vor.u32 %v1695, %v1693
      %v1697 = vrot.slane %v1696, 4
      %v1699 = vshll.u32 %v576, 16
      %v1701 = vrot.slane %v1699, 5
      %v1702 = vsel %vm1506, %v1697, %v1701
      %v1703 = vrot.slane %v909, 4
      %v1704 = vrot.slane %v912, 5
      %v1705 = vor.u32 %v1703, %v1704
      %v1706 = vrot.slane %v1705, 4
      %v1707 = vrot.slane %v921, 5
      %v1708 = vsel %vm1506, %v1706, %v1707
      %v1709 = vrot.slane %v918, 4
      %v1710 = vor.u32 %v1709, %v1707
      %v1711 = vrot.slane %v1710, 4
      %v1713 = vshll.u32 %v580, 16
      %v1715 = vrot.slane %v1713, 5
      %v1716 = vsel %vm1506, %v1711, %v1715
      %v1717 = vrot.slane %v931, 4
      %v1718 = vrot.slane %v934, 5
      %v1719 = vor.u32 %v1717, %v1718
      %v1720 = vrot.slane %v1719, 4
      %v1721 = vrot.slane %v943, 5
      %v1722 = vsel %vm1506, %v1720, %v1721
      %v1723 = vrot.slane %v940, 4
      %v1724 = vor.u32 %v1723, %v1721
      %v1725 = vrot.slane %v1724, 4
      %v1727 = vshll.u32 %v584, 16
      %v1729 = vrot.slane %v1727, 5
      %v1730 = vsel %vm1506, %v1725, %v1729
      %s1731 = scalar_lea.vmem %s1, 4
      %v1732 = vld [vmem:[%s1731] sm:$0x3]
      %v1733 = vunpack.c.l.b16 %v1512
      %v1734 = vunpack.c.l.b16 %v1520
      %v1735 = vunpack.c.l.b16 %v1526
      %v1736 = vunpack.c.l.b16 %v1534
      %v1737 = vunpack.c.l.b16 %v1540
      %v1738 = vunpack.c.l.b16 %v1548
      %v1739 = vunpack.c.l.b16 %v1554
      %v1740 = vunpack.c.l.b16 %v1562
      %v1741 = vunpack.c.l.b16 %v1568
      %v1742 = vunpack.c.l.b16 %v1576
      %v1743 = vunpack.c.l.b16 %v1582
      %v1744 = vunpack.c.l.b16 %v1590
      %v1745 = vunpack.c.l.b16 %v1596
      %v1746 = vunpack.c.l.b16 %v1604
      %v1747 = vunpack.c.l.b16 %v1610
      %v1748 = vunpack.c.l.b16 %v1618
      %v1749 = vunpack.c.l.b16 %v1624
      %v1750 = vunpack.c.l.b16 %v1632
      %v1751 = vunpack.c.l.b16 %v1638
      %v1752 = vunpack.c.l.b16 %v1646
      %v1753 = vunpack.c.l.b16 %v1652
      %v1754 = vunpack.c.l.b16 %v1660
      %v1755 = vunpack.c.l.b16 %v1666
      %v1756 = vunpack.c.l.b16 %v1674
      %v1757 = vunpack.c.l.b16 %v1680
      %v1758 = vunpack.c.l.b16 %v1688
      %v1759 = vunpack.c.l.b16 %v1694
      %v1760 = vunpack.c.l.b16 %v1702
      %v1761 = vunpack.c.l.b16 %v1708
      %v1762 = vunpack.c.l.b16 %v1716
      %v1763 = vunpack.c.l.b16 %v1722
      %v1764 = vunpack.c.l.b16 %v1730
      %v1765 = vpack.c.b16 %v1734, %v1733
      %v1766 = vpack.c.b16 %v1736, %v1735
      %v1767 = vpack.c.b16 %v1738, %v1737
      %v1768 = vpack.c.b16 %v1740, %v1739
      %v1769 = vpack.c.b16 %v1742, %v1741
      %v1770 = vpack.c.b16 %v1744, %v1743
      %v1771 = vpack.c.b16 %v1746, %v1745
      %v1772 = vpack.c.b16 %v1748, %v1747
      %v1773 = vpack.c.b16 %v1750, %v1749
      %v1774 = vpack.c.b16 %v1752, %v1751
      %v1775 = vpack.c.b16 %v1754, %v1753
      %v1776 = vpack.c.b16 %v1756, %v1755
      %v1777 = vpack.c.b16 %v1758, %v1757
      %v1778 = vpack.c.b16 %v1760, %v1759
      %v1779 = vpack.c.b16 %v1762, %v1761
      %v1780 = vpack.c.b16 %v1764, %v1763
      %v1782 = vsel %vm1030, %v1765, 0
      %v1785 = vsel %vm1030, %v1766, 0
      %v1788 = vsel %vm1030, %v1767, 0
      %v1791 = vsel %vm1030, %v1768, 0
      %v1794 = vsel %vm1030, %v1769, 0
      %v1797 = vsel %vm1030, %v1770, 0
      %v1800 = vsel %vm1030, %v1771, 0
      %v1803 = vsel %vm1030, %v1772, 0
      %v1806 = vsel %vm1030, %v1773, 0
      %v1809 = vsel %vm1030, %v1774, 0
      %v1812 = vsel %vm1030, %v1775, 0
      %v1815 = vsel %vm1030, %v1776, 0
      %v1818 = vsel %vm1030, %v1777, 0
      %v1821 = vsel %vm1030, %v1778, 0
      %v1824 = vsel %vm1030, %v1779, 0
      %v1827 = vsel %vm1030, %v1780, 0
      %v1830 = vsel %vm1079, %v1732, 0
      %1832 = vmatprep.subr.bf16.mxu0 0
      %1833 = vmatpush1.bf16.msra.mxu0 %v1830
      %1834 = vmatprep.subr.bf16.mxu0 0
      %1835 = vmatpush1.bf16.msra.mxu0 0
      %1836 = vmatprep.subr.bf16.mxu0 0
      %1837 = vmatpush1.bf16.msra.mxu0 0
      %1838 = vmatprep.subr.bf16.mxu0 0
      %1839 = vmatpush1.bf16.msra.mxu0 0
      %1840 = vmatprep.subr.bf16.mxu0 0
      %1841 = vmatpush1.bf16.msra.mxu0 0
      %1842 = vmatprep.subr.bf16.mxu0 0
      %1843 = vmatpush1.bf16.msra.mxu0 0
      %1844 = vmatprep.subr.bf16.mxu0 0
      %1845 = vmatpush1.bf16.msra.mxu0 0
      %1846 = vmatprep.subr.bf16.mxu0 0
      %1847 = vmatpush1.bf16.msra.mxu0 0
      %1848 = vmatprep.subr.bf16.mxu0 0
      %1849 = vmatpush1.bf16.msra.mxu0 0
      %1850 = vmatprep.subr.bf16.mxu0 0
      %1851 = vmatpush1.bf16.msra.mxu0 0
      %1852 = vmatprep.subr.bf16.mxu0 0
      %1853 = vmatpush1.bf16.msra.mxu0 0
      %1854 = vmatprep.subr.bf16.mxu0 0
      %1855 = vmatpush1.bf16.msra.mxu0 0
      %1856 = vmatprep.subr.bf16.mxu0 0
      %1857 = vmatpush1.bf16.msra.mxu0 0
      %1858 = vmatprep.subr.bf16.mxu0 0
      %1859 = vmatpush1.bf16.msra.mxu0 0
      %1860 = vmatprep.subr.bf16.mxu0 0
      %1861 = vmatpush1.bf16.msra.mxu0 0
      %1862 = vmatprep.subr.bf16.mxu0 0
      %1863 = vmatpush1.bf16.msra.mxu0 0
      %1864 = vmatprep.mubr.bf16.mxu0 0
      %1865 = vmatmul.mubr.bf16.gmra.mrb[0].mxu0 %v1782
      %v1866 = vpop.f32.mrb[0].mxu0
      %v1867 = vadd.f32 0.0, %v1866
      %v1868 = vpop.f32.mrb[0].mxu0
      %v1869 = vpop.f32.mrb[0].mxu0
      %v1870 = vadd.f32 0.0, %v1869
      %v1871 = vpop.f32.mrb[0].mxu0
      %1872 = vmatprep.mubr.bf16.mxu0 0
      %1873 = vmatmul.mubr.bf16.gmra.mrb[0].mxu0 %v1785
      %v1874 = vpop.f32.mrb[0].mxu0
      %v1875 = vadd.f32 0.0, %v1874
      %v1876 = vpop.f32.mrb[0].mxu0
      %v1877 = vpop.f32.mrb[0].mxu0
      %v1878 = vadd.f32 0.0, %v1877
      %v1879 = vpop.f32.mrb[0].mxu0
      %1880 = vmatprep.mubr.bf16.mxu0 0
      %1881 = vmatmul.mubr.bf16.gmra.mrb[0].mxu0 %v1788
      %v1882 = vpop.f32.mrb[0].mxu0
      %v1883 = vadd.f32 0.0, %v1882
      %v1884 = vpop.f32.mrb[0].mxu0
      %v1885 = vpop.f32.mrb[0].mxu0
      %v1886 = vadd.f32 0.0, %v1885
      %v1887 = vpop.f32.mrb[0].mxu0
      %1888 = vmatprep.mubr.bf16.mxu0 0
      %1889 = vmatmul.mubr.bf16.gmra.mrb[0].mxu0 %v1791
      %v1890 = vpop.f32.mrb[0].mxu0
      %v1891 = vadd.f32 0.0, %v1890
      %v1892 = vpop.f32.mrb[0].mxu0
      %v1893 = vpop.f32.mrb[0].mxu0
      %v1894 = vadd.f32 0.0, %v1893
      %v1895 = vpop.f32.mrb[0].mxu0
      %1896 = vmatprep.mubr.bf16.mxu0 0
      %1897 = vmatmul.mubr.bf16.gmra.mrb[0].mxu0 %v1794
      %v1898 = vpop.f32.mrb[0].mxu0
      %v1899 = vadd.f32 0.0, %v1898
      %v1900 = vpop.f32.mrb[0].mxu0
      %v1901 = vpop.f32.mrb[0].mxu0
      %v1902 = vadd.f32 0.0, %v1901
      %v1903 = vpop.f32.mrb[0].mxu0
      %1904 = vmatprep.mubr.bf16.mxu0 0
      %1905 = vmatmul.mubr.bf16.gmra.mrb[0].mxu0 %v1797
      %v1906 = vpop.f32.mrb[0].mxu0
      %v1907 = vadd.f32 0.0, %v1906
      %v1908 = vpop.f32.mrb[0].mxu0
      %v1909 = vpop.f32.mrb[0].mxu0
      %v1910 = vadd.f32 0.0, %v1909
      %v1911 = vpop.f32.mrb[0].mxu0
      %1912 = vmatprep.mubr.bf16.mxu0 0
      %1913 = vmatmul.mubr.bf16.gmra.mrb[0].mxu0 %v1800
      %v1914 = vpop.f32.mrb[0].mxu0
      %v1915 = vadd.f32 0.0, %v1914
      %v1916 = vpop.f32.mrb[0].mxu0
      %v1917 = vpop.f32.mrb[0].mxu0
      %v1918 = vadd.f32 0.0, %v1917
      %v1919 = vpop.f32.mrb[0].mxu0
      %1920 = vmatprep.mubr.bf16.mxu0 0
      %1921 = vmatmul.mubr.bf16.gmra.mrb[0].mxu0 %v1803
      %v1922 = vpop.f32.mrb[0].mxu0
      %v1923 = vadd.f32 0.0, %v1922
      %v1924 = vpop.f32.mrb[0].mxu0
      %v1925 = vpop.f32.mrb[0].mxu0
      %v1926 = vadd.f32 0.0, %v1925
      %v1927 = vpop.f32.mrb[0].mxu0
      %1928 = vmatprep.mubr.bf16.mxu0 0
      %1929 = vmatmul.mubr.bf16.gmra.mrb[0].mxu0 %v1806
      %v1930 = vpop.f32.mrb[0].mxu0
      %v1931 = vadd.f32 0.0, %v1930
      %v1932 = vpop.f32.mrb[0].mxu0
      %v1933 = vpop.f32.mrb[0].mxu0
      %v1934 = vadd.f32 0.0, %v1933
      %v1935 = vpop.f32.mrb[0].mxu0
      %1936 = vmatprep.mubr.bf16.mxu0 0
      %1937 = vmatmul.mubr.bf16.gmra.mrb[0].mxu0 %v1809
      %v1938 = vpop.f32.mrb[0].mxu0
      %v1939 = vadd.f32 0.0, %v1938
      %v1940 = vpop.f32.mrb[0].mxu0
      %v1941 = vpop.f32.mrb[0].mxu0
      %v1942 = vadd.f32 0.0, %v1941
      %v1943 = vpop.f32.mrb[0].mxu0
      %1944 = vmatprep.mubr.bf16.mxu0 0
      %1945 = vmatmul.mubr.bf16.gmra.mrb[0].mxu0 %v1812
      %v1946 = vpop.f32.mrb[0].mxu0
      %v1947 = vadd.f32 0.0, %v1946
      %v1948 = vpop.f32.mrb[0].mxu0
      %v1949 = vpop.f32.mrb[0].mxu0
      %v1950 = vadd.f32 0.0, %v1949
      %v1951 = vpop.f32.mrb[0].mxu0
      %1952 = vmatprep.mubr.bf16.mxu0 0
      %1953 = vmatmul.mubr.bf16.gmra.mrb[0].mxu0 %v1815
      %v1954 = vpop.f32.mrb[0].mxu0
      %v1955 = vadd.f32 0.0, %v1954
      %v1956 = vpop.f32.mrb[0].mxu0
      %v1957 = vpop.f32.mrb[0].mxu0
      %v1958 = vadd.f32 0.0, %v1957
      %v1959 = vpop.f32.mrb[0].mxu0
      %1960 = vmatprep.mubr.bf16.mxu0 0
      %1961 = vmatmul.mubr.bf16.gmra.mrb[0].mxu0 %v1818
      %v1962 = vpop.f32.mrb[0].mxu0
      %v1963 = vadd.f32 0.0, %v1962
      %v1964 = vpop.f32.mrb[0].mxu0
      %v1965 = vpop.f32.mrb[0].mxu0
      %v1966 = vadd.f32 0.0, %v1965
      %v1967 = vpop.f32.mrb[0].mxu0
      %1968 = vmatprep.mubr.bf16.mxu0 0
      %1969 = vmatmul.mubr.bf16.gmra.mrb[0].mxu0 %v1821
      %v1970 = vpop.f32.mrb[0].mxu0
      %v1971 = vadd.f32 0.0, %v1970
      %v1972 = vpop.f32.mrb[0].mxu0
      %v1973 = vpop.f32.mrb[0].mxu0
      %v1974 = vadd.f32 0.0, %v1973
      %v1975 = vpop.f32.mrb[0].mxu0
      %1976 = vmatprep.mubr.bf16.mxu0 0
      %1977 = vmatmul.mubr.bf16.gmra.mrb[0].mxu0 %v1824
      %v1978 = vpop.f32.mrb[0].mxu0
      %v1979 = vadd.f32 0.0, %v1978
      %v1980 = vpop.f32.mrb[0].mxu0
      %v1981 = vpop.f32.mrb[0].mxu0
      %v1982 = vadd.f32 0.0, %v1981
      %v1983 = vpop.f32.mrb[0].mxu0
      %1984 = vmatprep.mubr.bf16.mxu0 0
      %1985 = vmatmul.mubr.bf16.gmra.mrb[0].mxu0 %v1827
      %v1986 = vpop.f32.mrb[0].mxu0
      %v1987 = vadd.f32 0.0, %v1986
      %v1988 = vpop.f32.mrb[0].mxu0
      %v1989 = vpop.f32.mrb[0].mxu0
      %v1990 = vadd.f32 0.0, %v1989
      %v1991 = vpop.f32.mrb[0].mxu0
      %1992 = vdwg.mxu0
      %v1993 = vadd.f32 %v1378, %v1867
      %v1994 = vadd.f32 %v1381, %v1870
      %v1995 = vadd.f32 %v1386, %v1875
      %v1996 = vadd.f32 %v1389, %v1878
      %v1997 = vadd.f32 %v1394, %v1883
      %v1998 = vadd.f32 %v1397, %v1886
      %v1999 = vadd.f32 %v1402, %v1891
      %v2000 = vadd.f32 %v1405, %v1894
      %v2001 = vadd.f32 %v1410, %v1899
      %v2002 = vadd.f32 %v1413, %v1902
      %v2003 = vadd.f32 %v1418, %v1907
      %v2004 = vadd.f32 %v1421, %v1910
      %v2005 = vadd.f32 %v1426, %v1915
      %v2006 = vadd.f32 %v1429, %v1918
      %v2007 = vadd.f32 %v1434, %v1923
      %v2008 = vadd.f32 %v1437, %v1926
      %v2009 = vadd.f32 %v1442, %v1931
      %v2010 = vadd.f32 %v1445, %v1934
      %v2011 = vadd.f32 %v1450, %v1939
      %v2012 = vadd.f32 %v1453, %v1942
      %v2013 = vadd.f32 %v1458, %v1947
      %v2014 = vadd.f32 %v1461, %v1950
      %v2015 = vadd.f32 %v1466, %v1955
      %v2016 = vadd.f32 %v1469, %v1958
      %v2017 = vadd.f32 %v1474, %v1963
      %v2018 = vadd.f32 %v1477, %v1966
      %v2019 = vadd.f32 %v1482, %v1971
      %v2020 = vadd.f32 %v1485, %v1974
      %v2021 = vadd.f32 %v1490, %v1979
      %v2022 = vadd.f32 %v1493, %v1982
      %v2023 = vadd.f32 %v1498, %v1987
      %v2024 = vadd.f32 %v1501, %v1990
      %v2026 = vshrl.u32 %v585, 16
      %v2028 = vrot.slane %v2026, 7
      %v2029 = vrot.slane %v2028, 4
      %v2031 = vshrl.u32 %v586, 16
      %v2033 = vrot.slane %v2031, 7
      %v2034 = vshll.u32 %v586, 16
      %v2036 = vor.u32 %v2033, %v2034
      %v2037 = vsel %vm594, %v2029, %v2036
      %v2038 = vrot.slane %v2033, 4
      %v2040 = vshrl.u32 %v587, 16
      %v2042 = vrot.slane %v2040, 7
      %v2043 = vshll.u32 %v587, 16
      %v2045 = vor.u32 %v2042, %v2043
      %v2046 = vsel %vm594, %v2038, %v2045
      %s2047 = scalar_lea.vmem %s1, 6
      %v2048 = vld [vmem:[%s2047] sm:$0x3]
      %v2049 = vunpack.c.l.b16 %v2037
      %v2050 = vunpack.c.l.b16 %v2046
      %v2051 = vpack.c.b16 %v2050, %v2049
      %v2053 = vsel %vm1030, %v2051, 0
      %v2056 = vsel %vm1079, %v2048, 0
      %2058 = vmatprep.subr.bf16.mxu0 0
      %2059 = vmatpush1.bf16.msra.mxu0 %v2056
      %2060 = vmatprep.subr.bf16.mxu0 0
      %2061 = vmatpush1.bf16.msra.mxu0 0
      %2062 = vmatprep.subr.bf16.mxu0 0
      %2063 = vmatpush1.bf16.msra.mxu0 0
      %2064 = vmatprep.subr.bf16.mxu0 0
      %2065 = vmatpush1.bf16.msra.mxu0 0
      %2066 = vmatprep.subr.bf16.mxu0 0
      %2067 = vmatpush1.bf16.msra.mxu0 0
      %2068 = vmatprep.subr.bf16.mxu0 0
      %2069 = vmatpush1.bf16.msra.mxu0 0
      %2070 = vmatprep.subr.bf16.mxu0 0
      %2071 = vmatpush1.bf16.msra.mxu0 0
      %2072 = vmatprep.subr.bf16.mxu0 0
      %2073 = vmatpush1.bf16.msra.mxu0 0
      %2074 = vmatprep.subr.bf16.mxu0 0
      %2075 = vmatpush1.bf16.msra.mxu0 0
      %2076 = vmatprep.subr.bf16.mxu0 0
      %2077 = vmatpush1.bf16.msra.mxu0 0
      %2078 = vmatprep.subr.bf16.mxu0 0
      %2079 = vmatpush1.bf16.msra.mxu0 0
      %2080 = vmatprep.subr.bf16.mxu0 0
      %2081 = vmatpush1.bf16.msra.mxu0 0
      %2082 = vmatprep.subr.bf16.mxu0 0
      %2083 = vmatpush1.bf16.msra.mxu0 0
      %2084 = vmatprep.subr.bf16.mxu0 0
      %2085 = vmatpush1.bf16.msra.mxu0 0
      %2086 = vmatprep.subr.bf16.mxu0 0
      %2087 = vmatpush1.bf16.msra.mxu0 0
      %2088 = vmatprep.subr.bf16.mxu0 0
      %2089 = vmatpush1.bf16.msra.mxu0 0
      %2090 = vmatprep.mubr.bf16.mxu0 0
      %2091 = vmatmul.mubr.bf16.gmra.mrb[0].mxu0 %v1296
      %v2092 = vpop.f32.mrb[0].mxu0
      %v2093 = vadd.f32 0.0, %v2092
      %v2094 = vpop.f32.mrb[0].mxu0
      %v2095 = vpop.f32.mrb[0].mxu0
      %v2096 = vadd.f32 0.0, %v2095
      %v2097 = vpop.f32.mrb[0].mxu0
      %2098 = vmatprep.mubr.bf16.mxu0 0
      %2099 = vmatmul.mubr.bf16.gmra.mrb[0].mxu0 %v1299
      %v2100 = vpop.f32.mrb[0].mxu0
      %v2101 = vadd.f32 0.0, %v2100
      %v2102 = vpop.f32.mrb[0].mxu0
      %v2103 = vpop.f32.mrb[0].mxu0
      %v2104 = vadd.f32 0.0, %v2103
      %v2105 = vpop.f32.mrb[0].mxu0
      %2106 = vmatprep.mubr.bf16.mxu0 0
      %2107 = vmatmul.mubr.bf16.gmra.mrb[0].mxu0 %v1302
      %v2108 = vpop.f32.mrb[0].mxu0
      %v2109 = vadd.f32 0.0, %v2108
      %v2110 = vpop.f32.mrb[0].mxu0
      %v2111 = vpop.f32.mrb[0].mxu0
      %v2112 = vadd.f32 0.0, %v2111
      %v2113 = vpop.f32.mrb[0].mxu0
      %2114 = vmatprep.mubr.bf16.mxu0 0
      %2115 = vmatmul.mubr.bf16.gmra.mrb[0].mxu0 %v1305
      %v2116 = vpop.f32.mrb[0].mxu0
      %v2117 = vadd.f32 0.0, %v2116
      %v2118 = vpop.f32.mrb[0].mxu0
      %v2119 = vpop.f32.mrb[0].mxu0
      %v2120 = vadd.f32 0.0, %v2119
      %v2121 = vpop.f32.mrb[0].mxu0
      %2122 = vmatprep.mubr.bf16.mxu0 0
      %2123 = vmatmul.mubr.bf16.gmra.mrb[0].mxu0 %v1308
      %v2124 = vpop.f32.mrb[0].mxu0
      %v2125 = vadd.f32 0.0, %v2124
      %v2126 = vpop.f32.mrb[0].mxu0
      %v2127 = vpop.f32.mrb[0].mxu0
      %v2128 = vadd.f32 0.0, %v2127
      %v2129 = vpop.f32.mrb[0].mxu0
      %2130 = vmatprep.mubr.bf16.mxu0 0
      %2131 = vmatmul.mubr.bf16.gmra.mrb[0].mxu0 %v1311
      %v2132 = vpop.f32.mrb[0].mxu0
      %v2133 = vadd.f32 0.0, %v2132
      %v2134 = vpop.f32.mrb[0].mxu0
      %v2135 = vpop.f32.mrb[0].mxu0
      %v2136 = vadd.f32 0.0, %v2135
      %v2137 = vpop.f32.mrb[0].mxu0
      %2138 = vmatprep.mubr.bf16.mxu0 0
      %2139 = vmatmul.mubr.bf16.gmra.mrb[0].mxu0 %v1314
      %v2140 = vpop.f32.mrb[0].mxu0
      %v2141 = vadd.f32 0.0, %v2140
      %v2142 = vpop.f32.mrb[0].mxu0
      %v2143 = vpop.f32.mrb[0].mxu0
      %v2144 = vadd.f32 0.0, %v2143
      %v2145 = vpop.f32.mrb[0].mxu0
      %2146 = vmatprep.mubr.bf16.mxu0 0
      %2147 = vmatmul.mubr.bf16.gmra.mrb[0].mxu0 %v1317
      %v2148 = vpop.f32.mrb[0].mxu0
      %v2149 = vadd.f32 0.0, %v2148
      %v2150 = vpop.f32.mrb[0].mxu0
      %v2151 = vpop.f32.mrb[0].mxu0
      %v2152 = vadd.f32 0.0, %v2151
      %v2153 = vpop.f32.mrb[0].mxu0
      %2154 = vmatprep.mubr.bf16.mxu0 0
      %2155 = vmatmul.mubr.bf16.gmra.mrb[0].mxu0 %v1320
      %v2156 = vpop.f32.mrb[0].mxu0
      %v2157 = vadd.f32 0.0, %v2156
      %v2158 = vpop.f32.mrb[0].mxu0
      %v2159 = vpop.f32.mrb[0].mxu0
      %v2160 = vadd.f32 0.0, %v2159
      %v2161 = vpop.f32.mrb[0].mxu0
      %2162 = vmatprep.mubr.bf16.mxu0 0
      %2163 = vmatmul.mubr.bf16.gmra.mrb[0].mxu0 %v1323
      %v2164 = vpop.f32.mrb[0].mxu0
      %v2165 = vadd.f32 0.0, %v2164
      %v2166 = vpop.f32.mrb[0].mxu0
      %v2167 = vpop.f32.mrb[0].mxu0
      %v2168 = vadd.f32 0.0, %v2167
      %v2169 = vpop.f32.mrb[0].mxu0
      %2170 = vmatprep.mubr.bf16.mxu0 0
      %2171 = vmatmul.mubr.bf16.gmra.mrb[0].mxu0 %v1326
      %v2172 = vpop.f32.mrb[0].mxu0
      %v2173 = vadd.f32 0.0, %v2172
      %v2174 = vpop.f32.mrb[0].mxu0
      %v2175 = vpop.f32.mrb[0].mxu0
      %v2176 = vadd.f32 0.0, %v2175
      %v2177 = vpop.f32.mrb[0].mxu0
      %2178 = vmatprep.mubr.bf16.mxu0 0
      %2179 = vmatmul.mubr.bf16.gmra.mrb[0].mxu0 %v1329
      %v2180 = vpop.f32.mrb[0].mxu0
      %v2181 = vadd.f32 0.0, %v2180
      %v2182 = vpop.f32.mrb[0].mxu0
      %v2183 = vpop.f32.mrb[0].mxu0
      %v2184 = vadd.f32 0.0, %v2183
      %v2185 = vpop.f32.mrb[0].mxu0
      %2186 = vmatprep.mubr.bf16.mxu0 0
      %2187 = vmatmul.mubr.bf16.gmra.mrb[0].mxu0 %v1332
      %v2188 = vpop.f32.mrb[0].mxu0
      %v2189 = vadd.f32 0.0, %v2188
      %v2190 = vpop.f32.mrb[0].mxu0
      %v2191 = vpop.f32.mrb[0].mxu0
      %v2192 = vadd.f32 0.0, %v2191
      %v2193 = vpop.f32.mrb[0].mxu0
      %2194 = vmatprep.mubr.bf16.mxu0 0
      %2195 = vmatmul.mubr.bf16.gmra.mrb[0].mxu0 %v1335
      %v2196 = vpop.f32.mrb[0].mxu0
      %v2197 = vadd.f32 0.0, %v2196
      %v2198 = vpop.f32.mrb[0].mxu0
      %v2199 = vpop.f32.mrb[0].mxu0
      %v2200 = vadd.f32 0.0, %v2199
      %v2201 = vpop.f32.mrb[0].mxu0
      %2202 = vmatprep.mubr.bf16.mxu0 0
      %2203 = vmatmul.mubr.bf16.gmra.mrb[0].mxu0 %v1338
      %v2204 = vpop.f32.mrb[0].mxu0
      %v2205 = vadd.f32 0.0, %v2204
      %v2206 = vpop.f32.mrb[0].mxu0
      %v2207 = vpop.f32.mrb[0].mxu0
      %v2208 = vadd.f32 0.0, %v2207
      %v2209 = vpop.f32.mrb[0].mxu0
      %2210 = vmatprep.mubr.bf16.mxu0 0
      %2211 = vmatmul.mubr.bf16.gmra.mrb[0].mxu0 %v2053
      %v2212 = vpop.f32.mrb[0].mxu0
      %v2213 = vadd.f32 0.0, %v2212
      %v2214 = vpop.f32.mrb[0].mxu0
      %v2215 = vpop.f32.mrb[0].mxu0
      %v2216 = vadd.f32 0.0, %v2215
      %v2217 = vpop.f32.mrb[0].mxu0
      %2218 = vdwg.mxu0
      %v2219 = vadd.f32 %v1993, %v2093
      %v2220 = vadd.f32 %v1994, %v2096
      %v2221 = vadd.f32 %v1995, %v2101
      %v2222 = vadd.f32 %v1996, %v2104
      %v2223 = vadd.f32 %v1997, %v2109
      %v2224 = vadd.f32 %v1998, %v2112
      %v2225 = vadd.f32 %v1999, %v2117
      %v2226 = vadd.f32 %v2000, %v2120
      %v2227 = vadd.f32 %v2001, %v2125
      %v2228 = vadd.f32 %v2002, %v2128
      %v2229 = vadd.f32 %v2003, %v2133
      %v2230 = vadd.f32 %v2004, %v2136
      %v2231 = vadd.f32 %v2005, %v2141
      %v2232 = vadd.f32 %v2006, %v2144
      %v2233 = vadd.f32 %v2007, %v2149
      %v2234 = vadd.f32 %v2008, %v2152
      %v2235 = vadd.f32 %v2009, %v2157
      %v2236 = vadd.f32 %v2010, %v2160
      %v2237 = vadd.f32 %v2011, %v2165
      %v2238 = vadd.f32 %v2012, %v2168
      %v2239 = vadd.f32 %v2013, %v2173
      %v2240 = vadd.f32 %v2014, %v2176
      %v2241 = vadd.f32 %v2015, %v2181
      %v2242 = vadd.f32 %v2016, %v2184
      %v2243 = vadd.f32 %v2017, %v2189
      %v2244 = vadd.f32 %v2018, %v2192
      %v2245 = vadd.f32 %v2019, %v2197
      %v2246 = vadd.f32 %v2020, %v2200
      %v2247 = vadd.f32 %v2021, %v2205
      %v2248 = vadd.f32 %v2022, %v2208
      %v2249 = vadd.f32 %v2023, %v2213
      %v2250 = vadd.f32 %v2024, %v2216
      %s2251 = scalar_lea.vmem %s1, 8
      %v2252 = vld [vmem:[%s2251] sm:$0x3]
      %v2255 = vunpack.c.l.b16 %v586
      %v2256 = vunpack.c.l.b16 %v587
      %v2257 = vpack.c.b16 %v2256, %v2255
      %v2259 = vsel %vm1030, %v2257, 0
      %v2262 = vsel %vm1079, %v2252, 0
      %2264 = vmatprep.subr.bf16.mxu0 0
      %2265 = vmatpush1.bf16.msra.mxu0 %v2262
      %2266 = vmatprep.subr.bf16.mxu0 0
      %2267 = vmatpush1.bf16.msra.mxu0 0
      %2268 = vmatprep.subr.bf16.mxu0 0
      %2269 = vmatpush1.bf16.msra.mxu0 0
      %2270 = vmatprep.subr.bf16.mxu0 0
      %2271 = vmatpush1.bf16.msra.mxu0 0
      %2272 = vmatprep.subr.bf16.mxu0 0
      %2273 = vmatpush1.bf16.msra.mxu0 0
      %2274 = vmatprep.subr.bf16.mxu0 0
      %2275 = vmatpush1.bf16.msra.mxu0 0
      %2276 = vmatprep.subr.bf16.mxu0 0
      %2277 = vmatpush1.bf16.msra.mxu0 0
      %2278 = vmatprep.subr.bf16.mxu0 0
      %2279 = vmatpush1.bf16.msra.mxu0 0
      %2280 = vmatprep.subr.bf16.mxu0 0
      %2281 = vmatpush1.bf16.msra.mxu0 0
      %2282 = vmatprep.subr.bf16.mxu0 0
      %2283 = vmatpush1.bf16.msra.mxu0 0
      %2284 = vmatprep.subr.bf16.mxu0 0
      %2285 = vmatpush1.bf16.msra.mxu0 0
      %2286 = vmatprep.subr.bf16.mxu0 0
      %2287 = vmatpush1.bf16.msra.mxu0 0
      %2288 = vmatprep.subr.bf16.mxu0 0
      %2289 = vmatpush1.bf16.msra.mxu0 0
      %2290 = vmatprep.subr.bf16.mxu0 0
      %2291 = vmatpush1.bf16.msra.mxu0 0
      %2292 = vmatprep.subr.bf16.mxu0 0
      %2293 = vmatpush1.bf16.msra.mxu0 0
      %2294 = vmatprep.subr.bf16.mxu0 0
      %2295 = vmatpush1.bf16.msra.mxu0 0
      %2296 = vmatprep.mubr.bf16.mxu0 0
      %2297 = vmatmul.mubr.bf16.gmra.mrb[0].mxu0 %v1035
      %v2298 = vpop.f32.mrb[0].mxu0
      %v2299 = vadd.f32 0.0, %v2298
      %v2300 = vpop.f32.mrb[0].mxu0
      %v2301 = vpop.f32.mrb[0].mxu0
      %v2302 = vadd.f32 0.0, %v2301
      %v2303 = vpop.f32.mrb[0].mxu0
      %2304 = vmatprep.mubr.bf16.mxu0 0
      %2305 = vmatmul.mubr.bf16.gmra.mrb[0].mxu0 %v1038
      %v2306 = vpop.f32.mrb[0].mxu0
      %v2307 = vadd.f32 0.0, %v2306
      %v2308 = vpop.f32.mrb[0].mxu0
      %v2309 = vpop.f32.mrb[0].mxu0
      %v2310 = vadd.f32 0.0, %v2309
      %v2311 = vpop.f32.mrb[0].mxu0
      %2312 = vmatprep.mubr.bf16.mxu0 0
      %2313 = vmatmul.mubr.bf16.gmra.mrb[0].mxu0 %v1041
      %v2314 = vpop.f32.mrb[0].mxu0
      %v2315 = vadd.f32 0.0, %v2314
      %v2316 = vpop.f32.mrb[0].mxu0
      %v2317 = vpop.f32.mrb[0].mxu0
      %v2318 = vadd.f32 0.0, %v2317
      %v2319 = vpop.f32.mrb[0].mxu0
      %2320 = vmatprep.mubr.bf16.mxu0 0
      %2321 = vmatmul.mubr.bf16.gmra.mrb[0].mxu0 %v1044
      %v2322 = vpop.f32.mrb[0].mxu0
      %v2323 = vadd.f32 0.0, %v2322
      %v2324 = vpop.f32.mrb[0].mxu0
      %v2325 = vpop.f32.mrb[0].mxu0
      %v2326 = vadd.f32 0.0, %v2325
      %v2327 = vpop.f32.mrb[0].mxu0
      %2328 = vmatprep.mubr.bf16.mxu0 0
      %2329 = vmatmul.mubr.bf16.gmra.mrb[0].mxu0 %v1047
      %v2330 = vpop.f32.mrb[0].mxu0
      %v2331 = vadd.f32 0.0, %v2330
      %v2332 = vpop.f32.mrb[0].mxu0
      %v2333 = vpop.f32.mrb[0].mxu0
      %v2334 = vadd.f32 0.0, %v2333
      %v2335 = vpop.f32.mrb[0].mxu0
      %2336 = vmatprep.mubr.bf16.mxu0 0
      %2337 = vmatmul.mubr.bf16.gmra.mrb[0].mxu0 %v1050
      %v2338 = vpop.f32.mrb[0].mxu0
      %v2339 = vadd.f32 0.0, %v2338
      %v2340 = vpop.f32.mrb[0].mxu0
      %v2341 = vpop.f32.mrb[0].mxu0
      %v2342 = vadd.f32 0.0, %v2341
      %v2343 = vpop.f32.mrb[0].mxu0
      %2344 = vmatprep.mubr.bf16.mxu0 0
      %2345 = vmatmul.mubr.bf16.gmra.mrb[0].mxu0 %v1053
      %v2346 = vpop.f32.mrb[0].mxu0
      %v2347 = vadd.f32 0.0, %v2346
      %v2348 = vpop.f32.mrb[0].mxu0
      %v2349 = vpop.f32.mrb[0].mxu0
      %v2350 = vadd.f32 0.0, %v2349
      %v2351 = vpop.f32.mrb[0].mxu0
      %2352 = vmatprep.mubr.bf16.mxu0 0
      %2353 = vmatmul.mubr.bf16.gmra.mrb[0].mxu0 %v1056
      %v2354 = vpop.f32.mrb[0].mxu0
      %v2355 = vadd.f32 0.0, %v2354
      %v2356 = vpop.f32.mrb[0].mxu0
      %v2357 = vpop.f32.mrb[0].mxu0
      %v2358 = vadd.f32 0.0, %v2357
      %v2359 = vpop.f32.mrb[0].mxu0
      %2360 = vmatprep.mubr.bf16.mxu0 0
      %2361 = vmatmul.mubr.bf16.gmra.mrb[0].mxu0 %v1059
      %v2362 = vpop.f32.mrb[0].mxu0
      %v2363 = vadd.f32 0.0, %v2362
      %v2364 = vpop.f32.mrb[0].mxu0
      %v2365 = vpop.f32.mrb[0].mxu0
      %v2366 = vadd.f32 0.0, %v2365
      %v2367 = vpop.f32.mrb[0].mxu0
      %2368 = vmatprep.mubr.bf16.mxu0 0
      %2369 = vmatmul.mubr.bf16.gmra.mrb[0].mxu0 %v1062
      %v2370 = vpop.f32.mrb[0].mxu0
      %v2371 = vadd.f32 0.0, %v2370
      %v2372 = vpop.f32.mrb[0].mxu0
      %v2373 = vpop.f32.mrb[0].mxu0
      %v2374 = vadd.f32 0.0, %v2373
      %v2375 = vpop.f32.mrb[0].mxu0
      %2376 = vmatprep.mubr.bf16.mxu0 0
      %2377 = vmatmul.mubr.bf16.gmra.mrb[0].mxu0 %v1065
      %v2378 = vpop.f32.mrb[0].mxu0
      %v2379 = vadd.f32 0.0, %v2378
      %v2380 = vpop.f32.mrb[0].mxu0
      %v2381 = vpop.f32.mrb[0].mxu0
      %v2382 = vadd.f32 0.0, %v2381
      %v2383 = vpop.f32.mrb[0].mxu0
      %2384 = vmatprep.mubr.bf16.mxu0 0
      %2385 = vmatmul.mubr.bf16.gmra.mrb[0].mxu0 %v1068
      %v2386 = vpop.f32.mrb[0].mxu0
      %v2387 = vadd.f32 0.0, %v2386
      %v2388 = vpop.f32.mrb[0].mxu0
      %v2389 = vpop.f32.mrb[0].mxu0
      %v2390 = vadd.f32 0.0, %v2389
      %v2391 = vpop.f32.mrb[0].mxu0
      %2392 = vmatprep.mubr.bf16.mxu0 0
      %2393 = vmatmul.mubr.bf16.gmra.mrb[0].mxu0 %v1071
      %v2394 = vpop.f32.mrb[0].mxu0
      %v2395 = vadd.f32 0.0, %v2394
      %v2396 = vpop.f32.mrb[0].mxu0
      %v2397 = vpop.f32.mrb[0].mxu0
      %v2398 = vadd.f32 0.0, %v2397
      %v2399 = vpop.f32.mrb[0].mxu0
      %2400 = vmatprep.mubr.bf16.mxu0 0
      %2401 = vmatmul.mubr.bf16.gmra.mrb[0].mxu0 %v1074
      %v2402 = vpop.f32.mrb[0].mxu0
      %v2403 = vadd.f32 0.0, %v2402
      %v2404 = vpop.f32.mrb[0].mxu0
      %v2405 = vpop.f32.mrb[0].mxu0
      %v2406 = vadd.f32 0.0, %v2405
      %v2407 = vpop.f32.mrb[0].mxu0
      %2408 = vmatprep.mubr.bf16.mxu0 0
      %2409 = vmatmul.mubr.bf16.gmra.mrb[0].mxu0 %v1077
      %v2410 = vpop.f32.mrb[0].mxu0
      %v2411 = vadd.f32 0.0, %v2410
      %v2412 = vpop.f32.mrb[0].mxu0
      %v2413 = vpop.f32.mrb[0].mxu0
      %v2414 = vadd.f32 0.0, %v2413
      %v2415 = vpop.f32.mrb[0].mxu0
      %2416 = vmatprep.mubr.bf16.mxu0 0
      %2417 = vmatmul.mubr.bf16.gmra.mrb[0].mxu0 %v2259
      %v2418 = vpop.f32.mrb[0].mxu0
      %v2419 = vadd.f32 0.0, %v2418
      %v2420 = vpop.f32.mrb[0].mxu0
      %v2421 = vpop.f32.mrb[0].mxu0
      %v2422 = vadd.f32 0.0, %v2421
      %v2423 = vpop.f32.mrb[0].mxu0
      %2424 = vdwg.mxu0
      %v2425 = vadd.f32 %v2219, %v2299
      %v2426 = vadd.f32 %v2220, %v2302
      %v2427 = vadd.f32 %v2221, %v2307
      %v2428 = vadd.f32 %v2222, %v2310
      %v2429 = vadd.f32 %v2223, %v2315
      %v2430 = vadd.f32 %v2224, %v2318
      %v2431 = vadd.f32 %v2225, %v2323
      %v2432 = vadd.f32 %v2226, %v2326
      %v2433 = vadd.f32 %v2227, %v2331
      %v2434 = vadd.f32 %v2228, %v2334
      %v2435 = vadd.f32 %v2229, %v2339
      %v2436 = vadd.f32 %v2230, %v2342
      %v2437 = vadd.f32 %v2231, %v2347
      %v2438 = vadd.f32 %v2232, %v2350
      %v2439 = vadd.f32 %v2233, %v2355
      %v2440 = vadd.f32 %v2234, %v2358
      %v2441 = vadd.f32 %v2235, %v2363
      %v2442 = vadd.f32 %v2236, %v2366
      %v2443 = vadd.f32 %v2237, %v2371
      %v2444 = vadd.f32 %v2238, %v2374
      %v2445 = vadd.f32 %v2239, %v2379
      %v2446 = vadd.f32 %v2240, %v2382
      %v2447 = vadd.f32 %v2241, %v2387
      %v2448 = vadd.f32 %v2242, %v2390
      %v2449 = vadd.f32 %v2243, %v2395
      %v2450 = vadd.f32 %v2244, %v2398
      %v2451 = vadd.f32 %v2245, %v2403
      %v2452 = vadd.f32 %v2246, %v2406
      %v2453 = vadd.f32 %v2247, %v2411
      %v2454 = vadd.f32 %v2248, %v2414
      %v2455 = vadd.f32 %v2249, %v2419
      %v2456 = vadd.f32 %v2250, %v2422
      %v2457 = vrot.slane %v2031, 4
      %v2458 = vrot.slane %v2034, 5
      %v2459 = vor.u32 %v2457, %v2458
      %v2460 = vrot.slane %v2459, 4
      %v2461 = vrot.slane %v2043, 5
      %v2462 = vsel %vm1506, %v2460, %v2461
      %v2463 = vrot.slane %v2040, 4
      %v2464 = vor.u32 %v2463, %v2461
      %v2465 = vrot.slane %v2464, 4
      %v2467 = vshll.u32 %v588, 16
      %v2469 = vrot.slane %v2467, 5
      %v2470 = vsel %vm1506, %v2465, %v2469
      %s2471 = scalar_lea.vmem %s1, 10
      %v2472 = vld [vmem:[%s2471] sm:$0x3]
      %v2473 = vunpack.c.l.b16 %v2462
      %v2474 = vunpack.c.l.b16 %v2470
      %v2475 = vpack.c.b16 %v2474, %v2473
      %v2477 = vsel %vm1030, %v2475, 0
      %v2480 = vsel %vm1079, %v2472, 0
      %2482 = vmatprep.subr.bf16.mxu0 0
      %2483 = vmatpush1.bf16.msra.mxu0 %v2480
      %2484 = vmatprep.subr.bf16.mxu0 0
      %2485 = vmatpush1.bf16.msra.mxu0 0
      %2486 = vmatprep.subr.bf16.mxu0 0
      %2487 = vmatpush1.bf16.msra.mxu0 0
      %2488 = vmatprep.subr.bf16.mxu0 0
      %2489 = vmatpush1.bf16.msra.mxu0 0
      %2490 = vmatprep.subr.bf16.mxu0 0
      %2491 = vmatpush1.bf16.msra.mxu0 0
      %2492 = vmatprep.subr.bf16.mxu0 0
      %2493 = vmatpush1.bf16.msra.mxu0 0
      %2494 = vmatprep.subr.bf16.mxu0 0
      %2495 = vmatpush1.bf16.msra.mxu0 0
      %2496 = vmatprep.subr.bf16.mxu0 0
      %2497 = vmatpush1.bf16.msra.mxu0 0
      %2498 = vmatprep.subr.bf16.mxu0 0
      %2499 = vmatpush1.bf16.msra.mxu0 0
      %2500 = vmatprep.subr.bf16.mxu0 0
      %2501 = vmatpush1.bf16.msra.mxu0 0
      %2502 = vmatprep.subr.bf16.mxu0 0
      %2503 = vmatpush1.bf16.msra.mxu0 0
      %2504 = vmatprep.subr.bf16.mxu0 0
      %2505 = vmatpush1.bf16.msra.mxu0 0
      %2506 = vmatprep.subr.bf16.mxu0 0
      %2507 = vmatpush1.bf16.msra.mxu0 0
      %2508 = vmatprep.subr.bf16.mxu0 0
      %2509 = vmatpush1.bf16.msra.mxu0 0
      %2510 = vmatprep.subr.bf16.mxu0 0
      %2511 = vmatpush1.bf16.msra.mxu0 0
      %2512 = vmatprep.subr.bf16.mxu0 0
      %2513 = vmatpush1.bf16.msra.mxu0 0
      %2514 = vmatprep.mubr.bf16.mxu0 0
      %2515 = vmatmul.mubr.bf16.gmra.mrb[0].mxu0 %v1785
      %v2516 = vpop.f32.mrb[0].mxu0
      %v2517 = vadd.f32 0.0, %v2516
      %v2518 = vpop.f32.mrb[0].mxu0
      %v2519 = vpop.f32.mrb[0].mxu0
      %v2520 = vadd.f32 0.0, %v2519
      %v2521 = vpop.f32.mrb[0].mxu0
      %2522 = vmatprep.mubr.bf16.mxu0 0
      %2523 = vmatmul.mubr.bf16.gmra.mrb[0].mxu0 %v1788
      %v2524 = vpop.f32.mrb[0].mxu0
      %v2525 = vadd.f32 0.0, %v2524
      %v2526 = vpop.f32.mrb[0].mxu0
      %v2527 = vpop.f32.mrb[0].mxu0
      %v2528 = vadd.f32 0.0, %v2527
      %v2529 = vpop.f32.mrb[0].mxu0
      %2530 = vmatprep.mubr.bf16.mxu0 0
      %2531 = vmatmul.mubr.bf16.gmra.mrb[0].mxu0 %v1791
      %v2532 = vpop.f32.mrb[0].mxu0
      %v2533 = vadd.f32 0.0, %v2532
      %v2534 = vpop.f32.mrb[0].mxu0
      %v2535 = vpop.f32.mrb[0].mxu0
      %v2536 = vadd.f32 0.0, %v2535
      %v2537 = vpop.f32.mrb[0].mxu0
      %2538 = vmatprep.mubr.bf16.mxu0 0
      %2539 = vmatmul.mubr.bf16.gmra.mrb[0].mxu0 %v1794
      %v2540 = vpop.f32.mrb[0].mxu0
      %v2541 = vadd.f32 0.0, %v2540
      %v2542 = vpop.f32.mrb[0].mxu0
      %v2543 = vpop.f32.mrb[0].mxu0
      %v2544 = vadd.f32 0.0, %v2543
      %v2545 = vpop.f32.mrb[0].mxu0
      %2546 = vmatprep.mubr.bf16.mxu0 0
      %2547 = vmatmul.mubr.bf16.gmra.mrb[0].mxu0 %v1797
      %v2548 = vpop.f32.mrb[0].mxu0
      %v2549 = vadd.f32 0.0, %v2548
      %v2550 = vpop.f32.mrb[0].mxu0
      %v2551 = vpop.f32.mrb[0].mxu0
      %v2552 = vadd.f32 0.0, %v2551
      %v2553 = vpop.f32.mrb[0].mxu0
      %2554 = vmatprep.mubr.bf16.mxu0 0
      %2555 = vmatmul.mubr.bf16.gmra.mrb[0].mxu0 %v1800
      %v2556 = vpop.f32.mrb[0].mxu0
      %v2557 = vadd.f32 0.0, %v2556
      %v2558 = vpop.f32.mrb[0].mxu0
      %v2559 = vpop.f32.mrb[0].mxu0
      %v2560 = vadd.f32 0.0, %v2559
      %v2561 = vpop.f32.mrb[0].mxu0
      %2562 = vmatprep.mubr.bf16.mxu0 0
      %2563 = vmatmul.mubr.bf16.gmra.mrb[0].mxu0 %v1803
      %v2564 = vpop.f32.mrb[0].mxu0
      %v2565 = vadd.f32 0.0, %v2564
      %v2566 = vpop.f32.mrb[0].mxu0
      %v2567 = vpop.f32.mrb[0].mxu0
      %v2568 = vadd.f32 0.0, %v2567
      %v2569 = vpop.f32.mrb[0].mxu0
      %2570 = vmatprep.mubr.bf16.mxu0 0
      %2571 = vmatmul.mubr.bf16.gmra.mrb[0].mxu0 %v1806
      %v2572 = vpop.f32.mrb[0].mxu0
      %v2573 = vadd.f32 0.0, %v2572
      %v2574 = vpop.f32.mrb[0].mxu0
      %v2575 = vpop.f32.mrb[0].mxu0
      %v2576 = vadd.f32 0.0, %v2575
      %v2577 = vpop.f32.mrb[0].mxu0
      %2578 = vmatprep.mubr.bf16.mxu0 0
      %2579 = vmatmul.mubr.bf16.gmra.mrb[0].mxu0 %v1809
      %v2580 = vpop.f32.mrb[0].mxu0
      %v2581 = vadd.f32 0.0, %v2580
      %v2582 = vpop.f32.mrb[0].mxu0
      %v2583 = vpop.f32.mrb[0].mxu0
      %v2584 = vadd.f32 0.0, %v2583
      %v2585 = vpop.f32.mrb[0].mxu0
      %2586 = vmatprep.mubr.bf16.mxu0 0
      %2587 = vmatmul.mubr.bf16.gmra.mrb[0].mxu0 %v1812
      %v2588 = vpop.f32.mrb[0].mxu0
      %v2589 = vadd.f32 0.0, %v2588
      %v2590 = vpop.f32.mrb[0].mxu0
      %v2591 = vpop.f32.mrb[0].mxu0
      %v2592 = vadd.f32 0.0, %v2591
      %v2593 = vpop.f32.mrb[0].mxu0
      %2594 = vmatprep.mubr.bf16.mxu0 0
      %2595 = vmatmul.mubr.bf16.gmra.mrb[0].mxu0 %v1815
      %v2596 = vpop.f32.mrb[0].mxu0
      %v2597 = vadd.f32 0.0, %v2596
      %v2598 = vpop.f32.mrb[0].mxu0
      %v2599 = vpop.f32.mrb[0].mxu0
      %v2600 = vadd.f32 0.0, %v2599
      %v2601 = vpop.f32.mrb[0].mxu0
      %2602 = vmatprep.mubr.bf16.mxu0 0
      %2603 = vmatmul.mubr.bf16.gmra.mrb[0].mxu0 %v1818
      %v2604 = vpop.f32.mrb[0].mxu0
      %v2605 = vadd.f32 0.0, %v2604
      %v2606 = vpop.f32.mrb[0].mxu0
      %v2607 = vpop.f32.mrb[0].mxu0
      %v2608 = vadd.f32 0.0, %v2607
      %v2609 = vpop.f32.mrb[0].mxu0
      %2610 = vmatprep.mubr.bf16.mxu0 0
      %2611 = vmatmul.mubr.bf16.gmra.mrb[0].mxu0 %v1821
      %v2612 = vpop.f32.mrb[0].mxu0
      %v2613 = vadd.f32 0.0, %v2612
      %v2614 = vpop.f32.mrb[0].mxu0
      %v2615 = vpop.f32.mrb[0].mxu0
      %v2616 = vadd.f32 0.0, %v2615
      %v2617 = vpop.f32.mrb[0].mxu0
      %2618 = vmatprep.mubr.bf16.mxu0 0
      %2619 = vmatmul.mubr.bf16.gmra.mrb[0].mxu0 %v1824
      %v2620 = vpop.f32.mrb[0].mxu0
      %v2621 = vadd.f32 0.0, %v2620
      %v2622 = vpop.f32.mrb[0].mxu0
      %v2623 = vpop.f32.mrb[0].mxu0
      %v2624 = vadd.f32 0.0, %v2623
      %v2625 = vpop.f32.mrb[0].mxu0
      %2626 = vmatprep.mubr.bf16.mxu0 0
      %2627 = vmatmul.mubr.bf16.gmra.mrb[0].mxu0 %v1827
      %v2628 = vpop.f32.mrb[0].mxu0
      %v2629 = vadd.f32 0.0, %v2628
      %v2630 = vpop.f32.mrb[0].mxu0
      %v2631 = vpop.f32.mrb[0].mxu0
      %v2632 = vadd.f32 0.0, %v2631
      %v2633 = vpop.f32.mrb[0].mxu0
      %2634 = vmatprep.mubr.bf16.mxu0 0
      %2635 = vmatmul.mubr.bf16.gmra.mrb[0].mxu0 %v2477
      %v2636 = vpop.f32.mrb[0].mxu0
      %v2637 = vadd.f32 0.0, %v2636
      %v2638 = vpop.f32.mrb[0].mxu0
      %v2639 = vpop.f32.mrb[0].mxu0
      %v2640 = vadd.f32 0.0, %v2639
      %v2641 = vpop.f32.mrb[0].mxu0
      %2642 = vdwg.mxu0
      %v2643 = vadd.f32 %v2425, %v2517
      %v2644 = vadd.f32 %v2426, %v2520
      %v2645 = vadd.f32 %v2427, %v2525
      %v2646 = vadd.f32 %v2428, %v2528
      %v2647 = vadd.f32 %v2429, %v2533
      %v2648 = vadd.f32 %v2430, %v2536
      %v2649 = vadd.f32 %v2431, %v2541
      %v2650 = vadd.f32 %v2432, %v2544
      %v2651 = vadd.f32 %v2433, %v2549
      %v2652 = vadd.f32 %v2434, %v2552
      %v2653 = vadd.f32 %v2435, %v2557
      %v2654 = vadd.f32 %v2436, %v2560
      %v2655 = vadd.f32 %v2437, %v2565
      %v2656 = vadd.f32 %v2438, %v2568
      %v2657 = vadd.f32 %v2439, %v2573
      %v2658 = vadd.f32 %v2440, %v2576
      %v2659 = vadd.f32 %v2441, %v2581
      %v2660 = vadd.f32 %v2442, %v2584
      %v2661 = vadd.f32 %v2443, %v2589
      %v2662 = vadd.f32 %v2444, %v2592
      %v2663 = vadd.f32 %v2445, %v2597
      %v2664 = vadd.f32 %v2446, %v2600
      %v2665 = vadd.f32 %v2447, %v2605
      %v2666 = vadd.f32 %v2448, %v2608
      %v2667 = vadd.f32 %v2449, %v2613
      %v2668 = vadd.f32 %v2450, %v2616
      %v2669 = vadd.f32 %v2451, %v2621
      %v2670 = vadd.f32 %v2452, %v2624
      %v2671 = vadd.f32 %v2453, %v2629
      %v2672 = vadd.f32 %v2454, %v2632
      %v2673 = vadd.f32 %v2455, %v2637
      %v2674 = vadd.f32 %v2456, %v2640
      %v2676 = vshrl.u32 %v589, 16
      %v2678 = vrot.slane %v2676, 7
      %v2679 = vrot.slane %v2678, 4
      %v2681 = vshrl.u32 %v590, 16
      %v2683 = vrot.slane %v2681, 7
      %v2684 = vshll.u32 %v590, 16
      %v2686 = vor.u32 %v2683, %v2684
      %v2687 = vsel %vm594, %v2679, %v2686
      %v2688 = vrot.slane %v2683, 4
      %v2690 = vshrl.u32 %v591, 16
      %v2692 = vrot.slane %v2690, 7
      %v2693 = vshll.u32 %v591, 16
      %v2695 = vor.u32 %v2692, %v2693
      %v2696 = vsel %vm594, %v2688, %v2695
      %s2697 = scalar_lea.vmem %s1, 12
      %v2698 = vld [vmem:[%s2697] sm:$0x3]
      %v2699 = vunpack.c.l.b16 %v2687
      %v2700 = vunpack.c.l.b16 %v2696
      %v2701 = vpack.c.b16 %v2700, %v2699
      %v2703 = vsel %vm1030, %v2701, 0
      %v2706 = vsel %vm1079, %v2698, 0
      %2708 = vmatprep.subr.bf16.mxu0 0
      %2709 = vmatpush1.bf16.msra.mxu0 %v2706
      %2710 = vmatprep.subr.bf16.mxu0 0
      %2711 = vmatpush1.bf16.msra.mxu0 0
      %2712 = vmatprep.subr.bf16.mxu0 0
      %2713 = vmatpush1.bf16.msra.mxu0 0
      %2714 = vmatprep.subr.bf16.mxu0 0
      %2715 = vmatpush1.bf16.msra.mxu0 0
      %2716 = vmatprep.subr.bf16.mxu0 0
      %2717 = vmatpush1.bf16.msra.mxu0 0
      %2718 = vmatprep.subr.bf16.mxu0 0
      %2719 = vmatpush1.bf16.msra.mxu0 0
      %2720 = vmatprep.subr.bf16.mxu0 0
      %2721 = vmatpush1.bf16.msra.mxu0 0
      %2722 = vmatprep.subr.bf16.mxu0 0
      %2723 = vmatpush1.bf16.msra.mxu0 0
      %2724 = vmatprep.subr.bf16.mxu0 0
      %2725 = vmatpush1.bf16.msra.mxu0 0
      %2726 = vmatprep.subr.bf16.mxu0 0
      %2727 = vmatpush1.bf16.msra.mxu0 0
      %2728 = vmatprep.subr.bf16.mxu0 0
      %2729 = vmatpush1.bf16.msra.mxu0 0
      %2730 = vmatprep.subr.bf16.mxu0 0
      %2731 = vmatpush1.bf16.msra.mxu0 0
      %2732 = vmatprep.subr.bf16.mxu0 0
      %2733 = vmatpush1.bf16.msra.mxu0 0
      %2734 = vmatprep.subr.bf16.mxu0 0
      %2735 = vmatpush1.bf16.msra.mxu0 0
      %2736 = vmatprep.subr.bf16.mxu0 0
      %2737 = vmatpush1.bf16.msra.mxu0 0
      %2738 = vmatprep.subr.bf16.mxu0 0
      %2739 = vmatpush1.bf16.msra.mxu0 0
      %2740 = vmatprep.mubr.bf16.mxu0 0
      %2741 = vmatmul.mubr.bf16.gmra.mrb[0].mxu0 %v1299
      %v2742 = vpop.f32.mrb[0].mxu0
      %v2743 = vadd.f32 0.0, %v2742
      %v2744 = vpop.f32.mrb[0].mxu0
      %v2745 = vpop.f32.mrb[0].mxu0
      %v2746 = vadd.f32 0.0, %v2745
      %v2747 = vpop.f32.mrb[0].mxu0
      %2748 = vmatprep.mubr.bf16.mxu0 0
      %2749 = vmatmul.mubr.bf16.gmra.mrb[0].mxu0 %v1302
      %v2750 = vpop.f32.mrb[0].mxu0
      %v2751 = vadd.f32 0.0, %v2750
      %v2752 = vpop.f32.mrb[0].mxu0
      %v2753 = vpop.f32.mrb[0].mxu0
      %v2754 = vadd.f32 0.0, %v2753
      %v2755 = vpop.f32.mrb[0].mxu0
      %2756 = vmatprep.mubr.bf16.mxu0 0
      %2757 = vmatmul.mubr.bf16.gmra.mrb[0].mxu0 %v1305
      %v2758 = vpop.f32.mrb[0].mxu0
      %v2759 = vadd.f32 0.0, %v2758
      %v2760 = vpop.f32.mrb[0].mxu0
      %v2761 = vpop.f32.mrb[0].mxu0
      %v2762 = vadd.f32 0.0, %v2761
      %v2763 = vpop.f32.mrb[0].mxu0
      %2764 = vmatprep.mubr.bf16.mxu0 0
      %2765 = vmatmul.mubr.bf16.gmra.mrb[0].mxu0 %v1308
      %v2766 = vpop.f32.mrb[0].mxu0
      %v2767 = vadd.f32 0.0, %v2766
      %v2768 = vpop.f32.mrb[0].mxu0
      %v2769 = vpop.f32.mrb[0].mxu0
      %v2770 = vadd.f32 0.0, %v2769
      %v2771 = vpop.f32.mrb[0].mxu0
      %2772 = vmatprep.mubr.bf16.mxu0 0
      %2773 = vmatmul.mubr.bf16.gmra.mrb[0].mxu0 %v1311
      %v2774 = vpop.f32.mrb[0].mxu0
      %v2775 = vadd.f32 0.0, %v2774
      %v2776 = vpop.f32.mrb[0].mxu0
      %v2777 = vpop.f32.mrb[0].mxu0
      %v2778 = vadd.f32 0.0, %v2777
      %v2779 = vpop.f32.mrb[0].mxu0
      %2780 = vmatprep.mubr.bf16.mxu0 0
      %2781 = vmatmul.mubr.bf16.gmra.mrb[0].mxu0 %v1314
      %v2782 = vpop.f32.mrb[0].mxu0
      %v2783 = vadd.f32 0.0, %v2782
      %v2784 = vpop.f32.mrb[0].mxu0
      %v2785 = vpop.f32.mrb[0].mxu0
      %v2786 = vadd.f32 0.0, %v2785
      %v2787 = vpop.f32.mrb[0].mxu0
      %2788 = vmatprep.mubr.bf16.mxu0 0
      %2789 = vmatmul.mubr.bf16.gmra.mrb[0].mxu0 %v1317
      %v2790 = vpop.f32.mrb[0].mxu0
      %v2791 = vadd.f32 0.0, %v2790
      %v2792 = vpop.f32.mrb[0].mxu0
      %v2793 = vpop.f32.mrb[0].mxu0
      %v2794 = vadd.f32 0.0, %v2793
      %v2795 = vpop.f32.mrb[0].mxu0
      %2796 = vmatprep.mubr.bf16.mxu0 0
      %2797 = vmatmul.mubr.bf16.gmra.mrb[0].mxu0 %v1320
      %v2798 = vpop.f32.mrb[0].mxu0
      %v2799 = vadd.f32 0.0, %v2798
      %v2800 = vpop.f32.mrb[0].mxu0
      %v2801 = vpop.f32.mrb[0].mxu0
      %v2802 = vadd.f32 0.0, %v2801
      %v2803 = vpop.f32.mrb[0].mxu0
      %2804 = vmatprep.mubr.bf16.mxu0 0
      %2805 = vmatmul.mubr.bf16.gmra.mrb[0].mxu0 %v1323
      %v2806 = vpop.f32.mrb[0].mxu0
      %v2807 = vadd.f32 0.0, %v2806
      %v2808 = vpop.f32.mrb[0].mxu0
      %v2809 = vpop.f32.mrb[0].mxu0
      %v2810 = vadd.f32 0.0, %v2809
      %v2811 = vpop.f32.mrb[0].mxu0
      %2812 = vmatprep.mubr.bf16.mxu0 0
      %2813 = vmatmul.mubr.bf16.gmra.mrb[0].mxu0 %v1326
      %v2814 = vpop.f32.mrb[0].mxu0
      %v2815 = vadd.f32 0.0, %v2814
      %v2816 = vpop.f32.mrb[0].mxu0
      %v2817 = vpop.f32.mrb[0].mxu0
      %v2818 = vadd.f32 0.0, %v2817
      %v2819 = vpop.f32.mrb[0].mxu0
      %2820 = vmatprep.mubr.bf16.mxu0 0
      %2821 = vmatmul.mubr.bf16.gmra.mrb[0].mxu0 %v1329
      %v2822 = vpop.f32.mrb[0].mxu0
      %v2823 = vadd.f32 0.0, %v2822
      %v2824 = vpop.f32.mrb[0].mxu0
      %v2825 = vpop.f32.mrb[0].mxu0
      %v2826 = vadd.f32 0.0, %v2825
      %v2827 = vpop.f32.mrb[0].mxu0
      %2828 = vmatprep.mubr.bf16.mxu0 0
      %2829 = vmatmul.mubr.bf16.gmra.mrb[0].mxu0 %v1332
      %v2830 = vpop.f32.mrb[0].mxu0
      %v2831 = vadd.f32 0.0, %v2830
      %v2832 = vpop.f32.mrb[0].mxu0
      %v2833 = vpop.f32.mrb[0].mxu0
      %v2834 = vadd.f32 0.0, %v2833
      %v2835 = vpop.f32.mrb[0].mxu0
      %2836 = vmatprep.mubr.bf16.mxu0 0
      %2837 = vmatmul.mubr.bf16.gmra.mrb[0].mxu0 %v1335
      %v2838 = vpop.f32.mrb[0].mxu0
      %v2839 = vadd.f32 0.0, %v2838
      %v2840 = vpop.f32.mrb[0].mxu0
      %v2841 = vpop.f32.mrb[0].mxu0
      %v2842 = vadd.f32 0.0, %v2841
      %v2843 = vpop.f32.mrb[0].mxu0
      %2844 = vmatprep.mubr.bf16.mxu0 0
      %2845 = vmatmul.mubr.bf16.gmra.mrb[0].mxu0 %v1338
      %v2846 = vpop.f32.mrb[0].mxu0
      %v2847 = vadd.f32 0.0, %v2846
      %v2848 = vpop.f32.mrb[0].mxu0
      %v2849 = vpop.f32.mrb[0].mxu0
      %v2850 = vadd.f32 0.0, %v2849
      %v2851 = vpop.f32.mrb[0].mxu0
      %2852 = vmatprep.mubr.bf16.mxu0 0
      %2853 = vmatmul.mubr.bf16.gmra.mrb[0].mxu0 %v2053
      %v2854 = vpop.f32.mrb[0].mxu0
      %v2855 = vadd.f32 0.0, %v2854
      %v2856 = vpop.f32.mrb[0].mxu0
      %v2857 = vpop.f32.mrb[0].mxu0
      %v2858 = vadd.f32 0.0, %v2857
      %v2859 = vpop.f32.mrb[0].mxu0
      %2860 = vmatprep.mubr.bf16.mxu0 0
      %2861 = vmatmul.mubr.bf16.gmra.mrb[0].mxu0 %v2703
      %v2862 = vpop.f32.mrb[0].mxu0
      %v2863 = vadd.f32 0.0, %v2862
      %v2864 = vpop.f32.mrb[0].mxu0
      %v2865 = vpop.f32.mrb[0].mxu0
      %v2866 = vadd.f32 0.0, %v2865
      %v2867 = vpop.f32.mrb[0].mxu0
      %2868 = vdwg.mxu0
      %v2869 = vadd.f32 %v2643, %v2743
      %v2870 = vadd.f32 %v2644, %v2746
      %v2871 = vadd.f32 %v2645, %v2751
      %v2872 = vadd.f32 %v2646, %v2754
      %v2873 = vadd.f32 %v2647, %v2759
      %v2874 = vadd.f32 %v2648, %v2762
      %v2875 = vadd.f32 %v2649, %v2767
      %v2876 = vadd.f32 %v2650, %v2770
      %v2877 = vadd.f32 %v2651, %v2775
      %v2878 = vadd.f32 %v2652, %v2778
      %v2879 = vadd.f32 %v2653, %v2783
      %v2880 = vadd.f32 %v2654, %v2786
      %v2881 = vadd.f32 %v2655, %v2791
      %v2882 = vadd.f32 %v2656, %v2794
      %v2883 = vadd.f32 %v2657, %v2799
      %v2884 = vadd.f32 %v2658, %v2802
      %v2885 = vadd.f32 %v2659, %v2807
      %v2886 = vadd.f32 %v2660, %v2810
      %v2887 = vadd.f32 %v2661, %v2815
      %v2888 = vadd.f32 %v2662, %v2818
      %v2889 = vadd.f32 %v2663, %v2823
      %v2890 = vadd.f32 %v2664, %v2826
      %v2891 = vadd.f32 %v2665, %v2831
      %v2892 = vadd.f32 %v2666, %v2834
      %v2893 = vadd.f32 %v2667, %v2839
      %v2894 = vadd.f32 %v2668, %v2842
      %v2895 = vadd.f32 %v2669, %v2847
      %v2896 = vadd.f32 %v2670, %v2850
      %v2897 = vadd.f32 %v2671, %v2855
      %v2898 = vadd.f32 %v2672, %v2858
      %v2899 = vadd.f32 %v2673, %v2863
      %v2900 = vadd.f32 %v2674, %v2866
      %s2901 = scalar_lea.vmem %s1, 14
      %v2902 = vld [vmem:[%s2901] sm:$0x3]
      %v2905 = vunpack.c.l.b16 %v590
      %v2906 = vunpack.c.l.b16 %v591
      %v2907 = vpack.c.b16 %v2906, %v2905
      %v2909 = vsel %vm1030, %v2907, 0
      %v2912 = vsel %vm1079, %v2902, 0
      %2914 = vmatprep.subr.bf16.mxu0 0
      %2915 = vmatpush1.bf16.msra.mxu0 %v2912
      %2916 = vmatprep.subr.bf16.mxu0 0
      %2917 = vmatpush1.bf16.msra.mxu0 0
      %2918 = vmatprep.subr.bf16.mxu0 0
      %2919 = vmatpush1.bf16.msra.mxu0 0
      %2920 = vmatprep.subr.bf16.mxu0 0
      %2921 = vmatpush1.bf16.msra.mxu0 0
      %2922 = vmatprep.subr.bf16.mxu0 0
      %2923 = vmatpush1.bf16.msra.mxu0 0
      %2924 = vmatprep.subr.bf16.mxu0 0
      %2925 = vmatpush1.bf16.msra.mxu0 0
      %2926 = vmatprep.subr.bf16.mxu0 0
      %2927 = vmatpush1.bf16.msra.mxu0 0
      %2928 = vmatprep.subr.bf16.mxu0 0
      %2929 = vmatpush1.bf16.msra.mxu0 0
      %2930 = vmatprep.subr.bf16.mxu0 0
      %2931 = vmatpush1.bf16.msra.mxu0 0
      %2932 = vmatprep.subr.bf16.mxu0 0
      %2933 = vmatpush1.bf16.msra.mxu0 0
      %2934 = vmatprep.subr.bf16.mxu0 0
      %2935 = vmatpush1.bf16.msra.mxu0 0
      %2936 = vmatprep.subr.bf16.mxu0 0
      %2937 = vmatpush1.bf16.msra.mxu0 0
      %2938 = vmatprep.subr.bf16.mxu0 0
      %2939 = vmatpush1.bf16.msra.mxu0 0
      %2940 = vmatprep.subr.bf16.mxu0 0
      %2941 = vmatpush1.bf16.msra.mxu0 0
      %2942 = vmatprep.subr.bf16.mxu0 0
      %2943 = vmatpush1.bf16.msra.mxu0 0
      %2944 = vmatprep.subr.bf16.mxu0 0
      %2945 = vmatpush1.bf16.msra.mxu0 0
      %2946 = vmatprep.mubr.bf16.mxu0 0
      %2947 = vmatmul.mubr.bf16.gmra.mrb[0].mxu0 %v1038
      %v2948 = vpop.f32.mrb[0].mxu0
      %v2949 = vadd.f32 0.0, %v2948
      %v2950 = vpop.f32.mrb[0].mxu0
      %v2951 = vpop.f32.mrb[0].mxu0
      %v2952 = vadd.f32 0.0, %v2951
      %v2953 = vpop.f32.mrb[0].mxu0
      %2954 = vmatprep.mubr.bf16.mxu0 0
      %2955 = vmatmul.mubr.bf16.gmra.mrb[0].mxu0 %v1041
      %v2956 = vpop.f32.mrb[0].mxu0
      %v2957 = vadd.f32 0.0, %v2956
      %v2958 = vpop.f32.mrb[0].mxu0
      %v2959 = vpop.f32.mrb[0].mxu0
      %v2960 = vadd.f32 0.0, %v2959
      %v2961 = vpop.f32.mrb[0].mxu0
      %2962 = vmatprep.mubr.bf16.mxu0 0
      %2963 = vmatmul.mubr.bf16.gmra.mrb[0].mxu0 %v1044
      %v2964 = vpop.f32.mrb[0].mxu0
      %v2965 = vadd.f32 0.0, %v2964
      %v2966 = vpop.f32.mrb[0].mxu0
      %v2967 = vpop.f32.mrb[0].mxu0
      %v2968 = vadd.f32 0.0, %v2967
      %v2969 = vpop.f32.mrb[0].mxu0
      %2970 = vmatprep.mubr.bf16.mxu0 0
      %2971 = vmatmul.mubr.bf16.gmra.mrb[0].mxu0 %v1047
      %v2972 = vpop.f32.mrb[0].mxu0
      %v2973 = vadd.f32 0.0, %v2972
      %v2974 = vpop.f32.mrb[0].mxu0
      %v2975 = vpop.f32.mrb[0].mxu0
      %v2976 = vadd.f32 0.0, %v2975
      %v2977 = vpop.f32.mrb[0].mxu0
      %2978 = vmatprep.mubr.bf16.mxu0 0
      %2979 = vmatmul.mubr.bf16.gmra.mrb[0].mxu0 %v1050
      %v2980 = vpop.f32.mrb[0].mxu0
      %v2981 = vadd.f32 0.0, %v2980
      %v2982 = vpop.f32.mrb[0].mxu0
      %v2983 = vpop.f32.mrb[0].mxu0
      %v2984 = vadd.f32 0.0, %v2983
      %v2985 = vpop.f32.mrb[0].mxu0
      %2986 = vmatprep.mubr.bf16.mxu0 0
      %2987 = vmatmul.mubr.bf16.gmra.mrb[0].mxu0 %v1053
      %v2988 = vpop.f32.mrb[0].mxu0
      %v2989 = vadd.f32 0.0, %v2988
      %v2990 = vpop.f32.mrb[0].mxu0
      %v2991 = vpop.f32.mrb[0].mxu0
      %v2992 = vadd.f32 0.0, %v2991
      %v2993 = vpop.f32.mrb[0].mxu0
      %2994 = vmatprep.mubr.bf16.mxu0 0
      %2995 = vmatmul.mubr.bf16.gmra.mrb[0].mxu0 %v1056
      %v2996 = vpop.f32.mrb[0].mxu0
      %v2997 = vadd.f32 0.0, %v2996
      %v2998 = vpop.f32.mrb[0].mxu0
      %v2999 = vpop.f32.mrb[0].mxu0
      %v3000 = vadd.f32 0.0, %v2999
      %v3001 = vpop.f32.mrb[0].mxu0
      %3002 = vmatprep.mubr.bf16.mxu0 0
      %3003 = vmatmul.mubr.bf16.gmra.mrb[0].mxu0 %v1059
      %v3004 = vpop.f32.mrb[0].mxu0
      %v3005 = vadd.f32 0.0, %v3004
      %v3006 = vpop.f32.mrb[0].mxu0
      %v3007 = vpop.f32.mrb[0].mxu0
      %v3008 = vadd.f32 0.0, %v3007
      %v3009 = vpop.f32.mrb[0].mxu0
      %3010 = vmatprep.mubr.bf16.mxu0 0
      %3011 = vmatmul.mubr.bf16.gmra.mrb[0].mxu0 %v1062
      %v3012 = vpop.f32.mrb[0].mxu0
      %v3013 = vadd.f32 0.0, %v3012
      %v3014 = vpop.f32.mrb[0].mxu0
      %v3015 = vpop.f32.mrb[0].mxu0
      %v3016 = vadd.f32 0.0, %v3015
      %v3017 = vpop.f32.mrb[0].mxu0
      %3018 = vmatprep.mubr.bf16.mxu0 0
      %3019 = vmatmul.mubr.bf16.gmra.mrb[0].mxu0 %v1065
      %v3020 = vpop.f32.mrb[0].mxu0
      %v3021 = vadd.f32 0.0, %v3020
      %v3022 = vpop.f32.mrb[0].mxu0
      %v3023 = vpop.f32.mrb[0].mxu0
      %v3024 = vadd.f32 0.0, %v3023
      %v3025 = vpop.f32.mrb[0].mxu0
      %3026 = vmatprep.mubr.bf16.mxu0 0
      %3027 = vmatmul.mubr.bf16.gmra.mrb[0].mxu0 %v1068
      %v3028 = vpop.f32.mrb[0].mxu0
      %v3029 = vadd.f32 0.0, %v3028
      %v3030 = vpop.f32.mrb[0].mxu0
      %v3031 = vpop.f32.mrb[0].mxu0
      %v3032 = vadd.f32 0.0, %v3031
      %v3033 = vpop.f32.mrb[0].mxu0
      %3034 = vmatprep.mubr.bf16.mxu0 0
      %3035 = vmatmul.mubr.bf16.gmra.mrb[0].mxu0 %v1071
      %v3036 = vpop.f32.mrb[0].mxu0
      %v3037 = vadd.f32 0.0, %v3036
      %v3038 = vpop.f32.mrb[0].mxu0
      %v3039 = vpop.f32.mrb[0].mxu0
      %v3040 = vadd.f32 0.0, %v3039
      %v3041 = vpop.f32.mrb[0].mxu0
      %3042 = vmatprep.mubr.bf16.mxu0 0
      %3043 = vmatmul.mubr.bf16.gmra.mrb[0].mxu0 %v1074
      %v3044 = vpop.f32.mrb[0].mxu0
      %v3045 = vadd.f32 0.0, %v3044
      %v3046 = vpop.f32.mrb[0].mxu0
      %v3047 = vpop.f32.mrb[0].mxu0
      %v3048 = vadd.f32 0.0, %v3047
      %v3049 = vpop.f32.mrb[0].mxu0
      %3050 = vmatprep.mubr.bf16.mxu0 0
      %3051 = vmatmul.mubr.bf16.gmra.mrb[0].mxu0 %v1077
      %v3052 = vpop.f32.mrb[0].mxu0
      %v3053 = vadd.f32 0.0, %v3052
      %v3054 = vpop.f32.mrb[0].mxu0
      %v3055 = vpop.f32.mrb[0].mxu0
      %v3056 = vadd.f32 0.0, %v3055
      %v3057 = vpop.f32.mrb[0].mxu0
      %3058 = vmatprep.mubr.bf16.mxu0 0
      %3059 = vmatmul.mubr.bf16.gmra.mrb[0].mxu0 %v2259
      %v3060 = vpop.f32.mrb[0].mxu0
      %v3061 = vadd.f32 0.0, %v3060
      %v3062 = vpop.f32.mrb[0].mxu0
      %v3063 = vpop.f32.mrb[0].mxu0
      %v3064 = vadd.f32 0.0, %v3063
      %v3065 = vpop.f32.mrb[0].mxu0
      %3066 = vmatprep.mubr.bf16.mxu0 0
      %3067 = vmatmul.mubr.bf16.gmra.mrb[0].mxu0 %v2909
      %v3068 = vpop.f32.mrb[0].mxu0
      %v3069 = vadd.f32 0.0, %v3068
      %v3070 = vpop.f32.mrb[0].mxu0
      %v3071 = vpop.f32.mrb[0].mxu0
      %v3072 = vadd.f32 0.0, %v3071
      %v3073 = vpop.f32.mrb[0].mxu0
      %3074 = vdwg.mxu0
      %v3075 = vadd.f32 %v2869, %v2949
      %v3076 = vadd.f32 %v2870, %v2952
      %v3077 = vadd.f32 %v2871, %v2957
      %v3078 = vadd.f32 %v2872, %v2960
      %v3079 = vadd.f32 %v2873, %v2965
      %v3080 = vadd.f32 %v2874, %v2968
      %v3081 = vadd.f32 %v2875, %v2973
      %v3082 = vadd.f32 %v2876, %v2976
      %v3083 = vadd.f32 %v2877, %v2981
      %v3084 = vadd.f32 %v2878, %v2984
      %v3085 = vadd.f32 %v2879, %v2989
      %v3086 = vadd.f32 %v2880, %v2992
      %v3087 = vadd.f32 %v2881, %v2997
      %v3088 = vadd.f32 %v2882, %v3000
      %v3089 = vadd.f32 %v2883, %v3005
      %v3090 = vadd.f32 %v2884, %v3008
      %v3091 = vadd.f32 %v2885, %v3013
      %v3092 = vadd.f32 %v2886, %v3016
      %v3093 = vadd.f32 %v2887, %v3021
      %v3094 = vadd.f32 %v2888, %v3024
      %v3095 = vadd.f32 %v2889, %v3029
      %v3096 = vadd.f32 %v2890, %v3032
      %v3097 = vadd.f32 %v2891, %v3037
      %v3098 = vadd.f32 %v2892, %v3040
      %v3099 = vadd.f32 %v2893, %v3045
      %v3100 = vadd.f32 %v2894, %v3048
      %v3101 = vadd.f32 %v2895, %v3053
      %v3102 = vadd.f32 %v2896, %v3056
      %v3103 = vadd.f32 %v2897, %v3061
      %v3104 = vadd.f32 %v2898, %v3064
      %v3105 = vadd.f32 %v2899, %v3069
      %v3106 = vadd.f32 %v2900, %v3072
      %v3107 = vrot.slane %v2681, 4
      %v3108 = vrot.slane %v2684, 5
      %v3109 = vor.u32 %v3107, %v3108
      %v3110 = vrot.slane %v3109, 4
      %v3111 = vrot.slane %v2693, 5
      %v3112 = vsel %vm1506, %v3110, %v3111
      %v3113 = vrot.slane %v2690, 4
      %v3114 = vor.u32 %v3113, %v3111
      %v3115 = vrot.slane %v3114, 4
      %v3117 = vshll.u32 %v592, 16
      %v3119 = vrot.slane %v3117, 5
      %v3120 = vsel %vm1506, %v3115, %v3119
      %s3121 = scalar_lea.vmem %s1, 16
      %v3122 = vld [vmem:[%s3121] sm:$0x3]
      %v3123 = vunpack.c.l.b16 %v3112
      %v3124 = vunpack.c.l.b16 %v3120
      %v3125 = vpack.c.b16 %v3124, %v3123
      %v3127 = vsel %vm1030, %v3125, 0
      %v3130 = vsel %vm1079, %v3122, 0
      %3132 = vmatprep.subr.bf16.mxu0 0
      %3133 = vmatpush1.bf16.msra.mxu0 %v3130
      %3134 = vmatprep.subr.bf16.mxu0 0
      %3135 = vmatpush1.bf16.msra.mxu0 0
      %3136 = vmatprep.subr.bf16.mxu0 0
      %3137 = vmatpush1.bf16.msra.mxu0 0
      %3138 = vmatprep.subr.bf16.mxu0 0
      %3139 = vmatpush1.bf16.msra.mxu0 0
      %3140 = vmatprep.subr.bf16.mxu0 0
      %3141 = vmatpush1.bf16.msra.mxu0 0
      %3142 = vmatprep.subr.bf16.mxu0 0
      %3143 = vmatpush1.bf16.msra.mxu0 0
      %3144 = vmatprep.subr.bf16.mxu0 0
      %3145 = vmatpush1.bf16.msra.mxu0 0
      %3146 = vmatprep.subr.bf16.mxu0 0
      %3147 = vmatpush1.bf16.msra.mxu0 0
      %3148 = vmatprep.subr.bf16.mxu0 0
      %3149 = vmatpush1.bf16.msra.mxu0 0
      %3150 = vmatprep.subr.bf16.mxu0 0
      %3151 = vmatpush1.bf16.msra.mxu0 0
      %3152 = vmatprep.subr.bf16.mxu0 0
      %3153 = vmatpush1.bf16.msra.mxu0 0
      %3154 = vmatprep.subr.bf16.mxu0 0
      %3155 = vmatpush1.bf16.msra.mxu0 0
      %3156 = vmatprep.subr.bf16.mxu0 0
      %3157 = vmatpush1.bf16.msra.mxu0 0
      %3158 = vmatprep.subr.bf16.mxu0 0
      %3159 = vmatpush1.bf16.msra.mxu0 0
      %3160 = vmatprep.subr.bf16.mxu0 0
      %3161 = vmatpush1.bf16.msra.mxu0 0
      %3162 = vmatprep.subr.bf16.mxu0 0
      %3163 = vmatpush1.bf16.msra.mxu0 0
      %3164 = vmatprep.mubr.bf16.mxu0 0
      %3165 = vmatmul.mubr.bf16.gmra.mrb[0].mxu0 %v1788
      %v3166 = vpop.f32.mrb[0].mxu0
      %v3167 = vadd.f32 0.0, %v3166
      %v3168 = vpop.f32.mrb[0].mxu0
      %v3169 = vpop.f32.mrb[0].mxu0
      %v3170 = vadd.f32 0.0, %v3169
      %v3171 = vpop.f32.mrb[0].mxu0
      %3172 = vmatprep.mubr.bf16.mxu0 0
      %3173 = vmatmul.mubr.bf16.gmra.mrb[0].mxu0 %v1791
      %v3174 = vpop.f32.mrb[0].mxu0
      %v3175 = vadd.f32 0.0, %v3174
      %v3176 = vpop.f32.mrb[0].mxu0
      %v3177 = vpop.f32.mrb[0].mxu0
      %v3178 = vadd.f32 0.0, %v3177
      %v3179 = vpop.f32.mrb[0].mxu0
      %3180 = vmatprep.mubr.bf16.mxu0 0
      %3181 = vmatmul.mubr.bf16.gmra.mrb[0].mxu0 %v1794
      %v3182 = vpop.f32.mrb[0].mxu0
      %v3183 = vadd.f32 0.0, %v3182
      %v3184 = vpop.f32.mrb[0].mxu0
      %v3185 = vpop.f32.mrb[0].mxu0
      %v3186 = vadd.f32 0.0, %v3185
      %v3187 = vpop.f32.mrb[0].mxu0
      %3188 = vmatprep.mubr.bf16.mxu0 0
      %3189 = vmatmul.mubr.bf16.gmra.mrb[0].mxu0 %v1797
      %v3190 = vpop.f32.mrb[0].mxu0
      %v3191 = vadd.f32 0.0, %v3190
      %v3192 = vpop.f32.mrb[0].mxu0
      %v3193 = vpop.f32.mrb[0].mxu0
      %v3194 = vadd.f32 0.0, %v3193
      %v3195 = vpop.f32.mrb[0].mxu0
      %3196 = vmatprep.mubr.bf16.mxu0 0
      %3197 = vmatmul.mubr.bf16.gmra.mrb[0].mxu0 %v1800
      %v3198 = vpop.f32.mrb[0].mxu0
      %v3199 = vadd.f32 0.0, %v3198
      %v3200 = vpop.f32.mrb[0].mxu0
      %v3201 = vpop.f32.mrb[0].mxu0
      %v3202 = vadd.f32 0.0, %v3201
      %v3203 = vpop.f32.mrb[0].mxu0
      %3204 = vmatprep.mubr.bf16.mxu0 0
      %3205 = vmatmul.mubr.bf16.gmra.mrb[0].mxu0 %v1803
      %v3206 = vpop.f32.mrb[0].mxu0
      %v3207 = vadd.f32 0.0, %v3206
      %v3208 = vpop.f32.mrb[0].mxu0
      %v3209 = vpop.f32.mrb[0].mxu0
      %v3210 = vadd.f32 0.0, %v3209
      %v3211 = vpop.f32.mrb[0].mxu0
      %3212 = vmatprep.mubr.bf16.mxu0 0
      %3213 = vmatmul.mubr.bf16.gmra.mrb[0].mxu0 %v1806
      %v3214 = vpop.f32.mrb[0].mxu0
      %v3215 = vadd.f32 0.0, %v3214
      %v3216 = vpop.f32.mrb[0].mxu0
      %v3217 = vpop.f32.mrb[0].mxu0
      %v3218 = vadd.f32 0.0, %v3217
      %v3219 = vpop.f32.mrb[0].mxu0
      %3220 = vmatprep.mubr.bf16.mxu0 0
      %3221 = vmatmul.mubr.bf16.gmra.mrb[0].mxu0 %v1809
      %v3222 = vpop.f32.mrb[0].mxu0
      %v3223 = vadd.f32 0.0, %v3222
      %v3224 = vpop.f32.mrb[0].mxu0
      %v3225 = vpop.f32.mrb[0].mxu0
      %v3226 = vadd.f32 0.0, %v3225
      %v3227 = vpop.f32.mrb[0].mxu0
      %3228 = vmatprep.mubr.bf16.mxu0 0
      %3229 = vmatmul.mubr.bf16.gmra.mrb[0].mxu0 %v1812
      %v3230 = vpop.f32.mrb[0].mxu0
      %v3231 = vadd.f32 0.0, %v3230
      %v3232 = vpop.f32.mrb[0].mxu0
      %v3233 = vpop.f32.mrb[0].mxu0
      %v3234 = vadd.f32 0.0, %v3233
      %v3235 = vpop.f32.mrb[0].mxu0
      %3236 = vmatprep.mubr.bf16.mxu0 0
      %3237 = vmatmul.mubr.bf16.gmra.mrb[0].mxu0 %v1815
      %v3238 = vpop.f32.mrb[0].mxu0
      %v3239 = vadd.f32 0.0, %v3238
      %v3240 = vpop.f32.mrb[0].mxu0
      %v3241 = vpop.f32.mrb[0].mxu0
      %v3242 = vadd.f32 0.0, %v3241
      %v3243 = vpop.f32.mrb[0].mxu0
      %3244 = vmatprep.mubr.bf16.mxu0 0
      %3245 = vmatmul.mubr.bf16.gmra.mrb[0].mxu0 %v1818
      %v3246 = vpop.f32.mrb[0].mxu0
      %v3247 = vadd.f32 0.0, %v3246
      %v3248 = vpop.f32.mrb[0].mxu0
      %v3249 = vpop.f32.mrb[0].mxu0
      %v3250 = vadd.f32 0.0, %v3249
      %v3251 = vpop.f32.mrb[0].mxu0
      %3252 = vmatprep.mubr.bf16.mxu0 0
      %3253 = vmatmul.mubr.bf16.gmra.mrb[0].mxu0 %v1821
      %v3254 = vpop.f32.mrb[0].mxu0
      %v3255 = vadd.f32 0.0, %v3254
      %v3256 = vpop.f32.mrb[0].mxu0
      %v3257 = vpop.f32.mrb[0].mxu0
      %v3258 = vadd.f32 0.0, %v3257
      %v3259 = vpop.f32.mrb[0].mxu0
      %3260 = vmatprep.mubr.bf16.mxu0 0
      %3261 = vmatmul.mubr.bf16.gmra.mrb[0].mxu0 %v1824
      %v3262 = vpop.f32.mrb[0].mxu0
      %v3263 = vadd.f32 0.0, %v3262
      %v3264 = vpop.f32.mrb[0].mxu0
      %v3265 = vpop.f32.mrb[0].mxu0
      %v3266 = vadd.f32 0.0, %v3265
      %v3267 = vpop.f32.mrb[0].mxu0
      %3268 = vmatprep.mubr.bf16.mxu0 0
      %3269 = vmatmul.mubr.bf16.gmra.mrb[0].mxu0 %v1827
      %v3270 = vpop.f32.mrb[0].mxu0
      %v3271 = vadd.f32 0.0, %v3270
      %v3272 = vpop.f32.mrb[0].mxu0
      %v3273 = vpop.f32.mrb[0].mxu0
      %v3274 = vadd.f32 0.0, %v3273
      %v3275 = vpop.f32.mrb[0].mxu0
      %3276 = vmatprep.mubr.bf16.mxu0 0
      %3277 = vmatmul.mubr.bf16.gmra.mrb[0].mxu0 %v2477
      %v3278 = vpop.f32.mrb[0].mxu0
      %v3279 = vadd.f32 0.0, %v3278
      %v3280 = vpop.f32.mrb[0].mxu0
      %v3281 = vpop.f32.mrb[0].mxu0
      %v3282 = vadd.f32 0.0, %v3281
      %v3283 = vpop.f32.mrb[0].mxu0
      %3284 = vmatprep.mubr.bf16.mxu0 0
      %3285 = vmatmul.mubr.bf16.gmra.mrb[0].mxu0 %v3127
      %v3286 = vpop.f32.mrb[0].mxu0
      %v3287 = vadd.f32 0.0, %v3286
      %v3288 = vpop.f32.mrb[0].mxu0
      %v3289 = vpop.f32.mrb[0].mxu0
      %v3290 = vadd.f32 0.0, %v3289
      %v3291 = vpop.f32.mrb[0].mxu0
      %3292 = vdwg.mxu0
      %v3293 = vadd.f32 %v3075, %v3167
      %v3294 = vadd.f32 %v3076, %v3170
      %v3295 = vadd.f32 %v3077, %v3175
      %v3296 = vadd.f32 %v3078, %v3178
      %v3297 = vadd.f32 %v3079, %v3183
      %v3298 = vadd.f32 %v3080, %v3186
      %v3299 = vadd.f32 %v3081, %v3191
      %v3300 = vadd.f32 %v3082, %v3194
      %v3301 = vadd.f32 %v3083, %v3199
      %v3302 = vadd.f32 %v3084, %v3202
      %v3303 = vadd.f32 %v3085, %v3207
      %v3304 = vadd.f32 %v3086, %v3210
      %v3305 = vadd.f32 %v3087, %v3215
      %v3306 = vadd.f32 %v3088, %v3218
      %v3307 = vadd.f32 %v3089, %v3223
      %v3308 = vadd.f32 %v3090, %v3226
      %v3309 = vadd.f32 %v3091, %v3231
      %v3310 = vadd.f32 %v3092, %v3234
      %v3311 = vadd.f32 %v3093, %v3239
      %v3312 = vadd.f32 %v3094, %v3242
      %v3313 = vadd.f32 %v3095, %v3247
      %v3314 = vadd.f32 %v3096, %v3250
      %v3315 = vadd.f32 %v3097, %v3255
      %v3316 = vadd.f32 %v3098, %v3258
      %v3317 = vadd.f32 %v3099, %v3263
      %v3318 = vadd.f32 %v3100, %v3266
      %v3319 = vadd.f32 %v3101, %v3271
      %v3320 = vadd.f32 %v3102, %v3274
      %v3321 = vadd.f32 %v3103, %v3279
      %v3322 = vadd.f32 %v3104, %v3282
      %v3323 = vadd.f32 %v3105, %v3287
      %v3324 = vadd.f32 %v3106, %v3290
      %3325 = vst [vmem:[%s208] sm:$0xff] %v3293
      %3326 = vst [vmem:[%s208 + $0x8] sm:$0xff] %v3294
      %3327 = vst [vmem:[%s208 + $0x10] sm:$0xff] %v3295
      %3328 = vst [vmem:[%s208 + $0x18] sm:$0xff] %v3296
      %3329 = vst [vmem:[%s208 + $0x20] sm:$0xff] %v3297
      %3330 = vst [vmem:[%s208 + $0x28] sm:$0xff] %v3298
      %3331 = vst [vmem:[%s208 + $0x30] sm:$0xff] %v3299
      %3332 = vst [vmem:[%s208 + $0x38] sm:$0xff] %v3300
      %3333 = vst [vmem:[%s208 + $0x40] sm:$0xff] %v3301
      %3334 = vst [vmem:[%s208 + $0x48] sm:$0xff] %v3302
      %3335 = vst [vmem:[%s208 + $0x50] sm:$0xff] %v3303
      %3336 = vst [vmem:[%s208 + $0x58] sm:$0xff] %v3304
      %3337 = vst [vmem:[%s208 + $0x60] sm:$0xff] %v3305
      %3338 = vst [vmem:[%s208 + $0x68] sm:$0xff] %v3306
      %3339 = vst [vmem:[%s208 + $0x70] sm:$0xff] %v3307
      %3340 = vst [vmem:[%s208 + $0x78] sm:$0xff] %v3308
      %3341 = vst [vmem:[%s208 + $0x80] sm:$0xff] %v3309
      %3342 = vst [vmem:[%s208 + $0x88] sm:$0xff] %v3310
      %3343 = vst [vmem:[%s208 + $0x90] sm:$0xff] %v3311
      %3344 = vst [vmem:[%s208 + $0x98] sm:$0xff] %v3312
      %3345 = vst [vmem:[%s208 + $0xa0] sm:$0xff] %v3313
      %3346 = vst [vmem:[%s208 + $0xa8] sm:$0xff] %v3314
      %3347 = vst [vmem:[%s208 + $0xb0] sm:$0xff] %v3315
      %3348 = vst [vmem:[%s208 + $0xb8] sm:$0xff] %v3316
      %3349 = vst [vmem:[%s208 + $0xc0] sm:$0xff] %v3317
      %3350 = vst [vmem:[%s208 + $0xc8] sm:$0xff] %v3318
      %3351 = vst [vmem:[%s208 + $0xd0] sm:$0xff] %v3319
      %3352 = vst [vmem:[%s208 + $0xd8] sm:$0xff] %v3320
      %3353 = vst [vmem:[%s208 + $0xe0] sm:$0xff] %v3321
      %3354 = vst [vmem:[%s208 + $0xe8] sm:$0xff] %v3322
      %3355 = vst [vmem:[%s208 + $0xf0] sm:$0xff] %v3323
      %3356 = vst [vmem:[%s208 + $0xf8] sm:$0xff] %v3324
      %v3357 = vadd.f32 %v3293, %v3294
      %v3358 = vadd.f32 %v3357, %v3295
      %v3359 = vadd.f32 %v3358, %v3296
      %v3360 = vadd.f32 %v3359, %v3297
      %v3361 = vadd.f32 %v3360, %v3298
      %v3362 = vadd.f32 %v3361, %v3299
      %v3363 = vadd.f32 %v3362, %v3300
      %v3364 = vadd.f32 %v3363, %v3301
      %v3365 = vadd.f32 %v3364, %v3302
      %v3366 = vadd.f32 %v3365, %v3303
      %v3367 = vadd.f32 %v3366, %v3304
      %v3368 = vadd.f32 %v3367, %v3305
      %v3369 = vadd.f32 %v3368, %v3306
      %v3370 = vadd.f32 %v3369, %v3307
      %v3371 = vadd.f32 %v3370, %v3308
      %v3372 = vadd.f32 %v3371, %v3309
      %v3373 = vadd.f32 %v3372, %v3310
      %v3374 = vadd.f32 %v3373, %v3311
      %v3375 = vadd.f32 %v3374, %v3312
      %v3376 = vadd.f32 %v3375, %v3313
      %v3377 = vadd.f32 %v3376, %v3314
      %v3378 = vadd.f32 %v3377, %v3315
      %v3379 = vadd.f32 %v3378, %v3316
      %v3380 = vadd.f32 %v3379, %v3317
      %v3381 = vadd.f32 %v3380, %v3318
      %v3382 = vadd.f32 %v3381, %v3319
      %v3383 = vadd.f32 %v3382, %v3320
      %v3384 = vadd.f32 %v3383, %v3321
      %v3385 = vadd.f32 %v3384, %v3322
      %v3386 = vadd.f32 %v3385, %v3323
      %v3387 = vadd.f32 %v3386, %v3324
      %v3388 = vrot.slane %v3387, 4
      %v3389 = vadd.f32 %v3387, %v3388
      %v3390 = vrot.slane %v3389, 2
      %v3391 = vadd.f32 %v3389, %v3390
      %v3392 = vrot.slane %v3391, 1
      %v3393 = vadd.f32 %v3391, %v3392
      %3394 = vst [vmem:[%s211] sm:$0x1] %v3393
      %v3395 = vmul.f32 %v3293, %v3293
      %v3396 = vmul.f32 %v3294, %v3294
      %v3397 = vmul.f32 %v3295, %v3295
      %v3398 = vmul.f32 %v3296, %v3296
      %v3399 = vmul.f32 %v3297, %v3297
      %v3400 = vmul.f32 %v3298, %v3298
      %v3401 = vmul.f32 %v3299, %v3299
      %v3402 = vmul.f32 %v3300, %v3300
      %v3403 = vmul.f32 %v3301, %v3301
      %v3404 = vmul.f32 %v3302, %v3302
      %v3405 = vmul.f32 %v3303, %v3303
      %v3406 = vmul.f32 %v3304, %v3304
      %v3407 = vmul.f32 %v3305, %v3305
      %v3408 = vmul.f32 %v3306, %v3306
      %v3409 = vmul.f32 %v3307, %v3307
      %v3410 = vmul.f32 %v3308, %v3308
      %v3411 = vmul.f32 %v3309, %v3309
      %v3412 = vmul.f32 %v3310, %v3310
      %v3413 = vmul.f32 %v3311, %v3311
      %v3414 = vmul.f32 %v3312, %v3312
      %v3415 = vmul.f32 %v3313, %v3313
      %v3416 = vmul.f32 %v3314, %v3314
      %v3417 = vmul.f32 %v3315, %v3315
      %v3418 = vmul.f32 %v3316, %v3316
      %v3419 = vmul.f32 %v3317, %v3317
      %v3420 = vmul.f32 %v3318, %v3318
      %v3421 = vmul.f32 %v3319, %v3319
      %v3422 = vmul.f32 %v3320, %v3320
      %v3423 = vmul.f32 %v3321, %v3321
      %v3424 = vmul.f32 %v3322, %v3322
      %v3425 = vmul.f32 %v3323, %v3323
      %v3426 = vmul.f32 %v3324, %v3324
      %v3427 = vadd.f32 %v3395, %v3396
      %v3428 = vadd.f32 %v3427, %v3397
      %v3429 = vadd.f32 %v3428, %v3398
      %v3430 = vadd.f32 %v3429, %v3399
      %v3431 = vadd.f32 %v3430, %v3400
      %v3432 = vadd.f32 %v3431, %v3401
      %v3433 = vadd.f32 %v3432, %v3402
      %v3434 = vadd.f32 %v3433, %v3403
      %v3435 = vadd.f32 %v3434, %v3404
      %v3436 = vadd.f32 %v3435, %v3405
      %v3437 = vadd.f32 %v3436, %v3406
      %v3438 = vadd.f32 %v3437, %v3407
      %v3439 = vadd.f32 %v3438, %v3408
      %v3440 = vadd.f32 %v3439, %v3409
      %v3441 = vadd.f32 %v3440, %v3410
      %v3442 = vadd.f32 %v3441, %v3411
      %v3443 = vadd.f32 %v3442, %v3412
      %v3444 = vadd.f32 %v3443, %v3413
      %v3445 = vadd.f32 %v3444, %v3414
      %v3446 = vadd.f32 %v3445, %v3415
      %v3447 = vadd.f32 %v3446, %v3416
      %v3448 = vadd.f32 %v3447, %v3417
      %v3449 = vadd.f32 %v3448, %v3418
      %v3450 = vadd.f32 %v3449, %v3419
      %v3451 = vadd.f32 %v3450, %v3420
      %v3452 = vadd.f32 %v3451, %v3421
      %v3453 = vadd.f32 %v3452, %v3422
      %v3454 = vadd.f32 %v3453, %v3423
      %v3455 = vadd.f32 %v3454, %v3424
      %v3456 = vadd.f32 %v3455, %v3425
      %v3457 = vadd.f32 %v3456, %v3426
      %v3458 = vrot.slane %v3457, 4
      %v3459 = vadd.f32 %v3457, %v3458
      %v3460 = vrot.slane %v3459, 2
      %v3461 = vadd.f32 %v3459, %v3460
      %v3462 = vrot.slane %v3461, 1
      %v3463 = vadd.f32 %v3461, %v3462
      %3464 = vst [vmem:[%s214] sm:$0x1] %v3463
      %p3465 = scmp.lt.s32.totalorder %s16, 1
      %s3466 = scalar_select %p3465, %s16, 1
      %s3467 = smul.addr %s3466, 32
      %s3468 = smul.addr %s3467, 8
      %s3469 = scalar_lea.vmem %s2, %s3468
      %p3470 = scmp.lt.s32.totalorder %s16, 1
      %s3471 = scalar_select %p3470, %s16, 1
      %s3472 = scalar_lea.vmem %s3, %s3471
      %p3473 = scmp.lt.s32.totalorder %s16, 1
      %s3474 = scalar_select %p3473, %s16, 1
      %s3475 = scalar_lea.vmem %s4, %s3474
      // Predicated region
      $region29: #{_forward.3} parent=27 // pred_check
        %p3476 = pneg %p81
      $region30: #{_forward.3} parent=27 // pred_check_branch
        %3478 = sbr.rel (%p3476) target = $region32
      $region31: #{_forward.3} parent=27 // pred_region
        _
      $region32: #{_forward.3} parent=27 // pred_fallthru
        _
      // Predicated region
      $region33: #{_forward.3} parent=27 // pred_check
        %p3479 = pneg %p107
      $region34: #{_forward.3} parent=27 // pred_check_branch
        %3481 = sbr.rel (%p3479) target = $region36
      $region35: #{_forward.3} parent=27 // pred_region
        _
      $region36: #{_forward.3} parent=27 // pred_fallthru
        _
      // Predicated region
      $region37: #{_forward.3} parent=27 // pred_check
        %p3482 = pneg %p133
      $region38: #{_forward.3} parent=27 // pred_check_branch
        %3484 = sbr.rel (%p3482) target = $region40
      $region39: #{_forward.3} parent=27 // pred_region
        _
      $region40: #{_forward.3} parent=27 // pred_fallthru
        _
    $region28: #{_forward.3} parent=5 // pred_fallthru
      _
    %p3485 = scmp.le.s32.totalorder 2, %s11
    // Predicated region
    $region41: #{_forward.3} parent=5 // pred_check
      %p3486 = pneg %p3485
    $region42: #{_forward.3} parent=5 // pred_check_branch
      %3488 = sbr.rel (%p3486) target = $region44
    $region43: #{_forward.3} parent=5 // pred_region
      %s3489 = ssub.s32 %s11, 2
      // Predicated region
      $region45: #{_forward.3} parent=43 // pred_check
        %p3490 = pneg %p87
      $region46: #{_forward.3} parent=43 // pred_check_branch
        %3492 = sbr.rel (%p3490) target = $region48
      $region47: #{_forward.3} parent=43 // pred_region
        %p3493 = scmp.lt.s32.totalorder %s17, 1
        %s3494 = scalar_select %p3493, %s17, 1
        %s3495 = smul.addr %s3494, 32
        %s3496 = smul.addr %s3495, 8
        %s3497 = scalar_lea.vmem %s2, %s3496
      $region48: #{_forward.3} parent=43 // pred_fallthru
        _
      // Predicated region
      $region49: #{_forward.3} parent=43 // pred_check
        %p3498 = pneg %p113
      $region50: #{_forward.3} parent=43 // pred_check_branch
        %3500 = sbr.rel (%p3498) target = $region52
      $region51: #{_forward.3} parent=43 // pred_region
        %p3501 = scmp.lt.s32.totalorder %s17, 1
        %s3502 = scalar_select %p3501, %s17, 1
        %s3503 = scalar_lea.vmem %s3, %s3502
      $region52: #{_forward.3} parent=43 // pred_fallthru
        _
      // Predicated region
      $region53: #{_forward.3} parent=43 // pred_check
        %p3504 = pneg %p139
      $region54: #{_forward.3} parent=43 // pred_check_branch
        %3506 = sbr.rel (%p3504) target = $region56
      $region55: #{_forward.3} parent=43 // pred_region
        %p3507 = scmp.lt.s32.totalorder %s17, 1
        %s3508 = scalar_select %p3507, %s17, 1
        %s3509 = scalar_lea.vmem %s4, %s3508
      $region56: #{_forward.3} parent=43 // pred_fallthru
        _
    $region44: #{_forward.3} parent=5 // pred_fallthru
      _
  $region6: #{_forward.3} parent=0 // loop_footer
    %s15 = sadd.s32 1, %s11
  $region7: #{_forward.3} parent=0 // loop_footer_branch
    %10 = sbr.rel target = $region3
  $region8: #{_forward.3} parent=0 // loop_exit
    _

// kernel: _forward.4
$region0: #{_forward.4}
  #allocation0 [shape = 'u32[]', space=smem, size = 0x4, offset = 0x4, fixed_abs, tag = 'smem constant byte address 0x4 - core index']
  #allocation1 [shape = 'u32[144,128]{1,0:T(1,128)}', space=vmem, size = 0x12000, scoped, tag = 'internal scratch']
  #allocation2 [shape = 'bf16[18,25,128]{2,1,0:T(8,128)(2,1)}', space=vmem, size = 0x24000, scoped, tag = 'scratch operand']
  %s0 = inlined_call_operand.vmem [shape: f32[2,16,16,128], index: 0, kind: input, shape index: {}]
  %s1 = inlined_call_operand.vmem [shape: f32[1,128], index: 1, kind: input, shape index: {}]
  %s2 = inlined_call_operand.vmem [shape: f32[1,128], index: 2, kind: input, shape index: {}]
  %s3 = inlined_call_operand.vmem [shape: bf16[9,128,128], index: 3, kind: input, shape index: {}]
  %s4 = inlined_call_operand.vmem [shape: f32[2,16,16,128], index: 4, kind: output, shape index: {0}]
  %s5 = inlined_call_operand.vmem [shape: f32[2,1,128], index: 5, kind: output, shape index: {1}]
  %s6 = inlined_call_operand.vmem [shape: f32[2,1,128], index: 6, kind: output, shape index: {2}]
  %7 = xla_tuple %s4, %s5, %s6
  %s8 = sld [smem:[#allocation0]]
  $region65: #{_forward.4} parent=0
    _
  %s10 = ssub.s32 1, %s8
  %s11 = scalar_select 0, %s10, %s8
  loop: start=0, step=1, limit=4
  $region2: #{_forward.4} parent=0 // loop_pre_header
    _
  $region3: #{_forward.4} parent=0 // loop_header
    %s13 = sphi 0, %s17
    %p14 = scmp.ge.s32.totalorder %s13, 4
    %s23 = sphi 0, %s25
    %s26 = sphi 0, %s23
    %s27 = sphi 0, %s26
    %s43 = sphi 0, %s27
    %s47 = sphi 0, %s47
    %s49 = sphi 0, %s47
    %s50 = sphi 0, %s49
    %s64 = sphi 0, %s50
    %s68 = sphi 0, %s68
    %s70 = sphi 0, %s68
    %s71 = sphi 0, %s70
    %s85 = sphi 0, %s71
    %s89 = sphi 0, %s89
    %s91 = sphi 0, %s89
    %s92 = sphi 0, %s91
    %s106 = sphi 0, %s92
    %s112 = sphi 0, %s114
    %s115 = sphi 0, %s112
    %s116 = sphi 0, %s115
    %s132 = sphi 0, %s116
    %s138 = sphi 0, %s140
    %s141 = sphi 0, %s138
    %s142 = sphi 0, %s141
    %s158 = sphi 0, %s142
    %s164 = sphi 0, %s166
    %s167 = sphi 0, %s164
    %s168 = sphi 0, %s167
    %s184 = sphi 0, %s168
  $region4: #{_forward.4} parent=0 // loop_header_branch
    %16 = sbr.rel (%p14) target = $region8
  $region5: #{_forward.4} parent=0 // loop_body
    %s18 = ssub.s32 %s13, 1
    %s19 = ssub.s32 %s13, 2
    %s20 = sadd.s32 %s13, 1
    %s21 = ssub.s32 %s13, %s20
    %p22 = scmp.eq.s32.totalorder %s21, 0
    %s24 = sadd.s32 %s23, 1
    %s25 = scalar_select %p22, %s23, %s24
    %p28 = pneg %p22
    %p29 = scmp.eq.s32.totalorder %s13, 1
    %p30 = por %p28, %p29
    %p31 = scmp.ne.s32.totalorder %s23, %s26
    %p32 = scmp.eq.s32.totalorder %s13, 0
    %p33 = por %p31, %p32
    %p34 = scmp.ne.s32.totalorder %s23, %s26
    %p35 = scmp.eq.s32.totalorder %s18, 1
    %p36 = por %p34, %p35
    %p37 = scmp.ne.s32.totalorder %s26, %s27
    %p38 = scmp.eq.s32.totalorder %s18, 0
    %p39 = por %p37, %p38
    %p40 = scmp.ne.s32.totalorder %s26, %s27
    %p41 = scmp.eq.s32.totalorder %s19, 1
    %p42 = por %p40, %p41
    %p44 = scmp.ne.s32.totalorder %s27, %s43
    %p45 = scmp.eq.s32.totalorder %s19, 0
    %p46 = por %p44, %p45
    %s48 = sadd.s32 %s47, 1
    %p51 = scmp.eq.s32.totalorder %s13, 1
    %p52 = scmp.ne.s32.totalorder %s47, %s49
    %p53 = scmp.eq.s32.totalorder %s13, 0
    %p54 = por %p52, %p53
    %p55 = scmp.ne.s32.totalorder %s47, %s49
    %p56 = scmp.eq.s32.totalorder %s18, 1
    %p57 = por %p55, %p56
    %p58 = scmp.ne.s32.totalorder %s49, %s50
    %p59 = scmp.eq.s32.totalorder %s18, 0
    %p60 = por %p58, %p59
    %p61 = scmp.ne.s32.totalorder %s49, %s50
    %p62 = scmp.eq.s32.totalorder %s19, 1
    %p63 = por %p61, %p62
    %p65 = scmp.ne.s32.totalorder %s50, %s64
    %p66 = scmp.eq.s32.totalorder %s19, 0
    %p67 = por %p65, %p66
    %s69 = sadd.s32 %s68, 1
    %p72 = scmp.eq.s32.totalorder %s13, 1
    %p73 = scmp.ne.s32.totalorder %s68, %s70
    %p74 = scmp.eq.s32.totalorder %s13, 0
    %p75 = por %p73, %p74
    %p76 = scmp.ne.s32.totalorder %s68, %s70
    %p77 = scmp.eq.s32.totalorder %s18, 1
    %p78 = por %p76, %p77
    %p79 = scmp.ne.s32.totalorder %s70, %s71
    %p80 = scmp.eq.s32.totalorder %s18, 0
    %p81 = por %p79, %p80
    %p82 = scmp.ne.s32.totalorder %s70, %s71
    %p83 = scmp.eq.s32.totalorder %s19, 1
    %p84 = por %p82, %p83
    %p86 = scmp.ne.s32.totalorder %s71, %s85
    %p87 = scmp.eq.s32.totalorder %s19, 0
    %p88 = por %p86, %p87
    %s90 = sadd.s32 %s89, 1
    %p93 = scmp.eq.s32.totalorder %s13, 1
    %p94 = scmp.ne.s32.totalorder %s89, %s91
    %p95 = scmp.eq.s32.totalorder %s13, 0
    %p96 = por %p94, %p95
    %p97 = scmp.ne.s32.totalorder %s89, %s91
    %p98 = scmp.eq.s32.totalorder %s18, 1
    %p99 = por %p97, %p98
    %p100 = scmp.ne.s32.totalorder %s91, %s92
    %p101 = scmp.eq.s32.totalorder %s18, 0
    %p102 = por %p100, %p101
    %p103 = scmp.ne.s32.totalorder %s91, %s92
    %p104 = scmp.eq.s32.totalorder %s19, 1
    %p105 = por %p103, %p104
    %p107 = scmp.ne.s32.totalorder %s92, %s106
    %p108 = scmp.eq.s32.totalorder %s19, 0
    %p109 = por %p107, %p108
    %s110 = ssub.s32 %s13, %s20
    %p111 = scmp.eq.s32.totalorder %s110, 0
    %s113 = sadd.s32 %s112, 1
    %s114 = scalar_select %p111, %s112, %s113
    %p117 = pneg %p111
    %p118 = scmp.eq.s32.totalorder %s13, 1
    %p119 = por %p117, %p118
    %p120 = scmp.ne.s32.totalorder %s112, %s115
    %p121 = scmp.eq.s32.totalorder %s13, 0
    %p122 = por %p120, %p121
    %p123 = scmp.ne.s32.totalorder %s112, %s115
    %p124 = scmp.eq.s32.totalorder %s18, 1
    %p125 = por %p123, %p124
    %p126 = scmp.ne.s32.totalorder %s115, %s116
    %p127 = scmp.eq.s32.totalorder %s18, 0
    %p128 = por %p126, %p127
    %p129 = scmp.ne.s32.totalorder %s115, %s116
    %p130 = scmp.eq.s32.totalorder %s19, 1
    %p131 = por %p129, %p130
    %p133 = scmp.ne.s32.totalorder %s116, %s132
    %p134 = scmp.eq.s32.totalorder %s19, 0
    %p135 = por %p133, %p134
    %s136 = ssub.s32 %s13, %s20
    %p137 = scmp.eq.s32.totalorder %s136, 0
    %s139 = sadd.s32 %s138, 1
    %s140 = scalar_select %p137, %s138, %s139
    %p143 = pneg %p137
    %p144 = scmp.eq.s32.totalorder %s13, 1
    %p145 = por %p143, %p144
    %p146 = scmp.ne.s32.totalorder %s138, %s141
    %p147 = scmp.eq.s32.totalorder %s13, 0
    %p148 = por %p146, %p147
    %p149 = scmp.ne.s32.totalorder %s138, %s141
    %p150 = scmp.eq.s32.totalorder %s18, 1
    %p151 = por %p149, %p150
    %p152 = scmp.ne.s32.totalorder %s141, %s142
    %p153 = scmp.eq.s32.totalorder %s18, 0
    %p154 = por %p152, %p153
    %p155 = scmp.ne.s32.totalorder %s141, %s142
    %p156 = scmp.eq.s32.totalorder %s19, 1
    %p157 = por %p155, %p156
    %p159 = scmp.ne.s32.totalorder %s142, %s158
    %p160 = scmp.eq.s32.totalorder %s19, 0
    %p161 = por %p159, %p160
    %s162 = ssub.s32 %s13, %s20
    %p163 = scmp.eq.s32.totalorder %s162, 0
    %s165 = sadd.s32 %s164, 1
    %s166 = scalar_select %p163, %s164, %s165
    %p169 = pneg %p163
    %p170 = scmp.eq.s32.totalorder %s13, 1
    %p171 = por %p169, %p170
    %p172 = scmp.ne.s32.totalorder %s164, %s167
    %p173 = scmp.eq.s32.totalorder %s13, 0
    %p174 = por %p172, %p173
    %p175 = scmp.ne.s32.totalorder %s164, %s167
    %p176 = scmp.eq.s32.totalorder %s18, 1
    %p177 = por %p175, %p176
    %p178 = scmp.ne.s32.totalorder %s167, %s168
    %p179 = scmp.eq.s32.totalorder %s18, 0
    %p180 = por %p178, %p179
    %p181 = scmp.ne.s32.totalorder %s167, %s168
    %p182 = scmp.eq.s32.totalorder %s19, 1
    %p183 = por %p181, %p182
    %p185 = scmp.ne.s32.totalorder %s168, %s184
    %p186 = scmp.eq.s32.totalorder %s19, 0
    %p187 = por %p185, %p186
    %p188 = scmp.le.s32.totalorder 1, %s13
    %p189 = scmp.lt.s32.totalorder %s13, 3
    %p190 = pnand %p188, %p189
    %p191 = pneg %p190
    // Predicated region
    $region9: #{_forward.4} parent=5 // pred_check
      _
    $region10: #{_forward.4} parent=5 // pred_check_branch
      %193 = sbr.rel (%p190) target = $region12
    $region11: #{_forward.4} parent=5 // pred_region
      %s194 = ssub.s32 %s13, 1
      // Predicated region
      $region13: #{_forward.4} parent=11 // pred_check
        %p195 = pneg %p60
      $region14: #{_forward.4} parent=11 // pred_check_branch
        %197 = sbr.rel (%p195) target = $region16
      $region15: #{_forward.4} parent=11 // pred_region
        _
      $region16: #{_forward.4} parent=11 // pred_fallthru
        _
      // Predicated region
      $region17: #{_forward.4} parent=11 // pred_check
        %p198 = pneg %p81
      $region18: #{_forward.4} parent=11 // pred_check_branch
        %200 = sbr.rel (%p198) target = $region20
      $region19: #{_forward.4} parent=11 // pred_region
        _
      $region20: #{_forward.4} parent=11 // pred_fallthru
        _
      // Predicated region
      $region21: #{_forward.4} parent=11 // pred_check
        %p201 = pneg %p102
      $region22: #{_forward.4} parent=11 // pred_check_branch
        %203 = sbr.rel (%p201) target = $region24
      $region23: #{_forward.4} parent=11 // pred_region
        _
      $region24: #{_forward.4} parent=11 // pred_fallthru
        _
    $region12: #{_forward.4} parent=5 // pred_fallthru
      _
    %p204 = scmp.lt.s32.totalorder %s13, 2
    // Predicated region
    $region25: #{_forward.4} parent=5 // pred_check
      %p205 = pneg %p204
    $region26: #{_forward.4} parent=5 // pred_check_branch
      %207 = sbr.rel (%p205) target = $region28
    $region27: #{_forward.4} parent=5 // pred_region
      // Predicated region
      $region29: #{_forward.4} parent=27 // pred_check
        %p208 = pneg %p33
      $region30: #{_forward.4} parent=27 // pred_check_branch
        %210 = sbr.rel (%p208) target = $region32
      $region31: #{_forward.4} parent=27 // pred_region
        %p211 = scmp.lt.s32.totalorder %s13, 1
        %s212 = scalar_select %p211, %s13, 1
        %s213 = smul.addr %s212, 32
        %s214 = smul.addr %s213, 8
        %s215 = scalar_lea.vmem %s0, %s214
      $region32: #{_forward.4} parent=27 // pred_fallthru
        _
    $region28: #{_forward.4} parent=5 // pred_fallthru
      _
    %p216 = scmp.le.s32.totalorder 1, %s13
    %p217 = scmp.lt.s32.totalorder %s13, 3
    %p218 = pnand %p216, %p217
    %p219 = pneg %p218
    // Predicated region
    $region33: #{_forward.4} parent=5 // pred_check
      _
    $region34: #{_forward.4} parent=5 // pred_check_branch
      %221 = sbr.rel (%p218) target = $region36
    $region35: #{_forward.4} parent=5 // pred_region
      %s222 = ssub.s32 %s13, 1
      %p223 = scmp.lt.s32.totalorder %s18, 1
      %s224 = scalar_select %p223, %s18, 1
      %s225 = smul.addr %s224, 32
      %s226 = smul.addr %s225, 8
      %s227 = scalar_lea.vmem %s0, %s226
      %p228 = pneg %p39
      %p229 = pneg %p36
      %p230 = pneg %p60
      %p231 = pneg %p57
      %p232 = pneg %p81
      %p233 = pneg %p78
      %p234 = pneg %p102
      %p235 = pneg %p99
      %p236 = pneg %p128
      %p237 = pneg %p125
      %p238 = scmp.lt.s32.totalorder %s18, 1
      %s239 = scalar_select %p238, %s18, 1
      %s240 = smul.addr %s239, 32
      %s241 = smul.addr %s240, 8
      %s242 = scalar_lea.vmem %s4, %s241
      %p243 = pneg %p154
      %p244 = pneg %p151
      %p245 = scmp.lt.s32.totalorder %s18, 1
      %s246 = scalar_select %p245, %s18, 1
      %s247 = scalar_lea.vmem %s5, %s246
      %p248 = pneg %p180
      %p249 = pneg %p177
      %p250 = scmp.lt.s32.totalorder %s18, 1
      %s251 = scalar_select %p250, %s18, 1
      %s252 = scalar_lea.vmem %s6, %s251
      %p253 = scmp.lt.s32.totalorder %s18, 1
      %s254 = scalar_select %p253, %s18, 1
      %s255 = smul.addr %s254, 32
      %s256 = smul.addr %s255, 8
      %s257 = scalar_lea.vmem %s0, %s256
      %p258 = scmp.lt.s32.totalorder %s18, 1
      %s259 = scalar_select %p258, %s18, 1
      %s260 = smul.addr %s259, 32
      %s261 = smul.addr %s260, 8
      %s262 = scalar_lea.vmem %s4, %s261
      %p263 = scmp.lt.s32.totalorder %s18, 1
      %s264 = scalar_select %p263, %s18, 1
      %s265 = scalar_lea.vmem %s5, %s264
      %p266 = scmp.lt.s32.totalorder %s18, 1
      %s267 = scalar_select %p266, %s18, 1
      %s268 = scalar_lea.vmem %s6, %s267
      %v270 = vld [vmem:[%s257] sm:$0xff]
      %v271 = vld [vmem:[%s257 + $0x8] sm:$0xff]
      %v272 = vld [vmem:[%s257 + $0x10] sm:$0xff]
      %v273 = vld [vmem:[%s257 + $0x18] sm:$0xff]
      %v274 = vld [vmem:[%s257 + $0x20] sm:$0xff]
      %v275 = vld [vmem:[%s257 + $0x28] sm:$0xff]
      %v276 = vld [vmem:[%s257 + $0x30] sm:$0xff]
      %v277 = vld [vmem:[%s257 + $0x38] sm:$0xff]
      %v278 = vld [vmem:[%s257 + $0x40] sm:$0xff]
      %v279 = vld [vmem:[%s257 + $0x48] sm:$0xff]
      %v280 = vld [vmem:[%s257 + $0x50] sm:$0xff]
      %v281 = vld [vmem:[%s257 + $0x58] sm:$0xff]
      %v282 = vld [vmem:[%s257 + $0x60] sm:$0xff]
      %v283 = vld [vmem:[%s257 + $0x68] sm:$0xff]
      %v284 = vld [vmem:[%s257 + $0x70] sm:$0xff]
      %v285 = vld [vmem:[%s257 + $0x78] sm:$0xff]
      %v286 = vld [vmem:[%s257 + $0x80] sm:$0xff]
      %v287 = vld [vmem:[%s257 + $0x88] sm:$0xff]
      %v288 = vld [vmem:[%s257 + $0x90] sm:$0xff]
      %v289 = vld [vmem:[%s257 + $0x98] sm:$0xff]
      %v290 = vld [vmem:[%s257 + $0xa0] sm:$0xff]
      %v291 = vld [vmem:[%s257 + $0xa8] sm:$0xff]
      %v292 = vld [vmem:[%s257 + $0xb0] sm:$0xff]
      %v293 = vld [vmem:[%s257 + $0xb8] sm:$0xff]
      %v294 = vld [vmem:[%s257 + $0xc0] sm:$0xff]
      %v295 = vld [vmem:[%s257 + $0xc8] sm:$0xff]
      %v296 = vld [vmem:[%s257 + $0xd0] sm:$0xff]
      %v297 = vld [vmem:[%s257 + $0xd8] sm:$0xff]
      %v298 = vld [vmem:[%s257 + $0xe0] sm:$0xff]
      %v299 = vld [vmem:[%s257 + $0xe8] sm:$0xff]
      %v300 = vld [vmem:[%s257 + $0xf0] sm:$0xff]
      %v301 = vld [vmem:[%s257 + $0xf8] sm:$0xff]
      %v302 = vld [vmem:[%s1] sm:$0x1]
      %v304 = vlaneseq
      %v305 = vshrl.u32 %v304, 7
      %v306 = vsub.s32 0, %v305
      %v307 = vrot.slane %v302, %v306
      %v309 = vmul.f32 %v270, %v307
      %v310 = vmul.f32 %v271, %v307
      %v311 = vmul.f32 %v272, %v307
      %v312 = vmul.f32 %v273, %v307
      %v313 = vmul.f32 %v274, %v307
      %v314 = vmul.f32 %v275, %v307
      %v315 = vmul.f32 %v276, %v307
      %v316 = vmul.f32 %v277, %v307
      %v317 = vmul.f32 %v278, %v307
      %v318 = vmul.f32 %v279, %v307
      %v319 = vmul.f32 %v280, %v307
      %v320 = vmul.f32 %v281, %v307
      %v321 = vmul.f32 %v282, %v307
      %v322 = vmul.f32 %v283, %v307
      %v323 = vmul.f32 %v284, %v307
      %v324 = vmul.f32 %v285, %v307
      %v325 = vmul.f32 %v286, %v307
      %v326 = vmul.f32 %v287, %v307
      %v327 = vmul.f32 %v288, %v307
      %v328 = vmul.f32 %v289, %v307
      %v329 = vmul.f32 %v290, %v307
      %v330 = vmul.f32 %v291, %v307
      %v331 = vmul.f32 %v292, %v307
      %v332 = vmul.f32 %v293, %v307
      %v333 = vmul.f32 %v294, %v307
      %v334 = vmul.f32 %v295, %v307
      %v335 = vmul.f32 %v296, %v307
      %v336 = vmul.f32 %v297, %v307
      %v337 = vmul.f32 %v298, %v307
      %v338 = vmul.f32 %v299, %v307
      %v339 = vmul.f32 %v300, %v307
      %v340 = vmul.f32 %v301, %v307
      %v341 = vld [vmem:[%s2] sm:$0x1]
      %v343 = vlaneseq
      %v344 = vshrl.u32 %v343, 7
      %v345 = vsub.s32 0, %v344
      %v346 = vrot.slane %v341, %v345
      %v348 = vadd.f32 %v309, %v346
      %v349 = vadd.f32 %v310, %v346
      %v350 = vadd.f32 %v311, %v346
      %v351 = vadd.f32 %v312, %v346
      %v352 = vadd.f32 %v313, %v346
      %v353 = vadd.f32 %v314, %v346
      %v354 = vadd.f32 %v315, %v346
      %v355 = vadd.f32 %v316, %v346
      %v356 = vadd.f32 %v317, %v346
      %v357 = vadd.f32 %v318, %v346
      %v358 = vadd.f32 %v319, %v346
      %v359 = vadd.f32 %v320, %v346
      %v360 = vadd.f32 %v321, %v346
      %v361 = vadd.f32 %v322, %v346
      %v362 = vadd.f32 %v323, %v346
      %v363 = vadd.f32 %v324, %v346
      %v364 = vadd.f32 %v325, %v346
      %v365 = vadd.f32 %v326, %v346
      %v366 = vadd.f32 %v327, %v346
      %v367 = vadd.f32 %v328, %v346
      %v368 = vadd.f32 %v329, %v346
      %v369 = vadd.f32 %v330, %v346
      %v370 = vadd.f32 %v331, %v346
      %v371 = vadd.f32 %v332, %v346
      %v372 = vadd.f32 %v333, %v346
      %v373 = vadd.f32 %v334, %v346
      %v374 = vadd.f32 %v335, %v346
      %v375 = vadd.f32 %v336, %v346
      %v376 = vadd.f32 %v337, %v346
      %v377 = vadd.f32 %v338, %v346
      %v378 = vadd.f32 %v339, %v346
      %v379 = vadd.f32 %v340, %v346
      %v380 = vmax.f32 %v348, 0.0
      %v381 = vmax.f32 %v349, 0.0
      %v382 = vmax.f32 %v350, 0.0
      %v383 = vmax.f32 %v351, 0.0
      %v384 = vmax.f32 %v352, 0.0
      %v385 = vmax.f32 %v353, 0.0
      %v386 = vmax.f32 %v354, 0.0
      %v387 = vmax.f32 %v355, 0.0
      %v388 = vmax.f32 %v356, 0.0
      %v389 = vmax.f32 %v357, 0.0
      %v390 = vmax.f32 %v358, 0.0
      %v391 = vmax.f32 %v359, 0.0
      %v392 = vmax.f32 %v360, 0.0
      %v393 = vmax.f32 %v361, 0.0
      %v394 = vmax.f32 %v362, 0.0
      %v395 = vmax.f32 %v363, 0.0
      %v396 = vmax.f32 %v364, 0.0
      %v397 = vmax.f32 %v365, 0.0
      %v398 = vmax.f32 %v366, 0.0
      %v399 = vmax.f32 %v367, 0.0
      %v400 = vmax.f32 %v368, 0.0
      %v401 = vmax.f32 %v369, 0.0
      %v402 = vmax.f32 %v370, 0.0
      %v403 = vmax.f32 %v371, 0.0
      %v404 = vmax.f32 %v372, 0.0
      %v405 = vmax.f32 %v373, 0.0
      %v406 = vmax.f32 %v374, 0.0
      %v407 = vmax.f32 %v375, 0.0
      %v408 = vmax.f32 %v376, 0.0
      %v409 = vmax.f32 %v377, 0.0
      %v410 = vmax.f32 %v378, 0.0
      %v411 = vmax.f32 %v379, 0.0
      %412 = vst [vmem:[#allocation2] sm:$0xf] 0
      %413 = vst [vmem:[#allocation2 + $0x4] sm:$0xf] 0
      %414 = vst [vmem:[#allocation2 + $0x8] sm:$0xf] 0
      %vm415 = vcmask 1040384
      %vm416 = vsmask.f32 256
      %vm417 = vmand %vm415, %vm416
      %v418 = vld [vmem:[#allocation2 + $0xc] sm:$0x1]
      %v419 = vsel %vm417, 0, %v418
      %420 = vst [vmem:[#allocation2 + $0xc] sm:$0x1] %v419
      %421 = vst [vmem:[#allocation2 + $0x10] sm:$0xf] 0
      %422 = vst [vmem:[#allocation2 + $0x14] sm:$0xf] 0
      %423 = vst [vmem:[#allocation2 + $0x18] sm:$0xf] 0
      %v424 = vld [vmem:[#allocation2 + $0x1c] sm:$0x1]
      %v425 = vsel %vm417, 0, %v424
      %426 = vst [vmem:[#allocation2 + $0x1c] sm:$0x1] %v425
      %427 = vst [vmem:[#allocation2 + $0x20] sm:$0xf] 0
      %428 = vst [vmem:[#allocation2 + $0x24] sm:$0xf] 0
      %429 = vst [vmem:[#allocation2 + $0x28] sm:$0xf] 0
      %v430 = vld [vmem:[#allocation2 + $0x2c] sm:$0x1]
      %v431 = vsel %vm417, 0, %v430
      %432 = vst [vmem:[#allocation2 + $0x2c] sm:$0x1] %v431
      %433 = vst [vmem:[#allocation2 + $0x30] sm:$0xf] 0
      %434 = vst [vmem:[#allocation2 + $0x34] sm:$0xf] 0
      %435 = vst [vmem:[#allocation2 + $0x38] sm:$0xf] 0
      %v436 = vld [vmem:[#allocation2 + $0x3c] sm:$0x1]
      %v437 = vsel %vm417, 0, %v436
      %438 = vst [vmem:[#allocation2 + $0x3c] sm:$0x1] %v437
      %439 = vst [vmem:[#allocation2 + $0x40] sm:$0xf] 0
      %440 = vst [vmem:[#allocation2 + $0x44] sm:$0xf] 0
      %441 = vst [vmem:[#allocation2 + $0x48] sm:$0xf] 0
      %v442 = vld [vmem:[#allocation2 + $0x4c] sm:$0x1]
      %v443 = vsel %vm417, 0, %v442
      %444 = vst [vmem:[#allocation2 + $0x4c] sm:$0x1] %v443
      %445 = vst [vmem:[#allocation2 + $0x50] sm:$0xf] 0
      %446 = vst [vmem:[#allocation2 + $0x54] sm:$0xf] 0
      %447 = vst [vmem:[#allocation2 + $0x58] sm:$0xf] 0
      %v448 = vld [vmem:[#allocation2 + $0x5c] sm:$0x1]
      %v449 = vsel %vm417, 0, %v448
      %450 = vst [vmem:[#allocation2 + $0x5c] sm:$0x1] %v449
      %451 = vst [vmem:[#allocation2 + $0x60] sm:$0xf] 0
      %452 = vst [vmem:[#allocation2 + $0x64] sm:$0xf] 0
      %453 = vst [vmem:[#allocation2 + $0x68] sm:$0xf] 0
      %v454 = vld [vmem:[#allocation2 + $0x6c] sm:$0x1]
      %v455 = vsel %vm417, 0, %v454
      %456 = vst [vmem:[#allocation2 + $0x6c] sm:$0x1] %v455
      %457 = vst [vmem:[#allocation2 + $0x70] sm:$0xf] 0
      %458 = vst [vmem:[#allocation2 + $0x74] sm:$0xf] 0
      %459 = vst [vmem:[#allocation2 + $0x78] sm:$0xf] 0
      %v460 = vld [vmem:[#allocation2 + $0x7c] sm:$0x1]
      %v461 = vsel %vm417, 0, %v460
      %462 = vst [vmem:[#allocation2 + $0x7c] sm:$0x1] %v461
      %463 = vst [vmem:[#allocation2 + $0x80] sm:$0xf] 0
      %464 = vst [vmem:[#allocation2 + $0x84] sm:$0xf] 0
      %465 = vst [vmem:[#allocation2 + $0x88] sm:$0xf] 0
      %v466 = vld [vmem:[#allocation2 + $0x8c] sm:$0x1]
      %v467 = vsel %vm417, 0, %v466
      %468 = vst [vmem:[#allocation2 + $0x8c] sm:$0x1] %v467
      %469 = vst [vmem:[#allocation2 + $0x90] sm:$0xf] 0
      %470 = vst [vmem:[#allocation2 + $0x94] sm:$0xf] 0
      %471 = vst [vmem:[#allocation2 + $0x98] sm:$0xf] 0
      %v472 = vld [vmem:[#allocation2 + $0x9c] sm:$0x1]
      %v473 = vsel %vm417, 0, %v472
      %474 = vst [vmem:[#allocation2 + $0x9c] sm:$0x1] %v473
      %475 = vst [vmem:[#allocation2 + $0xa0] sm:$0xf] 0
      %476 = vst [vmem:[#allocation2 + $0xa4] sm:$0xf] 0
      %477 = vst [vmem:[#allocation2 + $0xa8] sm:$0xf] 0
      %v478 = vld [vmem:[#allocation2 + $0xac] sm:$0x1]
      %v479 = vsel %vm417, 0, %v478
      %480 = vst [vmem:[#allocation2 + $0xac] sm:$0x1] %v479
      %481 = vst [vmem:[#allocation2 + $0xb0] sm:$0xf] 0
      %482 = vst [vmem:[#allocation2 + $0xb4] sm:$0xf] 0
      %483 = vst [vmem:[#allocation2 + $0xb8] sm:$0xf] 0
      %v484 = vld [vmem:[#allocation2 + $0xbc] sm:$0x1]
      %v485 = vsel %vm417, 0, %v484
      %486 = vst [vmem:[#allocation2 + $0xbc] sm:$0x1] %v485
      %487 = vst [vmem:[#allocation2 + $0xc0] sm:$0xf] 0
      %488 = vst [vmem:[#allocation2 + $0xc4] sm:$0xf] 0
      %489 = vst [vmem:[#allocation2 + $0xc8] sm:$0xf] 0
      %v490 = vld [vmem:[#allocation2 + $0xcc] sm:$0x1]
      %v491 = vsel %vm417, 0, %v490
      %492 = vst [vmem:[#allocation2 + $0xcc] sm:$0x1] %v491
      %493 = vst [vmem:[#allocation2 + $0xd0] sm:$0xf] 0
      %494 = vst [vmem:[#allocation2 + $0xd4] sm:$0xf] 0
      %495 = vst [vmem:[#allocation2 + $0xd8] sm:$0xf] 0
      %v496 = vld [vmem:[#allocation2 + $0xdc] sm:$0x1]
      %v497 = vsel %vm417, 0, %v496
      %498 = vst [vmem:[#allocation2 + $0xdc] sm:$0x1] %v497
      %499 = vst [vmem:[#allocation2 + $0xe0] sm:$0xf] 0
      %500 = vst [vmem:[#allocation2 + $0xe4] sm:$0xf] 0
      %501 = vst [vmem:[#allocation2 + $0xe8] sm:$0xf] 0
      %v502 = vld [vmem:[#allocation2 + $0xec] sm:$0x1]
      %v503 = vsel %vm417, 0, %v502
      %504 = vst [vmem:[#allocation2 + $0xec] sm:$0x1] %v503
      %505 = vst [vmem:[#allocation2 + $0xf0] sm:$0xf] 0
      %506 = vst [vmem:[#allocation2 + $0xf4] sm:$0xf] 0
      %507 = vst [vmem:[#allocation2 + $0xf8] sm:$0xf] 0
      %v508 = vld [vmem:[#allocation2 + $0xfc] sm:$0x1]
      %v509 = vsel %vm417, 0, %v508
      %510 = vst [vmem:[#allocation2 + $0xfc] sm:$0x1] %v509
      %511 = vst [vmem:[#allocation2 + $0x100] sm:$0xf] 0
      %512 = vst [vmem:[#allocation2 + $0x104] sm:$0xf] 0
      %513 = vst [vmem:[#allocation2 + $0x108] sm:$0xf] 0
      %v514 = vld [vmem:[#allocation2 + $0x10c] sm:$0x1]
      %v515 = vsel %vm417, 0, %v514
      %516 = vst [vmem:[#allocation2 + $0x10c] sm:$0x1] %v515
      %517 = vst [vmem:[#allocation2 + $0x110] sm:$0xf] 0
      %518 = vst [vmem:[#allocation2 + $0x114] sm:$0xf] 0
      %519 = vst [vmem:[#allocation2 + $0x118] sm:$0xf] 0
      %v520 = vld [vmem:[#allocation2 + $0x11c] sm:$0x1]
      %v521 = vsel %vm417, 0, %v520
      %522 = vst [vmem:[#allocation2 + $0x11c] sm:$0x1] %v521
      %v523 = vpack.c.bf16 %v381, %v380
      %v524 = vpack.c.bf16 %v383, %v382
      %v525 = vpack.c.bf16 %v385, %v384
      %v526 = vpack.c.bf16 %v387, %v386
      %v527 = vpack.c.bf16 %v389, %v388
      %v528 = vpack.c.bf16 %v391, %v390
      %v529 = vpack.c.bf16 %v393, %v392
      %v530 = vpack.c.bf16 %v395, %v394
      %v531 = vpack.c.bf16 %v397, %v396
      %v532 = vpack.c.bf16 %v399, %v398
      %v533 = vpack.c.bf16 %v401, %v400
      %v534 = vpack.c.bf16 %v403, %v402
      %v535 = vpack.c.bf16 %v405, %v404
      %v536 = vpack.c.bf16 %v407, %v406
      %v537 = vpack.c.bf16 %v409, %v408
      %v538 = vpack.c.bf16 %v411, %v410
      %v555 = vunpack.c.l.b16 %v523
      %v556 = vunpack.c.h.b16 %v523
      %v557 = vunpack.c.l.b16 %v524
      %v558 = vunpack.c.h.b16 %v524
      %v559 = vunpack.c.l.b16 %v525
      %v560 = vunpack.c.h.b16 %v525
      %v561 = vunpack.c.l.b16 %v526
      %v562 = vunpack.c.h.b16 %v526
      %v563 = vunpack.c.l.b16 %v527
      %v564 = vunpack.c.h.b16 %v527
      %v565 = vunpack.c.l.b16 %v528
      %v566 = vunpack.c.h.b16 %v528
      %v567 = vunpack.c.l.b16 %v529
      %v568 = vunpack.c.h.b16 %v529
      %v569 = vunpack.c.l.b16 %v530
      %v570 = vunpack.c.h.b16 %v530
      %v571 = vunpack.c.l.b16 %v531
      %v572 = vunpack.c.h.b16 %v531
      %v573 = vunpack.c.l.b16 %v532
      %v574 = vunpack.c.h.b16 %v532
      %v575 = vunpack.c.l.b16 %v533
      %v576 = vunpack.c.h.b16 %v533
      %v577 = vunpack.c.l.b16 %v534
      %v578 = vunpack.c.h.b16 %v534
      %v579 = vunpack.c.l.b16 %v535
      %v580 = vunpack.c.h.b16 %v535
      %v581 = vunpack.c.l.b16 %v536
      %v582 = vunpack.c.h.b16 %v536
      %v583 = vunpack.c.l.b16 %v537
      %v584 = vunpack.c.h.b16 %v537
      %v585 = vunpack.c.l.b16 %v538
      %v586 = vunpack.c.h.b16 %v538
      %v587 = vpack.c.b16 %v555, %v555
      %v588 = vpack.c.b16 %v556, %v556
      %v589 = vpack.c.b16 %v557, %v557
      %v590 = vpack.c.b16 %v558, %v558
      %v591 = vpack.c.b16 %v559, %v559
      %v592 = vpack.c.b16 %v560, %v560
      %v593 = vpack.c.b16 %v561, %v561
      %v594 = vpack.c.b16 %v562, %v562
      %v595 = vpack.c.b16 %v563, %v563
      %v596 = vpack.c.b16 %v564, %v564
      %v597 = vpack.c.b16 %v565, %v565
      %v598 = vpack.c.b16 %v566, %v566
      %v599 = vpack.c.b16 %v567, %v567
      %v600 = vpack.c.b16 %v568, %v568
      %v601 = vpack.c.b16 %v569, %v569
      %v602 = vpack.c.b16 %v570, %v570
      %v603 = vpack.c.b16 %v571, %v571
      %v604 = vpack.c.b16 %v572, %v572
      %v605 = vpack.c.b16 %v573, %v573
      %v606 = vpack.c.b16 %v574, %v574
      %v607 = vpack.c.b16 %v575, %v575
      %v608 = vpack.c.b16 %v576, %v576
      %v609 = vpack.c.b16 %v577, %v577
      %v610 = vpack.c.b16 %v578, %v578
      %v611 = vpack.c.b16 %v579, %v579
      %v612 = vpack.c.b16 %v580, %v580
      %v613 = vpack.c.b16 %v581, %v581
      %v614 = vpack.c.b16 %v582, %v582
      %v615 = vpack.c.b16 %v583, %v583
      %v616 = vpack.c.b16 %v584, %v584
      %v617 = vpack.c.b16 %v585, %v585
      %v618 = vpack.c.b16 %v586, %v586
      %s651 = scalar_lea.vmem [#allocation2], 16
      %652 = vst [vmem:[%s651 + $0x4] sm:$0xf] %v587
      %653 = vst [vmem:[%s651 + $0x8] sm:$0xf] %v588
      %654 = vst [vmem:[%s651 + $0x14] sm:$0xf] %v589
      %655 = vst [vmem:[%s651 + $0x18] sm:$0xf] %v590
      %656 = vst [vmem:[%s651 + $0x24] sm:$0xf] %v591
      %657 = vst [vmem:[%s651 + $0x28] sm:$0xf] %v592
      %658 = vst [vmem:[%s651 + $0x34] sm:$0xf] %v593
      %659 = vst [vmem:[%s651 + $0x38] sm:$0xf] %v594
      %660 = vst [vmem:[%s651 + $0x44] sm:$0xf] %v595
      %661 = vst [vmem:[%s651 + $0x48] sm:$0xf] %v596
      %662 = vst [vmem:[%s651 + $0x54] sm:$0xf] %v597
      %663 = vst [vmem:[%s651 + $0x58] sm:$0xf] %v598
      %664 = vst [vmem:[%s651 + $0x64] sm:$0xf] %v599
      %665 = vst [vmem:[%s651 + $0x68] sm:$0xf] %v600
      %666 = vst [vmem:[%s651 + $0x74] sm:$0xf] %v601
      %667 = vst [vmem:[%s651 + $0x78] sm:$0xf] %v602
      %668 = vst [vmem:[%s651 + $0x84] sm:$0xf] %v603
      %669 = vst [vmem:[%s651 + $0x88] sm:$0xf] %v604
      %670 = vst [vmem:[%s651 + $0x94] sm:$0xf] %v605
      %671 = vst [vmem:[%s651 + $0x98] sm:$0xf] %v606
      %672 = vst [vmem:[%s651 + $0xa4] sm:$0xf] %v607
      %673 = vst [vmem:[%s651 + $0xa8] sm:$0xf] %v608
      %674 = vst [vmem:[%s651 + $0xb4] sm:$0xf] %v609
      %675 = vst [vmem:[%s651 + $0xb8] sm:$0xf] %v610
      %676 = vst [vmem:[%s651 + $0xc4] sm:$0xf] %v611
      %677 = vst [vmem:[%s651 + $0xc8] sm:$0xf] %v612
      %678 = vst [vmem:[%s651 + $0xd4] sm:$0xf] %v613
      %679 = vst [vmem:[%s651 + $0xd8] sm:$0xf] %v614
      %680 = vst [vmem:[%s651 + $0xe4] sm:$0xf] %v615
      %681 = vst [vmem:[%s651 + $0xe8] sm:$0xf] %v616
      %682 = vst [vmem:[%s651 + $0xf4] sm:$0xf] %v617
      %683 = vst [vmem:[%s651 + $0xf8] sm:$0xf] %v618
      %v684 = vld [vmem:[#allocation2] sm:$0xf]
      %v685 = vld [vmem:[#allocation2 + $0x4] sm:$0xf]
      %v686 = vld [vmem:[#allocation2 + $0x8] sm:$0xf]
      %v687 = vld [vmem:[#allocation2 + $0xc] sm:$0x1]
      %v688 = vld [vmem:[#allocation2 + $0x10] sm:$0xf]
      %v689 = vld [vmem:[#allocation2 + $0x14] sm:$0xf]
      %v690 = vld [vmem:[#allocation2 + $0x18] sm:$0xf]
      %v691 = vld [vmem:[#allocation2 + $0x1c] sm:$0x1]
      %v692 = vld [vmem:[#allocation2 + $0x20] sm:$0xf]
      %v693 = vld [vmem:[#allocation2 + $0x24] sm:$0xf]
      %v694 = vld [vmem:[#allocation2 + $0x28] sm:$0xf]
      %v695 = vld [vmem:[#allocation2 + $0x2c] sm:$0x1]
      %v696 = vld [vmem:[#allocation2 + $0x30] sm:$0xf]
      %v697 = vld [vmem:[#allocation2 + $0x34] sm:$0xf]
      %v698 = vld [vmem:[#allocation2 + $0x38] sm:$0xf]
      %v699 = vld [vmem:[#allocation2 + $0x3c] sm:$0x1]
      %v700 = vld [vmem:[#allocation2 + $0x40] sm:$0xf]
      %v701 = vld [vmem:[#allocation2 + $0x44] sm:$0xf]
      %v702 = vld [vmem:[#allocation2 + $0x48] sm:$0xf]
      %v703 = vld [vmem:[#allocation2 + $0x4c] sm:$0x1]
      %v704 = vld [vmem:[#allocation2 + $0x50] sm:$0xf]
      %v705 = vld [vmem:[#allocation2 + $0x54] sm:$0xf]
      %v706 = vld [vmem:[#allocation2 + $0x58] sm:$0xf]
      %v707 = vld [vmem:[#allocation2 + $0x5c] sm:$0x1]
      %v708 = vld [vmem:[#allocation2 + $0x60] sm:$0xf]
      %v709 = vld [vmem:[#allocation2 + $0x64] sm:$0xf]
      %v710 = vld [vmem:[#allocation2 + $0x68] sm:$0xf]
      %v711 = vld [vmem:[#allocation2 + $0x6c] sm:$0x1]
      %v712 = vld [vmem:[#allocation2 + $0x70] sm:$0xf]
      %v713 = vld [vmem:[#allocation2 + $0x74] sm:$0xf]
      %v714 = vld [vmem:[#allocation2 + $0x78] sm:$0xf]
      %v715 = vld [vmem:[#allocation2 + $0x7c] sm:$0x1]
      %v716 = vld [vmem:[#allocation2 + $0x80] sm:$0xf]
      %v717 = vld [vmem:[#allocation2 + $0x84] sm:$0xf]
      %v718 = vld [vmem:[#allocation2 + $0x88] sm:$0xf]
      %v719 = vld [vmem:[#allocation2 + $0x8c] sm:$0x1]
      %v720 = vld [vmem:[#allocation2 + $0x90] sm:$0xf]
      %v721 = vld [vmem:[#allocation2 + $0x94] sm:$0xf]
      %v722 = vld [vmem:[#allocation2 + $0x98] sm:$0xf]
      %v723 = vld [vmem:[#allocation2 + $0x9c] sm:$0x1]
      %v724 = vld [vmem:[#allocation2 + $0xa0] sm:$0xf]
      %v725 = vld [vmem:[#allocation2 + $0xa4] sm:$0xf]
      %v726 = vld [vmem:[#allocation2 + $0xa8] sm:$0xf]
      %v727 = vld [vmem:[#allocation2 + $0xac] sm:$0x1]
      %v728 = vld [vmem:[#allocation2 + $0xb0] sm:$0xf]
      %v729 = vld [vmem:[#allocation2 + $0xb4] sm:$0xf]
      %v730 = vld [vmem:[#allocation2 + $0xb8] sm:$0xf]
      %v731 = vld [vmem:[#allocation2 + $0xbc] sm:$0x1]
      %v732 = vld [vmem:[#allocation2 + $0xc0] sm:$0xf]
      %v733 = vld [vmem:[#allocation2 + $0xc4] sm:$0xf]
      %v734 = vld [vmem:[#allocation2 + $0xc8] sm:$0xf]
      %v735 = vld [vmem:[#allocation2 + $0xcc] sm:$0x1]
      %v736 = vld [vmem:[#allocation2 + $0xd0] sm:$0xf]
      %v737 = vld [vmem:[#allocation2 + $0xd4] sm:$0xf]
      %v738 = vld [vmem:[#allocation2 + $0xd8] sm:$0xf]
      %v739 = vld [vmem:[#allocation2 + $0xdc] sm:$0x1]
      %v740 = vld [vmem:[#allocation2 + $0xe0] sm:$0xf]
      %v741 = vld [vmem:[#allocation2 + $0xe4] sm:$0xf]
      %v742 = vld [vmem:[#allocation2 + $0xe8] sm:$0xf]
      %v743 = vld [vmem:[#allocation2 + $0xec] sm:$0x1]
      %v744 = vld [vmem:[#allocation2 + $0xf0] sm:$0xf]
      %v745 = vld [vmem:[#allocation2 + $0xf4] sm:$0xf]
      %v746 = vld [vmem:[#allocation2 + $0xf8] sm:$0xf]
      %v747 = vld [vmem:[#allocation2 + $0xfc] sm:$0x1]
      %v748 = vld [vmem:[#allocation2 + $0x100] sm:$0xf]
      %v749 = vld [vmem:[#allocation2 + $0x104] sm:$0xf]
      %v750 = vld [vmem:[#allocation2 + $0x108] sm:$0xf]
      %v751 = vld [vmem:[#allocation2 + $0x10c] sm:$0x1]
      %v752 = vld [vmem:[#allocation2 + $0x110] sm:$0xf]
      %v753 = vld [vmem:[#allocation2 + $0x114] sm:$0xf]
      %v754 = vld [vmem:[#allocation2 + $0x118] sm:$0xf]
      %v755 = vld [vmem:[#allocation2 + $0x11c] sm:$0x1]
      %vm756 = vsmask.f32 4368
      %vm757 = vmor %vm416, %vm756
      %v759 = vshrl.u32 %v684, 16
      %v761 = vrot.slane %v759, 7
      %v762 = vrot.slane %v761, 4
      %v764 = vshrl.u32 %v685, 16
      %v766 = vrot.slane %v764, 7
      %v767 = vshll.u32 %v685, 16
      %v769 = vor.u32 %v766, %v767
      %v770 = vsel %vm757, %v762, %v769
      %v771 = vrot.slane %v766, 4
      %v773 = vshrl.u32 %v686, 16
      %v775 = vrot.slane %v773, 7
      %v776 = vshll.u32 %v686, 16
      %v778 = vor.u32 %v775, %v776
      %v779 = vsel %vm757, %v771, %v778
      %v781 = vshrl.u32 %v688, 16
      %v783 = vrot.slane %v781, 7
      %v784 = vrot.slane %v783, 4
      %v786 = vshrl.u32 %v689, 16
      %v788 = vrot.slane %v786, 7
      %v789 = vshll.u32 %v689, 16
      %v791 = vor.u32 %v788, %v789
      %v792 = vsel %vm757, %v784, %v791
      %v793 = vrot.slane %v788, 4
      %v795 = vshrl.u32 %v690, 16
      %v797 = vrot.slane %v795, 7
      %v798 = vshll.u32 %v690, 16
      %v800 = vor.u32 %v797, %v798
      %v801 = vsel %vm757, %v793, %v800
      %v803 = vshrl.u32 %v692, 16
      %v805 = vrot.slane %v803, 7
      %v806 = vrot.slane %v805, 4
      %v808 = vshrl.u32 %v693, 16
      %v810 = vrot.slane %v808, 7
      %v811 = vshll.u32 %v693, 16
      %v813 = vor.u32 %v810, %v811
      %v814 = vsel %vm757, %v806, %v813
      %v815 = vrot.slane %v810, 4
      %v817 = vshrl.u32 %v694, 16
      %v819 = vrot.slane %v817, 7
      %v820 = vshll.u32 %v694, 16
      %v822 = vor.u32 %v819, %v820
      %v823 = vsel %vm757, %v815, %v822
      %v825 = vshrl.u32 %v696, 16
      %v827 = vrot.slane %v825, 7
      %v828 = vrot.slane %v827, 4
      %v830 = vshrl.u32 %v697, 16
      %v832 = vrot.slane %v830, 7
      %v833 = vshll.u32 %v697, 16
      %v835 = vor.u32 %v832, %v833
      %v836 = vsel %vm757, %v828, %v835
      %v837 = vrot.slane %v832, 4
      %v839 = vshrl.u32 %v698, 16
      %v841 = vrot.slane %v839, 7
      %v842 = vshll.u32 %v698, 16
      %v844 = vor.u32 %v841, %v842
      %v845 = vsel %vm757, %v837, %v844
      %v847 = vshrl.u32 %v700, 16
      %v849 = vrot.slane %v847, 7
      %v850 = vrot.slane %v849, 4
      %v852 = vshrl.u32 %v701, 16
      %v854 = vrot.slane %v852, 7
      %v855 = vshll.u32 %v701, 16
      %v857 = vor.u32 %v854, %v855
      %v858 = vsel %vm757, %v850, %v857
      %v859 = vrot.slane %v854, 4
      %v861 = vshrl.u32 %v702, 16
      %v863 = vrot.slane %v861, 7
      %v864 = vshll.u32 %v702, 16
      %v866 = vor.u32 %v863, %v864
      %v867 = vsel %vm757, %v859, %v866
      %v869 = vshrl.u32 %v704, 16
      %v871 = vrot.slane %v869, 7
      %v872 = vrot.slane %v871, 4
      %v874 = vshrl.u32 %v705, 16
      %v876 = vrot.slane %v874, 7
      %v877 = vshll.u32 %v705, 16
      %v879 = vor.u32 %v876, %v877
      %v880 = vsel %vm757, %v872, %v879
      %v881 = vrot.slane %v876, 4
      %v883 = vshrl.u32 %v706, 16
      %v885 = vrot.slane %v883, 7
      %v886 = vshll.u32 %v706, 16
      %v888 = vor.u32 %v885, %v886
      %v889 = vsel %vm757, %v881, %v888
      %v891 = vshrl.u32 %v708, 16
      %v893 = vrot.slane %v891, 7
      %v894 = vrot.slane %v893, 4
      %v896 = vshrl.u32 %v709, 16
      %v898 = vrot.slane %v896, 7
      %v899 = vshll.u32 %v709, 16
      %v901 = vor.u32 %v898, %v899
      %v902 = vsel %vm757, %v894, %v901
      %v903 = vrot.slane %v898, 4
      %v905 = vshrl.u32 %v710, 16
      %v907 = vrot.slane %v905, 7
      %v908 = vshll.u32 %v710, 16
      %v910 = vor.u32 %v907, %v908
      %v911 = vsel %vm757, %v903, %v910
      %v913 = vshrl.u32 %v712, 16
      %v915 = vrot.slane %v913, 7
      %v916 = vrot.slane %v915, 4
      %v918 = vshrl.u32 %v713, 16
      %v920 = vrot.slane %v918, 7
      %v921 = vshll.u32 %v713, 16
      %v923 = vor.u32 %v920, %v921
      %v924 = vsel %vm757, %v916, %v923
      %v925 = vrot.slane %v920, 4
      %v927 = vshrl.u32 %v714, 16
      %v929 = vrot.slane %v927, 7
      %v930 = vshll.u32 %v714, 16
      %v932 = vor.u32 %v929, %v930
      %v933 = vsel %vm757, %v925, %v932
      %v935 = vshrl.u32 %v716, 16
      %v937 = vrot.slane %v935, 7
      %v938 = vrot.slane %v937, 4
      %v940 = vshrl.u32 %v717, 16
      %v942 = vrot.slane %v940, 7
      %v943 = vshll.u32 %v717, 16
      %v945 = vor.u32 %v942, %v943
      %v946 = vsel %vm757, %v938, %v945
      %v947 = vrot.slane %v942, 4
      %v949 = vshrl.u32 %v718, 16
      %v951 = vrot.slane %v949, 7
      %v952 = vshll.u32 %v718, 16
      %v954 = vor.u32 %v951, %v952
      %v955 = vsel %vm757, %v947, %v954
      %v957 = vshrl.u32 %v720, 16
      %v959 = vrot.slane %v957, 7
      %v960 = vrot.slane %v959, 4
      %v962 = vshrl.u32 %v721, 16
      %v964 = vrot.slane %v962, 7
      %v965 = vshll.u32 %v721, 16
      %v967 = vor.u32 %v964, %v965
      %v968 = vsel %vm757, %v960, %v967
      %v969 = vrot.slane %v964, 4
      %v971 = vshrl.u32 %v722, 16
      %v973 = vrot.slane %v971, 7
      %v974 = vshll.u32 %v722, 16
      %v976 = vor.u32 %v973, %v974
      %v977 = vsel %vm757, %v969, %v976
      %v979 = vshrl.u32 %v724, 16
      %v981 = vrot.slane %v979, 7
      %v982 = vrot.slane %v981, 4
      %v984 = vshrl.u32 %v725, 16
      %v986 = vrot.slane %v984, 7
      %v987 = vshll.u32 %v725, 16
      %v989 = vor.u32 %v986, %v987
      %v990 = vsel %vm757, %v982, %v989
      %v991 = vrot.slane %v986, 4
      %v993 = vshrl.u32 %v726, 16
      %v995 = vrot.slane %v993, 7
      %v996 = vshll.u32 %v726, 16
      %v998 = vor.u32 %v995, %v996
      %v999 = vsel %vm757, %v991, %v998
      %v1001 = vshrl.u32 %v728, 16
      %v1003 = vrot.slane %v1001, 7
      %v1004 = vrot.slane %v1003, 4
      %v1006 = vshrl.u32 %v729, 16
      %v1008 = vrot.slane %v1006, 7
      %v1009 = vshll.u32 %v729, 16
      %v1011 = vor.u32 %v1008, %v1009
      %v1012 = vsel %vm757, %v1004, %v1011
      %v1013 = vrot.slane %v1008, 4
      %v1015 = vshrl.u32 %v730, 16
      %v1017 = vrot.slane %v1015, 7
      %v1018 = vshll.u32 %v730, 16
      %v1020 = vor.u32 %v1017, %v1018
      %v1021 = vsel %vm757, %v1013, %v1020
      %v1023 = vshrl.u32 %v732, 16
      %v1025 = vrot.slane %v1023, 7
      %v1026 = vrot.slane %v1025, 4
      %v1028 = vshrl.u32 %v733, 16
      %v1030 = vrot.slane %v1028, 7
      %v1031 = vshll.u32 %v733, 16
      %v1033 = vor.u32 %v1030, %v1031
      %v1034 = vsel %vm757, %v1026, %v1033
      %v1035 = vrot.slane %v1030, 4
      %v1037 = vshrl.u32 %v734, 16
      %v1039 = vrot.slane %v1037, 7
      %v1040 = vshll.u32 %v734, 16
      %v1042 = vor.u32 %v1039, %v1040
      %v1043 = vsel %vm757, %v1035, %v1042
      %v1045 = vshrl.u32 %v736, 16
      %v1047 = vrot.slane %v1045, 7
      %v1048 = vrot.slane %v1047, 4
      %v1050 = vshrl.u32 %v737, 16
      %v1052 = vrot.slane %v1050, 7
      %v1053 = vshll.u32 %v737, 16
      %v1055 = vor.u32 %v1052, %v1053
      %v1056 = vsel %vm757, %v1048, %v1055
      %v1057 = vrot.slane %v1052, 4
      %v1059 = vshrl.u32 %v738, 16
      %v1061 = vrot.slane %v1059, 7
      %v1062 = vshll.u32 %v738, 16
      %v1064 = vor.u32 %v1061, %v1062
      %v1065 = vsel %vm757, %v1057, %v1064
      %v1067 = vshrl.u32 %v740, 16
      %v1069 = vrot.slane %v1067, 7
      %v1070 = vrot.slane %v1069, 4
      %v1072 = vshrl.u32 %v741, 16
      %v1074 = vrot.slane %v1072, 7
      %v1075 = vshll.u32 %v741, 16
      %v1077 = vor.u32 %v1074, %v1075
      %v1078 = vsel %vm757, %v1070, %v1077
      %v1079 = vrot.slane %v1074, 4
      %v1081 = vshrl.u32 %v742, 16
      %v1083 = vrot.slane %v1081, 7
      %v1084 = vshll.u32 %v742, 16
      %v1086 = vor.u32 %v1083, %v1084
      %v1087 = vsel %vm757, %v1079, %v1086
      %v1089 = vshrl.u32 %v744, 16
      %v1091 = vrot.slane %v1089, 7
      %v1092 = vrot.slane %v1091, 4
      %v1094 = vshrl.u32 %v745, 16
      %v1096 = vrot.slane %v1094, 7
      %v1097 = vshll.u32 %v745, 16
      %v1099 = vor.u32 %v1096, %v1097
      %v1100 = vsel %vm757, %v1092, %v1099
      %v1101 = vrot.slane %v1096, 4
      %v1103 = vshrl.u32 %v746, 16
      %v1105 = vrot.slane %v1103, 7
      %v1106 = vshll.u32 %v746, 16
      %v1108 = vor.u32 %v1105, %v1106
      %v1109 = vsel %vm757, %v1101, %v1108
      %v1110 = vld [vmem:[%s3] sm:$0xf]
      %v1111 = vld [vmem:[%s3 + $0x4] sm:$0xf]
      %v1112 = vld [vmem:[%s3 + $0x8] sm:$0xf]
      %v1113 = vld [vmem:[%s3 + $0xc] sm:$0xf]
      %v1114 = vld [vmem:[%s3 + $0x10] sm:$0xf]
      %v1115 = vld [vmem:[%s3 + $0x14] sm:$0xf]
      %v1116 = vld [vmem:[%s3 + $0x18] sm:$0xf]
      %v1117 = vld [vmem:[%s3 + $0x1c] sm:$0xf]
      %v1118 = vld [vmem:[%s3 + $0x20] sm:$0xf]
      %v1119 = vld [vmem:[%s3 + $0x24] sm:$0xf]
      %v1120 = vld [vmem:[%s3 + $0x28] sm:$0xf]
      %v1121 = vld [vmem:[%s3 + $0x2c] sm:$0xf]
      %v1122 = vld [vmem:[%s3 + $0x30] sm:$0xf]
      %v1123 = vld [vmem:[%s3 + $0x34] sm:$0xf]
      %v1124 = vld [vmem:[%s3 + $0x38] sm:$0xf]
      %v1125 = vld [vmem:[%s3 + $0x3c] sm:$0xf]
      %s1126 = scalar_lea.vmem %s3, 64
      %v1127 = vld [vmem:[%s1126] sm:$0xf]
      %v1128 = vld [vmem:[%s1126 + $0x4] sm:$0xf]
      %v1129 = vld [vmem:[%s1126 + $0x8] sm:$0xf]
      %v1130 = vld [vmem:[%s1126 + $0xc] sm:$0xf]
      %v1131 = vld [vmem:[%s1126 + $0x10] sm:$0xf]
      %v1132 = vld [vmem:[%s1126 + $0x14] sm:$0xf]
      %v1133 = vld [vmem:[%s1126 + $0x18] sm:$0xf]
      %v1134 = vld [vmem:[%s1126 + $0x1c] sm:$0xf]
      %v1135 = vld [vmem:[%s1126 + $0x20] sm:$0xf]
      %v1136 = vld [vmem:[%s1126 + $0x24] sm:$0xf]
      %v1137 = vld [vmem:[%s1126 + $0x28] sm:$0xf]
      %v1138 = vld [vmem:[%s1126 + $0x2c] sm:$0xf]
      %v1139 = vld [vmem:[%s1126 + $0x30] sm:$0xf]
      %v1140 = vld [vmem:[%s1126 + $0x34] sm:$0xf]
      %v1141 = vld [vmem:[%s1126 + $0x38] sm:$0xf]
      %v1142 = vld [vmem:[%s1126 + $0x3c] sm:$0xf]
      %v1175 = vunpack.c.l.b16 %v685
      %v1176 = vunpack.c.l.b16 %v686
      %v1177 = vunpack.c.l.b16 %v689
      %v1178 = vunpack.c.l.b16 %v690
      %v1179 = vunpack.c.l.b16 %v693
      %v1180 = vunpack.c.l.b16 %v694
      %v1181 = vunpack.c.l.b16 %v697
      %v1182 = vunpack.c.l.b16 %v698
      %v1183 = vunpack.c.l.b16 %v701
      %v1184 = vunpack.c.l.b16 %v702
      %v1185 = vunpack.c.l.b16 %v705
      %v1186 = vunpack.c.l.b16 %v706
      %v1187 = vunpack.c.l.b16 %v709
      %v1188 = vunpack.c.l.b16 %v710
      %v1189 = vunpack.c.l.b16 %v713
      %v1190 = vunpack.c.l.b16 %v714
      %v1191 = vunpack.c.l.b16 %v717
      %v1192 = vunpack.c.l.b16 %v718
      %v1193 = vunpack.c.l.b16 %v721
      %v1194 = vunpack.c.l.b16 %v722
      %v1195 = vunpack.c.l.b16 %v725
      %v1196 = vunpack.c.l.b16 %v726
      %v1197 = vunpack.c.l.b16 %v729
      %v1198 = vunpack.c.l.b16 %v730
      %v1199 = vunpack.c.l.b16 %v733
      %v1200 = vunpack.c.l.b16 %v734
      %v1201 = vunpack.c.l.b16 %v737
      %v1202 = vunpack.c.l.b16 %v738
      %v1203 = vunpack.c.l.b16 %v741
      %v1204 = vunpack.c.l.b16 %v742
      %v1205 = vunpack.c.l.b16 %v745
      %v1206 = vunpack.c.l.b16 %v746
      %v1207 = vpack.c.b16 %v1176, %v1175
      %v1208 = vpack.c.b16 %v1178, %v1177
      %v1209 = vpack.c.b16 %v1180, %v1179
      %v1210 = vpack.c.b16 %v1182, %v1181
      %v1211 = vpack.c.b16 %v1184, %v1183
      %v1212 = vpack.c.b16 %v1186, %v1185
      %v1213 = vpack.c.b16 %v1188, %v1187
      %v1214 = vpack.c.b16 %v1190, %v1189
      %v1215 = vpack.c.b16 %v1192, %v1191
      %v1216 = vpack.c.b16 %v1194, %v1193
      %v1217 = vpack.c.b16 %v1196, %v1195
      %v1218 = vpack.c.b16 %v1198, %v1197
      %v1219 = vpack.c.b16 %v1200, %v1199
      %v1220 = vpack.c.b16 %v1202, %v1201
      %v1221 = vpack.c.b16 %v1204, %v1203
      %v1222 = vpack.c.b16 %v1206, %v1205
      %v1255 = vunpack.c.l.b16 %v1127
      %v1256 = vunpack.c.l.b16 %v1128
      %v1257 = vunpack.c.l.b16 %v1129
      %v1258 = vunpack.c.l.b16 %v1130
      %v1259 = vunpack.c.l.b16 %v1131
      %v1260 = vunpack.c.l.b16 %v1132
      %v1261 = vunpack.c.l.b16 %v1133
      %v1262 = vunpack.c.l.b16 %v1134
      %v1263 = vunpack.c.l.b16 %v1135
      %v1264 = vunpack.c.l.b16 %v1136
      %v1265 = vunpack.c.l.b16 %v1137
      %v1266 = vunpack.c.l.b16 %v1138
      %v1267 = vunpack.c.l.b16 %v1139
      %v1268 = vunpack.c.l.b16 %v1140
      %v1269 = vunpack.c.l.b16 %v1141
      %v1270 = vunpack.c.l.b16 %v1142
      %v1271 = vpack.c.b16 %v1256, %v1255
      %v1272 = vpack.c.b16 %v1258, %v1257
      %v1273 = vpack.c.b16 %v1260, %v1259
      %v1274 = vpack.c.b16 %v1262, %v1261
      %v1275 = vpack.c.b16 %v1264, %v1263
      %v1276 = vpack.c.b16 %v1266, %v1265
      %v1277 = vpack.c.b16 %v1268, %v1267
      %v1278 = vpack.c.b16 %v1270, %v1269
      %1287 = vmatprep.subr.bf16.mxu0 0
      %1288 = vmatpush1.bf16.msra.mxu0 %v1271
      %1289 = vmatprep.subr.bf16.mxu0 0
      %1290 = vmatpush1.bf16.msra.mxu0 %v1272
      %1291 = vmatprep.subr.bf16.mxu0 0
      %1292 = vmatpush1.bf16.msra.mxu0 %v1273
      %1293 = vmatprep.subr.bf16.mxu0 0
      %1294 = vmatpush1.bf16.msra.mxu0 %v1274
      %1295 = vmatprep.subr.bf16.mxu0 0
      %1296 = vmatpush1.bf16.msra.mxu0 %v1275
      %1297 = vmatprep.subr.bf16.mxu0 0
      %1298 = vmatpush1.bf16.msra.mxu0 %v1276
      %1299 = vmatprep.subr.bf16.mxu0 0
      %1300 = vmatpush1.bf16.msra.mxu0 %v1277
      %1301 = vmatprep.subr.bf16.mxu0 0
      %1302 = vmatpush1.bf16.msra.mxu0 %v1278
      %1303 = vmatprep.subr.bf16.mxu0 0
      %1304 = vmatpush1.bf16.msra.mxu0 0
      %1305 = vmatprep.subr.bf16.mxu0 0
      %1306 = vmatpush1.bf16.msra.mxu0 0
      %1307 = vmatprep.subr.bf16.mxu0 0
      %1308 = vmatpush1.bf16.msra.mxu0 0
      %1309 = vmatprep.subr.bf16.mxu0 0
      %1310 = vmatpush1.bf16.msra.mxu0 0
      %1311 = vmatprep.subr.bf16.mxu0 0
      %1312 = vmatpush1.bf16.msra.mxu0 0
      %1313 = vmatprep.subr.bf16.mxu0 0
      %1314 = vmatpush1.bf16.msra.mxu0 0
      %1315 = vmatprep.subr.bf16.mxu0 0
      %1316 = vmatpush1.bf16.msra.mxu0 0
      %1317 = vmatprep.subr.bf16.mxu0 0
      %1318 = vmatpush1.bf16.msra.mxu0 0
      %1319 = vmatprep.mubr.bf16.mxu0 0
      %1320 = vmatmul.mubr.bf16.gmra.mrb[0].mxu0 %v1207
      %v1321 = vpop.f32.mrb[0].mxu0
      %v1322 = vadd.f32 0.0, %v1321
      %v1323 = vpop.f32.mrb[0].mxu0
      %v1324 = vpop.f32.mrb[0].mxu0
      %v1325 = vadd.f32 0.0, %v1324
      %v1326 = vpop.f32.mrb[0].mxu0
      %1327 = vmatprep.mubr.bf16.mxu0 0
      %1328 = vmatmul.mubr.bf16.gmra.mrb[0].mxu0 %v1208
      %v1329 = vpop.f32.mrb[0].mxu0
      %v1330 = vadd.f32 0.0, %v1329
      %v1331 = vpop.f32.mrb[0].mxu0
      %v1332 = vpop.f32.mrb[0].mxu0
      %v1333 = vadd.f32 0.0, %v1332
      %v1334 = vpop.f32.mrb[0].mxu0
      %1335 = vmatprep.mubr.bf16.mxu0 0
      %1336 = vmatmul.mubr.bf16.gmra.mrb[0].mxu0 %v1209
      %v1337 = vpop.f32.mrb[0].mxu0
      %v1338 = vadd.f32 0.0, %v1337
      %v1339 = vpop.f32.mrb[0].mxu0
      %v1340 = vpop.f32.mrb[0].mxu0
      %v1341 = vadd.f32 0.0, %v1340
      %v1342 = vpop.f32.mrb[0].mxu0
      %1343 = vmatprep.mubr.bf16.mxu0 0
      %1344 = vmatmul.mubr.bf16.gmra.mrb[0].mxu0 %v1210
      %v1345 = vpop.f32.mrb[0].mxu0
      %v1346 = vadd.f32 0.0, %v1345
      %v1347 = vpop.f32.mrb[0].mxu0
      %v1348 = vpop.f32.mrb[0].mxu0
      %v1349 = vadd.f32 0.0, %v1348
      %v1350 = vpop.f32.mrb[0].mxu0
      %1351 = vmatprep.mubr.bf16.mxu0 0
      %1352 = vmatmul.mubr.bf16.gmra.mrb[0].mxu0 %v1211
      %v1353 = vpop.f32.mrb[0].mxu0
      %v1354 = vadd.f32 0.0, %v1353
      %v1355 = vpop.f32.mrb[0].mxu0
      %v1356 = vpop.f32.mrb[0].mxu0
      %v1357 = vadd.f32 0.0, %v1356
      %v1358 = vpop.f32.mrb[0].mxu0
      %1359 = vmatprep.mubr.bf16.mxu0 0
      %1360 = vmatmul.mubr.bf16.gmra.mrb[0].mxu0 %v1212
      %v1361 = vpop.f32.mrb[0].mxu0
      %v1362 = vadd.f32 0.0, %v1361
      %v1363 = vpop.f32.mrb[0].mxu0
      %v1364 = vpop.f32.mrb[0].mxu0
      %v1365 = vadd.f32 0.0, %v1364
      %v1366 = vpop.f32.mrb[0].mxu0
      %1367 = vmatprep.mubr.bf16.mxu0 0
      %1368 = vmatmul.mubr.bf16.gmra.mrb[0].mxu0 %v1213
      %v1369 = vpop.f32.mrb[0].mxu0
      %v1370 = vadd.f32 0.0, %v1369
      %v1371 = vpop.f32.mrb[0].mxu0
      %v1372 = vpop.f32.mrb[0].mxu0
      %v1373 = vadd.f32 0.0, %v1372
      %v1374 = vpop.f32.mrb[0].mxu0
      %1375 = vmatprep.mubr.bf16.mxu0 0
      %1376 = vmatmul.mubr.bf16.gmra.mrb[0].mxu0 %v1214
      %v1377 = vpop.f32.mrb[0].mxu0
      %v1378 = vadd.f32 0.0, %v1377
      %v1379 = vpop.f32.mrb[0].mxu0
      %v1380 = vpop.f32.mrb[0].mxu0
      %v1381 = vadd.f32 0.0, %v1380
      %v1382 = vpop.f32.mrb[0].mxu0
      %1383 = vmatprep.mubr.bf16.mxu0 0
      %1384 = vmatmul.mubr.bf16.gmra.mrb[0].mxu0 %v1215
      %v1385 = vpop.f32.mrb[0].mxu0
      %v1386 = vadd.f32 0.0, %v1385
      %v1387 = vpop.f32.mrb[0].mxu0
      %v1388 = vpop.f32.mrb[0].mxu0
      %v1389 = vadd.f32 0.0, %v1388
      %v1390 = vpop.f32.mrb[0].mxu0
      %1391 = vmatprep.mubr.bf16.mxu0 0
      %1392 = vmatmul.mubr.bf16.gmra.mrb[0].mxu0 %v1216
      %v1393 = vpop.f32.mrb[0].mxu0
      %v1394 = vadd.f32 0.0, %v1393
      %v1395 = vpop.f32.mrb[0].mxu0
      %v1396 = vpop.f32.mrb[0].mxu0
      %v1397 = vadd.f32 0.0, %v1396
      %v1398 = vpop.f32.mrb[0].mxu0
      %1399 = vmatprep.mubr.bf16.mxu0 0
      %1400 = vmatmul.mubr.bf16.gmra.mrb[0].mxu0 %v1217
      %v1401 = vpop.f32.mrb[0].mxu0
      %v1402 = vadd.f32 0.0, %v1401
      %v1403 = vpop.f32.mrb[0].mxu0
      %v1404 = vpop.f32.mrb[0].mxu0
      %v1405 = vadd.f32 0.0, %v1404
      %v1406 = vpop.f32.mrb[0].mxu0
      %1407 = vmatprep.mubr.bf16.mxu0 0
      %1408 = vmatmul.mubr.bf16.gmra.mrb[0].mxu0 %v1218
      %v1409 = vpop.f32.mrb[0].mxu0
      %v1410 = vadd.f32 0.0, %v1409
      %v1411 = vpop.f32.mrb[0].mxu0
      %v1412 = vpop.f32.mrb[0].mxu0
      %v1413 = vadd.f32 0.0, %v1412
      %v1414 = vpop.f32.mrb[0].mxu0
      %1415 = vmatprep.mubr.bf16.mxu0 0
      %1416 = vmatmul.mubr.bf16.gmra.mrb[0].mxu0 %v1219
      %v1417 = vpop.f32.mrb[0].mxu0
      %v1418 = vadd.f32 0.0, %v1417
      %v1419 = vpop.f32.mrb[0].mxu0
      %v1420 = vpop.f32.mrb[0].mxu0
      %v1421 = vadd.f32 0.0, %v1420
      %v1422 = vpop.f32.mrb[0].mxu0
      %1423 = vmatprep.mubr.bf16.mxu0 0
      %1424 = vmatmul.mubr.bf16.gmra.mrb[0].mxu0 %v1220
      %v1425 = vpop.f32.mrb[0].mxu0
      %v1426 = vadd.f32 0.0, %v1425
      %v1427 = vpop.f32.mrb[0].mxu0
      %v1428 = vpop.f32.mrb[0].mxu0
      %v1429 = vadd.f32 0.0, %v1428
      %v1430 = vpop.f32.mrb[0].mxu0
      %1431 = vmatprep.mubr.bf16.mxu0 0
      %1432 = vmatmul.mubr.bf16.gmra.mrb[0].mxu0 %v1221
      %v1433 = vpop.f32.mrb[0].mxu0
      %v1434 = vadd.f32 0.0, %v1433
      %v1435 = vpop.f32.mrb[0].mxu0
      %v1436 = vpop.f32.mrb[0].mxu0
      %v1437 = vadd.f32 0.0, %v1436
      %v1438 = vpop.f32.mrb[0].mxu0
      %1439 = vmatprep.mubr.bf16.mxu0 0
      %1440 = vmatmul.mubr.bf16.gmra.mrb[0].mxu0 %v1222
      %v1441 = vpop.f32.mrb[0].mxu0
      %v1442 = vadd.f32 0.0, %v1441
      %v1443 = vpop.f32.mrb[0].mxu0
      %v1444 = vpop.f32.mrb[0].mxu0
      %v1445 = vadd.f32 0.0, %v1444
      %v1446 = vpop.f32.mrb[0].mxu0
      %1447 = vdwg.mxu0
      %v1448 = vunpack.c.l.b16 %v770
      %v1449 = vunpack.c.l.b16 %v779
      %v1450 = vunpack.c.l.b16 %v792
      %v1451 = vunpack.c.l.b16 %v801
      %v1452 = vunpack.c.l.b16 %v814
      %v1453 = vunpack.c.l.b16 %v823
      %v1454 = vunpack.c.l.b16 %v836
      %v1455 = vunpack.c.l.b16 %v845
      %v1456 = vunpack.c.l.b16 %v858
      %v1457 = vunpack.c.l.b16 %v867
      %v1458 = vunpack.c.l.b16 %v880
      %v1459 = vunpack.c.l.b16 %v889
      %v1460 = vunpack.c.l.b16 %v902
      %v1461 = vunpack.c.l.b16 %v911
      %v1462 = vunpack.c.l.b16 %v924
      %v1463 = vunpack.c.l.b16 %v933
      %v1464 = vunpack.c.l.b16 %v946
      %v1465 = vunpack.c.l.b16 %v955
      %v1466 = vunpack.c.l.b16 %v968
      %v1467 = vunpack.c.l.b16 %v977
      %v1468 = vunpack.c.l.b16 %v990
      %v1469 = vunpack.c.l.b16 %v999
      %v1470 = vunpack.c.l.b16 %v1012
      %v1471 = vunpack.c.l.b16 %v1021
      %v1472 = vunpack.c.l.b16 %v1034
      %v1473 = vunpack.c.l.b16 %v1043
      %v1474 = vunpack.c.l.b16 %v1056
      %v1475 = vunpack.c.l.b16 %v1065
      %v1476 = vunpack.c.l.b16 %v1078
      %v1477 = vunpack.c.l.b16 %v1087
      %v1478 = vunpack.c.l.b16 %v1100
      %v1479 = vunpack.c.l.b16 %v1109
      %v1480 = vpack.c.b16 %v1449, %v1448
      %v1481 = vpack.c.b16 %v1451, %v1450
      %v1482 = vpack.c.b16 %v1453, %v1452
      %v1483 = vpack.c.b16 %v1455, %v1454
      %v1484 = vpack.c.b16 %v1457, %v1456
      %v1485 = vpack.c.b16 %v1459, %v1458
      %v1486 = vpack.c.b16 %v1461, %v1460
      %v1487 = vpack.c.b16 %v1463, %v1462
      %v1488 = vpack.c.b16 %v1465, %v1464
      %v1489 = vpack.c.b16 %v1467, %v1466
      %v1490 = vpack.c.b16 %v1469, %v1468
      %v1491 = vpack.c.b16 %v1471, %v1470
      %v1492 = vpack.c.b16 %v1473, %v1472
      %v1493 = vpack.c.b16 %v1475, %v1474
      %v1494 = vpack.c.b16 %v1477, %v1476
      %v1495 = vpack.c.b16 %v1479, %v1478
      %v1528 = vunpack.c.l.b16 %v1110
      %v1529 = vunpack.c.l.b16 %v1111
      %v1530 = vunpack.c.l.b16 %v1112
      %v1531 = vunpack.c.l.b16 %v1113
      %v1532 = vunpack.c.l.b16 %v1114
      %v1533 = vunpack.c.l.b16 %v1115
      %v1534 = vunpack.c.l.b16 %v1116
      %v1535 = vunpack.c.l.b16 %v1117
      %v1536 = vunpack.c.l.b16 %v1118
      %v1537 = vunpack.c.l.b16 %v1119
      %v1538 = vunpack.c.l.b16 %v1120
      %v1539 = vunpack.c.l.b16 %v1121
      %v1540 = vunpack.c.l.b16 %v1122
      %v1541 = vunpack.c.l.b16 %v1123
      %v1542 = vunpack.c.l.b16 %v1124
      %v1543 = vunpack.c.l.b16 %v1125
      %v1544 = vpack.c.b16 %v1529, %v1528
      %v1545 = vpack.c.b16 %v1531, %v1530
      %v1546 = vpack.c.b16 %v1533, %v1532
      %v1547 = vpack.c.b16 %v1535, %v1534
      %v1548 = vpack.c.b16 %v1537, %v1536
      %v1549 = vpack.c.b16 %v1539, %v1538
      %v1550 = vpack.c.b16 %v1541, %v1540
      %v1551 = vpack.c.b16 %v1543, %v1542
      %1560 = vmatprep.subr.bf16.mxu0 0
      %1561 = vmatpush1.bf16.msra.mxu0 %v1544
      %1562 = vmatprep.subr.bf16.mxu0 0
      %1563 = vmatpush1.bf16.msra.mxu0 %v1545
      %1564 = vmatprep.subr.bf16.mxu0 0
      %1565 = vmatpush1.bf16.msra.mxu0 %v1546
      %1566 = vmatprep.subr.bf16.mxu0 0
      %1567 = vmatpush1.bf16.msra.mxu0 %v1547
      %1568 = vmatprep.subr.bf16.mxu0 0
      %1569 = vmatpush1.bf16.msra.mxu0 %v1548
      %1570 = vmatprep.subr.bf16.mxu0 0
      %1571 = vmatpush1.bf16.msra.mxu0 %v1549
      %1572 = vmatprep.subr.bf16.mxu0 0
      %1573 = vmatpush1.bf16.msra.mxu0 %v1550
      %1574 = vmatprep.subr.bf16.mxu0 0
      %1575 = vmatpush1.bf16.msra.mxu0 %v1551
      %1576 = vmatprep.subr.bf16.mxu0 0
      %1577 = vmatpush1.bf16.msra.mxu0 0
      %1578 = vmatprep.subr.bf16.mxu0 0
      %1579 = vmatpush1.bf16.msra.mxu0 0
      %1580 = vmatprep.subr.bf16.mxu0 0
      %1581 = vmatpush1.bf16.msra.mxu0 0
      %1582 = vmatprep.subr.bf16.mxu0 0
      %1583 = vmatpush1.bf16.msra.mxu0 0
      %1584 = vmatprep.subr.bf16.mxu0 0
      %1585 = vmatpush1.bf16.msra.mxu0 0
      %1586 = vmatprep.subr.bf16.mxu0 0
      %1587 = vmatpush1.bf16.msra.mxu0 0
      %1588 = vmatprep.subr.bf16.mxu0 0
      %1589 = vmatpush1.bf16.msra.mxu0 0
      %1590 = vmatprep.subr.bf16.mxu0 0
      %1591 = vmatpush1.bf16.msra.mxu0 0
      %1592 = vmatprep.mubr.bf16.mxu0 0
      %1593 = vmatmul.mubr.bf16.gmra.mrb[0].mxu0 %v1480
      %v1594 = vpop.f32.mrb[0].mxu0
      %v1595 = vadd.f32 %v1322, %v1594
      %v1596 = vpop.f32.mrb[0].mxu0
      %v1597 = vpop.f32.mrb[0].mxu0
      %v1598 = vadd.f32 %v1325, %v1597
      %v1599 = vpop.f32.mrb[0].mxu0
      %1600 = vmatprep.mubr.bf16.mxu0 0
      %1601 = vmatmul.mubr.bf16.gmra.mrb[0].mxu0 %v1481
      %v1602 = vpop.f32.mrb[0].mxu0
      %v1603 = vadd.f32 %v1330, %v1602
      %v1604 = vpop.f32.mrb[0].mxu0
      %v1605 = vpop.f32.mrb[0].mxu0
      %v1606 = vadd.f32 %v1333, %v1605
      %v1607 = vpop.f32.mrb[0].mxu0
      %1608 = vmatprep.mubr.bf16.mxu0 0
      %1609 = vmatmul.mubr.bf16.gmra.mrb[0].mxu0 %v1482
      %v1610 = vpop.f32.mrb[0].mxu0
      %v1611 = vadd.f32 %v1338, %v1610
      %v1612 = vpop.f32.mrb[0].mxu0
      %v1613 = vpop.f32.mrb[0].mxu0
      %v1614 = vadd.f32 %v1341, %v1613
      %v1615 = vpop.f32.mrb[0].mxu0
      %1616 = vmatprep.mubr.bf16.mxu0 0
      %1617 = vmatmul.mubr.bf16.gmra.mrb[0].mxu0 %v1483
      %v1618 = vpop.f32.mrb[0].mxu0
      %v1619 = vadd.f32 %v1346, %v1618
      %v1620 = vpop.f32.mrb[0].mxu0
      %v1621 = vpop.f32.mrb[0].mxu0
      %v1622 = vadd.f32 %v1349, %v1621
      %v1623 = vpop.f32.mrb[0].mxu0
      %1624 = vmatprep.mubr.bf16.mxu0 0
      %1625 = vmatmul.mubr.bf16.gmra.mrb[0].mxu0 %v1484
      %v1626 = vpop.f32.mrb[0].mxu0
      %v1627 = vadd.f32 %v1354, %v1626
      %v1628 = vpop.f32.mrb[0].mxu0
      %v1629 = vpop.f32.mrb[0].mxu0
      %v1630 = vadd.f32 %v1357, %v1629
      %v1631 = vpop.f32.mrb[0].mxu0
      %1632 = vmatprep.mubr.bf16.mxu0 0
      %1633 = vmatmul.mubr.bf16.gmra.mrb[0].mxu0 %v1485
      %v1634 = vpop.f32.mrb[0].mxu0
      %v1635 = vadd.f32 %v1362, %v1634
      %v1636 = vpop.f32.mrb[0].mxu0
      %v1637 = vpop.f32.mrb[0].mxu0
      %v1638 = vadd.f32 %v1365, %v1637
      %v1639 = vpop.f32.mrb[0].mxu0
      %1640 = vmatprep.mubr.bf16.mxu0 0
      %1641 = vmatmul.mubr.bf16.gmra.mrb[0].mxu0 %v1486
      %v1642 = vpop.f32.mrb[0].mxu0
      %v1643 = vadd.f32 %v1370, %v1642
      %v1644 = vpop.f32.mrb[0].mxu0
      %v1645 = vpop.f32.mrb[0].mxu0
      %v1646 = vadd.f32 %v1373, %v1645
      %v1647 = vpop.f32.mrb[0].mxu0
      %1648 = vmatprep.mubr.bf16.mxu0 0
      %1649 = vmatmul.mubr.bf16.gmra.mrb[0].mxu0 %v1487
      %v1650 = vpop.f32.mrb[0].mxu0
      %v1651 = vadd.f32 %v1378, %v1650
      %v1652 = vpop.f32.mrb[0].mxu0
      %v1653 = vpop.f32.mrb[0].mxu0
      %v1654 = vadd.f32 %v1381, %v1653
      %v1655 = vpop.f32.mrb[0].mxu0
      %1656 = vmatprep.mubr.bf16.mxu0 0
      %1657 = vmatmul.mubr.bf16.gmra.mrb[0].mxu0 %v1488
      %v1658 = vpop.f32.mrb[0].mxu0
      %v1659 = vadd.f32 %v1386, %v1658
      %v1660 = vpop.f32.mrb[0].mxu0
      %v1661 = vpop.f32.mrb[0].mxu0
      %v1662 = vadd.f32 %v1389, %v1661
      %v1663 = vpop.f32.mrb[0].mxu0
      %1664 = vmatprep.mubr.bf16.mxu0 0
      %1665 = vmatmul.mubr.bf16.gmra.mrb[0].mxu0 %v1489
      %v1666 = vpop.f32.mrb[0].mxu0
      %v1667 = vadd.f32 %v1394, %v1666
      %v1668 = vpop.f32.mrb[0].mxu0
      %v1669 = vpop.f32.mrb[0].mxu0
      %v1670 = vadd.f32 %v1397, %v1669
      %v1671 = vpop.f32.mrb[0].mxu0
      %1672 = vmatprep.mubr.bf16.mxu0 0
      %1673 = vmatmul.mubr.bf16.gmra.mrb[0].mxu0 %v1490
      %v1674 = vpop.f32.mrb[0].mxu0
      %v1675 = vadd.f32 %v1402, %v1674
      %v1676 = vpop.f32.mrb[0].mxu0
      %v1677 = vpop.f32.mrb[0].mxu0
      %v1678 = vadd.f32 %v1405, %v1677
      %v1679 = vpop.f32.mrb[0].mxu0
      %1680 = vmatprep.mubr.bf16.mxu0 0
      %1681 = vmatmul.mubr.bf16.gmra.mrb[0].mxu0 %v1491
      %v1682 = vpop.f32.mrb[0].mxu0
      %v1683 = vadd.f32 %v1410, %v1682
      %v1684 = vpop.f32.mrb[0].mxu0
      %v1685 = vpop.f32.mrb[0].mxu0
      %v1686 = vadd.f32 %v1413, %v1685
      %v1687 = vpop.f32.mrb[0].mxu0
      %1688 = vmatprep.mubr.bf16.mxu0 0
      %1689 = vmatmul.mubr.bf16.gmra.mrb[0].mxu0 %v1492
      %v1690 = vpop.f32.mrb[0].mxu0
      %v1691 = vadd.f32 %v1418, %v1690
      %v1692 = vpop.f32.mrb[0].mxu0
      %v1693 = vpop.f32.mrb[0].mxu0
      %v1694 = vadd.f32 %v1421, %v1693
      %v1695 = vpop.f32.mrb[0].mxu0
      %1696 = vmatprep.mubr.bf16.mxu0 0
      %1697 = vmatmul.mubr.bf16.gmra.mrb[0].mxu0 %v1493
      %v1698 = vpop.f32.mrb[0].mxu0
      %v1699 = vadd.f32 %v1426, %v1698
      %v1700 = vpop.f32.mrb[0].mxu0
      %v1701 = vpop.f32.mrb[0].mxu0
      %v1702 = vadd.f32 %v1429, %v1701
      %v1703 = vpop.f32.mrb[0].mxu0
      %1704 = vmatprep.mubr.bf16.mxu0 0
      %1705 = vmatmul.mubr.bf16.gmra.mrb[0].mxu0 %v1494
      %v1706 = vpop.f32.mrb[0].mxu0
      %v1707 = vadd.f32 %v1434, %v1706
      %v1708 = vpop.f32.mrb[0].mxu0
      %v1709 = vpop.f32.mrb[0].mxu0
      %v1710 = vadd.f32 %v1437, %v1709
      %v1711 = vpop.f32.mrb[0].mxu0
      %1712 = vmatprep.mubr.bf16.mxu0 0
      %1713 = vmatmul.mubr.bf16.gmra.mrb[0].mxu0 %v1495
      %v1714 = vpop.f32.mrb[0].mxu0
      %v1715 = vadd.f32 %v1442, %v1714
      %v1716 = vpop.f32.mrb[0].mxu0
      %v1717 = vpop.f32.mrb[0].mxu0
      %v1718 = vadd.f32 %v1445, %v1717
      %v1719 = vpop.f32.mrb[0].mxu0
      %1720 = vdwg.mxu0
      %vm1721 = vsmask.f32 3328
      %vm1722 = vsmask.f32 7440
      %vm1723 = vmor %vm1721, %vm1722
      %v1724 = vrot.slane %v764, 4
      %v1725 = vrot.slane %v767, 5
      %v1726 = vor.u32 %v1724, %v1725
      %v1727 = vrot.slane %v1726, 4
      %v1728 = vrot.slane %v776, 5
      %v1729 = vsel %vm1723, %v1727, %v1728
      %v1730 = vrot.slane %v773, 4
      %v1731 = vor.u32 %v1730, %v1728
      %v1732 = vrot.slane %v1731, 4
      %v1734 = vshll.u32 %v687, 16
      %v1736 = vrot.slane %v1734, 5
      %v1737 = vsel %vm1723, %v1732, %v1736
      %v1738 = vrot.slane %v786, 4
      %v1739 = vrot.slane %v789, 5
      %v1740 = vor.u32 %v1738, %v1739
      %v1741 = vrot.slane %v1740, 4
      %v1742 = vrot.slane %v798, 5
      %v1743 = vsel %vm1723, %v1741, %v1742
      %v1744 = vrot.slane %v795, 4
      %v1745 = vor.u32 %v1744, %v1742
      %v1746 = vrot.slane %v1745, 4
      %v1748 = vshll.u32 %v691, 16
      %v1750 = vrot.slane %v1748, 5
      %v1751 = vsel %vm1723, %v1746, %v1750
      %v1752 = vrot.slane %v808, 4
      %v1753 = vrot.slane %v811, 5
      %v1754 = vor.u32 %v1752, %v1753
      %v1755 = vrot.slane %v1754, 4
      %v1756 = vrot.slane %v820, 5
      %v1757 = vsel %vm1723, %v1755, %v1756
      %v1758 = vrot.slane %v817, 4
      %v1759 = vor.u32 %v1758, %v1756
      %v1760 = vrot.slane %v1759, 4
      %v1762 = vshll.u32 %v695, 16
      %v1764 = vrot.slane %v1762, 5
      %v1765 = vsel %vm1723, %v1760, %v1764
      %v1766 = vrot.slane %v830, 4
      %v1767 = vrot.slane %v833, 5
      %v1768 = vor.u32 %v1766, %v1767
      %v1769 = vrot.slane %v1768, 4
      %v1770 = vrot.slane %v842, 5
      %v1771 = vsel %vm1723, %v1769, %v1770
      %v1772 = vrot.slane %v839, 4
      %v1773 = vor.u32 %v1772, %v1770
      %v1774 = vrot.slane %v1773, 4
      %v1776 = vshll.u32 %v699, 16
      %v1778 = vrot.slane %v1776, 5
      %v1779 = vsel %vm1723, %v1774, %v1778
      %v1780 = vrot.slane %v852, 4
      %v1781 = vrot.slane %v855, 5
      %v1782 = vor.u32 %v1780, %v1781
      %v1783 = vrot.slane %v1782, 4
      %v1784 = vrot.slane %v864, 5
      %v1785 = vsel %vm1723, %v1783, %v1784
      %v1786 = vrot.slane %v861, 4
      %v1787 = vor.u32 %v1786, %v1784
      %v1788 = vrot.slane %v1787, 4
      %v1790 = vshll.u32 %v703, 16
      %v1792 = vrot.slane %v1790, 5
      %v1793 = vsel %vm1723, %v1788, %v1792
      %v1794 = vrot.slane %v874, 4
      %v1795 = vrot.slane %v877, 5
      %v1796 = vor.u32 %v1794, %v1795
      %v1797 = vrot.slane %v1796, 4
      %v1798 = vrot.slane %v886, 5
      %v1799 = vsel %vm1723, %v1797, %v1798
      %v1800 = vrot.slane %v883, 4
      %v1801 = vor.u32 %v1800, %v1798
      %v1802 = vrot.slane %v1801, 4
      %v1804 = vshll.u32 %v707, 16
      %v1806 = vrot.slane %v1804, 5
      %v1807 = vsel %vm1723, %v1802, %v1806
      %v1808 = vrot.slane %v896, 4
      %v1809 = vrot.slane %v899, 5
      %v1810 = vor.u32 %v1808, %v1809
      %v1811 = vrot.slane %v1810, 4
      %v1812 = vrot.slane %v908, 5
      %v1813 = vsel %vm1723, %v1811, %v1812
      %v1814 = vrot.slane %v905, 4
      %v1815 = vor.u32 %v1814, %v1812
      %v1816 = vrot.slane %v1815, 4
      %v1818 = vshll.u32 %v711, 16
      %v1820 = vrot.slane %v1818, 5
      %v1821 = vsel %vm1723, %v1816, %v1820
      %v1822 = vrot.slane %v918, 4
      %v1823 = vrot.slane %v921, 5
      %v1824 = vor.u32 %v1822, %v1823
      %v1825 = vrot.slane %v1824, 4
      %v1826 = vrot.slane %v930, 5
      %v1827 = vsel %vm1723, %v1825, %v1826
      %v1828 = vrot.slane %v927, 4
      %v1829 = vor.u32 %v1828, %v1826
      %v1830 = vrot.slane %v1829, 4
      %v1832 = vshll.u32 %v715, 16
      %v1834 = vrot.slane %v1832, 5
      %v1835 = vsel %vm1723, %v1830, %v1834
      %v1836 = vrot.slane %v940, 4
      %v1837 = vrot.slane %v943, 5
      %v1838 = vor.u32 %v1836, %v1837
      %v1839 = vrot.slane %v1838, 4
      %v1840 = vrot.slane %v952, 5
      %v1841 = vsel %vm1723, %v1839, %v1840
      %v1842 = vrot.slane %v949, 4
      %v1843 = vor.u32 %v1842, %v1840
      %v1844 = vrot.slane %v1843, 4
      %v1846 = vshll.u32 %v719, 16
      %v1848 = vrot.slane %v1846, 5
      %v1849 = vsel %vm1723, %v1844, %v1848
      %v1850 = vrot.slane %v962, 4
      %v1851 = vrot.slane %v965, 5
      %v1852 = vor.u32 %v1850, %v1851
      %v1853 = vrot.slane %v1852, 4
      %v1854 = vrot.slane %v974, 5
      %v1855 = vsel %vm1723, %v1853, %v1854
      %v1856 = vrot.slane %v971, 4
      %v1857 = vor.u32 %v1856, %v1854
      %v1858 = vrot.slane %v1857, 4
      %v1860 = vshll.u32 %v723, 16
      %v1862 = vrot.slane %v1860, 5
      %v1863 = vsel %vm1723, %v1858, %v1862
      %v1864 = vrot.slane %v984, 4
      %v1865 = vrot.slane %v987, 5
      %v1866 = vor.u32 %v1864, %v1865
      %v1867 = vrot.slane %v1866, 4
      %v1868 = vrot.slane %v996, 5
      %v1869 = vsel %vm1723, %v1867, %v1868
      %v1870 = vrot.slane %v993, 4
      %v1871 = vor.u32 %v1870, %v1868
      %v1872 = vrot.slane %v1871, 4
      %v1874 = vshll.u32 %v727, 16
      %v1876 = vrot.slane %v1874, 5
      %v1877 = vsel %vm1723, %v1872, %v1876
      %v1878 = vrot.slane %v1006, 4
      %v1879 = vrot.slane %v1009, 5
      %v1880 = vor.u32 %v1878, %v1879
      %v1881 = vrot.slane %v1880, 4
      %v1882 = vrot.slane %v1018, 5
      %v1883 = vsel %vm1723, %v1881, %v1882
      %v1884 = vrot.slane %v1015, 4
      %v1885 = vor.u32 %v1884, %v1882
      %v1886 = vrot.slane %v1885, 4
      %v1888 = vshll.u32 %v731, 16
      %v1890 = vrot.slane %v1888, 5
      %v1891 = vsel %vm1723, %v1886, %v1890
      %v1892 = vrot.slane %v1028, 4
      %v1893 = vrot.slane %v1031, 5
      %v1894 = vor.u32 %v1892, %v1893
      %v1895 = vrot.slane %v1894, 4
      %v1896 = vrot.slane %v1040, 5
      %v1897 = vsel %vm1723, %v1895, %v1896
      %v1898 = vrot.slane %v1037, 4
      %v1899 = vor.u32 %v1898, %v1896
      %v1900 = vrot.slane %v1899, 4
      %v1902 = vshll.u32 %v735, 16
      %v1904 = vrot.slane %v1902, 5
      %v1905 = vsel %vm1723, %v1900, %v1904
      %v1906 = vrot.slane %v1050, 4
      %v1907 = vrot.slane %v1053, 5
      %v1908 = vor.u32 %v1906, %v1907
      %v1909 = vrot.slane %v1908, 4
      %v1910 = vrot.slane %v1062, 5
      %v1911 = vsel %vm1723, %v1909, %v1910
      %v1912 = vrot.slane %v1059, 4
      %v1913 = vor.u32 %v1912, %v1910
      %v1914 = vrot.slane %v1913, 4
      %v1916 = vshll.u32 %v739, 16
      %v1918 = vrot.slane %v1916, 5
      %v1919 = vsel %vm1723, %v1914, %v1918
      %v1920 = vrot.slane %v1072, 4
      %v1921 = vrot.slane %v1075, 5
      %v1922 = vor.u32 %v1920, %v1921
      %v1923 = vrot.slane %v1922, 4
      %v1924 = vrot.slane %v1084, 5
      %v1925 = vsel %vm1723, %v1923, %v1924
      %v1926 = vrot.slane %v1081, 4
      %v1927 = vor.u32 %v1926, %v1924
      %v1928 = vrot.slane %v1927, 4
      %v1930 = vshll.u32 %v743, 16
      %v1932 = vrot.slane %v1930, 5
      %v1933 = vsel %vm1723, %v1928, %v1932
      %v1934 = vrot.slane %v1094, 4
      %v1935 = vrot.slane %v1097, 5
      %v1936 = vor.u32 %v1934, %v1935
      %v1937 = vrot.slane %v1936, 4
      %v1938 = vrot.slane %v1106, 5
      %v1939 = vsel %vm1723, %v1937, %v1938
      %v1940 = vrot.slane %v1103, 4
      %v1941 = vor.u32 %v1940, %v1938
      %v1942 = vrot.slane %v1941, 4
      %v1944 = vshll.u32 %v747, 16
      %v1946 = vrot.slane %v1944, 5
      %v1947 = vsel %vm1723, %v1942, %v1946
      %s1948 = scalar_lea.vmem %s3, 128
      %v1949 = vld [vmem:[%s1948] sm:$0xf]
      %v1950 = vld [vmem:[%s1948 + $0x4] sm:$0xf]
      %v1951 = vld [vmem:[%s1948 + $0x8] sm:$0xf]
      %v1952 = vld [vmem:[%s1948 + $0xc] sm:$0xf]
      %v1953 = vld [vmem:[%s1948 + $0x10] sm:$0xf]
      %v1954 = vld [vmem:[%s1948 + $0x14] sm:$0xf]
      %v1955 = vld [vmem:[%s1948 + $0x18] sm:$0xf]
      %v1956 = vld [vmem:[%s1948 + $0x1c] sm:$0xf]
      %v1957 = vld [vmem:[%s1948 + $0x20] sm:$0xf]
      %v1958 = vld [vmem:[%s1948 + $0x24] sm:$0xf]
      %v1959 = vld [vmem:[%s1948 + $0x28] sm:$0xf]
      %v1960 = vld [vmem:[%s1948 + $0x2c] sm:$0xf]
      %v1961 = vld [vmem:[%s1948 + $0x30] sm:$0xf]
      %v1962 = vld [vmem:[%s1948 + $0x34] sm:$0xf]
      %v1963 = vld [vmem:[%s1948 + $0x38] sm:$0xf]
      %v1964 = vld [vmem:[%s1948 + $0x3c] sm:$0xf]
      %v1965 = vunpack.c.l.b16 %v1729
      %v1966 = vunpack.c.l.b16 %v1737
      %v1967 = vunpack.c.l.b16 %v1743
      %v1968 = vunpack.c.l.b16 %v1751
      %v1969 = vunpack.c.l.b16 %v1757
      %v1970 = vunpack.c.l.b16 %v1765
      %v1971 = vunpack.c.l.b16 %v1771
      %v1972 = vunpack.c.l.b16 %v1779
      %v1973 = vunpack.c.l.b16 %v1785
      %v1974 = vunpack.c.l.b16 %v1793
      %v1975 = vunpack.c.l.b16 %v1799
      %v1976 = vunpack.c.l.b16 %v1807
      %v1977 = vunpack.c.l.b16 %v1813
      %v1978 = vunpack.c.l.b16 %v1821
      %v1979 = vunpack.c.l.b16 %v1827
      %v1980 = vunpack.c.l.b16 %v1835
      %v1981 = vunpack.c.l.b16 %v1841
      %v1982 = vunpack.c.l.b16 %v1849
      %v1983 = vunpack.c.l.b16 %v1855
      %v1984 = vunpack.c.l.b16 %v1863
      %v1985 = vunpack.c.l.b16 %v1869
      %v1986 = vunpack.c.l.b16 %v1877
      %v1987 = vunpack.c.l.b16 %v1883
      %v1988 = vunpack.c.l.b16 %v1891
      %v1989 = vunpack.c.l.b16 %v1897
      %v1990 = vunpack.c.l.b16 %v1905
      %v1991 = vunpack.c.l.b16 %v1911
      %v1992 = vunpack.c.l.b16 %v1919
      %v1993 = vunpack.c.l.b16 %v1925
      %v1994 = vunpack.c.l.b16 %v1933
      %v1995 = vunpack.c.l.b16 %v1939
      %v1996 = vunpack.c.l.b16 %v1947
      %v1997 = vpack.c.b16 %v1966, %v1965
      %v1998 = vpack.c.b16 %v1968, %v1967
      %v1999 = vpack.c.b16 %v1970, %v1969
      %v2000 = vpack.c.b16 %v1972, %v1971
      %v2001 = vpack.c.b16 %v1974, %v1973
      %v2002 = vpack.c.b16 %v1976, %v1975
      %v2003 = vpack.c.b16 %v1978, %v1977
      %v2004 = vpack.c.b16 %v1980, %v1979
      %v2005 = vpack.c.b16 %v1982, %v1981
      %v2006 = vpack.c.b16 %v1984, %v1983
      %v2007 = vpack.c.b16 %v1986, %v1985
      %v2008 = vpack.c.b16 %v1988, %v1987
      %v2009 = vpack.c.b16 %v1990, %v1989
      %v2010 = vpack.c.b16 %v1992, %v1991
      %v2011 = vpack.c.b16 %v1994, %v1993
      %v2012 = vpack.c.b16 %v1996, %v1995
      %v2045 = vunpack.c.l.b16 %v1949
      %v2046 = vunpack.c.l.b16 %v1950
      %v2047 = vunpack.c.l.b16 %v1951
      %v2048 = vunpack.c.l.b16 %v1952
      %v2049 = vunpack.c.l.b16 %v1953
      %v2050 = vunpack.c.l.b16 %v1954
      %v2051 = vunpack.c.l.b16 %v1955
      %v2052 = vunpack.c.l.b16 %v1956
      %v2053 = vunpack.c.l.b16 %v1957
      %v2054 = vunpack.c.l.b16 %v1958
      %v2055 = vunpack.c.l.b16 %v1959
      %v2056 = vunpack.c.l.b16 %v1960
      %v2057 = vunpack.c.l.b16 %v1961
      %v2058 = vunpack.c.l.b16 %v1962
      %v2059 = vunpack.c.l.b16 %v1963
      %v2060 = vunpack.c.l.b16 %v1964
      %v2061 = vpack.c.b16 %v2046, %v2045
      %v2062 = vpack.c.b16 %v2048, %v2047
      %v2063 = vpack.c.b16 %v2050, %v2049
      %v2064 = vpack.c.b16 %v2052, %v2051
      %v2065 = vpack.c.b16 %v2054, %v2053
      %v2066 = vpack.c.b16 %v2056, %v2055
      %v2067 = vpack.c.b16 %v2058, %v2057
      %v2068 = vpack.c.b16 %v2060, %v2059
      %2077 = vmatprep.subr.bf16.mxu0 0
      %2078 = vmatpush1.bf16.msra.mxu0 %v2061
      %2079 = vmatprep.subr.bf16.mxu0 0
      %2080 = vmatpush1.bf16.msra.mxu0 %v2062
      %2081 = vmatprep.subr.bf16.mxu0 0
      %2082 = vmatpush1.bf16.msra.mxu0 %v2063
      %2083 = vmatprep.subr.bf16.mxu0 0
      %2084 = vmatpush1.bf16.msra.mxu0 %v2064
      %2085 = vmatprep.subr.bf16.mxu0 0
      %2086 = vmatpush1.bf16.msra.mxu0 %v2065
      %2087 = vmatprep.subr.bf16.mxu0 0
      %2088 = vmatpush1.bf16.msra.mxu0 %v2066
      %2089 = vmatprep.subr.bf16.mxu0 0
      %2090 = vmatpush1.bf16.msra.mxu0 %v2067
      %2091 = vmatprep.subr.bf16.mxu0 0
      %2092 = vmatpush1.bf16.msra.mxu0 %v2068
      %2093 = vmatprep.subr.bf16.mxu0 0
      %2094 = vmatpush1.bf16.msra.mxu0 0
      %2095 = vmatprep.subr.bf16.mxu0 0
      %2096 = vmatpush1.bf16.msra.mxu0 0
      %2097 = vmatprep.subr.bf16.mxu0 0
      %2098 = vmatpush1.bf16.msra.mxu0 0
      %2099 = vmatprep.subr.bf16.mxu0 0
      %2100 = vmatpush1.bf16.msra.mxu0 0
      %2101 = vmatprep.subr.bf16.mxu0 0
      %2102 = vmatpush1.bf16.msra.mxu0 0
      %2103 = vmatprep.subr.bf16.mxu0 0
      %2104 = vmatpush1.bf16.msra.mxu0 0
      %2105 = vmatprep.subr.bf16.mxu0 0
      %2106 = vmatpush1.bf16.msra.mxu0 0
      %2107 = vmatprep.subr.bf16.mxu0 0
      %2108 = vmatpush1.bf16.msra.mxu0 0
      %2109 = vmatprep.mubr.bf16.mxu0 0
      %2110 = vmatmul.mubr.bf16.gmra.mrb[0].mxu0 %v1997
      %v2111 = vpop.f32.mrb[0].mxu0
      %v2112 = vadd.f32 0.0, %v2111
      %v2113 = vpop.f32.mrb[0].mxu0
      %v2114 = vpop.f32.mrb[0].mxu0
      %v2115 = vadd.f32 0.0, %v2114
      %v2116 = vpop.f32.mrb[0].mxu0
      %2117 = vmatprep.mubr.bf16.mxu0 0
      %2118 = vmatmul.mubr.bf16.gmra.mrb[0].mxu0 %v1998
      %v2119 = vpop.f32.mrb[0].mxu0
      %v2120 = vadd.f32 0.0, %v2119
      %v2121 = vpop.f32.mrb[0].mxu0
      %v2122 = vpop.f32.mrb[0].mxu0
      %v2123 = vadd.f32 0.0, %v2122
      %v2124 = vpop.f32.mrb[0].mxu0
      %2125 = vmatprep.mubr.bf16.mxu0 0
      %2126 = vmatmul.mubr.bf16.gmra.mrb[0].mxu0 %v1999
      %v2127 = vpop.f32.mrb[0].mxu0
      %v2128 = vadd.f32 0.0, %v2127
      %v2129 = vpop.f32.mrb[0].mxu0
      %v2130 = vpop.f32.mrb[0].mxu0
      %v2131 = vadd.f32 0.0, %v2130
      %v2132 = vpop.f32.mrb[0].mxu0
      %2133 = vmatprep.mubr.bf16.mxu0 0
      %2134 = vmatmul.mubr.bf16.gmra.mrb[0].mxu0 %v2000
      %v2135 = vpop.f32.mrb[0].mxu0
      %v2136 = vadd.f32 0.0, %v2135
      %v2137 = vpop.f32.mrb[0].mxu0
      %v2138 = vpop.f32.mrb[0].mxu0
      %v2139 = vadd.f32 0.0, %v2138
      %v2140 = vpop.f32.mrb[0].mxu0
      %2141 = vmatprep.mubr.bf16.mxu0 0
      %2142 = vmatmul.mubr.bf16.gmra.mrb[0].mxu0 %v2001
      %v2143 = vpop.f32.mrb[0].mxu0
      %v2144 = vadd.f32 0.0, %v2143
      %v2145 = vpop.f32.mrb[0].mxu0
      %v2146 = vpop.f32.mrb[0].mxu0
      %v2147 = vadd.f32 0.0, %v2146
      %v2148 = vpop.f32.mrb[0].mxu0
      %2149 = vmatprep.mubr.bf16.mxu0 0
      %2150 = vmatmul.mubr.bf16.gmra.mrb[0].mxu0 %v2002
      %v2151 = vpop.f32.mrb[0].mxu0
      %v2152 = vadd.f32 0.0, %v2151
      %v2153 = vpop.f32.mrb[0].mxu0
      %v2154 = vpop.f32.mrb[0].mxu0
      %v2155 = vadd.f32 0.0, %v2154
      %v2156 = vpop.f32.mrb[0].mxu0
      %2157 = vmatprep.mubr.bf16.mxu0 0
      %2158 = vmatmul.mubr.bf16.gmra.mrb[0].mxu0 %v2003
      %v2159 = vpop.f32.mrb[0].mxu0
      %v2160 = vadd.f32 0.0, %v2159
      %v2161 = vpop.f32.mrb[0].mxu0
      %v2162 = vpop.f32.mrb[0].mxu0
      %v2163 = vadd.f32 0.0, %v2162
      %v2164 = vpop.f32.mrb[0].mxu0
      %2165 = vmatprep.mubr.bf16.mxu0 0
      %2166 = vmatmul.mubr.bf16.gmra.mrb[0].mxu0 %v2004
      %v2167 = vpop.f32.mrb[0].mxu0
      %v2168 = vadd.f32 0.0, %v2167
      %v2169 = vpop.f32.mrb[0].mxu0
      %v2170 = vpop.f32.mrb[0].mxu0
      %v2171 = vadd.f32 0.0, %v2170
      %v2172 = vpop.f32.mrb[0].mxu0
      %2173 = vmatprep.mubr.bf16.mxu0 0
      %2174 = vmatmul.mubr.bf16.gmra.mrb[0].mxu0 %v2005
      %v2175 = vpop.f32.mrb[0].mxu0
      %v2176 = vadd.f32 0.0, %v2175
      %v2177 = vpop.f32.mrb[0].mxu0
      %v2178 = vpop.f32.mrb[0].mxu0
      %v2179 = vadd.f32 0.0, %v2178
      %v2180 = vpop.f32.mrb[0].mxu0
      %2181 = vmatprep.mubr.bf16.mxu0 0
      %2182 = vmatmul.mubr.bf16.gmra.mrb[0].mxu0 %v2006
      %v2183 = vpop.f32.mrb[0].mxu0
      %v2184 = vadd.f32 0.0, %v2183
      %v2185 = vpop.f32.mrb[0].mxu0
      %v2186 = vpop.f32.mrb[0].mxu0
      %v2187 = vadd.f32 0.0, %v2186
      %v2188 = vpop.f32.mrb[0].mxu0
      %2189 = vmatprep.mubr.bf16.mxu0 0
      %2190 = vmatmul.mubr.bf16.gmra.mrb[0].mxu0 %v2007
      %v2191 = vpop.f32.mrb[0].mxu0
      %v2192 = vadd.f32 0.0, %v2191
      %v2193 = vpop.f32.mrb[0].mxu0
      %v2194 = vpop.f32.mrb[0].mxu0
      %v2195 = vadd.f32 0.0, %v2194
      %v2196 = vpop.f32.mrb[0].mxu0
      %2197 = vmatprep.mubr.bf16.mxu0 0
      %2198 = vmatmul.mubr.bf16.gmra.mrb[0].mxu0 %v2008
      %v2199 = vpop.f32.mrb[0].mxu0
      %v2200 = vadd.f32 0.0, %v2199
      %v2201 = vpop.f32.mrb[0].mxu0
      %v2202 = vpop.f32.mrb[0].mxu0
      %v2203 = vadd.f32 0.0, %v2202
      %v2204 = vpop.f32.mrb[0].mxu0
      %2205 = vmatprep.mubr.bf16.mxu0 0
      %2206 = vmatmul.mubr.bf16.gmra.mrb[0].mxu0 %v2009
      %v2207 = vpop.f32.mrb[0].mxu0
      %v2208 = vadd.f32 0.0, %v2207
      %v2209 = vpop.f32.mrb[0].mxu0
      %v2210 = vpop.f32.mrb[0].mxu0
      %v2211 = vadd.f32 0.0, %v2210
      %v2212 = vpop.f32.mrb[0].mxu0
      %2213 = vmatprep.mubr.bf16.mxu0 0
      %2214 = vmatmul.mubr.bf16.gmra.mrb[0].mxu0 %v2010
      %v2215 = vpop.f32.mrb[0].mxu0
      %v2216 = vadd.f32 0.0, %v2215
      %v2217 = vpop.f32.mrb[0].mxu0
      %v2218 = vpop.f32.mrb[0].mxu0
      %v2219 = vadd.f32 0.0, %v2218
      %v2220 = vpop.f32.mrb[0].mxu0
      %2221 = vmatprep.mubr.bf16.mxu0 0
      %2222 = vmatmul.mubr.bf16.gmra.mrb[0].mxu0 %v2011
      %v2223 = vpop.f32.mrb[0].mxu0
      %v2224 = vadd.f32 0.0, %v2223
      %v2225 = vpop.f32.mrb[0].mxu0
      %v2226 = vpop.f32.mrb[0].mxu0
      %v2227 = vadd.f32 0.0, %v2226
      %v2228 = vpop.f32.mrb[0].mxu0
      %2229 = vmatprep.mubr.bf16.mxu0 0
      %2230 = vmatmul.mubr.bf16.gmra.mrb[0].mxu0 %v2012
      %v2231 = vpop.f32.mrb[0].mxu0
      %v2232 = vadd.f32 0.0, %v2231
      %v2233 = vpop.f32.mrb[0].mxu0
      %v2234 = vpop.f32.mrb[0].mxu0
      %v2235 = vadd.f32 0.0, %v2234
      %v2236 = vpop.f32.mrb[0].mxu0
      %2237 = vdwg.mxu0
      %v2238 = vadd.f32 %v1595, %v2112
      %v2239 = vadd.f32 %v1598, %v2115
      %v2240 = vadd.f32 %v1603, %v2120
      %v2241 = vadd.f32 %v1606, %v2123
      %v2242 = vadd.f32 %v1611, %v2128
      %v2243 = vadd.f32 %v1614, %v2131
      %v2244 = vadd.f32 %v1619, %v2136
      %v2245 = vadd.f32 %v1622, %v2139
      %v2246 = vadd.f32 %v1627, %v2144
      %v2247 = vadd.f32 %v1630, %v2147
      %v2248 = vadd.f32 %v1635, %v2152
      %v2249 = vadd.f32 %v1638, %v2155
      %v2250 = vadd.f32 %v1643, %v2160
      %v2251 = vadd.f32 %v1646, %v2163
      %v2252 = vadd.f32 %v1651, %v2168
      %v2253 = vadd.f32 %v1654, %v2171
      %v2254 = vadd.f32 %v1659, %v2176
      %v2255 = vadd.f32 %v1662, %v2179
      %v2256 = vadd.f32 %v1667, %v2184
      %v2257 = vadd.f32 %v1670, %v2187
      %v2258 = vadd.f32 %v1675, %v2192
      %v2259 = vadd.f32 %v1678, %v2195
      %v2260 = vadd.f32 %v1683, %v2200
      %v2261 = vadd.f32 %v1686, %v2203
      %v2262 = vadd.f32 %v1691, %v2208
      %v2263 = vadd.f32 %v1694, %v2211
      %v2264 = vadd.f32 %v1699, %v2216
      %v2265 = vadd.f32 %v1702, %v2219
      %v2266 = vadd.f32 %v1707, %v2224
      %v2267 = vadd.f32 %v1710, %v2227
      %v2268 = vadd.f32 %v1715, %v2232
      %v2269 = vadd.f32 %v1718, %v2235
      %v2271 = vshrl.u32 %v748, 16
      %v2273 = vrot.slane %v2271, 7
      %v2274 = vrot.slane %v2273, 4
      %v2276 = vshrl.u32 %v749, 16
      %v2278 = vrot.slane %v2276, 7
      %v2279 = vshll.u32 %v749, 16
      %v2281 = vor.u32 %v2278, %v2279
      %v2282 = vsel %vm757, %v2274, %v2281
      %v2283 = vrot.slane %v2278, 4
      %v2285 = vshrl.u32 %v750, 16
      %v2287 = vrot.slane %v2285, 7
      %v2288 = vshll.u32 %v750, 16
      %v2290 = vor.u32 %v2287, %v2288
      %v2291 = vsel %vm757, %v2283, %v2290
      %s2292 = scalar_lea.vmem %s3, 192
      %v2293 = vld [vmem:[%s2292] sm:$0xf]
      %v2294 = vld [vmem:[%s2292 + $0x4] sm:$0xf]
      %v2295 = vld [vmem:[%s2292 + $0x8] sm:$0xf]
      %v2296 = vld [vmem:[%s2292 + $0xc] sm:$0xf]
      %v2297 = vld [vmem:[%s2292 + $0x10] sm:$0xf]
      %v2298 = vld [vmem:[%s2292 + $0x14] sm:$0xf]
      %v2299 = vld [vmem:[%s2292 + $0x18] sm:$0xf]
      %v2300 = vld [vmem:[%s2292 + $0x1c] sm:$0xf]
      %v2301 = vld [vmem:[%s2292 + $0x20] sm:$0xf]
      %v2302 = vld [vmem:[%s2292 + $0x24] sm:$0xf]
      %v2303 = vld [vmem:[%s2292 + $0x28] sm:$0xf]
      %v2304 = vld [vmem:[%s2292 + $0x2c] sm:$0xf]
      %v2305 = vld [vmem:[%s2292 + $0x30] sm:$0xf]
      %v2306 = vld [vmem:[%s2292 + $0x34] sm:$0xf]
      %v2307 = vld [vmem:[%s2292 + $0x38] sm:$0xf]
      %v2308 = vld [vmem:[%s2292 + $0x3c] sm:$0xf]
      %v2309 = vunpack.c.l.b16 %v2282
      %v2310 = vunpack.c.l.b16 %v2291
      %v2311 = vpack.c.b16 %v2310, %v2309
      %v2329 = vunpack.c.l.b16 %v2293
      %v2330 = vunpack.c.l.b16 %v2294
      %v2331 = vunpack.c.l.b16 %v2295
      %v2332 = vunpack.c.l.b16 %v2296
      %v2333 = vunpack.c.l.b16 %v2297
      %v2334 = vunpack.c.l.b16 %v2298
      %v2335 = vunpack.c.l.b16 %v2299
      %v2336 = vunpack.c.l.b16 %v2300
      %v2337 = vunpack.c.l.b16 %v2301
      %v2338 = vunpack.c.l.b16 %v2302
      %v2339 = vunpack.c.l.b16 %v2303
      %v2340 = vunpack.c.l.b16 %v2304
      %v2341 = vunpack.c.l.b16 %v2305
      %v2342 = vunpack.c.l.b16 %v2306
      %v2343 = vunpack.c.l.b16 %v2307
      %v2344 = vunpack.c.l.b16 %v2308
      %v2345 = vpack.c.b16 %v2330, %v2329
      %v2346 = vpack.c.b16 %v2332, %v2331
      %v2347 = vpack.c.b16 %v2334, %v2333
      %v2348 = vpack.c.b16 %v2336, %v2335
      %v2349 = vpack.c.b16 %v2338, %v2337
      %v2350 = vpack.c.b16 %v2340, %v2339
      %v2351 = vpack.c.b16 %v2342, %v2341
      %v2352 = vpack.c.b16 %v2344, %v2343
      %2361 = vmatprep.subr.bf16.mxu0 0
      %2362 = vmatpush1.bf16.msra.mxu0 %v2345
      %2363 = vmatprep.subr.bf16.mxu0 0
      %2364 = vmatpush1.bf16.msra.mxu0 %v2346
      %2365 = vmatprep.subr.bf16.mxu0 0
      %2366 = vmatpush1.bf16.msra.mxu0 %v2347
      %2367 = vmatprep.subr.bf16.mxu0 0
      %2368 = vmatpush1.bf16.msra.mxu0 %v2348
      %2369 = vmatprep.subr.bf16.mxu0 0
      %2370 = vmatpush1.bf16.msra.mxu0 %v2349
      %2371 = vmatprep.subr.bf16.mxu0 0
      %2372 = vmatpush1.bf16.msra.mxu0 %v2350
      %2373 = vmatprep.subr.bf16.mxu0 0
      %2374 = vmatpush1.bf16.msra.mxu0 %v2351
      %2375 = vmatprep.subr.bf16.mxu0 0
      %2376 = vmatpush1.bf16.msra.mxu0 %v2352
      %2377 = vmatprep.subr.bf16.mxu0 0
      %2378 = vmatpush1.bf16.msra.mxu0 0
      %2379 = vmatprep.subr.bf16.mxu0 0
      %2380 = vmatpush1.bf16.msra.mxu0 0
      %2381 = vmatprep.subr.bf16.mxu0 0
      %2382 = vmatpush1.bf16.msra.mxu0 0
      %2383 = vmatprep.subr.bf16.mxu0 0
      %2384 = vmatpush1.bf16.msra.mxu0 0
      %2385 = vmatprep.subr.bf16.mxu0 0
      %2386 = vmatpush1.bf16.msra.mxu0 0
      %2387 = vmatprep.subr.bf16.mxu0 0
      %2388 = vmatpush1.bf16.msra.mxu0 0
      %2389 = vmatprep.subr.bf16.mxu0 0
      %2390 = vmatpush1.bf16.msra.mxu0 0
      %2391 = vmatprep.subr.bf16.mxu0 0
      %2392 = vmatpush1.bf16.msra.mxu0 0
      %2393 = vmatprep.mubr.bf16.mxu0 0
      %2394 = vmatmul.mubr.bf16.gmra.mrb[0].mxu0 %v1481
      %v2395 = vpop.f32.mrb[0].mxu0
      %v2396 = vadd.f32 0.0, %v2395
      %v2397 = vpop.f32.mrb[0].mxu0
      %v2398 = vpop.f32.mrb[0].mxu0
      %v2399 = vadd.f32 0.0, %v2398
      %v2400 = vpop.f32.mrb[0].mxu0
      %2401 = vmatprep.mubr.bf16.mxu0 0
      %2402 = vmatmul.mubr.bf16.gmra.mrb[0].mxu0 %v1482
      %v2403 = vpop.f32.mrb[0].mxu0
      %v2404 = vadd.f32 0.0, %v2403
      %v2405 = vpop.f32.mrb[0].mxu0
      %v2406 = vpop.f32.mrb[0].mxu0
      %v2407 = vadd.f32 0.0, %v2406
      %v2408 = vpop.f32.mrb[0].mxu0
      %2409 = vmatprep.mubr.bf16.mxu0 0
      %2410 = vmatmul.mubr.bf16.gmra.mrb[0].mxu0 %v1483
      %v2411 = vpop.f32.mrb[0].mxu0
      %v2412 = vadd.f32 0.0, %v2411
      %v2413 = vpop.f32.mrb[0].mxu0
      %v2414 = vpop.f32.mrb[0].mxu0
      %v2415 = vadd.f32 0.0, %v2414
      %v2416 = vpop.f32.mrb[0].mxu0
      %2417 = vmatprep.mubr.bf16.mxu0 0
      %2418 = vmatmul.mubr.bf16.gmra.mrb[0].mxu0 %v1484
      %v2419 = vpop.f32.mrb[0].mxu0
      %v2420 = vadd.f32 0.0, %v2419
      %v2421 = vpop.f32.mrb[0].mxu0
      %v2422 = vpop.f32.mrb[0].mxu0
      %v2423 = vadd.f32 0.0, %v2422
      %v2424 = vpop.f32.mrb[0].mxu0
      %2425 = vmatprep.mubr.bf16.mxu0 0
      %2426 = vmatmul.mubr.bf16.gmra.mrb[0].mxu0 %v1485
      %v2427 = vpop.f32.mrb[0].mxu0
      %v2428 = vadd.f32 0.0, %v2427
      %v2429 = vpop.f32.mrb[0].mxu0
      %v2430 = vpop.f32.mrb[0].mxu0
      %v2431 = vadd.f32 0.0, %v2430
      %v2432 = vpop.f32.mrb[0].mxu0
      %2433 = vmatprep.mubr.bf16.mxu0 0
      %2434 = vmatmul.mubr.bf16.gmra.mrb[0].mxu0 %v1486
      %v2435 = vpop.f32.mrb[0].mxu0
      %v2436 = vadd.f32 0.0, %v2435
      %v2437 = vpop.f32.mrb[0].mxu0
      %v2438 = vpop.f32.mrb[0].mxu0
      %v2439 = vadd.f32 0.0, %v2438
      %v2440 = vpop.f32.mrb[0].mxu0
      %2441 = vmatprep.mubr.bf16.mxu0 0
      %2442 = vmatmul.mubr.bf16.gmra.mrb[0].mxu0 %v1487
      %v2443 = vpop.f32.mrb[0].mxu0
      %v2444 = vadd.f32 0.0, %v2443
      %v2445 = vpop.f32.mrb[0].mxu0
      %v2446 = vpop.f32.mrb[0].mxu0
      %v2447 = vadd.f32 0.0, %v2446
      %v2448 = vpop.f32.mrb[0].mxu0
      %2449 = vmatprep.mubr.bf16.mxu0 0
      %2450 = vmatmul.mubr.bf16.gmra.mrb[0].mxu0 %v1488
      %v2451 = vpop.f32.mrb[0].mxu0
      %v2452 = vadd.f32 0.0, %v2451
      %v2453 = vpop.f32.mrb[0].mxu0
      %v2454 = vpop.f32.mrb[0].mxu0
      %v2455 = vadd.f32 0.0, %v2454
      %v2456 = vpop.f32.mrb[0].mxu0
      %2457 = vmatprep.mubr.bf16.mxu0 0
      %2458 = vmatmul.mubr.bf16.gmra.mrb[0].mxu0 %v1489
      %v2459 = vpop.f32.mrb[0].mxu0
      %v2460 = vadd.f32 0.0, %v2459
      %v2461 = vpop.f32.mrb[0].mxu0
      %v2462 = vpop.f32.mrb[0].mxu0
      %v2463 = vadd.f32 0.0, %v2462
      %v2464 = vpop.f32.mrb[0].mxu0
      %2465 = vmatprep.mubr.bf16.mxu0 0
      %2466 = vmatmul.mubr.bf16.gmra.mrb[0].mxu0 %v1490
      %v2467 = vpop.f32.mrb[0].mxu0
      %v2468 = vadd.f32 0.0, %v2467
      %v2469 = vpop.f32.mrb[0].mxu0
      %v2470 = vpop.f32.mrb[0].mxu0
      %v2471 = vadd.f32 0.0, %v2470
      %v2472 = vpop.f32.mrb[0].mxu0
      %2473 = vmatprep.mubr.bf16.mxu0 0
      %2474 = vmatmul.mubr.bf16.gmra.mrb[0].mxu0 %v1491
      %v2475 = vpop.f32.mrb[0].mxu0
      %v2476 = vadd.f32 0.0, %v2475
      %v2477 = vpop.f32.mrb[0].mxu0
      %v2478 = vpop.f32.mrb[0].mxu0
      %v2479 = vadd.f32 0.0, %v2478
      %v2480 = vpop.f32.mrb[0].mxu0
      %2481 = vmatprep.mubr.bf16.mxu0 0
      %2482 = vmatmul.mubr.bf16.gmra.mrb[0].mxu0 %v1492
      %v2483 = vpop.f32.mrb[0].mxu0
      %v2484 = vadd.f32 0.0, %v2483
      %v2485 = vpop.f32.mrb[0].mxu0
      %v2486 = vpop.f32.mrb[0].mxu0
      %v2487 = vadd.f32 0.0, %v2486
      %v2488 = vpop.f32.mrb[0].mxu0
      %2489 = vmatprep.mubr.bf16.mxu0 0
      %2490 = vmatmul.mubr.bf16.gmra.mrb[0].mxu0 %v1493
      %v2491 = vpop.f32.mrb[0].mxu0
      %v2492 = vadd.f32 0.0, %v2491
      %v2493 = vpop.f32.mrb[0].mxu0
      %v2494 = vpop.f32.mrb[0].mxu0
      %v2495 = vadd.f32 0.0, %v2494
      %v2496 = vpop.f32.mrb[0].mxu0
      %2497 = vmatprep.mubr.bf16.mxu0 0
      %2498 = vmatmul.mubr.bf16.gmra.mrb[0].mxu0 %v1494
      %v2499 = vpop.f32.mrb[0].mxu0
      %v2500 = vadd.f32 0.0, %v2499
      %v2501 = vpop.f32.mrb[0].mxu0
      %v2502 = vpop.f32.mrb[0].mxu0
      %v2503 = vadd.f32 0.0, %v2502
      %v2504 = vpop.f32.mrb[0].mxu0
      %2505 = vmatprep.mubr.bf16.mxu0 0
      %2506 = vmatmul.mubr.bf16.gmra.mrb[0].mxu0 %v1495
      %v2507 = vpop.f32.mrb[0].mxu0
      %v2508 = vadd.f32 0.0, %v2507
      %v2509 = vpop.f32.mrb[0].mxu0
      %v2510 = vpop.f32.mrb[0].mxu0
      %v2511 = vadd.f32 0.0, %v2510
      %v2512 = vpop.f32.mrb[0].mxu0
      %2513 = vmatprep.mubr.bf16.mxu0 0
      %2514 = vmatmul.mubr.bf16.gmra.mrb[0].mxu0 %v2311
      %v2515 = vpop.f32.mrb[0].mxu0
      %v2516 = vadd.f32 0.0, %v2515
      %v2517 = vpop.f32.mrb[0].mxu0
      %v2518 = vpop.f32.mrb[0].mxu0
      %v2519 = vadd.f32 0.0, %v2518
      %v2520 = vpop.f32.mrb[0].mxu0
      %2521 = vdwg.mxu0
      %v2522 = vadd.f32 %v2238, %v2396
      %v2523 = vadd.f32 %v2239, %v2399
      %v2524 = vadd.f32 %v2240, %v2404
      %v2525 = vadd.f32 %v2241, %v2407
      %v2526 = vadd.f32 %v2242, %v2412
      %v2527 = vadd.f32 %v2243, %v2415
      %v2528 = vadd.f32 %v2244, %v2420
      %v2529 = vadd.f32 %v2245, %v2423
      %v2530 = vadd.f32 %v2246, %v2428
      %v2531 = vadd.f32 %v2247, %v2431
      %v2532 = vadd.f32 %v2248, %v2436
      %v2533 = vadd.f32 %v2249, %v2439
      %v2534 = vadd.f32 %v2250, %v2444
      %v2535 = vadd.f32 %v2251, %v2447
      %v2536 = vadd.f32 %v2252, %v2452
      %v2537 = vadd.f32 %v2253, %v2455
      %v2538 = vadd.f32 %v2254, %v2460
      %v2539 = vadd.f32 %v2255, %v2463
      %v2540 = vadd.f32 %v2256, %v2468
      %v2541 = vadd.f32 %v2257, %v2471
      %v2542 = vadd.f32 %v2258, %v2476
      %v2543 = vadd.f32 %v2259, %v2479
      %v2544 = vadd.f32 %v2260, %v2484
      %v2545 = vadd.f32 %v2261, %v2487
      %v2546 = vadd.f32 %v2262, %v2492
      %v2547 = vadd.f32 %v2263, %v2495
      %v2548 = vadd.f32 %v2264, %v2500
      %v2549 = vadd.f32 %v2265, %v2503
      %v2550 = vadd.f32 %v2266, %v2508
      %v2551 = vadd.f32 %v2267, %v2511
      %v2552 = vadd.f32 %v2268, %v2516
      %v2553 = vadd.f32 %v2269, %v2519
      %s2554 = scalar_lea.vmem %s3, 256
      %v2555 = vld [vmem:[%s2554] sm:$0xf]
      %v2556 = vld [vmem:[%s2554 + $0x4] sm:$0xf]
      %v2557 = vld [vmem:[%s2554 + $0x8] sm:$0xf]
      %v2558 = vld [vmem:[%s2554 + $0xc] sm:$0xf]
      %v2559 = vld [vmem:[%s2554 + $0x10] sm:$0xf]
      %v2560 = vld [vmem:[%s2554 + $0x14] sm:$0xf]
      %v2561 = vld [vmem:[%s2554 + $0x18] sm:$0xf]
      %v2562 = vld [vmem:[%s2554 + $0x1c] sm:$0xf]
      %v2563 = vld [vmem:[%s2554 + $0x20] sm:$0xf]
      %v2564 = vld [vmem:[%s2554 + $0x24] sm:$0xf]
      %v2565 = vld [vmem:[%s2554 + $0x28] sm:$0xf]
      %v2566 = vld [vmem:[%s2554 + $0x2c] sm:$0xf]
      %v2567 = vld [vmem:[%s2554 + $0x30] sm:$0xf]
      %v2568 = vld [vmem:[%s2554 + $0x34] sm:$0xf]
      %v2569 = vld [vmem:[%s2554 + $0x38] sm:$0xf]
      %v2570 = vld [vmem:[%s2554 + $0x3c] sm:$0xf]
      %v2573 = vunpack.c.l.b16 %v749
      %v2574 = vunpack.c.l.b16 %v750
      %v2575 = vpack.c.b16 %v2574, %v2573
      %v2593 = vunpack.c.l.b16 %v2555
      %v2594 = vunpack.c.l.b16 %v2556
      %v2595 = vunpack.c.l.b16 %v2557
      %v2596 = vunpack.c.l.b16 %v2558
      %v2597 = vunpack.c.l.b16 %v2559
      %v2598 = vunpack.c.l.b16 %v2560
      %v2599 = vunpack.c.l.b16 %v2561
      %v2600 = vunpack.c.l.b16 %v2562
      %v2601 = vunpack.c.l.b16 %v2563
      %v2602 = vunpack.c.l.b16 %v2564
      %v2603 = vunpack.c.l.b16 %v2565
      %v2604 = vunpack.c.l.b16 %v2566
      %v2605 = vunpack.c.l.b16 %v2567
      %v2606 = vunpack.c.l.b16 %v2568
      %v2607 = vunpack.c.l.b16 %v2569
      %v2608 = vunpack.c.l.b16 %v2570
      %v2609 = vpack.c.b16 %v2594, %v2593
      %v2610 = vpack.c.b16 %v2596, %v2595
      %v2611 = vpack.c.b16 %v2598, %v2597
      %v2612 = vpack.c.b16 %v2600, %v2599
      %v2613 = vpack.c.b16 %v2602, %v2601
      %v2614 = vpack.c.b16 %v2604, %v2603
      %v2615 = vpack.c.b16 %v2606, %v2605
      %v2616 = vpack.c.b16 %v2608, %v2607
      %2625 = vmatprep.subr.bf16.mxu0 0
      %2626 = vmatpush1.bf16.msra.mxu0 %v2609
      %2627 = vmatprep.subr.bf16.mxu0 0
      %2628 = vmatpush1.bf16.msra.mxu0 %v2610
      %2629 = vmatprep.subr.bf16.mxu0 0
      %2630 = vmatpush1.bf16.msra.mxu0 %v2611
      %2631 = vmatprep.subr.bf16.mxu0 0
      %2632 = vmatpush1.bf16.msra.mxu0 %v2612
      %2633 = vmatprep.subr.bf16.mxu0 0
      %2634 = vmatpush1.bf16.msra.mxu0 %v2613
      %2635 = vmatprep.subr.bf16.mxu0 0
      %2636 = vmatpush1.bf16.msra.mxu0 %v2614
      %2637 = vmatprep.subr.bf16.mxu0 0
      %2638 = vmatpush1.bf16.msra.mxu0 %v2615
      %2639 = vmatprep.subr.bf16.mxu0 0
      %2640 = vmatpush1.bf16.msra.mxu0 %v2616
      %2641 = vmatprep.subr.bf16.mxu0 0
      %2642 = vmatpush1.bf16.msra.mxu0 0
      %2643 = vmatprep.subr.bf16.mxu0 0
      %2644 = vmatpush1.bf16.msra.mxu0 0
      %2645 = vmatprep.subr.bf16.mxu0 0
      %2646 = vmatpush1.bf16.msra.mxu0 0
      %2647 = vmatprep.subr.bf16.mxu0 0
      %2648 = vmatpush1.bf16.msra.mxu0 0
      %2649 = vmatprep.subr.bf16.mxu0 0
      %2650 = vmatpush1.bf16.msra.mxu0 0
      %2651 = vmatprep.subr.bf16.mxu0 0
      %2652 = vmatpush1.bf16.msra.mxu0 0
      %2653 = vmatprep.subr.bf16.mxu0 0
      %2654 = vmatpush1.bf16.msra.mxu0 0
      %2655 = vmatprep.subr.bf16.mxu0 0
      %2656 = vmatpush1.bf16.msra.mxu0 0
      %2657 = vmatprep.mubr.bf16.mxu0 0
      %2658 = vmatmul.mubr.bf16.gmra.mrb[0].mxu0 %v1208
      %v2659 = vpop.f32.mrb[0].mxu0
      %v2660 = vadd.f32 0.0, %v2659
      %v2661 = vpop.f32.mrb[0].mxu0
      %v2662 = vpop.f32.mrb[0].mxu0
      %v2663 = vadd.f32 0.0, %v2662
      %v2664 = vpop.f32.mrb[0].mxu0
      %2665 = vmatprep.mubr.bf16.mxu0 0
      %2666 = vmatmul.mubr.bf16.gmra.mrb[0].mxu0 %v1209
      %v2667 = vpop.f32.mrb[0].mxu0
      %v2668 = vadd.f32 0.0, %v2667
      %v2669 = vpop.f32.mrb[0].mxu0
      %v2670 = vpop.f32.mrb[0].mxu0
      %v2671 = vadd.f32 0.0, %v2670
      %v2672 = vpop.f32.mrb[0].mxu0
      %2673 = vmatprep.mubr.bf16.mxu0 0
      %2674 = vmatmul.mubr.bf16.gmra.mrb[0].mxu0 %v1210
      %v2675 = vpop.f32.mrb[0].mxu0
      %v2676 = vadd.f32 0.0, %v2675
      %v2677 = vpop.f32.mrb[0].mxu0
      %v2678 = vpop.f32.mrb[0].mxu0
      %v2679 = vadd.f32 0.0, %v2678
      %v2680 = vpop.f32.mrb[0].mxu0
      %2681 = vmatprep.mubr.bf16.mxu0 0
      %2682 = vmatmul.mubr.bf16.gmra.mrb[0].mxu0 %v1211
      %v2683 = vpop.f32.mrb[0].mxu0
      %v2684 = vadd.f32 0.0, %v2683
      %v2685 = vpop.f32.mrb[0].mxu0
      %v2686 = vpop.f32.mrb[0].mxu0
      %v2687 = vadd.f32 0.0, %v2686
      %v2688 = vpop.f32.mrb[0].mxu0
      %2689 = vmatprep.mubr.bf16.mxu0 0
      %2690 = vmatmul.mubr.bf16.gmra.mrb[0].mxu0 %v1212
      %v2691 = vpop.f32.mrb[0].mxu0
      %v2692 = vadd.f32 0.0, %v2691
      %v2693 = vpop.f32.mrb[0].mxu0
      %v2694 = vpop.f32.mrb[0].mxu0
      %v2695 = vadd.f32 0.0, %v2694
      %v2696 = vpop.f32.mrb[0].mxu0
      %2697 = vmatprep.mubr.bf16.mxu0 0
      %2698 = vmatmul.mubr.bf16.gmra.mrb[0].mxu0 %v1213
      %v2699 = vpop.f32.mrb[0].mxu0
      %v2700 = vadd.f32 0.0, %v2699
      %v2701 = vpop.f32.mrb[0].mxu0
      %v2702 = vpop.f32.mrb[0].mxu0
      %v2703 = vadd.f32 0.0, %v2702
      %v2704 = vpop.f32.mrb[0].mxu0
      %2705 = vmatprep.mubr.bf16.mxu0 0
      %2706 = vmatmul.mubr.bf16.gmra.mrb[0].mxu0 %v1214
      %v2707 = vpop.f32.mrb[0].mxu0
      %v2708 = vadd.f32 0.0, %v2707
      %v2709 = vpop.f32.mrb[0].mxu0
      %v2710 = vpop.f32.mrb[0].mxu0
      %v2711 = vadd.f32 0.0, %v2710
      %v2712 = vpop.f32.mrb[0].mxu0
      %2713 = vmatprep.mubr.bf16.mxu0 0
      %2714 = vmatmul.mubr.bf16.gmra.mrb[0].mxu0 %v1215
      %v2715 = vpop.f32.mrb[0].mxu0
      %v2716 = vadd.f32 0.0, %v2715
      %v2717 = vpop.f32.mrb[0].mxu0
      %v2718 = vpop.f32.mrb[0].mxu0
      %v2719 = vadd.f32 0.0, %v2718
      %v2720 = vpop.f32.mrb[0].mxu0
      %2721 = vmatprep.mubr.bf16.mxu0 0
      %2722 = vmatmul.mubr.bf16.gmra.mrb[0].mxu0 %v1216
      %v2723 = vpop.f32.mrb[0].mxu0
      %v2724 = vadd.f32 0.0, %v2723
      %v2725 = vpop.f32.mrb[0].mxu0
      %v2726 = vpop.f32.mrb[0].mxu0
      %v2727 = vadd.f32 0.0, %v2726
      %v2728 = vpop.f32.mrb[0].mxu0
      %2729 = vmatprep.mubr.bf16.mxu0 0
      %2730 = vmatmul.mubr.bf16.gmra.mrb[0].mxu0 %v1217
      %v2731 = vpop.f32.mrb[0].mxu0
      %v2732 = vadd.f32 0.0, %v2731
      %v2733 = vpop.f32.mrb[0].mxu0
      %v2734 = vpop.f32.mrb[0].mxu0
      %v2735 = vadd.f32 0.0, %v2734
      %v2736 = vpop.f32.mrb[0].mxu0
      %2737 = vmatprep.mubr.bf16.mxu0 0
      %2738 = vmatmul.mubr.bf16.gmra.mrb[0].mxu0 %v1218
      %v2739 = vpop.f32.mrb[0].mxu0
      %v2740 = vadd.f32 0.0, %v2739
      %v2741 = vpop.f32.mrb[0].mxu0
      %v2742 = vpop.f32.mrb[0].mxu0
      %v2743 = vadd.f32 0.0, %v2742
      %v2744 = vpop.f32.mrb[0].mxu0
      %2745 = vmatprep.mubr.bf16.mxu0 0
      %2746 = vmatmul.mubr.bf16.gmra.mrb[0].mxu0 %v1219
      %v2747 = vpop.f32.mrb[0].mxu0
      %v2748 = vadd.f32 0.0, %v2747
      %v2749 = vpop.f32.mrb[0].mxu0
      %v2750 = vpop.f32.mrb[0].mxu0
      %v2751 = vadd.f32 0.0, %v2750
      %v2752 = vpop.f32.mrb[0].mxu0
      %2753 = vmatprep.mubr.bf16.mxu0 0
      %2754 = vmatmul.mubr.bf16.gmra.mrb[0].mxu0 %v1220
      %v2755 = vpop.f32.mrb[0].mxu0
      %v2756 = vadd.f32 0.0, %v2755
      %v2757 = vpop.f32.mrb[0].mxu0
      %v2758 = vpop.f32.mrb[0].mxu0
      %v2759 = vadd.f32 0.0, %v2758
      %v2760 = vpop.f32.mrb[0].mxu0
      %2761 = vmatprep.mubr.bf16.mxu0 0
      %2762 = vmatmul.mubr.bf16.gmra.mrb[0].mxu0 %v1221
      %v2763 = vpop.f32.mrb[0].mxu0
      %v2764 = vadd.f32 0.0, %v2763
      %v2765 = vpop.f32.mrb[0].mxu0
      %v2766 = vpop.f32.mrb[0].mxu0
      %v2767 = vadd.f32 0.0, %v2766
      %v2768 = vpop.f32.mrb[0].mxu0
      %2769 = vmatprep.mubr.bf16.mxu0 0
      %2770 = vmatmul.mubr.bf16.gmra.mrb[0].mxu0 %v1222
      %v2771 = vpop.f32.mrb[0].mxu0
      %v2772 = vadd.f32 0.0, %v2771
      %v2773 = vpop.f32.mrb[0].mxu0
      %v2774 = vpop.f32.mrb[0].mxu0
      %v2775 = vadd.f32 0.0, %v2774
      %v2776 = vpop.f32.mrb[0].mxu0
      %2777 = vmatprep.mubr.bf16.mxu0 0
      %2778 = vmatmul.mubr.bf16.gmra.mrb[0].mxu0 %v2575
      %v2779 = vpop.f32.mrb[0].mxu0
      %v2780 = vadd.f32 0.0, %v2779
      %v2781 = vpop.f32.mrb[0].mxu0
      %v2782 = vpop.f32.mrb[0].mxu0
      %v2783 = vadd.f32 0.0, %v2782
      %v2784 = vpop.f32.mrb[0].mxu0
      %2785 = vdwg.mxu0
      %v2786 = vadd.f32 %v2522, %v2660
      %v2787 = vadd.f32 %v2523, %v2663
      %v2788 = vadd.f32 %v2524, %v2668
      %v2789 = vadd.f32 %v2525, %v2671
      %v2790 = vadd.f32 %v2526, %v2676
      %v2791 = vadd.f32 %v2527, %v2679
      %v2792 = vadd.f32 %v2528, %v2684
      %v2793 = vadd.f32 %v2529, %v2687
      %v2794 = vadd.f32 %v2530, %v2692
      %v2795 = vadd.f32 %v2531, %v2695
      %v2796 = vadd.f32 %v2532, %v2700
      %v2797 = vadd.f32 %v2533, %v2703
      %v2798 = vadd.f32 %v2534, %v2708
      %v2799 = vadd.f32 %v2535, %v2711
      %v2800 = vadd.f32 %v2536, %v2716
      %v2801 = vadd.f32 %v2537, %v2719
      %v2802 = vadd.f32 %v2538, %v2724
      %v2803 = vadd.f32 %v2539, %v2727
      %v2804 = vadd.f32 %v2540, %v2732
      %v2805 = vadd.f32 %v2541, %v2735
      %v2806 = vadd.f32 %v2542, %v2740
      %v2807 = vadd.f32 %v2543, %v2743
      %v2808 = vadd.f32 %v2544, %v2748
      %v2809 = vadd.f32 %v2545, %v2751
      %v2810 = vadd.f32 %v2546, %v2756
      %v2811 = vadd.f32 %v2547, %v2759
      %v2812 = vadd.f32 %v2548, %v2764
      %v2813 = vadd.f32 %v2549, %v2767
      %v2814 = vadd.f32 %v2550, %v2772
      %v2815 = vadd.f32 %v2551, %v2775
      %v2816 = vadd.f32 %v2552, %v2780
      %v2817 = vadd.f32 %v2553, %v2783
      %v2818 = vrot.slane %v2276, 4
      %v2819 = vrot.slane %v2279, 5
      %v2820 = vor.u32 %v2818, %v2819
      %v2821 = vrot.slane %v2820, 4
      %v2822 = vrot.slane %v2288, 5
      %v2823 = vsel %vm1723, %v2821, %v2822
      %v2824 = vrot.slane %v2285, 4
      %v2825 = vor.u32 %v2824, %v2822
      %v2826 = vrot.slane %v2825, 4
      %v2828 = vshll.u32 %v751, 16
      %v2830 = vrot.slane %v2828, 5
      %v2831 = vsel %vm1723, %v2826, %v2830
      %s2832 = scalar_lea.vmem %s3, 320
      %v2833 = vld [vmem:[%s2832] sm:$0xf]
      %v2834 = vld [vmem:[%s2832 + $0x4] sm:$0xf]
      %v2835 = vld [vmem:[%s2832 + $0x8] sm:$0xf]
      %v2836 = vld [vmem:[%s2832 + $0xc] sm:$0xf]
      %v2837 = vld [vmem:[%s2832 + $0x10] sm:$0xf]
      %v2838 = vld [vmem:[%s2832 + $0x14] sm:$0xf]
      %v2839 = vld [vmem:[%s2832 + $0x18] sm:$0xf]
      %v2840 = vld [vmem:[%s2832 + $0x1c] sm:$0xf]
      %v2841 = vld [vmem:[%s2832 + $0x20] sm:$0xf]
      %v2842 = vld [vmem:[%s2832 + $0x24] sm:$0xf]
      %v2843 = vld [vmem:[%s2832 + $0x28] sm:$0xf]
      %v2844 = vld [vmem:[%s2832 + $0x2c] sm:$0xf]
      %v2845 = vld [vmem:[%s2832 + $0x30] sm:$0xf]
      %v2846 = vld [vmem:[%s2832 + $0x34] sm:$0xf]
      %v2847 = vld [vmem:[%s2832 + $0x38] sm:$0xf]
      %v2848 = vld [vmem:[%s2832 + $0x3c] sm:$0xf]
      %v2849 = vunpack.c.l.b16 %v2823
      %v2850 = vunpack.c.l.b16 %v2831
      %v2851 = vpack.c.b16 %v2850, %v2849
      %v2869 = vunpack.c.l.b16 %v2833
      %v2870 = vunpack.c.l.b16 %v2834
      %v2871 = vunpack.c.l.b16 %v2835
      %v2872 = vunpack.c.l.b16 %v2836
      %v2873 = vunpack.c.l.b16 %v2837
      %v2874 = vunpack.c.l.b16 %v2838
      %v2875 = vunpack.c.l.b16 %v2839
      %v2876 = vunpack.c.l.b16 %v2840
      %v2877 = vunpack.c.l.b16 %v2841
      %v2878 = vunpack.c.l.b16 %v2842
      %v2879 = vunpack.c.l.b16 %v2843
      %v2880 = vunpack.c.l.b16 %v2844
      %v2881 = vunpack.c.l.b16 %v2845
      %v2882 = vunpack.c.l.b16 %v2846
      %v2883 = vunpack.c.l.b16 %v2847
      %v2884 = vunpack.c.l.b16 %v2848
      %v2885 = vpack.c.b16 %v2870, %v2869
      %v2886 = vpack.c.b16 %v2872, %v2871
      %v2887 = vpack.c.b16 %v2874, %v2873
      %v2888 = vpack.c.b16 %v2876, %v2875
      %v2889 = vpack.c.b16 %v2878, %v2877
      %v2890 = vpack.c.b16 %v2880, %v2879
      %v2891 = vpack.c.b16 %v2882, %v2881
      %v2892 = vpack.c.b16 %v2884, %v2883
      %2901 = vmatprep.subr.bf16.mxu0 0
      %2902 = vmatpush1.bf16.msra.mxu0 %v2885
      %2903 = vmatprep.subr.bf16.mxu0 0
      %2904 = vmatpush1.bf16.msra.mxu0 %v2886
      %2905 = vmatprep.subr.bf16.mxu0 0
      %2906 = vmatpush1.bf16.msra.mxu0 %v2887
      %2907 = vmatprep.subr.bf16.mxu0 0
      %2908 = vmatpush1.bf16.msra.mxu0 %v2888
      %2909 = vmatprep.subr.bf16.mxu0 0
      %2910 = vmatpush1.bf16.msra.mxu0 %v2889
      %2911 = vmatprep.subr.bf16.mxu0 0
      %2912 = vmatpush1.bf16.msra.mxu0 %v2890
      %2913 = vmatprep.subr.bf16.mxu0 0
      %2914 = vmatpush1.bf16.msra.mxu0 %v2891
      %2915 = vmatprep.subr.bf16.mxu0 0
      %2916 = vmatpush1.bf16.msra.mxu0 %v2892
      %2917 = vmatprep.subr.bf16.mxu0 0
      %2918 = vmatpush1.bf16.msra.mxu0 0
      %2919 = vmatprep.subr.bf16.mxu0 0
      %2920 = vmatpush1.bf16.msra.mxu0 0
      %2921 = vmatprep.subr.bf16.mxu0 0
      %2922 = vmatpush1.bf16.msra.mxu0 0
      %2923 = vmatprep.subr.bf16.mxu0 0
      %2924 = vmatpush1.bf16.msra.mxu0 0
      %2925 = vmatprep.subr.bf16.mxu0 0
      %2926 = vmatpush1.bf16.msra.mxu0 0
      %2927 = vmatprep.subr.bf16.mxu0 0
      %2928 = vmatpush1.bf16.msra.mxu0 0
      %2929 = vmatprep.subr.bf16.mxu0 0
      %2930 = vmatpush1.bf16.msra.mxu0 0
      %2931 = vmatprep.subr.bf16.mxu0 0
      %2932 = vmatpush1.bf16.msra.mxu0 0
      %2933 = vmatprep.mubr.bf16.mxu0 0
      %2934 = vmatmul.mubr.bf16.gmra.mrb[0].mxu0 %v1998
      %v2935 = vpop.f32.mrb[0].mxu0
      %v2936 = vadd.f32 0.0, %v2935
      %v2937 = vpop.f32.mrb[0].mxu0
      %v2938 = vpop.f32.mrb[0].mxu0
      %v2939 = vadd.f32 0.0, %v2938
      %v2940 = vpop.f32.mrb[0].mxu0
      %2941 = vmatprep.mubr.bf16.mxu0 0
      %2942 = vmatmul.mubr.bf16.gmra.mrb[0].mxu0 %v1999
      %v2943 = vpop.f32.mrb[0].mxu0
      %v2944 = vadd.f32 0.0, %v2943
      %v2945 = vpop.f32.mrb[0].mxu0
      %v2946 = vpop.f32.mrb[0].mxu0
      %v2947 = vadd.f32 0.0, %v2946
      %v2948 = vpop.f32.mrb[0].mxu0
      %2949 = vmatprep.mubr.bf16.mxu0 0
      %2950 = vmatmul.mubr.bf16.gmra.mrb[0].mxu0 %v2000
      %v2951 = vpop.f32.mrb[0].mxu0
      %v2952 = vadd.f32 0.0, %v2951
      %v2953 = vpop.f32.mrb[0].mxu0
      %v2954 = vpop.f32.mrb[0].mxu0
      %v2955 = vadd.f32 0.0, %v2954
      %v2956 = vpop.f32.mrb[0].mxu0
      %2957 = vmatprep.mubr.bf16.mxu0 0
      %2958 = vmatmul.mubr.bf16.gmra.mrb[0].mxu0 %v2001
      %v2959 = vpop.f32.mrb[0].mxu0
      %v2960 = vadd.f32 0.0, %v2959
      %v2961 = vpop.f32.mrb[0].mxu0
      %v2962 = vpop.f32.mrb[0].mxu0
      %v2963 = vadd.f32 0.0, %v2962
      %v2964 = vpop.f32.mrb[0].mxu0
      %2965 = vmatprep.mubr.bf16.mxu0 0
      %2966 = vmatmul.mubr.bf16.gmra.mrb[0].mxu0 %v2002
      %v2967 = vpop.f32.mrb[0].mxu0
      %v2968 = vadd.f32 0.0, %v2967
      %v2969 = vpop.f32.mrb[0].mxu0
      %v2970 = vpop.f32.mrb[0].mxu0
      %v2971 = vadd.f32 0.0, %v2970
      %v2972 = vpop.f32.mrb[0].mxu0
      %2973 = vmatprep.mubr.bf16.mxu0 0
      %2974 = vmatmul.mubr.bf16.gmra.mrb[0].mxu0 %v2003
      %v2975 = vpop.f32.mrb[0].mxu0
      %v2976 = vadd.f32 0.0, %v2975
      %v2977 = vpop.f32.mrb[0].mxu0
      %v2978 = vpop.f32.mrb[0].mxu0
      %v2979 = vadd.f32 0.0, %v2978
      %v2980 = vpop.f32.mrb[0].mxu0
      %2981 = vmatprep.mubr.bf16.mxu0 0
      %2982 = vmatmul.mubr.bf16.gmra.mrb[0].mxu0 %v2004
      %v2983 = vpop.f32.mrb[0].mxu0
      %v2984 = vadd.f32 0.0, %v2983
      %v2985 = vpop.f32.mrb[0].mxu0
      %v2986 = vpop.f32.mrb[0].mxu0
      %v2987 = vadd.f32 0.0, %v2986
      %v2988 = vpop.f32.mrb[0].mxu0
      %2989 = vmatprep.mubr.bf16.mxu0 0
      %2990 = vmatmul.mubr.bf16.gmra.mrb[0].mxu0 %v2005
      %v2991 = vpop.f32.mrb[0].mxu0
      %v2992 = vadd.f32 0.0, %v2991
      %v2993 = vpop.f32.mrb[0].mxu0
      %v2994 = vpop.f32.mrb[0].mxu0
      %v2995 = vadd.f32 0.0, %v2994
      %v2996 = vpop.f32.mrb[0].mxu0
      %2997 = vmatprep.mubr.bf16.mxu0 0
      %2998 = vmatmul.mubr.bf16.gmra.mrb[0].mxu0 %v2006
      %v2999 = vpop.f32.mrb[0].mxu0
      %v3000 = vadd.f32 0.0, %v2999
      %v3001 = vpop.f32.mrb[0].mxu0
      %v3002 = vpop.f32.mrb[0].mxu0
      %v3003 = vadd.f32 0.0, %v3002
      %v3004 = vpop.f32.mrb[0].mxu0
      %3005 = vmatprep.mubr.bf16.mxu0 0
      %3006 = vmatmul.mubr.bf16.gmra.mrb[0].mxu0 %v2007
      %v3007 = vpop.f32.mrb[0].mxu0
      %v3008 = vadd.f32 0.0, %v3007
      %v3009 = vpop.f32.mrb[0].mxu0
      %v3010 = vpop.f32.mrb[0].mxu0
      %v3011 = vadd.f32 0.0, %v3010
      %v3012 = vpop.f32.mrb[0].mxu0
      %3013 = vmatprep.mubr.bf16.mxu0 0
      %3014 = vmatmul.mubr.bf16.gmra.mrb[0].mxu0 %v2008
      %v3015 = vpop.f32.mrb[0].mxu0
      %v3016 = vadd.f32 0.0, %v3015
      %v3017 = vpop.f32.mrb[0].mxu0
      %v3018 = vpop.f32.mrb[0].mxu0
      %v3019 = vadd.f32 0.0, %v3018
      %v3020 = vpop.f32.mrb[0].mxu0
      %3021 = vmatprep.mubr.bf16.mxu0 0
      %3022 = vmatmul.mubr.bf16.gmra.mrb[0].mxu0 %v2009
      %v3023 = vpop.f32.mrb[0].mxu0
      %v3024 = vadd.f32 0.0, %v3023
      %v3025 = vpop.f32.mrb[0].mxu0
      %v3026 = vpop.f32.mrb[0].mxu0
      %v3027 = vadd.f32 0.0, %v3026
      %v3028 = vpop.f32.mrb[0].mxu0
      %3029 = vmatprep.mubr.bf16.mxu0 0
      %3030 = vmatmul.mubr.bf16.gmra.mrb[0].mxu0 %v2010
      %v3031 = vpop.f32.mrb[0].mxu0
      %v3032 = vadd.f32 0.0, %v3031
      %v3033 = vpop.f32.mrb[0].mxu0
      %v3034 = vpop.f32.mrb[0].mxu0
      %v3035 = vadd.f32 0.0, %v3034
      %v3036 = vpop.f32.mrb[0].mxu0
      %3037 = vmatprep.mubr.bf16.mxu0 0
      %3038 = vmatmul.mubr.bf16.gmra.mrb[0].mxu0 %v2011
      %v3039 = vpop.f32.mrb[0].mxu0
      %v3040 = vadd.f32 0.0, %v3039
      %v3041 = vpop.f32.mrb[0].mxu0
      %v3042 = vpop.f32.mrb[0].mxu0
      %v3043 = vadd.f32 0.0, %v3042
      %v3044 = vpop.f32.mrb[0].mxu0
      %3045 = vmatprep.mubr.bf16.mxu0 0
      %3046 = vmatmul.mubr.bf16.gmra.mrb[0].mxu0 %v2012
      %v3047 = vpop.f32.mrb[0].mxu0
      %v3048 = vadd.f32 0.0, %v3047
      %v3049 = vpop.f32.mrb[0].mxu0
      %v3050 = vpop.f32.mrb[0].mxu0
      %v3051 = vadd.f32 0.0, %v3050
      %v3052 = vpop.f32.mrb[0].mxu0
      %3053 = vmatprep.mubr.bf16.mxu0 0
      %3054 = vmatmul.mubr.bf16.gmra.mrb[0].mxu0 %v2851
      %v3055 = vpop.f32.mrb[0].mxu0
      %v3056 = vadd.f32 0.0, %v3055
      %v3057 = vpop.f32.mrb[0].mxu0
      %v3058 = vpop.f32.mrb[0].mxu0
      %v3059 = vadd.f32 0.0, %v3058
      %v3060 = vpop.f32.mrb[0].mxu0
      %3061 = vdwg.mxu0
      %v3062 = vadd.f32 %v2786, %v2936
      %v3063 = vadd.f32 %v2787, %v2939
      %v3064 = vadd.f32 %v2788, %v2944
      %v3065 = vadd.f32 %v2789, %v2947
      %v3066 = vadd.f32 %v2790, %v2952
      %v3067 = vadd.f32 %v2791, %v2955
      %v3068 = vadd.f32 %v2792, %v2960
      %v3069 = vadd.f32 %v2793, %v2963
      %v3070 = vadd.f32 %v2794, %v2968
      %v3071 = vadd.f32 %v2795, %v2971
      %v3072 = vadd.f32 %v2796, %v2976
      %v3073 = vadd.f32 %v2797, %v2979
      %v3074 = vadd.f32 %v2798, %v2984
      %v3075 = vadd.f32 %v2799, %v2987
      %v3076 = vadd.f32 %v2800, %v2992
      %v3077 = vadd.f32 %v2801, %v2995
      %v3078 = vadd.f32 %v2802, %v3000
      %v3079 = vadd.f32 %v2803, %v3003
      %v3080 = vadd.f32 %v2804, %v3008
      %v3081 = vadd.f32 %v2805, %v3011
      %v3082 = vadd.f32 %v2806, %v3016
      %v3083 = vadd.f32 %v2807, %v3019
      %v3084 = vadd.f32 %v2808, %v3024
      %v3085 = vadd.f32 %v2809, %v3027
      %v3086 = vadd.f32 %v2810, %v3032
      %v3087 = vadd.f32 %v2811, %v3035
      %v3088 = vadd.f32 %v2812, %v3040
      %v3089 = vadd.f32 %v2813, %v3043
      %v3090 = vadd.f32 %v2814, %v3048
      %v3091 = vadd.f32 %v2815, %v3051
      %v3092 = vadd.f32 %v2816, %v3056
      %v3093 = vadd.f32 %v2817, %v3059
      %v3095 = vshrl.u32 %v752, 16
      %v3097 = vrot.slane %v3095, 7
      %v3098 = vrot.slane %v3097, 4
      %v3100 = vshrl.u32 %v753, 16
      %v3102 = vrot.slane %v3100, 7
      %v3103 = vshll.u32 %v753, 16
      %v3105 = vor.u32 %v3102, %v3103
      %v3106 = vsel %vm757, %v3098, %v3105
      %v3107 = vrot.slane %v3102, 4
      %v3109 = vshrl.u32 %v754, 16
      %v3111 = vrot.slane %v3109, 7
      %v3112 = vshll.u32 %v754, 16
      %v3114 = vor.u32 %v3111, %v3112
      %v3115 = vsel %vm757, %v3107, %v3114
      %s3116 = scalar_lea.vmem %s3, 384
      %v3117 = vld [vmem:[%s3116] sm:$0xf]
      %v3118 = vld [vmem:[%s3116 + $0x4] sm:$0xf]
      %v3119 = vld [vmem:[%s3116 + $0x8] sm:$0xf]
      %v3120 = vld [vmem:[%s3116 + $0xc] sm:$0xf]
      %v3121 = vld [vmem:[%s3116 + $0x10] sm:$0xf]
      %v3122 = vld [vmem:[%s3116 + $0x14] sm:$0xf]
      %v3123 = vld [vmem:[%s3116 + $0x18] sm:$0xf]
      %v3124 = vld [vmem:[%s3116 + $0x1c] sm:$0xf]
      %v3125 = vld [vmem:[%s3116 + $0x20] sm:$0xf]
      %v3126 = vld [vmem:[%s3116 + $0x24] sm:$0xf]
      %v3127 = vld [vmem:[%s3116 + $0x28] sm:$0xf]
      %v3128 = vld [vmem:[%s3116 + $0x2c] sm:$0xf]
      %v3129 = vld [vmem:[%s3116 + $0x30] sm:$0xf]
      %v3130 = vld [vmem:[%s3116 + $0x34] sm:$0xf]
      %v3131 = vld [vmem:[%s3116 + $0x38] sm:$0xf]
      %v3132 = vld [vmem:[%s3116 + $0x3c] sm:$0xf]
      %v3133 = vunpack.c.l.b16 %v3106
      %v3134 = vunpack.c.l.b16 %v3115
      %v3135 = vpack.c.b16 %v3134, %v3133
      %v3153 = vunpack.c.l.b16 %v3117
      %v3154 = vunpack.c.l.b16 %v3118
      %v3155 = vunpack.c.l.b16 %v3119
      %v3156 = vunpack.c.l.b16 %v3120
      %v3157 = vunpack.c.l.b16 %v3121
      %v3158 = vunpack.c.l.b16 %v3122
      %v3159 = vunpack.c.l.b16 %v3123
      %v3160 = vunpack.c.l.b16 %v3124
      %v3161 = vunpack.c.l.b16 %v3125
      %v3162 = vunpack.c.l.b16 %v3126
      %v3163 = vunpack.c.l.b16 %v3127
      %v3164 = vunpack.c.l.b16 %v3128
      %v3165 = vunpack.c.l.b16 %v3129
      %v3166 = vunpack.c.l.b16 %v3130
      %v3167 = vunpack.c.l.b16 %v3131
      %v3168 = vunpack.c.l.b16 %v3132
      %v3169 = vpack.c.b16 %v3154, %v3153
      %v3170 = vpack.c.b16 %v3156, %v3155
      %v3171 = vpack.c.b16 %v3158, %v3157
      %v3172 = vpack.c.b16 %v3160, %v3159
      %v3173 = vpack.c.b16 %v3162, %v3161
      %v3174 = vpack.c.b16 %v3164, %v3163
      %v3175 = vpack.c.b16 %v3166, %v3165
      %v3176 = vpack.c.b16 %v3168, %v3167
      %3185 = vmatprep.subr.bf16.mxu0 0
      %3186 = vmatpush1.bf16.msra.mxu0 %v3169
      %3187 = vmatprep.subr.bf16.mxu0 0
      %3188 = vmatpush1.bf16.msra.mxu0 %v3170
      %3189 = vmatprep.subr.bf16.mxu0 0
      %3190 = vmatpush1.bf16.msra.mxu0 %v3171
      %3191 = vmatprep.subr.bf16.mxu0 0
      %3192 = vmatpush1.bf16.msra.mxu0 %v3172
      %3193 = vmatprep.subr.bf16.mxu0 0
      %3194 = vmatpush1.bf16.msra.mxu0 %v3173
      %3195 = vmatprep.subr.bf16.mxu0 0
      %3196 = vmatpush1.bf16.msra.mxu0 %v3174
      %3197 = vmatprep.subr.bf16.mxu0 0
      %3198 = vmatpush1.bf16.msra.mxu0 %v3175
      %3199 = vmatprep.subr.bf16.mxu0 0
      %3200 = vmatpush1.bf16.msra.mxu0 %v3176
      %3201 = vmatprep.subr.bf16.mxu0 0
      %3202 = vmatpush1.bf16.msra.mxu0 0
      %3203 = vmatprep.subr.bf16.mxu0 0
      %3204 = vmatpush1.bf16.msra.mxu0 0
      %3205 = vmatprep.subr.bf16.mxu0 0
      %3206 = vmatpush1.bf16.msra.mxu0 0
      %3207 = vmatprep.subr.bf16.mxu0 0
      %3208 = vmatpush1.bf16.msra.mxu0 0
      %3209 = vmatprep.subr.bf16.mxu0 0
      %3210 = vmatpush1.bf16.msra.mxu0 0
      %3211 = vmatprep.subr.bf16.mxu0 0
      %3212 = vmatpush1.bf16.msra.mxu0 0
      %3213 = vmatprep.subr.bf16.mxu0 0
      %3214 = vmatpush1.bf16.msra.mxu0 0
      %3215 = vmatprep.subr.bf16.mxu0 0
      %3216 = vmatpush1.bf16.msra.mxu0 0
      %3217 = vmatprep.mubr.bf16.mxu0 0
      %3218 = vmatmul.mubr.bf16.gmra.mrb[0].mxu0 %v1482
      %v3219 = vpop.f32.mrb[0].mxu0
      %v3220 = vadd.f32 0.0, %v3219
      %v3221 = vpop.f32.mrb[0].mxu0
      %v3222 = vpop.f32.mrb[0].mxu0
      %v3223 = vadd.f32 0.0, %v3222
      %v3224 = vpop.f32.mrb[0].mxu0
      %3225 = vmatprep.mubr.bf16.mxu0 0
      %3226 = vmatmul.mubr.bf16.gmra.mrb[0].mxu0 %v1483
      %v3227 = vpop.f32.mrb[0].mxu0
      %v3228 = vadd.f32 0.0, %v3227
      %v3229 = vpop.f32.mrb[0].mxu0
      %v3230 = vpop.f32.mrb[0].mxu0
      %v3231 = vadd.f32 0.0, %v3230
      %v3232 = vpop.f32.mrb[0].mxu0
      %3233 = vmatprep.mubr.bf16.mxu0 0
      %3234 = vmatmul.mubr.bf16.gmra.mrb[0].mxu0 %v1484
      %v3235 = vpop.f32.mrb[0].mxu0
      %v3236 = vadd.f32 0.0, %v3235
      %v3237 = vpop.f32.mrb[0].mxu0
      %v3238 = vpop.f32.mrb[0].mxu0
      %v3239 = vadd.f32 0.0, %v3238
      %v3240 = vpop.f32.mrb[0].mxu0
      %3241 = vmatprep.mubr.bf16.mxu0 0
      %3242 = vmatmul.mubr.bf16.gmra.mrb[0].mxu0 %v1485
      %v3243 = vpop.f32.mrb[0].mxu0
      %v3244 = vadd.f32 0.0, %v3243
      %v3245 = vpop.f32.mrb[0].mxu0
      %v3246 = vpop.f32.mrb[0].mxu0
      %v3247 = vadd.f32 0.0, %v3246
      %v3248 = vpop.f32.mrb[0].mxu0
      %3249 = vmatprep.mubr.bf16.mxu0 0
      %3250 = vmatmul.mubr.bf16.gmra.mrb[0].mxu0 %v1486
      %v3251 = vpop.f32.mrb[0].mxu0
      %v3252 = vadd.f32 0.0, %v3251
      %v3253 = vpop.f32.mrb[0].mxu0
      %v3254 = vpop.f32.mrb[0].mxu0
      %v3255 = vadd.f32 0.0, %v3254
      %v3256 = vpop.f32.mrb[0].mxu0
      %3257 = vmatprep.mubr.bf16.mxu0 0
      %3258 = vmatmul.mubr.bf16.gmra.mrb[0].mxu0 %v1487
      %v3259 = vpop.f32.mrb[0].mxu0
      %v3260 = vadd.f32 0.0, %v3259
      %v3261 = vpop.f32.mrb[0].mxu0
      %v3262 = vpop.f32.mrb[0].mxu0
      %v3263 = vadd.f32 0.0, %v3262
      %v3264 = vpop.f32.mrb[0].mxu0
      %3265 = vmatprep.mubr.bf16.mxu0 0
      %3266 = vmatmul.mubr.bf16.gmra.mrb[0].mxu0 %v1488
      %v3267 = vpop.f32.mrb[0].mxu0
      %v3268 = vadd.f32 0.0, %v3267
      %v3269 = vpop.f32.mrb[0].mxu0
      %v3270 = vpop.f32.mrb[0].mxu0
      %v3271 = vadd.f32 0.0, %v3270
      %v3272 = vpop.f32.mrb[0].mxu0
      %3273 = vmatprep.mubr.bf16.mxu0 0
      %3274 = vmatmul.mubr.bf16.gmra.mrb[0].mxu0 %v1489
      %v3275 = vpop.f32.mrb[0].mxu0
      %v3276 = vadd.f32 0.0, %v3275
      %v3277 = vpop.f32.mrb[0].mxu0
      %v3278 = vpop.f32.mrb[0].mxu0
      %v3279 = vadd.f32 0.0, %v3278
      %v3280 = vpop.f32.mrb[0].mxu0
      %3281 = vmatprep.mubr.bf16.mxu0 0
      %3282 = vmatmul.mubr.bf16.gmra.mrb[0].mxu0 %v1490
      %v3283 = vpop.f32.mrb[0].mxu0
      %v3284 = vadd.f32 0.0, %v3283
      %v3285 = vpop.f32.mrb[0].mxu0
      %v3286 = vpop.f32.mrb[0].mxu0
      %v3287 = vadd.f32 0.0, %v3286
      %v3288 = vpop.f32.mrb[0].mxu0
      %3289 = vmatprep.mubr.bf16.mxu0 0
      %3290 = vmatmul.mubr.bf16.gmra.mrb[0].mxu0 %v1491
      %v3291 = vpop.f32.mrb[0].mxu0
      %v3292 = vadd.f32 0.0, %v3291
      %v3293 = vpop.f32.mrb[0].mxu0
      %v3294 = vpop.f32.mrb[0].mxu0
      %v3295 = vadd.f32 0.0, %v3294
      %v3296 = vpop.f32.mrb[0].mxu0
      %3297 = vmatprep.mubr.bf16.mxu0 0
      %3298 = vmatmul.mubr.bf16.gmra.mrb[0].mxu0 %v1492
      %v3299 = vpop.f32.mrb[0].mxu0
      %v3300 = vadd.f32 0.0, %v3299
      %v3301 = vpop.f32.mrb[0].mxu0
      %v3302 = vpop.f32.mrb[0].mxu0
      %v3303 = vadd.f32 0.0, %v3302
      %v3304 = vpop.f32.mrb[0].mxu0
      %3305 = vmatprep.mubr.bf16.mxu0 0
      %3306 = vmatmul.mubr.bf16.gmra.mrb[0].mxu0 %v1493
      %v3307 = vpop.f32.mrb[0].mxu0
      %v3308 = vadd.f32 0.0, %v3307
      %v3309 = vpop.f32.mrb[0].mxu0
      %v3310 = vpop.f32.mrb[0].mxu0
      %v3311 = vadd.f32 0.0, %v3310
      %v3312 = vpop.f32.mrb[0].mxu0
      %3313 = vmatprep.mubr.bf16.mxu0 0
      %3314 = vmatmul.mubr.bf16.gmra.mrb[0].mxu0 %v1494
      %v3315 = vpop.f32.mrb[0].mxu0
      %v3316 = vadd.f32 0.0, %v3315
      %v3317 = vpop.f32.mrb[0].mxu0
      %v3318 = vpop.f32.mrb[0].mxu0
      %v3319 = vadd.f32 0.0, %v3318
      %v3320 = vpop.f32.mrb[0].mxu0
      %3321 = vmatprep.mubr.bf16.mxu0 0
      %3322 = vmatmul.mubr.bf16.gmra.mrb[0].mxu0 %v1495
      %v3323 = vpop.f32.mrb[0].mxu0
      %v3324 = vadd.f32 0.0, %v3323
      %v3325 = vpop.f32.mrb[0].mxu0
      %v3326 = vpop.f32.mrb[0].mxu0
      %v3327 = vadd.f32 0.0, %v3326
      %v3328 = vpop.f32.mrb[0].mxu0
      %3329 = vmatprep.mubr.bf16.mxu0 0
      %3330 = vmatmul.mubr.bf16.gmra.mrb[0].mxu0 %v2311
      %v3331 = vpop.f32.mrb[0].mxu0
      %v3332 = vadd.f32 0.0, %v3331
      %v3333 = vpop.f32.mrb[0].mxu0
      %v3334 = vpop.f32.mrb[0].mxu0
      %v3335 = vadd.f32 0.0, %v3334
      %v3336 = vpop.f32.mrb[0].mxu0
      %3337 = vmatprep.mubr.bf16.mxu0 0
      %3338 = vmatmul.mubr.bf16.gmra.mrb[0].mxu0 %v3135
      %v3339 = vpop.f32.mrb[0].mxu0
      %v3340 = vadd.f32 0.0, %v3339
      %v3341 = vpop.f32.mrb[0].mxu0
      %v3342 = vpop.f32.mrb[0].mxu0
      %v3343 = vadd.f32 0.0, %v3342
      %v3344 = vpop.f32.mrb[0].mxu0
      %3345 = vdwg.mxu0
      %v3346 = vadd.f32 %v3062, %v3220
      %v3347 = vadd.f32 %v3063, %v3223
      %v3348 = vadd.f32 %v3064, %v3228
      %v3349 = vadd.f32 %v3065, %v3231
      %v3350 = vadd.f32 %v3066, %v3236
      %v3351 = vadd.f32 %v3067, %v3239
      %v3352 = vadd.f32 %v3068, %v3244
      %v3353 = vadd.f32 %v3069, %v3247
      %v3354 = vadd.f32 %v3070, %v3252
      %v3355 = vadd.f32 %v3071, %v3255
      %v3356 = vadd.f32 %v3072, %v3260
      %v3357 = vadd.f32 %v3073, %v3263
      %v3358 = vadd.f32 %v3074, %v3268
      %v3359 = vadd.f32 %v3075, %v3271
      %v3360 = vadd.f32 %v3076, %v3276
      %v3361 = vadd.f32 %v3077, %v3279
      %v3362 = vadd.f32 %v3078, %v3284
      %v3363 = vadd.f32 %v3079, %v3287
      %v3364 = vadd.f32 %v3080, %v3292
      %v3365 = vadd.f32 %v3081, %v3295
      %v3366 = vadd.f32 %v3082, %v3300
      %v3367 = vadd.f32 %v3083, %v3303
      %v3368 = vadd.f32 %v3084, %v3308
      %v3369 = vadd.f32 %v3085, %v3311
      %v3370 = vadd.f32 %v3086, %v3316
      %v3371 = vadd.f32 %v3087, %v3319
      %v3372 = vadd.f32 %v3088, %v3324
      %v3373 = vadd.f32 %v3089, %v3327
      %v3374 = vadd.f32 %v3090, %v3332
      %v3375 = vadd.f32 %v3091, %v3335
      %v3376 = vadd.f32 %v3092, %v3340
      %v3377 = vadd.f32 %v3093, %v3343
      %s3378 = scalar_lea.vmem %s3, 448
      %v3379 = vld [vmem:[%s3378] sm:$0xf]
      %v3380 = vld [vmem:[%s3378 + $0x4] sm:$0xf]
      %v3381 = vld [vmem:[%s3378 + $0x8] sm:$0xf]
      %v3382 = vld [vmem:[%s3378 + $0xc] sm:$0xf]
      %v3383 = vld [vmem:[%s3378 + $0x10] sm:$0xf]
      %v3384 = vld [vmem:[%s3378 + $0x14] sm:$0xf]
      %v3385 = vld [vmem:[%s3378 + $0x18] sm:$0xf]
      %v3386 = vld [vmem:[%s3378 + $0x1c] sm:$0xf]
      %v3387 = vld [vmem:[%s3378 + $0x20] sm:$0xf]
      %v3388 = vld [vmem:[%s3378 + $0x24] sm:$0xf]
      %v3389 = vld [vmem:[%s3378 + $0x28] sm:$0xf]
      %v3390 = vld [vmem:[%s3378 + $0x2c] sm:$0xf]
      %v3391 = vld [vmem:[%s3378 + $0x30] sm:$0xf]
      %v3392 = vld [vmem:[%s3378 + $0x34] sm:$0xf]
      %v3393 = vld [vmem:[%s3378 + $0x38] sm:$0xf]
      %v3394 = vld [vmem:[%s3378 + $0x3c] sm:$0xf]
      %v3397 = vunpack.c.l.b16 %v753
      %v3398 = vunpack.c.l.b16 %v754
      %v3399 = vpack.c.b16 %v3398, %v3397
      %v3417 = vunpack.c.l.b16 %v3379
      %v3418 = vunpack.c.l.b16 %v3380
      %v3419 = vunpack.c.l.b16 %v3381
      %v3420 = vunpack.c.l.b16 %v3382
      %v3421 = vunpack.c.l.b16 %v3383
      %v3422 = vunpack.c.l.b16 %v3384
      %v3423 = vunpack.c.l.b16 %v3385
      %v3424 = vunpack.c.l.b16 %v3386
      %v3425 = vunpack.c.l.b16 %v3387
      %v3426 = vunpack.c.l.b16 %v3388
      %v3427 = vunpack.c.l.b16 %v3389
      %v3428 = vunpack.c.l.b16 %v3390
      %v3429 = vunpack.c.l.b16 %v3391
      %v3430 = vunpack.c.l.b16 %v3392
      %v3431 = vunpack.c.l.b16 %v3393
      %v3432 = vunpack.c.l.b16 %v3394
      %v3433 = vpack.c.b16 %v3418, %v3417
      %v3434 = vpack.c.b16 %v3420, %v3419
      %v3435 = vpack.c.b16 %v3422, %v3421
      %v3436 = vpack.c.b16 %v3424, %v3423
      %v3437 = vpack.c.b16 %v3426, %v3425
      %v3438 = vpack.c.b16 %v3428, %v3427
      %v3439 = vpack.c.b16 %v3430, %v3429
      %v3440 = vpack.c.b16 %v3432, %v3431
      %3449 = vmatprep.subr.bf16.mxu0 0
      %3450 = vmatpush1.bf16.msra.mxu0 %v3433
      %3451 = vmatprep.subr.bf16.mxu0 0
      %3452 = vmatpush1.bf16.msra.mxu0 %v3434
      %3453 = vmatprep.subr.bf16.mxu0 0
      %3454 = vmatpush1.bf16.msra.mxu0 %v3435
      %3455 = vmatprep.subr.bf16.mxu0 0
      %3456 = vmatpush1.bf16.msra.mxu0 %v3436
      %3457 = vmatprep.subr.bf16.mxu0 0
      %3458 = vmatpush1.bf16.msra.mxu0 %v3437
      %3459 = vmatprep.subr.bf16.mxu0 0
      %3460 = vmatpush1.bf16.msra.mxu0 %v3438
      %3461 = vmatprep.subr.bf16.mxu0 0
      %3462 = vmatpush1.bf16.msra.mxu0 %v3439
      %3463 = vmatprep.subr.bf16.mxu0 0
      %3464 = vmatpush1.bf16.msra.mxu0 %v3440
      %3465 = vmatprep.subr.bf16.mxu0 0
      %3466 = vmatpush1.bf16.msra.mxu0 0
      %3467 = vmatprep.subr.bf16.mxu0 0
      %3468 = vmatpush1.bf16.msra.mxu0 0
      %3469 = vmatprep.subr.bf16.mxu0 0
      %3470 = vmatpush1.bf16.msra.mxu0 0
      %3471 = vmatprep.subr.bf16.mxu0 0
      %3472 = vmatpush1.bf16.msra.mxu0 0
      %3473 = vmatprep.subr.bf16.mxu0 0
      %3474 = vmatpush1.bf16.msra.mxu0 0
      %3475 = vmatprep.subr.bf16.mxu0 0
      %3476 = vmatpush1.bf16.msra.mxu0 0
      %3477 = vmatprep.subr.bf16.mxu0 0
      %3478 = vmatpush1.bf16.msra.mxu0 0
      %3479 = vmatprep.subr.bf16.mxu0 0
      %3480 = vmatpush1.bf16.msra.mxu0 0
      %3481 = vmatprep.mubr.bf16.mxu0 0
      %3482 = vmatmul.mubr.bf16.gmra.mrb[0].mxu0 %v1209
      %v3483 = vpop.f32.mrb[0].mxu0
      %v3484 = vadd.f32 0.0, %v3483
      %v3485 = vpop.f32.mrb[0].mxu0
      %v3486 = vpop.f32.mrb[0].mxu0
      %v3487 = vadd.f32 0.0, %v3486
      %v3488 = vpop.f32.mrb[0].mxu0
      %3489 = vmatprep.mubr.bf16.mxu0 0
      %3490 = vmatmul.mubr.bf16.gmra.mrb[0].mxu0 %v1210
      %v3491 = vpop.f32.mrb[0].mxu0
      %v3492 = vadd.f32 0.0, %v3491
      %v3493 = vpop.f32.mrb[0].mxu0
      %v3494 = vpop.f32.mrb[0].mxu0
      %v3495 = vadd.f32 0.0, %v3494
      %v3496 = vpop.f32.mrb[0].mxu0
      %3497 = vmatprep.mubr.bf16.mxu0 0
      %3498 = vmatmul.mubr.bf16.gmra.mrb[0].mxu0 %v1211
      %v3499 = vpop.f32.mrb[0].mxu0
      %v3500 = vadd.f32 0.0, %v3499
      %v3501 = vpop.f32.mrb[0].mxu0
      %v3502 = vpop.f32.mrb[0].mxu0
      %v3503 = vadd.f32 0.0, %v3502
      %v3504 = vpop.f32.mrb[0].mxu0
      %3505 = vmatprep.mubr.bf16.mxu0 0
      %3506 = vmatmul.mubr.bf16.gmra.mrb[0].mxu0 %v1212
      %v3507 = vpop.f32.mrb[0].mxu0
      %v3508 = vadd.f32 0.0, %v3507
      %v3509 = vpop.f32.mrb[0].mxu0
      %v3510 = vpop.f32.mrb[0].mxu0
      %v3511 = vadd.f32 0.0, %v3510
      %v3512 = vpop.f32.mrb[0].mxu0
      %3513 = vmatprep.mubr.bf16.mxu0 0
      %3514 = vmatmul.mubr.bf16.gmra.mrb[0].mxu0 %v1213
      %v3515 = vpop.f32.mrb[0].mxu0
      %v3516 = vadd.f32 0.0, %v3515
      %v3517 = vpop.f32.mrb[0].mxu0
      %v3518 = vpop.f32.mrb[0].mxu0
      %v3519 = vadd.f32 0.0, %v3518
      %v3520 = vpop.f32.mrb[0].mxu0
      %3521 = vmatprep.mubr.bf16.mxu0 0
      %3522 = vmatmul.mubr.bf16.gmra.mrb[0].mxu0 %v1214
      %v3523 = vpop.f32.mrb[0].mxu0
      %v3524 = vadd.f32 0.0, %v3523
      %v3525 = vpop.f32.mrb[0].mxu0
      %v3526 = vpop.f32.mrb[0].mxu0
      %v3527 = vadd.f32 0.0, %v3526
      %v3528 = vpop.f32.mrb[0].mxu0
      %3529 = vmatprep.mubr.bf16.mxu0 0
      %3530 = vmatmul.mubr.bf16.gmra.mrb[0].mxu0 %v1215
      %v3531 = vpop.f32.mrb[0].mxu0
      %v3532 = vadd.f32 0.0, %v3531
      %v3533 = vpop.f32.mrb[0].mxu0
      %v3534 = vpop.f32.mrb[0].mxu0
      %v3535 = vadd.f32 0.0, %v3534
      %v3536 = vpop.f32.mrb[0].mxu0
      %3537 = vmatprep.mubr.bf16.mxu0 0
      %3538 = vmatmul.mubr.bf16.gmra.mrb[0].mxu0 %v1216
      %v3539 = vpop.f32.mrb[0].mxu0
      %v3540 = vadd.f32 0.0, %v3539
      %v3541 = vpop.f32.mrb[0].mxu0
      %v3542 = vpop.f32.mrb[0].mxu0
      %v3543 = vadd.f32 0.0, %v3542
      %v3544 = vpop.f32.mrb[0].mxu0
      %3545 = vmatprep.mubr.bf16.mxu0 0
      %3546 = vmatmul.mubr.bf16.gmra.mrb[0].mxu0 %v1217
      %v3547 = vpop.f32.mrb[0].mxu0
      %v3548 = vadd.f32 0.0, %v3547
      %v3549 = vpop.f32.mrb[0].mxu0
      %v3550 = vpop.f32.mrb[0].mxu0
      %v3551 = vadd.f32 0.0, %v3550
      %v3552 = vpop.f32.mrb[0].mxu0
      %3553 = vmatprep.mubr.bf16.mxu0 0
      %3554 = vmatmul.mubr.bf16.gmra.mrb[0].mxu0 %v1218
      %v3555 = vpop.f32.mrb[0].mxu0
      %v3556 = vadd.f32 0.0, %v3555
      %v3557 = vpop.f32.mrb[0].mxu0
      %v3558 = vpop.f32.mrb[0].mxu0
      %v3559 = vadd.f32 0.0, %v3558
      %v3560 = vpop.f32.mrb[0].mxu0
      %3561 = vmatprep.mubr.bf16.mxu0 0
      %3562 = vmatmul.mubr.bf16.gmra.mrb[0].mxu0 %v1219
      %v3563 = vpop.f32.mrb[0].mxu0
      %v3564 = vadd.f32 0.0, %v3563
      %v3565 = vpop.f32.mrb[0].mxu0
      %v3566 = vpop.f32.mrb[0].mxu0
      %v3567 = vadd.f32 0.0, %v3566
      %v3568 = vpop.f32.mrb[0].mxu0
      %3569 = vmatprep.mubr.bf16.mxu0 0
      %3570 = vmatmul.mubr.bf16.gmra.mrb[0].mxu0 %v1220
      %v3571 = vpop.f32.mrb[0].mxu0
      %v3572 = vadd.f32 0.0, %v3571
      %v3573 = vpop.f32.mrb[0].mxu0
      %v3574 = vpop.f32.mrb[0].mxu0
      %v3575 = vadd.f32 0.0, %v3574
      %v3576 = vpop.f32.mrb[0].mxu0
      %3577 = vmatprep.mubr.bf16.mxu0 0
      %3578 = vmatmul.mubr.bf16.gmra.mrb[0].mxu0 %v1221
      %v3579 = vpop.f32.mrb[0].mxu0
      %v3580 = vadd.f32 0.0, %v3579
      %v3581 = vpop.f32.mrb[0].mxu0
      %v3582 = vpop.f32.mrb[0].mxu0
      %v3583 = vadd.f32 0.0, %v3582
      %v3584 = vpop.f32.mrb[0].mxu0
      %3585 = vmatprep.mubr.bf16.mxu0 0
      %3586 = vmatmul.mubr.bf16.gmra.mrb[0].mxu0 %v1222
      %v3587 = vpop.f32.mrb[0].mxu0
      %v3588 = vadd.f32 0.0, %v3587
      %v3589 = vpop.f32.mrb[0].mxu0
      %v3590 = vpop.f32.mrb[0].mxu0
      %v3591 = vadd.f32 0.0, %v3590
      %v3592 = vpop.f32.mrb[0].mxu0
      %3593 = vmatprep.mubr.bf16.mxu0 0
      %3594 = vmatmul.mubr.bf16.gmra.mrb[0].mxu0 %v2575
      %v3595 = vpop.f32.mrb[0].mxu0
      %v3596 = vadd.f32 0.0, %v3595
      %v3597 = vpop.f32.mrb[0].mxu0
      %v3598 = vpop.f32.mrb[0].mxu0
      %v3599 = vadd.f32 0.0, %v3598
      %v3600 = vpop.f32.mrb[0].mxu0
      %3601 = vmatprep.mubr.bf16.mxu0 0
      %3602 = vmatmul.mubr.bf16.gmra.mrb[0].mxu0 %v3399
      %v3603 = vpop.f32.mrb[0].mxu0
      %v3604 = vadd.f32 0.0, %v3603
      %v3605 = vpop.f32.mrb[0].mxu0
      %v3606 = vpop.f32.mrb[0].mxu0
      %v3607 = vadd.f32 0.0, %v3606
      %v3608 = vpop.f32.mrb[0].mxu0
      %3609 = vdwg.mxu0
      %v3610 = vadd.f32 %v3346, %v3484
      %v3611 = vadd.f32 %v3347, %v3487
      %v3612 = vadd.f32 %v3348, %v3492
      %v3613 = vadd.f32 %v3349, %v3495
      %v3614 = vadd.f32 %v3350, %v3500
      %v3615 = vadd.f32 %v3351, %v3503
      %v3616 = vadd.f32 %v3352, %v3508
      %v3617 = vadd.f32 %v3353, %v3511
      %v3618 = vadd.f32 %v3354, %v3516
      %v3619 = vadd.f32 %v3355, %v3519
      %v3620 = vadd.f32 %v3356, %v3524
      %v3621 = vadd.f32 %v3357, %v3527
      %v3622 = vadd.f32 %v3358, %v3532
      %v3623 = vadd.f32 %v3359, %v3535
      %v3624 = vadd.f32 %v3360, %v3540
      %v3625 = vadd.f32 %v3361, %v3543
      %v3626 = vadd.f32 %v3362, %v3548
      %v3627 = vadd.f32 %v3363, %v3551
      %v3628 = vadd.f32 %v3364, %v3556
      %v3629 = vadd.f32 %v3365, %v3559
      %v3630 = vadd.f32 %v3366, %v3564
      %v3631 = vadd.f32 %v3367, %v3567
      %v3632 = vadd.f32 %v3368, %v3572
      %v3633 = vadd.f32 %v3369, %v3575
      %v3634 = vadd.f32 %v3370, %v3580
      %v3635 = vadd.f32 %v3371, %v3583
      %v3636 = vadd.f32 %v3372, %v3588
      %v3637 = vadd.f32 %v3373, %v3591
      %v3638 = vadd.f32 %v3374, %v3596
      %v3639 = vadd.f32 %v3375, %v3599
      %v3640 = vadd.f32 %v3376, %v3604
      %v3641 = vadd.f32 %v3377, %v3607
      %v3642 = vrot.slane %v3100, 4
      %v3643 = vrot.slane %v3103, 5
      %v3644 = vor.u32 %v3642, %v3643
      %v3645 = vrot.slane %v3644, 4
      %v3646 = vrot.slane %v3112, 5
      %v3647 = vsel %vm1723, %v3645, %v3646
      %v3648 = vrot.slane %v3109, 4
      %v3649 = vor.u32 %v3648, %v3646
      %v3650 = vrot.slane %v3649, 4
      %v3652 = vshll.u32 %v755, 16
      %v3654 = vrot.slane %v3652, 5
      %v3655 = vsel %vm1723, %v3650, %v3654
      %s3656 = scalar_lea.vmem %s3, 512
      %v3657 = vld [vmem:[%s3656] sm:$0xf]
      %v3658 = vld [vmem:[%s3656 + $0x4] sm:$0xf]
      %v3659 = vld [vmem:[%s3656 + $0x8] sm:$0xf]
      %v3660 = vld [vmem:[%s3656 + $0xc] sm:$0xf]
      %v3661 = vld [vmem:[%s3656 + $0x10] sm:$0xf]
      %v3662 = vld [vmem:[%s3656 + $0x14] sm:$0xf]
      %v3663 = vld [vmem:[%s3656 + $0x18] sm:$0xf]
      %v3664 = vld [vmem:[%s3656 + $0x1c] sm:$0xf]
      %v3665 = vld [vmem:[%s3656 + $0x20] sm:$0xf]
      %v3666 = vld [vmem:[%s3656 + $0x24] sm:$0xf]
      %v3667 = vld [vmem:[%s3656 + $0x28] sm:$0xf]
      %v3668 = vld [vmem:[%s3656 + $0x2c] sm:$0xf]
      %v3669 = vld [vmem:[%s3656 + $0x30] sm:$0xf]
      %v3670 = vld [vmem:[%s3656 + $0x34] sm:$0xf]
      %v3671 = vld [vmem:[%s3656 + $0x38] sm:$0xf]
      %v3672 = vld [vmem:[%s3656 + $0x3c] sm:$0xf]
      %v3673 = vunpack.c.l.b16 %v3647
      %v3674 = vunpack.c.l.b16 %v3655
      %v3675 = vpack.c.b16 %v3674, %v3673
      %v3693 = vunpack.c.l.b16 %v3657
      %v3694 = vunpack.c.l.b16 %v3658
      %v3695 = vunpack.c.l.b16 %v3659
      %v3696 = vunpack.c.l.b16 %v3660
      %v3697 = vunpack.c.l.b16 %v3661
      %v3698 = vunpack.c.l.b16 %v3662
      %v3699 = vunpack.c.l.b16 %v3663
      %v3700 = vunpack.c.l.b16 %v3664
      %v3701 = vunpack.c.l.b16 %v3665
      %v3702 = vunpack.c.l.b16 %v3666
      %v3703 = vunpack.c.l.b16 %v3667
      %v3704 = vunpack.c.l.b16 %v3668
      %v3705 = vunpack.c.l.b16 %v3669
      %v3706 = vunpack.c.l.b16 %v3670
      %v3707 = vunpack.c.l.b16 %v3671
      %v3708 = vunpack.c.l.b16 %v3672
      %v3709 = vpack.c.b16 %v3694, %v3693
      %v3710 = vpack.c.b16 %v3696, %v3695
      %v3711 = vpack.c.b16 %v3698, %v3697
      %v3712 = vpack.c.b16 %v3700, %v3699
      %v3713 = vpack.c.b16 %v3702, %v3701
      %v3714 = vpack.c.b16 %v3704, %v3703
      %v3715 = vpack.c.b16 %v3706, %v3705
      %v3716 = vpack.c.b16 %v3708, %v3707
      %3725 = vmatprep.subr.bf16.mxu0 0
      %3726 = vmatpush1.bf16.msra.mxu0 %v3709
      %3727 = vmatprep.subr.bf16.mxu0 0
      %3728 = vmatpush1.bf16.msra.mxu0 %v3710
      %3729 = vmatprep.subr.bf16.mxu0 0
      %3730 = vmatpush1.bf16.msra.mxu0 %v3711
      %3731 = vmatprep.subr.bf16.mxu0 0
      %3732 = vmatpush1.bf16.msra.mxu0 %v3712
      %3733 = vmatprep.subr.bf16.mxu0 0
      %3734 = vmatpush1.bf16.msra.mxu0 %v3713
      %3735 = vmatprep.subr.bf16.mxu0 0
      %3736 = vmatpush1.bf16.msra.mxu0 %v3714
      %3737 = vmatprep.subr.bf16.mxu0 0
      %3738 = vmatpush1.bf16.msra.mxu0 %v3715
      %3739 = vmatprep.subr.bf16.mxu0 0
      %3740 = vmatpush1.bf16.msra.mxu0 %v3716
      %3741 = vmatprep.subr.bf16.mxu0 0
      %3742 = vmatpush1.bf16.msra.mxu0 0
      %3743 = vmatprep.subr.bf16.mxu0 0
      %3744 = vmatpush1.bf16.msra.mxu0 0
      %3745 = vmatprep.subr.bf16.mxu0 0
      %3746 = vmatpush1.bf16.msra.mxu0 0
      %3747 = vmatprep.subr.bf16.mxu0 0
      %3748 = vmatpush1.bf16.msra.mxu0 0
      %3749 = vmatprep.subr.bf16.mxu0 0
      %3750 = vmatpush1.bf16.msra.mxu0 0
      %3751 = vmatprep.subr.bf16.mxu0 0
      %3752 = vmatpush1.bf16.msra.mxu0 0
      %3753 = vmatprep.subr.bf16.mxu0 0
      %3754 = vmatpush1.bf16.msra.mxu0 0
      %3755 = vmatprep.subr.bf16.mxu0 0
      %3756 = vmatpush1.bf16.msra.mxu0 0
      %3757 = vmatprep.mubr.bf16.mxu0 0
      %3758 = vmatmul.mubr.bf16.gmra.mrb[0].mxu0 %v1999
      %v3759 = vpop.f32.mrb[0].mxu0
      %v3760 = vadd.f32 0.0, %v3759
      %v3761 = vpop.f32.mrb[0].mxu0
      %v3762 = vpop.f32.mrb[0].mxu0
      %v3763 = vadd.f32 0.0, %v3762
      %v3764 = vpop.f32.mrb[0].mxu0
      %3765 = vmatprep.mubr.bf16.mxu0 0
      %3766 = vmatmul.mubr.bf16.gmra.mrb[0].mxu0 %v2000
      %v3767 = vpop.f32.mrb[0].mxu0
      %v3768 = vadd.f32 0.0, %v3767
      %v3769 = vpop.f32.mrb[0].mxu0
      %v3770 = vpop.f32.mrb[0].mxu0
      %v3771 = vadd.f32 0.0, %v3770
      %v3772 = vpop.f32.mrb[0].mxu0
      %3773 = vmatprep.mubr.bf16.mxu0 0
      %3774 = vmatmul.mubr.bf16.gmra.mrb[0].mxu0 %v2001
      %v3775 = vpop.f32.mrb[0].mxu0
      %v3776 = vadd.f32 0.0, %v3775
      %v3777 = vpop.f32.mrb[0].mxu0
      %v3778 = vpop.f32.mrb[0].mxu0
      %v3779 = vadd.f32 0.0, %v3778
      %v3780 = vpop.f32.mrb[0].mxu0
      %3781 = vmatprep.mubr.bf16.mxu0 0
      %3782 = vmatmul.mubr.bf16.gmra.mrb[0].mxu0 %v2002
      %v3783 = vpop.f32.mrb[0].mxu0
      %v3784 = vadd.f32 0.0, %v3783
      %v3785 = vpop.f32.mrb[0].mxu0
      %v3786 = vpop.f32.mrb[0].mxu0
      %v3787 = vadd.f32 0.0, %v3786
      %v3788 = vpop.f32.mrb[0].mxu0
      %3789 = vmatprep.mubr.bf16.mxu0 0
      %3790 = vmatmul.mubr.bf16.gmra.mrb[0].mxu0 %v2003
      %v3791 = vpop.f32.mrb[0].mxu0
      %v3792 = vadd.f32 0.0, %v3791
      %v3793 = vpop.f32.mrb[0].mxu0
      %v3794 = vpop.f32.mrb[0].mxu0
      %v3795 = vadd.f32 0.0, %v3794
      %v3796 = vpop.f32.mrb[0].mxu0
      %3797 = vmatprep.mubr.bf16.mxu0 0
      %3798 = vmatmul.mubr.bf16.gmra.mrb[0].mxu0 %v2004
      %v3799 = vpop.f32.mrb[0].mxu0
      %v3800 = vadd.f32 0.0, %v3799
      %v3801 = vpop.f32.mrb[0].mxu0
      %v3802 = vpop.f32.mrb[0].mxu0
      %v3803 = vadd.f32 0.0, %v3802
      %v3804 = vpop.f32.mrb[0].mxu0
      %3805 = vmatprep.mubr.bf16.mxu0 0
      %3806 = vmatmul.mubr.bf16.gmra.mrb[0].mxu0 %v2005
      %v3807 = vpop.f32.mrb[0].mxu0
      %v3808 = vadd.f32 0.0, %v3807
      %v3809 = vpop.f32.mrb[0].mxu0
      %v3810 = vpop.f32.mrb[0].mxu0
      %v3811 = vadd.f32 0.0, %v3810
      %v3812 = vpop.f32.mrb[0].mxu0
      %3813 = vmatprep.mubr.bf16.mxu0 0
      %3814 = vmatmul.mubr.bf16.gmra.mrb[0].mxu0 %v2006
      %v3815 = vpop.f32.mrb[0].mxu0
      %v3816 = vadd.f32 0.0, %v3815
      %v3817 = vpop.f32.mrb[0].mxu0
      %v3818 = vpop.f32.mrb[0].mxu0
      %v3819 = vadd.f32 0.0, %v3818
      %v3820 = vpop.f32.mrb[0].mxu0
      %3821 = vmatprep.mubr.bf16.mxu0 0
      %3822 = vmatmul.mubr.bf16.gmra.mrb[0].mxu0 %v2007
      %v3823 = vpop.f32.mrb[0].mxu0
      %v3824 = vadd.f32 0.0, %v3823
      %v3825 = vpop.f32.mrb[0].mxu0
      %v3826 = vpop.f32.mrb[0].mxu0
      %v3827 = vadd.f32 0.0, %v3826
      %v3828 = vpop.f32.mrb[0].mxu0
      %3829 = vmatprep.mubr.bf16.mxu0 0
      %3830 = vmatmul.mubr.bf16.gmra.mrb[0].mxu0 %v2008
      %v3831 = vpop.f32.mrb[0].mxu0
      %v3832 = vadd.f32 0.0, %v3831
      %v3833 = vpop.f32.mrb[0].mxu0
      %v3834 = vpop.f32.mrb[0].mxu0
      %v3835 = vadd.f32 0.0, %v3834
      %v3836 = vpop.f32.mrb[0].mxu0
      %3837 = vmatprep.mubr.bf16.mxu0 0
      %3838 = vmatmul.mubr.bf16.gmra.mrb[0].mxu0 %v2009
      %v3839 = vpop.f32.mrb[0].mxu0
      %v3840 = vadd.f32 0.0, %v3839
      %v3841 = vpop.f32.mrb[0].mxu0
      %v3842 = vpop.f32.mrb[0].mxu0
      %v3843 = vadd.f32 0.0, %v3842
      %v3844 = vpop.f32.mrb[0].mxu0
      %3845 = vmatprep.mubr.bf16.mxu0 0
      %3846 = vmatmul.mubr.bf16.gmra.mrb[0].mxu0 %v2010
      %v3847 = vpop.f32.mrb[0].mxu0
      %v3848 = vadd.f32 0.0, %v3847
      %v3849 = vpop.f32.mrb[0].mxu0
      %v3850 = vpop.f32.mrb[0].mxu0
      %v3851 = vadd.f32 0.0, %v3850
      %v3852 = vpop.f32.mrb[0].mxu0
      %3853 = vmatprep.mubr.bf16.mxu0 0
      %3854 = vmatmul.mubr.bf16.gmra.mrb[0].mxu0 %v2011
      %v3855 = vpop.f32.mrb[0].mxu0
      %v3856 = vadd.f32 0.0, %v3855
      %v3857 = vpop.f32.mrb[0].mxu0
      %v3858 = vpop.f32.mrb[0].mxu0
      %v3859 = vadd.f32 0.0, %v3858
      %v3860 = vpop.f32.mrb[0].mxu0
      %3861 = vmatprep.mubr.bf16.mxu0 0
      %3862 = vmatmul.mubr.bf16.gmra.mrb[0].mxu0 %v2012
      %v3863 = vpop.f32.mrb[0].mxu0
      %v3864 = vadd.f32 0.0, %v3863
      %v3865 = vpop.f32.mrb[0].mxu0
      %v3866 = vpop.f32.mrb[0].mxu0
      %v3867 = vadd.f32 0.0, %v3866
      %v3868 = vpop.f32.mrb[0].mxu0
      %3869 = vmatprep.mubr.bf16.mxu0 0
      %3870 = vmatmul.mubr.bf16.gmra.mrb[0].mxu0 %v2851
      %v3871 = vpop.f32.mrb[0].mxu0
      %v3872 = vadd.f32 0.0, %v3871
      %v3873 = vpop.f32.mrb[0].mxu0
      %v3874 = vpop.f32.mrb[0].mxu0
      %v3875 = vadd.f32 0.0, %v3874
      %v3876 = vpop.f32.mrb[0].mxu0
      %3877 = vmatprep.mubr.bf16.mxu0 0
      %3878 = vmatmul.mubr.bf16.gmra.mrb[0].mxu0 %v3675
      %v3879 = vpop.f32.mrb[0].mxu0
      %v3880 = vadd.f32 0.0, %v3879
      %v3881 = vpop.f32.mrb[0].mxu0
      %v3882 = vpop.f32.mrb[0].mxu0
      %v3883 = vadd.f32 0.0, %v3882
      %v3884 = vpop.f32.mrb[0].mxu0
      %3885 = vdwg.mxu0
      %v3886 = vadd.f32 %v3610, %v3760
      %v3887 = vadd.f32 %v3611, %v3763
      %v3888 = vadd.f32 %v3612, %v3768
      %v3889 = vadd.f32 %v3613, %v3771
      %v3890 = vadd.f32 %v3614, %v3776
      %v3891 = vadd.f32 %v3615, %v3779
      %v3892 = vadd.f32 %v3616, %v3784
      %v3893 = vadd.f32 %v3617, %v3787
      %v3894 = vadd.f32 %v3618, %v3792
      %v3895 = vadd.f32 %v3619, %v3795
      %v3896 = vadd.f32 %v3620, %v3800
      %v3897 = vadd.f32 %v3621, %v3803
      %v3898 = vadd.f32 %v3622, %v3808
      %v3899 = vadd.f32 %v3623, %v3811
      %v3900 = vadd.f32 %v3624, %v3816
      %v3901 = vadd.f32 %v3625, %v3819
      %v3902 = vadd.f32 %v3626, %v3824
      %v3903 = vadd.f32 %v3627, %v3827
      %v3904 = vadd.f32 %v3628, %v3832
      %v3905 = vadd.f32 %v3629, %v3835
      %v3906 = vadd.f32 %v3630, %v3840
      %v3907 = vadd.f32 %v3631, %v3843
      %v3908 = vadd.f32 %v3632, %v3848
      %v3909 = vadd.f32 %v3633, %v3851
      %v3910 = vadd.f32 %v3634, %v3856
      %v3911 = vadd.f32 %v3635, %v3859
      %v3912 = vadd.f32 %v3636, %v3864
      %v3913 = vadd.f32 %v3637, %v3867
      %v3914 = vadd.f32 %v3638, %v3872
      %v3915 = vadd.f32 %v3639, %v3875
      %v3916 = vadd.f32 %v3640, %v3880
      %v3917 = vadd.f32 %v3641, %v3883
      %3918 = vst [vmem:[%s262] sm:$0xff] %v3886
      %3919 = vst [vmem:[%s262 + $0x8] sm:$0xff] %v3887
      %3920 = vst [vmem:[%s262 + $0x10] sm:$0xff] %v3888
      %3921 = vst [vmem:[%s262 + $0x18] sm:$0xff] %v3889
      %3922 = vst [vmem:[%s262 + $0x20] sm:$0xff] %v3890
      %3923 = vst [vmem:[%s262 + $0x28] sm:$0xff] %v3891
      %3924 = vst [vmem:[%s262 + $0x30] sm:$0xff] %v3892
      %3925 = vst [vmem:[%s262 + $0x38] sm:$0xff] %v3893
      %3926 = vst [vmem:[%s262 + $0x40] sm:$0xff] %v3894
      %3927 = vst [vmem:[%s262 + $0x48] sm:$0xff] %v3895
      %3928 = vst [vmem:[%s262 + $0x50] sm:$0xff] %v3896
      %3929 = vst [vmem:[%s262 + $0x58] sm:$0xff] %v3897
      %3930 = vst [vmem:[%s262 + $0x60] sm:$0xff] %v3898
      %3931 = vst [vmem:[%s262 + $0x68] sm:$0xff] %v3899
      %3932 = vst [vmem:[%s262 + $0x70] sm:$0xff] %v3900
      %3933 = vst [vmem:[%s262 + $0x78] sm:$0xff] %v3901
      %3934 = vst [vmem:[%s262 + $0x80] sm:$0xff] %v3902
      %3935 = vst [vmem:[%s262 + $0x88] sm:$0xff] %v3903
      %3936 = vst [vmem:[%s262 + $0x90] sm:$0xff] %v3904
      %3937 = vst [vmem:[%s262 + $0x98] sm:$0xff] %v3905
      %3938 = vst [vmem:[%s262 + $0xa0] sm:$0xff] %v3906
      %3939 = vst [vmem:[%s262 + $0xa8] sm:$0xff] %v3907
      %3940 = vst [vmem:[%s262 + $0xb0] sm:$0xff] %v3908
      %3941 = vst [vmem:[%s262 + $0xb8] sm:$0xff] %v3909
      %3942 = vst [vmem:[%s262 + $0xc0] sm:$0xff] %v3910
      %3943 = vst [vmem:[%s262 + $0xc8] sm:$0xff] %v3911
      %3944 = vst [vmem:[%s262 + $0xd0] sm:$0xff] %v3912
      %3945 = vst [vmem:[%s262 + $0xd8] sm:$0xff] %v3913
      %3946 = vst [vmem:[%s262 + $0xe0] sm:$0xff] %v3914
      %3947 = vst [vmem:[%s262 + $0xe8] sm:$0xff] %v3915
      %3948 = vst [vmem:[%s262 + $0xf0] sm:$0xff] %v3916
      %3949 = vst [vmem:[%s262 + $0xf8] sm:$0xff] %v3917
      %v3950 = vadd.f32 %v3886, %v3887
      %v3951 = vadd.f32 %v3950, %v3888
      %v3952 = vadd.f32 %v3951, %v3889
      %v3953 = vadd.f32 %v3952, %v3890
      %v3954 = vadd.f32 %v3953, %v3891
      %v3955 = vadd.f32 %v3954, %v3892
      %v3956 = vadd.f32 %v3955, %v3893
      %v3957 = vadd.f32 %v3956, %v3894
      %v3958 = vadd.f32 %v3957, %v3895
      %v3959 = vadd.f32 %v3958, %v3896
      %v3960 = vadd.f32 %v3959, %v3897
      %v3961 = vadd.f32 %v3960, %v3898
      %v3962 = vadd.f32 %v3961, %v3899
      %v3963 = vadd.f32 %v3962, %v3900
      %v3964 = vadd.f32 %v3963, %v3901
      %v3965 = vadd.f32 %v3964, %v3902
      %v3966 = vadd.f32 %v3965, %v3903
      %v3967 = vadd.f32 %v3966, %v3904
      %v3968 = vadd.f32 %v3967, %v3905
      %v3969 = vadd.f32 %v3968, %v3906
      %v3970 = vadd.f32 %v3969, %v3907
      %v3971 = vadd.f32 %v3970, %v3908
      %v3972 = vadd.f32 %v3971, %v3909
      %v3973 = vadd.f32 %v3972, %v3910
      %v3974 = vadd.f32 %v3973, %v3911
      %v3975 = vadd.f32 %v3974, %v3912
      %v3976 = vadd.f32 %v3975, %v3913
      %v3977 = vadd.f32 %v3976, %v3914
      %v3978 = vadd.f32 %v3977, %v3915
      %v3979 = vadd.f32 %v3978, %v3916
      %v3980 = vadd.f32 %v3979, %v3917
      %v3981 = vrot.slane %v3980, 4
      %v3982 = vadd.f32 %v3980, %v3981
      %v3983 = vrot.slane %v3982, 2
      %v3984 = vadd.f32 %v3982, %v3983
      %v3985 = vrot.slane %v3984, 1
      %v3986 = vadd.f32 %v3984, %v3985
      %3987 = vst [vmem:[%s265] sm:$0x1] %v3986
      %v3988 = vmul.f32 %v3886, %v3886
      %v3989 = vmul.f32 %v3887, %v3887
      %v3990 = vmul.f32 %v3888, %v3888
      %v3991 = vmul.f32 %v3889, %v3889
      %v3992 = vmul.f32 %v3890, %v3890
      %v3993 = vmul.f32 %v3891, %v3891
      %v3994 = vmul.f32 %v3892, %v3892
      %v3995 = vmul.f32 %v3893, %v3893
      %v3996 = vmul.f32 %v3894, %v3894
      %v3997 = vmul.f32 %v3895, %v3895
      %v3998 = vmul.f32 %v3896, %v3896
      %v3999 = vmul.f32 %v3897, %v3897
      %v4000 = vmul.f32 %v3898, %v3898
      %v4001 = vmul.f32 %v3899, %v3899
      %v4002 = vmul.f32 %v3900, %v3900
      %v4003 = vmul.f32 %v3901, %v3901
      %v4004 = vmul.f32 %v3902, %v3902
      %v4005 = vmul.f32 %v3903, %v3903
      %v4006 = vmul.f32 %v3904, %v3904
      %v4007 = vmul.f32 %v3905, %v3905
      %v4008 = vmul.f32 %v3906, %v3906
      %v4009 = vmul.f32 %v3907, %v3907
      %v4010 = vmul.f32 %v3908, %v3908
      %v4011 = vmul.f32 %v3909, %v3909
      %v4012 = vmul.f32 %v3910, %v3910
      %v4013 = vmul.f32 %v3911, %v3911
      %v4014 = vmul.f32 %v3912, %v3912
      %v4015 = vmul.f32 %v3913, %v3913
      %v4016 = vmul.f32 %v3914, %v3914
      %v4017 = vmul.f32 %v3915, %v3915
      %v4018 = vmul.f32 %v3916, %v3916
      %v4019 = vmul.f32 %v3917, %v3917
      %v4020 = vadd.f32 %v3988, %v3989
      %v4021 = vadd.f32 %v4020, %v3990
      %v4022 = vadd.f32 %v4021, %v3991
      %v4023 = vadd.f32 %v4022, %v3992
      %v4024 = vadd.f32 %v4023, %v3993
      %v4025 = vadd.f32 %v4024, %v3994
      %v4026 = vadd.f32 %v4025, %v3995
      %v4027 = vadd.f32 %v4026, %v3996
      %v4028 = vadd.f32 %v4027, %v3997
      %v4029 = vadd.f32 %v4028, %v3998
      %v4030 = vadd.f32 %v4029, %v3999
      %v4031 = vadd.f32 %v4030, %v4000
      %v4032 = vadd.f32 %v4031, %v4001
      %v4033 = vadd.f32 %v4032, %v4002
      %v4034 = vadd.f32 %v4033, %v4003
      %v4035 = vadd.f32 %v4034, %v4004
      %v4036 = vadd.f32 %v4035, %v4005
      %v4037 = vadd.f32 %v4036, %v4006
      %v4038 = vadd.f32 %v4037, %v4007
      %v4039 = vadd.f32 %v4038, %v4008
      %v4040 = vadd.f32 %v4039, %v4009
      %v4041 = vadd.f32 %v4040, %v4010
      %v4042 = vadd.f32 %v4041, %v4011
      %v4043 = vadd.f32 %v4042, %v4012
      %v4044 = vadd.f32 %v4043, %v4013
      %v4045 = vadd.f32 %v4044, %v4014
      %v4046 = vadd.f32 %v4045, %v4015
      %v4047 = vadd.f32 %v4046, %v4016
      %v4048 = vadd.f32 %v4047, %v4017
      %v4049 = vadd.f32 %v4048, %v4018
      %v4050 = vadd.f32 %v4049, %v4019
      %v4051 = vrot.slane %v4050, 4
      %v4052 = vadd.f32 %v4050, %v4051
      %v4053 = vrot.slane %v4052, 2
      %v4054 = vadd.f32 %v4052, %v4053
      %v4055 = vrot.slane %v4054, 1
      %v4056 = vadd.f32 %v4054, %v4055
      %4057 = vst [vmem:[%s268] sm:$0x1] %v4056
      %p4058 = scmp.lt.s32.totalorder %s18, 1
      %s4059 = scalar_select %p4058, %s18, 1
      %s4060 = smul.addr %s4059, 32
      %s4061 = smul.addr %s4060, 8
      %s4062 = scalar_lea.vmem %s4, %s4061
      %p4063 = scmp.lt.s32.totalorder %s18, 1
      %s4064 = scalar_select %p4063, %s18, 1
      %s4065 = scalar_lea.vmem %s5, %s4064
      %p4066 = scmp.lt.s32.totalorder %s18, 1
      %s4067 = scalar_select %p4066, %s18, 1
      %s4068 = scalar_lea.vmem %s6, %s4067
      // Predicated region
      $region37: #{_forward.4} parent=35 // pred_check
        %p4069 = pneg %p125
      $region38: #{_forward.4} parent=35 // pred_check_branch
        %4071 = sbr.rel (%p4069) target = $region40
      $region39: #{_forward.4} parent=35 // pred_region
        _
      $region40: #{_forward.4} parent=35 // pred_fallthru
        _
      // Predicated region
      $region41: #{_forward.4} parent=35 // pred_check
        %p4072 = pneg %p151
      $region42: #{_forward.4} parent=35 // pred_check_branch
        %4074 = sbr.rel (%p4072) target = $region44
      $region43: #{_forward.4} parent=35 // pred_region
        _
      $region44: #{_forward.4} parent=35 // pred_fallthru
        _
      // Predicated region
      $region45: #{_forward.4} parent=35 // pred_check
        %p4075 = pneg %p177
      $region46: #{_forward.4} parent=35 // pred_check_branch
        %4077 = sbr.rel (%p4075) target = $region48
      $region47: #{_forward.4} parent=35 // pred_region
        _
      $region48: #{_forward.4} parent=35 // pred_fallthru
        _
    $region36: #{_forward.4} parent=5 // pred_fallthru
      _
    %p4078 = scmp.le.s32.totalorder 2, %s13
    // Predicated region
    $region49: #{_forward.4} parent=5 // pred_check
      %p4079 = pneg %p4078
    $region50: #{_forward.4} parent=5 // pred_check_branch
      %4081 = sbr.rel (%p4079) target = $region52
    $region51: #{_forward.4} parent=5 // pred_region
      %s4082 = ssub.s32 %s13, 2
      // Predicated region
      $region53: #{_forward.4} parent=51 // pred_check
        %p4083 = pneg %p131
      $region54: #{_forward.4} parent=51 // pred_check_branch
        %4085 = sbr.rel (%p4083) target = $region56
      $region55: #{_forward.4} parent=51 // pred_region
        %p4086 = scmp.lt.s32.totalorder %s19, 1
        %s4087 = scalar_select %p4086, %s19, 1
        %s4088 = smul.addr %s4087, 32
        %s4089 = smul.addr %s4088, 8
        %s4090 = scalar_lea.vmem %s4, %s4089
      $region56: #{_forward.4} parent=51 // pred_fallthru
        _
      // Predicated region
      $region57: #{_forward.4} parent=51 // pred_check
        %p4091 = pneg %p157
      $region58: #{_forward.4} parent=51 // pred_check_branch
        %4093 = sbr.rel (%p4091) target = $region60
      $region59: #{_forward.4} parent=51 // pred_region
        %p4094 = scmp.lt.s32.totalorder %s19, 1
        %s4095 = scalar_select %p4094, %s19, 1
        %s4096 = scalar_lea.vmem %s5, %s4095
      $region60: #{_forward.4} parent=51 // pred_fallthru
        _
      // Predicated region
      $region61: #{_forward.4} parent=51 // pred_check
        %p4097 = pneg %p183
      $region62: #{_forward.4} parent=51 // pred_check_branch
        %4099 = sbr.rel (%p4097) target = $region64
      $region63: #{_forward.4} parent=51 // pred_region
        %p4100 = scmp.lt.s32.totalorder %s19, 1
        %s4101 = scalar_select %p4100, %s19, 1
        %s4102 = scalar_lea.vmem %s6, %s4101
      $region64: #{_forward.4} parent=51 // pred_fallthru
        _
    $region52: #{_forward.4} parent=5 // pred_fallthru
      _
  $region6: #{_forward.4} parent=0 // loop_footer
    %s17 = sadd.s32 1, %s13
  $region7: #{_forward.4} parent=0 // loop_footer_branch
    %12 = sbr.rel target = $region3
  $region8: #{_forward.4} parent=0 // loop_exit
    _

</llo_original>
